<compile_context>
chip_gen: v6e
topology: v6e:2x2x1
jax: 0.10.0
libtpu: 0.0.40
codegen_flags: <defaults>
</compile_context>

<pallas_src>
import functools

import jax
import jax.numpy as jnp
from jax.experimental import pallas as pl
from jax.experimental.pallas import tpu as pltpu

DIM = 512        # channel width fixed by the module definition
KSIZE = 5        # Conv1d kernel size
PAD = 2          # same-padding
HH = 2 * PAD     # halo rows (each side) of the intermediate h computed per tile (=4)
HX = HH + PAD    # halo rows (each side) of the x window per tile (=6)


def resblock_kernel(xw_ref, w1_ref, b1_ref, w2_ref, b2_ref, o_ref, hp_ref):
    # xw_ref: (bt, tl + 2*HX, C) f32  x window incl. HX-row halo each side
    #                                 (zero outside the true sequence).
    # w*_ref: (KSIZE, C, C) bf16      grid-invariant, single-buffered.
    # b*_ref: (1, C) f32
    # o_ref : (bt, tl, C)
    # hp_ref: (bt, tl + 2*HX, C) bf16 padded-activation scratch, reused for
    #                                 relu(x window) then relu(h window).
    bt, tl, C = o_ref.shape
    lh = tl + 2 * HH          # rows of the intermediate h computed per tile
    l = pl.program_id(1)
    nl = pl.num_programs(1)

    # ---- conv #1: h[t] = b1 + sum_k w1[k] . relu(x)[t+k-PAD], on lh rows ----
    hp_ref[...] = jnp.maximum(xw_ref[...], 0.0).astype(hp_ref.dtype)
    m1 = bt * lh
    acc = jnp.broadcast_to(b1_ref[0][None, :], (m1, C))       # f32 init = bias
    for k in range(KSIZE):                                     # 5 MXU matmuls, M = bt*lh
        lhs = hp_ref[:, k:k + lh, :].reshape(m1, C)            # bf16, ref-windowed load
        acc = acc + jnp.dot(lhs, w1_ref[k], preferred_element_type=jnp.float32)
    h = acc.reshape(bt, lh, C)

    # ---- relu(h) back into the scratch; zero halo rows outside the sequence
    # (these implement conv #2's zero padding at the sequence edges). ---------
    hp_ref[:, :lh, :] = jnp.maximum(h, 0.0).astype(hp_ref.dtype)

    @pl.when(l == 0)
    def _():
        hp_ref[:, :HH, :] = jnp.zeros((bt, HH, C), hp_ref.dtype)

    @pl.when(l == nl - 1)
    def _():
        hp_ref[:, tl + HH:lh, :] = jnp.zeros((bt, HH, C), hp_ref.dtype)

    # ---- conv #2: out row j uses relu(h) rows [j + (HH-PAD) + k] -------------
    m2 = bt * tl
    off = HH - PAD
    acc2 = jnp.broadcast_to(b2_ref[0][None, :], (m2, C))
    for k in range(KSIZE):                                     # 5 MXU matmuls, M = bt*tl
        lhs = hp_ref[:, off + k:off + k + tl, :].reshape(m2, C)
        acc2 = acc2 + jnp.dot(lhs, w2_ref[k], preferred_element_type=jnp.float32)
    h2 = acc2.reshape(bt, tl, C)

    # ---- residual: x (no halo) lives at xw rows [HX, HX + tl) ---------------
    o_ref[...] = (xw_ref[:, HX:HX + tl, :] + 0.3 * h2).astype(o_ref.dtype)


@functools.lru_cache(maxsize=None)
def _vmem_capacity_bytes():
    try:
        cap = getattr(pltpu.get_tpu_info(), "vmem_capacity_bytes", None)
        if cap:
            return int(cap)
    except Exception:
        pass
    return 64 * 1024 * 1024     # conservative default: v7x per-TensorCore VMEM


def _pick_tiles(N, L, target_rows, max_rows):
    """Choose (bt, tl): batch samples / output rows folded into one grid step.

    Preference order: block fits the per-generation row budget, the grid has
    >= 2 steps (both v7x TensorCores get work), bt*tl is a multiple of 256 /
    128 (full MXU passes on v6e/v7x / v5e), bt*tl near target_rows, even step
    count (balanced megacore split)."""
    tl_cands = sorted({d for d in range(8, L + 1, 8) if L % d == 0} | {L})
    bt_cands = [d for d in range(1, N + 1) if N % d == 0]
    # bt > 1 only with tl % 8 == 0 so matmul LHS reshapes stay sublane-aligned.
    cands = [(bt, tl) for tl in tl_cands for bt in bt_cands
             if bt == 1 or tl % 8 == 0]

    def score(c):
        bt, tl = c
        rows = bt * tl
        steps = (N // bt) * (L // tl)
        return (rows <= max_rows,
                steps >= 2,
                rows % 256 == 0,
                rows % 128 == 0,
                -abs(rows - target_rows),
                steps % 2 == 0)

    return max(cands, key=score)


def _window_input(x_nlc, tl):
    """(N, L, C) -> (N, L//tl, tl + 2*HX, C): overlapping per-tile windows with
    an HX-row halo each side, zero-padded at the sequence edges."""
    N, L, C = x_nlc.shape
    nl = L // tl
    xp = jnp.pad(x_nlc, ((0, 0), (HX, HX), (0, 0)))
    if nl == 1:
        return xp[:, None, :, :]
    idx = jnp.arange(nl)[:, None] * tl + jnp.arange(tl + 2 * HX)[None, :]
    return xp[:, idx, :]


def _prepare_params(w1, b1, w2, b2):
    """One-time param prep: PyTorch (C_out, C_in, K) weights -> (K, C_in, C_out)
    bf16; biases -> (1, C) f32.  Do this outside the hot path when possible."""
    C = w1.shape[0]
    w1k = jnp.transpose(w1, (2, 1, 0)).astype(jnp.bfloat16)
    w2k = jnp.transpose(w2, (2, 1, 0)).astype(jnp.bfloat16)
    b1k = b1.reshape(1, C).astype(jnp.float32)
    b2k = b2.reshape(1, C).astype(jnp.float32)
    return w1k, b1k, w2k, b2k


@jax.jit
def resblock_forward_nlc(x_nlc, w1k, b1k, w2k, b2k):
    """Channels-last entry point: x (N, L, C), params from _prepare_params."""
    N, L, C = x_nlc.shape

    vmem_cap = _vmem_capacity_bytes()
    big_vmem = vmem_cap >= 100 * 1024 * 1024          # v5e / v6e: 128 MiB
    target_rows = 2048 if big_vmem else 1024
    max_rows = 4096 if big_vmem else 2048             # bounds f32 blocks on v7x

    bt, tl = _pick_tiles(N, L, target_rows, max_rows)
    nl = L // tl
    lx = tl + 2 * HX

    xw = _window_input(x_nlc, tl)                     # (N, nl, lx, C)

    # VMEM budget from actual block sizes: double-buffered x/out blocks,
    # single-buffered weights, bf16 scratch, headroom for f32 temporaries.
    vmem_bytes = (
        2 * bt * lx * C * 4           # x windows, double-buffered, f32
        + 2 * bt * tl * C * 4         # out blocks, double-buffered, f32
        + 2 * KSIZE * C * C * 2       # w1 + w2, bf16, single-buffered
        + 4 * C * 4                   # biases (generous)
        + bt * lx * C * 2             # bf16 padded-activation scratch
        + 3 * bt * lx * C * 4         # f32 accumulator / h / relu temporaries
    )
    vmem_cap_use = int(vmem_cap * 0.75) if big_vmem else 48 * 1024 * 1024
    vmem_limit = min(int(vmem_bytes * 1.4) + (4 << 20), vmem_cap_use)

    flops = 2 * KSIZE * 2 * N * L * C * C             # 2 convs x 5 taps, MAC*2
    bytes_accessed = (N * nl * lx * C * 4             # x windows read
                      + N * L * C * 4                 # output written
                      + 2 * KSIZE * C * C * 2)        # weights read

    return pl.pallas_call(
        resblock_kernel,
        out_shape=jax.ShapeDtypeStruct((N, L, C), x_nlc.dtype),
        grid_spec=pltpu.PrefetchScalarGridSpec(
            num_scalar_prefetch=0,
            grid=(N // bt, nl),
            in_specs=[
                pl.BlockSpec((bt, None, lx, C), lambda n, l: (n, l, 0, 0)),   # x windows
                pl.BlockSpec((KSIZE, C, C), lambda n, l: (0, 0, 0),           # w1 (invariant)
                             pipeline_mode=pl.Buffered(1)),
                pl.BlockSpec((1, C), lambda n, l: (0, 0),                     # b1 (invariant)
                             pipeline_mode=pl.Buffered(1)),
                pl.BlockSpec((KSIZE, C, C), lambda n, l: (0, 0, 0),           # w2 (invariant)
                             pipeline_mode=pl.Buffered(1)),
                pl.BlockSpec((1, C), lambda n, l: (0, 0),                     # b2 (invariant)
                             pipeline_mode=pl.Buffered(1)),
            ],
            out_specs=pl.BlockSpec((bt, tl, C), lambda n, l: (n, l, 0)),
            scratch_shapes=[pltpu.VMEM((bt, lx, C), jnp.bfloat16)],
        ),
        compiler_params=pltpu.CompilerParams(
            dimension_semantics=("parallel", "parallel"),
            vmem_limit_bytes=vmem_limit,
        ),
        cost_estimate=pl.CostEstimate(
            flops=flops, transcendentals=0, bytes_accessed=bytes_accessed),
    )(xw, w1k, b1k, w2k, b2k)


@jax.jit
def resblock_forward(x_ncl, w1, b1, w2, b2):
    """PyTorch-layout entry point: x (N, C, L), w* (C_out, C_in, K), b* (C,).
    Prefer resblock_forward_nlc + _prepare_params in a real pipeline to avoid
    per-call transposes of activations and weights."""
    params = _prepare_params(w1, b1, w2, b2)
    x_nlc = jnp.transpose(x_ncl, (0, 2, 1))                  # (N, L, C)
    out_nlc = resblock_forward_nlc(x_nlc, *params)
    return jnp.transpose(out_nlc, (0, 2, 1))                 # back to (N, C, L)


def _reference_forward(x_ncl, w1, b1, w2, b2):
    """Pure-JAX f32 reference matching nn.Conv1d semantics (NCL, OIK weights)."""
    def conv1d(h, w, b):
        y = jax.lax.conv_general_dilated(
            h, w, window_strides=(1,), padding=[(PAD, PAD)],
            dimension_numbers=("NCH", "OIH", "NCH"))
        return y + b[None, :, None]

    h = jnp.maximum(x_ncl, 0.0)
    h = conv1d(h, w1, b1)
    h = jnp.maximum(h, 0.0)
    h = conv1d(h, w2, b2)
    return x_ncl + 0.3 * h


if __name__ == "__main__":
    key = jax.random.PRNGKey(0)
    k_x, k_w1, k_b1, k_w2, k_b2 = jax.random.split(key, 5)

    N, C, L = 2, DIM, 16                                     # small batch / seq; DIM fixed at 512
    x = jax.random.normal(k_x, (N, C, L), dtype=jnp.float32)

    # Deterministic synthetic parameters (PyTorch Conv1d shapes: (out, in, k), (out,)).
    fan_in = C * KSIZE
    scale = 1.0 / (fan_in ** 0.5)
    w1 = jax.random.uniform(k_w1, (C, C, KSIZE), jnp.float32, -scale, scale)
    b1 = jax.random.uniform(k_b1, (C,), jnp.float32, -scale, scale)
    w2 = jax.random.uniform(k_w2, (C, C, KSIZE), jnp.float32, -scale, scale)
    b2 = jax.random.uniform(k_b2, (C,), jnp.float32, -scale, scale)

    out = resblock_forward(x, w1, b1, w2, b2)
    out = jax.block_until_ready(out)

    ref = _reference_forward(x, w1, b1, w2, b2)
    assert out.shape == (N, C, L) and out.dtype == x.dtype
    # Tolerance loosened vs. pure-f32: MXU operands are bf16 (fan-in 2560),
    # accumulation stays f32; residual is exact f32.
    max_err = float(jnp.max(jnp.abs(out - ref)))
    assert jnp.allclose(out, ref, atol=2e-2, rtol=2e-2), \
        f"mismatch vs reference (max abs err {max_err})"

    print("KERNEL_OK")
</pallas_src>

<mosaic_0001>
module attributes {stable_mosaic.version = 11 : i64} {
  func.func @resblock_kernel(%arg0: i32, %arg1: i32, %arg2: memref<2x1x20x512xf32, #tpu.memory_space<vmem>>, %arg3: memref<5x512x512xbf16, #tpu.memory_space<vmem>>, %arg4: memref<1x512xf32, #tpu.memory_space<vmem>>, %arg5: memref<5x512x512xbf16, #tpu.memory_space<vmem>>, %arg6: memref<1x512xf32, #tpu.memory_space<vmem>>, %arg7: memref<2x8x512xf32, #tpu.memory_space<vmem>>, %arg8: memref<2x20x512xbf16, #tpu.memory_space<vmem>>) attributes {dimension_semantics = [#tpu.dimension_semantics<parallel>, #tpu.dimension_semantics<parallel>], iteration_bounds = array<i64: 1, 2>, scalar_prefetch = 0 : i64, scratch_operands = 1 : i64, tpu.core_type = #tpu.core_type<tc>, window_params = [{transform_indices = @transform_0, window_bounds = array<i64: 2, 1, 20, 512>}, {pipeline_mode = #tpu.pipeline_mode<synchronous>, transform_indices = @transform_1, window_bounds = array<i64: 5, 512, 512>}, {pipeline_mode = #tpu.pipeline_mode<synchronous>, transform_indices = @transform_2, window_bounds = array<i64: 1, 512>}, {pipeline_mode = #tpu.pipeline_mode<synchronous>, transform_indices = @transform_3, window_bounds = array<i64: 5, 512, 512>}, {pipeline_mode = #tpu.pipeline_mode<synchronous>, transform_indices = @transform_4, window_bounds = array<i64: 1, 512>}, {transform_indices = @transform_5, window_bounds = array<i64: 2, 8, 512>}]} {
    %c0 = arith.constant 0 : index
    %c0_0 = arith.constant 0 : index
    %c0_1 = arith.constant 0 : index
    %c0_2 = arith.constant 0 : index
    %0 = vector.load %arg2[%c0, %c0_0, %c0_1, %c0_2] : memref<2x1x20x512xf32, #tpu.memory_space<vmem>>, vector<2x1x20x512xf32>
    %1 = vector.shape_cast %0 : vector<2x1x20x512xf32> to vector<2x20x512xf32>
    %cst = arith.constant 0.000000e+00 : f32
    %2 = vector.broadcast %cst : f32 to vector<2x20x512xf32>
    %3 = arith.maximumf %1, %2 : vector<2x20x512xf32>
    %4 = arith.truncf %3 : vector<2x20x512xf32> to vector<2x20x512xbf16>
    %c0_3 = arith.constant 0 : index
    %c0_4 = arith.constant 0 : index
    %c0_5 = arith.constant 0 : index
    %5 = vector.load %arg8[%c0_3, %c0_4, %c0_5] : memref<2x20x512xbf16, #tpu.memory_space<vmem>>, vector<2x20x512xbf16>
    tpu.vector_store %arg8[%c0_3, %c0_4, %c0_5], %4 {strides = array<i32>} : memref<2x20x512xbf16, #tpu.memory_space<vmem>>, vector<2x20x512xbf16>,
    %c0_6 = arith.constant 0 : index
    %c0_7 = arith.constant 0 : index
    %6 = vector.load %arg4[%c0_6, %c0_7] : memref<1x512xf32, #tpu.memory_space<vmem>>, vector<1x512xf32>
    %7 = vector.shape_cast %6 : vector<1x512xf32> to vector<512xf32>
    %8 = vector.shape_cast %7 : vector<512xf32> to vector<1x512xf32>
    %9 = vector.shape_cast %8 : vector<1x512xf32> to vector<1x512xf32>
    %10 = vector.broadcast %9 : vector<1x512xf32> to vector<32x512xf32>
    %c0_8 = arith.constant 0 : index
    %c0_9 = arith.constant 0 : index
    %c0_10 = arith.constant 0 : index
    %11 = vector.load %arg8[%c0_8, %c0_9, %c0_10] : memref<2x20x512xbf16, #tpu.memory_space<vmem>>, vector<2x16x512xbf16>
    %12 = vector.shape_cast %11 : vector<2x16x512xbf16> to vector<32x512xbf16>
    %c0_11 = arith.constant 0 : index
    %c0_12 = arith.constant 0 : index
    %c0_13 = arith.constant 0 : index
    %13 = vector.load %arg3[%c0_11, %c0_12, %c0_13] : memref<5x512x512xbf16, #tpu.memory_space<vmem>>, vector<1x512x512xbf16>
    %14 = vector.shape_cast %13 : vector<1x512x512xbf16> to vector<512x512xbf16>
    %cst_14 = arith.constant dense<0.000000e+00> : vector<32x512xf32>
    %15 = tpu.matmul %12, %14, %cst_14 {dimension_numbers = #tpu.dot_dimension_numbers<[1], [0], [0], [1], [0, 0, 1, 1], [], []>} : vector<32x512xbf16>, vector<512x512xbf16>, vector<32x512xf32> -> vector<32x512xf32>
    %16 = arith.addf %10, %15 : vector<32x512xf32>
    %c0_15 = arith.constant 0 : index
    %c1 = arith.constant 1 : index
    %c0_16 = arith.constant 0 : index
    %17 = vector.load %arg8[%c0_15, %c1, %c0_16] : memref<2x20x512xbf16, #tpu.memory_space<vmem>>, vector<2x16x512xbf16>
    %18 = vector.shape_cast %17 : vector<2x16x512xbf16> to vector<32x512xbf16>
    %c1_17 = arith.constant 1 : index
    %c0_18 = arith.constant 0 : index
    %c0_19 = arith.constant 0 : index
    %19 = vector.load %arg3[%c1_17, %c0_18, %c0_19] : memref<5x512x512xbf16, #tpu.memory_space<vmem>>, vector<1x512x512xbf16>
    %20 = vector.shape_cast %19 : vector<1x512x512xbf16> to vector<512x512xbf16>
    %cst_20 = arith.constant dense<0.000000e+00> : vector<32x512xf32>
    %21 = tpu.matmul %18, %20, %cst_20 {dimension_numbers = #tpu.dot_dimension_numbers<[1], [0], [0], [1], [0, 0, 1, 1], [], []>} : vector<32x512xbf16>, vector<512x512xbf16>, vector<32x512xf32> -> vector<32x512xf32>
    %22 = arith.addf %16, %21 : vector<32x512xf32>
    %c0_21 = arith.constant 0 : index
    %c2 = arith.constant 2 : index
    %c0_22 = arith.constant 0 : index
    %23 = vector.load %arg8[%c0_21, %c2, %c0_22] : memref<2x20x512xbf16, #tpu.memory_space<vmem>>, vector<2x16x512xbf16>
    %24 = vector.shape_cast %23 : vector<2x16x512xbf16> to vector<32x512xbf16>
    %c2_23 = arith.constant 2 : index
    %c0_24 = arith.constant 0 : index
    %c0_25 = arith.constant 0 : index
    %25 = vector.load %arg3[%c2_23, %c0_24, %c0_25] : memref<5x512x512xbf16, #tpu.memory_space<vmem>>, vector<1x512x512xbf16>
    %26 = vector.shape_cast %25 : vector<1x512x512xbf16> to vector<512x512xbf16>
    %cst_26 = arith.constant dense<0.000000e+00> : vector<32x512xf32>
    %27 = tpu.matmul %24, %26, %cst_26 {dimension_numbers = #tpu.dot_dimension_numbers<[1], [0], [0], [1], [0, 0, 1, 1], [], []>} : vector<32x512xbf16>, vector<512x512xbf16>, vector<32x512xf32> -> vector<32x512xf32>
    %28 = arith.addf %22, %27 : vector<32x512xf32>
    %c0_27 = arith.constant 0 : index
    %c3 = arith.constant 3 : index
    %c0_28 = arith.constant 0 : index
    %29 = vector.load %arg8[%c0_27, %c3, %c0_28] : memref<2x20x512xbf16, #tpu.memory_space<vmem>>, vector<2x16x512xbf16>
    %30 = vector.shape_cast %29 : vector<2x16x512xbf16> to vector<32x512xbf16>
    %c3_29 = arith.constant 3 : index
    %c0_30 = arith.constant 0 : index
    %c0_31 = arith.constant 0 : index
    %31 = vector.load %arg3[%c3_29, %c0_30, %c0_31] : memref<5x512x512xbf16, #tpu.memory_space<vmem>>, vector<1x512x512xbf16>
    %32 = vector.shape_cast %31 : vector<1x512x512xbf16> to vector<512x512xbf16>
    %cst_32 = arith.constant dense<0.000000e+00> : vector<32x512xf32>
    %33 = tpu.matmul %30, %32, %cst_32 {dimension_numbers = #tpu.dot_dimension_numbers<[1], [0], [0], [1], [0, 0, 1, 1], [], []>} : vector<32x512xbf16>, vector<512x512xbf16>, vector<32x512xf32> -> vector<32x512xf32>
    %34 = arith.addf %28, %33 : vector<32x512xf32>
    %c0_33 = arith.constant 0 : index
    %c4 = arith.constant 4 : index
    %c0_34 = arith.constant 0 : index
    %35 = vector.load %arg8[%c0_33, %c4, %c0_34] : memref<2x20x512xbf16, #tpu.memory_space<vmem>>, vector<2x16x512xbf16>
    %36 = vector.shape_cast %35 : vector<2x16x512xbf16> to vector<32x512xbf16>
    %c4_35 = arith.constant 4 : index
    %c0_36 = arith.constant 0 : index
    %c0_37 = arith.constant 0 : index
    %37 = vector.load %arg3[%c4_35, %c0_36, %c0_37] : memref<5x512x512xbf16, #tpu.memory_space<vmem>>, vector<1x512x512xbf16>
    %38 = vector.shape_cast %37 : vector<1x512x512xbf16> to vector<512x512xbf16>
    %cst_38 = arith.constant dense<0.000000e+00> : vector<32x512xf32>
    %39 = tpu.matmul %36, %38, %cst_38 {dimension_numbers = #tpu.dot_dimension_numbers<[1], [0], [0], [1], [0, 0, 1, 1], [], []>} : vector<32x512xbf16>, vector<512x512xbf16>, vector<32x512xf32> -> vector<32x512xf32>
    %40 = arith.addf %34, %39 : vector<32x512xf32>
    %41 = vector.shape_cast %40 : vector<32x512xf32> to vector<2x16x512xf32>
    %cst_39 = arith.constant 0.000000e+00 : f32
    %42 = vector.broadcast %cst_39 : f32 to vector<2x16x512xf32>
    %43 = arith.maximumf %41, %42 : vector<2x16x512xf32>
    %44 = arith.truncf %43 : vector<2x16x512xf32> to vector<2x16x512xbf16>
    %c0_40 = arith.constant 0 : index
    %c0_41 = arith.constant 0 : index
    %c0_42 = arith.constant 0 : index
    %45 = vector.load %arg8[%c0_40, %c0_41, %c0_42] : memref<2x20x512xbf16, #tpu.memory_space<vmem>>, vector<2x16x512xbf16>
    tpu.vector_store %arg8[%c0_40, %c0_41, %c0_42], %44 {strides = array<i32>} : memref<2x20x512xbf16, #tpu.memory_space<vmem>>, vector<2x16x512xbf16>,
    %c0_i32 = arith.constant 0 : i32
    %46 = arith.cmpi eq, %arg1, %c0_i32 : i32
    %47 = arith.extui %46 : i1 to i32
    %c0_i32_43 = arith.constant 0 : i32
    %48 = arith.cmpi ne, %47, %c0_i32_43 : i32
    scf.if %48 {
      %cst_88 = arith.constant 0.000000e+00 : bf16
      %94 = vector.broadcast %cst_88 : bf16 to vector<2x4x512xbf16>
      %c0_89 = arith.constant 0 : index
      %c0_90 = arith.constant 0 : index
      %c0_91 = arith.constant 0 : index
      %95 = vector.load %arg8[%c0_89, %c0_90, %c0_91] : memref<2x20x512xbf16, #tpu.memory_space<vmem>>, vector<2x4x512xbf16>
      tpu.vector_store %arg8[%c0_89, %c0_90, %c0_91], %94 {strides = array<i32>} : memref<2x20x512xbf16, #tpu.memory_space<vmem>>, vector<2x4x512xbf16>,
    } else {
    }
    %c1_i32 = arith.constant 1 : i32
    %49 = arith.cmpi eq, %arg1, %c1_i32 : i32
    %50 = arith.extui %49 : i1 to i32
    %c0_i32_44 = arith.constant 0 : i32
    %51 = arith.cmpi ne, %50, %c0_i32_44 : i32
    scf.if %51 {
      %cst_88 = arith.constant 0.000000e+00 : bf16
      %94 = vector.broadcast %cst_88 : bf16 to vector<2x4x512xbf16>
      %c0_89 = arith.constant 0 : index
      %c12 = arith.constant 12 : index
      %c0_90 = arith.constant 0 : index
      %95 = vector.load %arg8[%c0_89, %c12, %c0_90] : memref<2x20x512xbf16, #tpu.memory_space<vmem>>, vector<2x4x512xbf16>
      tpu.vector_store %arg8[%c0_89, %c12, %c0_90], %94 {strides = array<i32>} : memref<2x20x512xbf16, #tpu.memory_space<vmem>>, vector<2x4x512xbf16>,
    } else {
    }
    %c0_45 = arith.constant 0 : index
    %c0_46 = arith.constant 0 : index
    %52 = vector.load %arg6[%c0_45, %c0_46] : memref<1x512xf32, #tpu.memory_space<vmem>>, vector<1x512xf32>
    %53 = vector.shape_cast %52 : vector<1x512xf32> to vector<512xf32>
    %54 = vector.shape_cast %53 : vector<512xf32> to vector<1x512xf32>
    %55 = vector.shape_cast %54 : vector<1x512xf32> to vector<1x512xf32>
    %56 = vector.broadcast %55 : vector<1x512xf32> to vector<16x512xf32>
    %c0_47 = arith.constant 0 : index
    %c2_48 = arith.constant 2 : index
    %c0_49 = arith.constant 0 : index
    %57 = vector.load %arg8[%c0_47, %c2_48, %c0_49] : memref<2x20x512xbf16, #tpu.memory_space<vmem>>, vector<2x8x512xbf16>
    %58 = vector.shape_cast %57 : vector<2x8x512xbf16> to vector<16x512xbf16>
    %c0_50 = arith.constant 0 : index
    %c0_51 = arith.constant 0 : index
    %c0_52 = arith.constant 0 : index
    %59 = vector.load %arg5[%c0_50, %c0_51, %c0_52] : memref<5x512x512xbf16, #tpu.memory_space<vmem>>, vector<1x512x512xbf16>
    %60 = vector.shape_cast %59 : vector<1x512x512xbf16> to vector<512x512xbf16>
    %cst_53 = arith.constant dense<0.000000e+00> : vector<16x512xf32>
    %61 = tpu.matmul %58, %60, %cst_53 {dimension_numbers = #tpu.dot_dimension_numbers<[1], [0], [0], [1], [0, 0, 1, 1], [], []>} : vector<16x512xbf16>, vector<512x512xbf16>, vector<16x512xf32> -> vector<16x512xf32>
    %62 = arith.addf %56, %61 : vector<16x512xf32>
    %c0_54 = arith.constant 0 : index
    %c3_55 = arith.constant 3 : index
    %c0_56 = arith.constant 0 : index
    %63 = vector.load %arg8[%c0_54, %c3_55, %c0_56] : memref<2x20x512xbf16, #tpu.memory_space<vmem>>, vector<2x8x512xbf16>
    %64 = vector.shape_cast %63 : vector<2x8x512xbf16> to vector<16x512xbf16>
    %c1_57 = arith.constant 1 : index
    %c0_58 = arith.constant 0 : index
    %c0_59 = arith.constant 0 : index
    %65 = vector.load %arg5[%c1_57, %c0_58, %c0_59] : memref<5x512x512xbf16, #tpu.memory_space<vmem>>, vector<1x512x512xbf16>
    %66 = vector.shape_cast %65 : vector<1x512x512xbf16> to vector<512x512xbf16>
    %cst_60 = arith.constant dense<0.000000e+00> : vector<16x512xf32>
    %67 = tpu.matmul %64, %66, %cst_60 {dimension_numbers = #tpu.dot_dimension_numbers<[1], [0], [0], [1], [0, 0, 1, 1], [], []>} : vector<16x512xbf16>, vector<512x512xbf16>, vector<16x512xf32> -> vector<16x512xf32>
    %68 = arith.addf %62, %67 : vector<16x512xf32>
    %c0_61 = arith.constant 0 : index
    %c4_62 = arith.constant 4 : index
    %c0_63 = arith.constant 0 : index
    %69 = vector.load %arg8[%c0_61, %c4_62, %c0_63] : memref<2x20x512xbf16, #tpu.memory_space<vmem>>, vector<2x8x512xbf16>
    %70 = vector.shape_cast %69 : vector<2x8x512xbf16> to vector<16x512xbf16>
    %c2_64 = arith.constant 2 : index
    %c0_65 = arith.constant 0 : index
    %c0_66 = arith.constant 0 : index
    %71 = vector.load %arg5[%c2_64, %c0_65, %c0_66] : memref<5x512x512xbf16, #tpu.memory_space<vmem>>, vector<1x512x512xbf16>
    %72 = vector.shape_cast %71 : vector<1x512x512xbf16> to vector<512x512xbf16>
    %cst_67 = arith.constant dense<0.000000e+00> : vector<16x512xf32>
    %73 = tpu.matmul %70, %72, %cst_67 {dimension_numbers = #tpu.dot_dimension_numbers<[1], [0], [0], [1], [0, 0, 1, 1], [], []>} : vector<16x512xbf16>, vector<512x512xbf16>, vector<16x512xf32> -> vector<16x512xf32>
    %74 = arith.addf %68, %73 : vector<16x512xf32>
    %c0_68 = arith.constant 0 : index
    %c5 = arith.constant 5 : index
    %c0_69 = arith.constant 0 : index
    %75 = vector.load %arg8[%c0_68, %c5, %c0_69] : memref<2x20x512xbf16, #tpu.memory_space<vmem>>, vector<2x8x512xbf16>
    %76 = vector.shape_cast %75 : vector<2x8x512xbf16> to vector<16x512xbf16>
    %c3_70 = arith.constant 3 : index
    %c0_71 = arith.constant 0 : index
    %c0_72 = arith.constant 0 : index
    %77 = vector.load %arg5[%c3_70, %c0_71, %c0_72] : memref<5x512x512xbf16, #tpu.memory_space<vmem>>, vector<1x512x512xbf16>
    %78 = vector.shape_cast %77 : vector<1x512x512xbf16> to vector<512x512xbf16>
    %cst_73 = arith.constant dense<0.000000e+00> : vector<16x512xf32>
    %79 = tpu.matmul %76, %78, %cst_73 {dimension_numbers = #tpu.dot_dimension_numbers<[1], [0], [0], [1], [0, 0, 1, 1], [], []>} : vector<16x512xbf16>, vector<512x512xbf16>, vector<16x512xf32> -> vector<16x512xf32>
    %80 = arith.addf %74, %79 : vector<16x512xf32>
    %c0_74 = arith.constant 0 : index
    %c6 = arith.constant 6 : index
    %c0_75 = arith.constant 0 : index
    %81 = vector.load %arg8[%c0_74, %c6, %c0_75] : memref<2x20x512xbf16, #tpu.memory_space<vmem>>, vector<2x8x512xbf16>
    %82 = vector.shape_cast %81 : vector<2x8x512xbf16> to vector<16x512xbf16>
    %c4_76 = arith.constant 4 : index
    %c0_77 = arith.constant 0 : index
    %c0_78 = arith.constant 0 : index
    %83 = vector.load %arg5[%c4_76, %c0_77, %c0_78] : memref<5x512x512xbf16, #tpu.memory_space<vmem>>, vector<1x512x512xbf16>
    %84 = vector.shape_cast %83 : vector<1x512x512xbf16> to vector<512x512xbf16>
    %cst_79 = arith.constant dense<0.000000e+00> : vector<16x512xf32>
    %85 = tpu.matmul %82, %84, %cst_79 {dimension_numbers = #tpu.dot_dimension_numbers<[1], [0], [0], [1], [0, 0, 1, 1], [], []>} : vector<16x512xbf16>, vector<512x512xbf16>, vector<16x512xf32> -> vector<16x512xf32>
    %86 = arith.addf %80, %85 : vector<16x512xf32>
    %87 = vector.shape_cast %86 : vector<16x512xf32> to vector<2x8x512xf32>
    %c0_80 = arith.constant 0 : index
    %c0_81 = arith.constant 0 : index
    %c6_82 = arith.constant 6 : index
    %c0_83 = arith.constant 0 : index
    %88 = vector.load %arg2[%c0_80, %c0_81, %c6_82, %c0_83] : memref<2x1x20x512xf32, #tpu.memory_space<vmem>>, vector<2x1x8x512xf32>
    %89 = vector.shape_cast %88 : vector<2x1x8x512xf32> to vector<2x8x512xf32>
    %cst_84 = arith.constant 3.000000e-01 : f32
    %90 = vector.broadcast %cst_84 : f32 to vector<2x8x512xf32>
    %91 = arith.mulf %90, %87 : vector<2x8x512xf32>
    %92 = arith.addf %89, %91 : vector<2x8x512xf32>
    %c0_85 = arith.constant 0 : index
    %c0_86 = arith.constant 0 : index
    %c0_87 = arith.constant 0 : index
    %93 = vector.load %arg7[%c0_85, %c0_86, %c0_87] : memref<2x8x512xf32, #tpu.memory_space<vmem>>, vector<2x8x512xf32>
    tpu.vector_store %arg7[%c0_85, %c0_86, %c0_87], %92 {strides = array<i32>} : memref<2x8x512xf32, #tpu.memory_space<vmem>>, vector<2x8x512xf32>,
    return
  }
  func.func @transform_0(%arg0: i32, %arg1: i32) -> (i32, i32, i32, i32) {
    %c0_i32 = arith.constant 0 : i32
    %c0_i32_0 = arith.constant 0 : i32
    %c0_i32_1 = arith.constant 0 : i32
    return %arg0, %arg1, %c0_i32, %c0_i32_0 : i32, i32, i32, i32
  }
  func.func @transform_1(%arg0: i32, %arg1: i32) -> (i32, i32, i32) {
    %c0_i32 = arith.constant 0 : i32
    %c0_i32_0 = arith.constant 0 : i32
    %c0_i32_1 = arith.constant 0 : i32
    %c0_i32_2 = arith.constant 0 : i32
    return %c0_i32, %c0_i32_0, %c0_i32_1 : i32, i32, i32
  }
  func.func @transform_2(%arg0: i32, %arg1: i32) -> (i32, i32) {
    %c0_i32 = arith.constant 0 : i32
    %c0_i32_0 = arith.constant 0 : i32
    %c0_i32_1 = arith.constant 0 : i32
    return %c0_i32, %c0_i32_0 : i32, i32
  }
  func.func @transform_3(%arg0: i32, %arg1: i32) -> (i32, i32, i32) {
    %c0_i32 = arith.constant 0 : i32
    %c0_i32_0 = arith.constant 0 : i32
    %c0_i32_1 = arith.constant 0 : i32
    %c0_i32_2 = arith.constant 0 : i32
    return %c0_i32, %c0_i32_0, %c0_i32_1 : i32, i32, i32
  }
  func.func @transform_4(%arg0: i32, %arg1: i32) -> (i32, i32) {
    %c0_i32 = arith.constant 0 : i32
    %c0_i32_0 = arith.constant 0 : i32
    %c0_i32_1 = arith.constant 0 : i32
    return %c0_i32, %c0_i32_0 : i32, i32
  }
  func.func @transform_5(%arg0: i32, %arg1: i32) -> (i32, i32, i32) {
    %c0_i32 = arith.constant 0 : i32
    %c0_i32_0 = arith.constant 0 : i32
    return %arg0, %arg1, %c0_i32 : i32, i32, i32
  }
}

</mosaic_0001>

<llo_original>
// kernel: resblock_forward_nlc.1
$region0: #{resblock_forward_nlc.1}
  #allocation0 [shape = 'u32[]', space=smem, size = 0x4, offset = 0x4, fixed_abs, tag = 'smem constant byte address 0x4 - core index']
  #allocation1 [shape = 'u32[144,128]{1,0:T(1,128)}', space=vmem, size = 0x12000, scoped, tag = 'internal scratch']
  #allocation2 [shape = 'bf16[2,20,512]{2,1,0:T(8,128)(2,1)}', space=vmem, size = 0xc000, scoped, tag = 'scratch operand']
  %s0 = inlined_call_operand.vmem [shape: f32[2,2,20,512], index: 0, kind: input, shape index: {}]
  %s1 = inlined_call_operand.hbm [shape: bf16[5,512,512], index: 1, kind: input, shape index: {}]
  %s2 = inlined_call_operand.hbm [shape: f32[1,512], index: 2, kind: input, shape index: {}]
  %s3 = inlined_call_operand.hbm [shape: bf16[5,512,512], index: 3, kind: input, shape index: {}]
  %s4 = inlined_call_operand.hbm [shape: f32[1,512], index: 4, kind: input, shape index: {}]
  %s5 = inlined_call_operand.hbm [shape: f32[2,16,512], index: 5, kind: output, shape index: {}]
  %s6 = sld [smem:[#allocation0]]
  $region100: #{resblock_forward_nlc.1} parent=0
    _
  %s8 = ssub.s32 1, %s6
  %s9 = scalar_select 0, %s8, %s6
  $region1: #{resblock_forward_nlc.1} parent=0
    #allocation3 [shape = 'u8[196608]{0}', space=vmem, size = 0x30000, scoped, tag = 'input window, operand 0']
    #allocation4 [shape = 'u8[2621440]{0}', space=vmem, size = 0x280000, scoped, tag = 'input window, operand 1, single buffered']
    #allocation5 [shape = 's32[2]{0}', space=sflag, size = 0x8, scoped, tag = 'scoped memory for resblock_forward_nlc.1']
    #allocation6 [shape = 's32[2]{0}', space=sflag, size = 0x8, scoped, tag = 'scoped memory for resblock_forward_nlc.1']
    #allocation7 [shape = 'u8[2048]{0}', space=vmem, size = 0x800, scoped, tag = 'input window, operand 2, single buffered']
    #allocation8 [shape = 's32[1]{0}', space=sflag, size = 0x4, scoped, tag = 'scoped memory for resblock_forward_nlc.1']
    #allocation9 [shape = 'u8[2621440]{0}', space=vmem, size = 0x280000, scoped, tag = 'input window, operand 3, single buffered']
    #allocation10 [shape = 'u8[2048]{0}', space=vmem, size = 0x800, scoped, tag = 'input window, operand 4, single buffered']
    #allocation11 [shape = 's32[1]{0}', space=sflag, size = 0x4, scoped, tag = 'scoped memory for resblock_forward_nlc.1']
    #allocation12 [shape = 'u8[65536]{0}', space=vmem, size = 0x10000, scoped, tag = 'output window, operand 0']
    %10 = vsyncpa [#allocation5], 0
    %11 = vsyncpa [#allocation8], 0
    %12 = vsyncpa [#allocation11], 0
    %13 = vsyncpa [#allocation6], 0
    %s14 = scalar_lea.sflag [#allocation6], 1
    %15 = vsyncpa %s14, 0
    loop: start=0, step=1, limit=4
    $region2: #{resblock_forward_nlc.1} parent=1 // loop_pre_header
      _
    $region3: #{resblock_forward_nlc.1} parent=1 // loop_header
      %s17 = sphi 0, %s21
      %p18 = scmp.ge.s32.totalorder %s17, 4
      %s24 = sphi 0, %s36
      %s25 = sphi 0, %s32
      %s26 = sphi 0, %s24
      %s27 = sphi 0, %s25
      %s28 = sphi 0, %s26
      %s29 = sphi 0, %s27
      %s41 = sphi 0, %s43
      %s44 = sphi 0, %s41
      %s45 = sphi 0, %s44
      %s61 = sphi 0, %s45
      %s65 = sphi 0, %s65
      %s67 = sphi 0, %s65
      %s68 = sphi 0, %s67
      %s82 = sphi 0, %s68
      %s86 = sphi 0, %s86
      %s88 = sphi 0, %s86
      %s89 = sphi 0, %s88
      %s103 = sphi 0, %s89
      %s107 = sphi 0, %s107
      %s109 = sphi 0, %s107
      %s110 = sphi 0, %s109
      %s124 = sphi 0, %s110
      %s128 = sphi 0, %s128
      %s130 = sphi 0, %s128
      %s131 = sphi 0, %s130
      %s145 = sphi 0, %s131
      %s153 = sphi 0, %s155
      %s156 = sphi 0, %s153
      %s157 = sphi 0, %s156
      %s173 = sphi 0, %s157
    $region4: #{resblock_forward_nlc.1} parent=1 // loop_header_branch
      %20 = sbr.rel (%p18) target = $region8
    $region5: #{resblock_forward_nlc.1} parent=1 // loop_body
      %s22 = ssub.s32 %s17, 1
      %s23 = ssub.s32 %s17, 2
      %s30 = sadd.s32 1, %s25
      %p31 = scmp.ge.s32.totalorder %s30, 2
      %s32 = scalar_select %p31, 0, %s30
      %s33 = sadd.s32 1, %s24
      %s34 = scalar_select %p31, %s33, %s24
      %p35 = scmp.ge.s32.totalorder %s34, 1
      %s36 = scalar_select %p35, 0, %s34
      %s37 = ssub.s32 %s24, %s36
      %s38 = ssub.s32 %s25, %s32
      %s39 = sor.u32 %s37, %s38
      %p40 = scmp.eq.s32.totalorder %s39, 0
      %s42 = sadd.s32 %s41, 1
      %s43 = scalar_select %p40, %s41, %s42
      %p46 = pneg %p40
      %p47 = scmp.eq.s32.totalorder %s17, 1
      %p48 = por %p46, %p47
      %p49 = scmp.ne.s32.totalorder %s41, %s44
      %p50 = scmp.eq.s32.totalorder %s17, 0
      %p51 = por %p49, %p50
      %p52 = scmp.ne.s32.totalorder %s41, %s44
      %p53 = scmp.eq.s32.totalorder %s22, 1
      %p54 = por %p52, %p53
      %p55 = scmp.ne.s32.totalorder %s44, %s45
      %p56 = scmp.eq.s32.totalorder %s22, 0
      %p57 = por %p55, %p56
      %p58 = scmp.ne.s32.totalorder %s44, %s45
      %p59 = scmp.eq.s32.totalorder %s23, 1
      %p60 = por %p58, %p59
      %p62 = scmp.ne.s32.totalorder %s45, %s61
      %p63 = scmp.eq.s32.totalorder %s23, 0
      %p64 = por %p62, %p63
      %s66 = sadd.s32 %s65, 1
      %p69 = scmp.eq.s32.totalorder %s17, 1
      %p70 = scmp.ne.s32.totalorder %s65, %s67
      %p71 = scmp.eq.s32.totalorder %s17, 0
      %p72 = por %p70, %p71
      %p73 = scmp.ne.s32.totalorder %s65, %s67
      %p74 = scmp.eq.s32.totalorder %s22, 1
      %p75 = por %p73, %p74
      %p76 = scmp.ne.s32.totalorder %s67, %s68
      %p77 = scmp.eq.s32.totalorder %s22, 0
      %p78 = por %p76, %p77
      %p79 = scmp.ne.s32.totalorder %s67, %s68
      %p80 = scmp.eq.s32.totalorder %s23, 1
      %p81 = por %p79, %p80
      %p83 = scmp.ne.s32.totalorder %s68, %s82
      %p84 = scmp.eq.s32.totalorder %s23, 0
      %p85 = por %p83, %p84
      %s87 = sadd.s32 %s86, 1
      %p90 = scmp.eq.s32.totalorder %s17, 1
      %p91 = scmp.ne.s32.totalorder %s86, %s88
      %p92 = scmp.eq.s32.totalorder %s17, 0
      %p93 = por %p91, %p92
      %p94 = scmp.ne.s32.totalorder %s86, %s88
      %p95 = scmp.eq.s32.totalorder %s22, 1
      %p96 = por %p94, %p95
      %p97 = scmp.ne.s32.totalorder %s88, %s89
      %p98 = scmp.eq.s32.totalorder %s22, 0
      %p99 = por %p97, %p98
      %p100 = scmp.ne.s32.totalorder %s88, %s89
      %p101 = scmp.eq.s32.totalorder %s23, 1
      %p102 = por %p100, %p101
      %p104 = scmp.ne.s32.totalorder %s89, %s103
      %p105 = scmp.eq.s32.totalorder %s23, 0
      %p106 = por %p104, %p105
      %s108 = sadd.s32 %s107, 1
      %p111 = scmp.eq.s32.totalorder %s17, 1
      %p112 = scmp.ne.s32.totalorder %s107, %s109
      %p113 = scmp.eq.s32.totalorder %s17, 0
      %p114 = por %p112, %p113
      %p115 = scmp.ne.s32.totalorder %s107, %s109
      %p116 = scmp.eq.s32.totalorder %s22, 1
      %p117 = por %p115, %p116
      %p118 = scmp.ne.s32.totalorder %s109, %s110
      %p119 = scmp.eq.s32.totalorder %s22, 0
      %p120 = por %p118, %p119
      %p121 = scmp.ne.s32.totalorder %s109, %s110
      %p122 = scmp.eq.s32.totalorder %s23, 1
      %p123 = por %p121, %p122
      %p125 = scmp.ne.s32.totalorder %s110, %s124
      %p126 = scmp.eq.s32.totalorder %s23, 0
      %p127 = por %p125, %p126
      %s129 = sadd.s32 %s128, 1
      %p132 = scmp.eq.s32.totalorder %s17, 1
      %p133 = scmp.ne.s32.totalorder %s128, %s130
      %p134 = scmp.eq.s32.totalorder %s17, 0
      %p135 = por %p133, %p134
      %p136 = scmp.ne.s32.totalorder %s128, %s130
      %p137 = scmp.eq.s32.totalorder %s22, 1
      %p138 = por %p136, %p137
      %p139 = scmp.ne.s32.totalorder %s130, %s131
      %p140 = scmp.eq.s32.totalorder %s22, 0
      %p141 = por %p139, %p140
      %p142 = scmp.ne.s32.totalorder %s130, %s131
      %p143 = scmp.eq.s32.totalorder %s23, 1
      %p144 = por %p142, %p143
      %p146 = scmp.ne.s32.totalorder %s131, %s145
      %p147 = scmp.eq.s32.totalorder %s23, 0
      %p148 = por %p146, %p147
      %s149 = ssub.s32 %s24, %s36
      %s150 = ssub.s32 %s25, %s32
      %s151 = sor.u32 %s149, %s150
      %p152 = scmp.eq.s32.totalorder %s151, 0
      %s154 = sadd.s32 %s153, 1
      %s155 = scalar_select %p152, %s153, %s154
      %p158 = pneg %p152
      %p159 = scmp.eq.s32.totalorder %s17, 1
      %p160 = por %p158, %p159
      %p161 = scmp.ne.s32.totalorder %s153, %s156
      %p162 = scmp.eq.s32.totalorder %s17, 0
      %p163 = por %p161, %p162
      %p164 = scmp.ne.s32.totalorder %s153, %s156
      %p165 = scmp.eq.s32.totalorder %s22, 1
      %p166 = por %p164, %p165
      %p167 = scmp.ne.s32.totalorder %s156, %s157
      %p168 = scmp.eq.s32.totalorder %s22, 0
      %p169 = por %p167, %p168
      %p170 = scmp.ne.s32.totalorder %s156, %s157
      %p171 = scmp.eq.s32.totalorder %s23, 1
      %p172 = por %p170, %p171
      %p174 = scmp.ne.s32.totalorder %s157, %s173
      %p175 = scmp.eq.s32.totalorder %s23, 0
      %p176 = por %p174, %p175
      %p177 = scmp.le.s32.totalorder 1, %s17
      %p178 = scmp.lt.s32.totalorder %s17, 3
      %p179 = pnand %p177, %p178
      %p180 = pneg %p179
      // Predicated region
      $region9: #{resblock_forward_nlc.1} parent=5 // pred_check
        _
      $region10: #{resblock_forward_nlc.1} parent=5 // pred_check_branch
        %182 = sbr.rel (%p179) target = $region12
      $region11: #{resblock_forward_nlc.1} parent=5 // pred_region
        %s183 = ssub.s32 %s17, 1
        // Predicated region
        $region13: #{resblock_forward_nlc.1} parent=11 // pred_check
          %p184 = pneg %p78
        $region14: #{resblock_forward_nlc.1} parent=11 // pred_check_branch
          %186 = sbr.rel (%p184) target = $region16
        $region15: #{resblock_forward_nlc.1} parent=11 // pred_region
          %s188 = ssub.s32 81920, 81920
          %189 = vsyncadd [#allocation5], %s188
          %s190 = sshll.u32 [#allocation4], 4
          %s191 = int_to_ptr.vmem [resolvable:$true] %s190
          %196 = dma.hbm_to_vmem [thread:$0]  %s1, 81920, %s191, [#allocation5], 256, 256, 16
        $region16: #{resblock_forward_nlc.1} parent=11 // pred_fallthru
          _
        // Predicated region
        $region17: #{resblock_forward_nlc.1} parent=11 // pred_check
          %p197 = pneg %p99
        $region18: #{resblock_forward_nlc.1} parent=11 // pred_check_branch
          %199 = sbr.rel (%p197) target = $region20
        $region19: #{resblock_forward_nlc.1} parent=11 // pred_region
          %s201 = ssub.s32 64, 64
          %202 = vsyncadd [#allocation8], %s201
          %s204 = sshll.u32 [#allocation7], 4
          %s205 = int_to_ptr.vmem [resolvable:$true] %s204
          %207 = dma.hbm_to_vmem [thread:$0]  %s2, 64, %s205, [#allocation8]
        $region20: #{resblock_forward_nlc.1} parent=11 // pred_fallthru
          _
        // Predicated region
        $region21: #{resblock_forward_nlc.1} parent=11 // pred_check
          %p208 = pneg %p120
        $region22: #{resblock_forward_nlc.1} parent=11 // pred_check_branch
          %210 = sbr.rel (%p208) target = $region24
        $region23: #{resblock_forward_nlc.1} parent=11 // pred_region
          %s212 = ssub.s32 81920, 81920
          %213 = vsyncadd [#allocation8], %s212
          %s214 = sshll.u32 [#allocation9], 4
          %s215 = int_to_ptr.vmem [resolvable:$true] %s214
          %220 = dma.hbm_to_vmem [thread:$0]  %s3, 81920, %s215, [#allocation8], 256, 256, 16
        $region24: #{resblock_forward_nlc.1} parent=11 // pred_fallthru
          _
        // Predicated region
        $region25: #{resblock_forward_nlc.1} parent=11 // pred_check
          %p221 = pneg %p141
        $region26: #{resblock_forward_nlc.1} parent=11 // pred_check_branch
          %223 = sbr.rel (%p221) target = $region28
        $region27: #{resblock_forward_nlc.1} parent=11 // pred_region
          %s225 = ssub.s32 64, 64
          %226 = vsyncadd [#allocation11], %s225
          %s228 = sshll.u32 [#allocation10], 4
          %s229 = int_to_ptr.vmem [resolvable:$true] %s228
          %231 = dma.hbm_to_vmem [thread:$0]  %s4, 64, %s229, [#allocation11]
        $region28: #{resblock_forward_nlc.1} parent=11 // pred_fallthru
          _
      $region12: #{resblock_forward_nlc.1} parent=5 // pred_fallthru
        _
      %p232 = scmp.lt.s32.totalorder %s17, 2
      // Predicated region
      $region29: #{resblock_forward_nlc.1} parent=5 // pred_check
        %p233 = pneg %p232
      $region30: #{resblock_forward_nlc.1} parent=5 // pred_check_branch
        %235 = sbr.rel (%p233) target = $region32
      $region31: #{resblock_forward_nlc.1} parent=5 // pred_region
        // Predicated region
        $region33: #{resblock_forward_nlc.1} parent=31 // pred_check
          %p236 = pneg %p51
        $region34: #{resblock_forward_nlc.1} parent=31 // pred_check_branch
          %238 = sbr.rel (%p236) target = $region36
        $region35: #{resblock_forward_nlc.1} parent=31 // pred_region
          %s239 = sand.u32 %s41, 1
          %s240 = sand.u32 %s41, 1
          %s241 = smul.addr %s240, 192
          %s242 = scalar_lea.vmem [#allocation3], %s241
          %s243 = smul.u32 2, %s24
          %s244 = smul.addr %s25, 12
          %s245 = smul.addr %s243, 24
          %s246 = sadd.s32 %s244, %s245
          %s247 = smul.addr %s246, 8
          %s248 = scalar_lea.vmem %s0, %s247
          // Predicated region
          $region37: #{resblock_forward_nlc.1} parent=35 // pred_check
            _
          $region38: #{resblock_forward_nlc.1} parent=35 // pred_check_branch
            %250 = sbr.rel (0) target = $region40
          $region39: #{resblock_forward_nlc.1} parent=35 // pred_region
            // Predicated region
            $region41: #{resblock_forward_nlc.1} parent=39 // pred_check
              _
            $region42: #{resblock_forward_nlc.1} parent=39 // pred_check_branch
              %252 = sbr.rel (0) target = $region44
            $region43: #{resblock_forward_nlc.1} parent=39 // pred_region
              loop: start=0, step=1, limit=1
              $region45: #{resblock_forward_nlc.1} parent=43 // loop_pre_header
                _
              $region46: #{resblock_forward_nlc.1} parent=43 // loop_header
                %s254 = sphi 0, %s258
                %p255 = scmp.ge.s32.totalorder %s254, 1
                %s259 = sphi %s248, %s248
                %s260 = sphi %s242, %s242
              $region47: #{resblock_forward_nlc.1} parent=43 // loop_header_branch
                %257 = sbr.rel (%p255) target = $region51
              $region48: #{resblock_forward_nlc.1} parent=43 // loop_body
                %v261 = vld [vmem:[%s259] sm:$0xff]
                %262 = vst [vmem:[%s260] sm:$0xff] %v261
                %v263 = vld [vmem:[%s259 + $0x8] sm:$0xff]
                %264 = vst [vmem:[%s260 + $0x8] sm:$0xff] %v263
                %v265 = vld [vmem:[%s259 + $0x10] sm:$0xff]
                %266 = vst [vmem:[%s260 + $0x10] sm:$0xff] %v265
                %v267 = vld [vmem:[%s259 + $0x18] sm:$0xff]
                %268 = vst [vmem:[%s260 + $0x18] sm:$0xff] %v267
                %v269 = vld [vmem:[%s259 + $0x20] sm:$0xff]
                %270 = vst [vmem:[%s260 + $0x20] sm:$0xff] %v269
                %v271 = vld [vmem:[%s259 + $0x28] sm:$0xff]
                %272 = vst [vmem:[%s260 + $0x28] sm:$0xff] %v271
                %v273 = vld [vmem:[%s259 + $0x30] sm:$0xff]
                %274 = vst [vmem:[%s260 + $0x30] sm:$0xff] %v273
                %v275 = vld [vmem:[%s259 + $0x38] sm:$0xff]
                %276 = vst [vmem:[%s260 + $0x38] sm:$0xff] %v275
                %v277 = vld [vmem:[%s259 + $0x40] sm:$0xff]
                %278 = vst [vmem:[%s260 + $0x40] sm:$0xff] %v277
                %v279 = vld [vmem:[%s259 + $0x48] sm:$0xff]
                %280 = vst [vmem:[%s260 + $0x48] sm:$0xff] %v279
                %v281 = vld [vmem:[%s259 + $0x50] sm:$0xff]
                %282 = vst [vmem:[%s260 + $0x50] sm:$0xff] %v281
                %v283 = vld [vmem:[%s259 + $0x58] sm:$0xff]
                %284 = vst [vmem:[%s260 + $0x58] sm:$0xff] %v283
                %v285 = vld [vmem:[%s259 + $0xc0] sm:$0xff]
                %286 = vst [vmem:[%s260 + $0x60] sm:$0xff] %v285
                %v287 = vld [vmem:[%s259 + $0xc8] sm:$0xff]
                %288 = vst [vmem:[%s260 + $0x68] sm:$0xff] %v287
                %v289 = vld [vmem:[%s259 + $0xd0] sm:$0xff]
                %290 = vst [vmem:[%s260 + $0x70] sm:$0xff] %v289
                %v291 = vld [vmem:[%s259 + $0xd8] sm:$0xff]
                %292 = vst [vmem:[%s260 + $0x78] sm:$0xff] %v291
                %v293 = vld [vmem:[%s259 + $0xe0] sm:$0xff]
                %294 = vst [vmem:[%s260 + $0x80] sm:$0xff] %v293
                %v295 = vld [vmem:[%s259 + $0xe8] sm:$0xff]
                %296 = vst [vmem:[%s260 + $0x88] sm:$0xff] %v295
                %v297 = vld [vmem:[%s259 + $0xf0] sm:$0xff]
                %298 = vst [vmem:[%s260 + $0x90] sm:$0xff] %v297
                %v299 = vld [vmem:[%s259 + $0xf8] sm:$0xff]
                %300 = vst [vmem:[%s260 + $0x98] sm:$0xff] %v299
                %v301 = vld [vmem:[%s259 + $0x100] sm:$0xff]
                %302 = vst [vmem:[%s260 + $0xa0] sm:$0xff] %v301
                %v303 = vld [vmem:[%s259 + $0x108] sm:$0xff]
                %304 = vst [vmem:[%s260 + $0xa8] sm:$0xff] %v303
                %v305 = vld [vmem:[%s259 + $0x110] sm:$0xff]
                %306 = vst [vmem:[%s260 + $0xb0] sm:$0xff] %v305
                %v307 = vld [vmem:[%s259 + $0x118] sm:$0xff]
                %308 = vst [vmem:[%s260 + $0xb8] sm:$0xff] %v307
              $region49: #{resblock_forward_nlc.1} parent=43 // loop_footer
                %s258 = sadd.s32 1, %s254
              $region50: #{resblock_forward_nlc.1} parent=43 // loop_footer_branch
                %253 = sbr.rel target = $region46
              $region51: #{resblock_forward_nlc.1} parent=43 // loop_exit
                _
            $region44: #{resblock_forward_nlc.1} parent=39 // pred_fallthru
              _
            // Predicated region
            $region52: #{resblock_forward_nlc.1} parent=39 // pred_check
              _
            $region53: #{resblock_forward_nlc.1} parent=39 // pred_check_branch
              %310 = sbr.rel target = $region55
            $region54: #{resblock_forward_nlc.1} parent=39 // pred_region
              _
            $region55: #{resblock_forward_nlc.1} parent=39 // pred_fallthru
              _
          $region40: #{resblock_forward_nlc.1} parent=35 // pred_fallthru
            _
          %311 = vnop
        $region36: #{resblock_forward_nlc.1} parent=31 // pred_fallthru
          _
      $region32: #{resblock_forward_nlc.1} parent=5 // pred_fallthru
        _
      %p312 = scmp.le.s32.totalorder 1, %s17
      %p313 = scmp.lt.s32.totalorder %s17, 3
      %p314 = pnand %p312, %p313
      %p315 = pneg %p314
      // Predicated region
      $region56: #{resblock_forward_nlc.1} parent=5 // pred_check
        _
      $region57: #{resblock_forward_nlc.1} parent=5 // pred_check_branch
        %317 = sbr.rel (%p314) target = $region59
      $region58: #{resblock_forward_nlc.1} parent=5 // pred_region
        %s318 = ssub.s32 %s17, 1
        %s319 = sand.u32 %s44, 1
        %s320 = sand.u32 %s44, 1
        %s321 = smul.addr %s320, 192
        %s322 = scalar_lea.vmem [#allocation3], %s321
        // Predicated region
        $region60: #{resblock_forward_nlc.1} parent=58 // pred_check
          %p323 = pneg %p57
        $region61: #{resblock_forward_nlc.1} parent=58 // pred_check_branch
          %325 = sbr.rel (%p323) target = $region63
        $region62: #{resblock_forward_nlc.1} parent=58 // pred_region
          _
        $region63: #{resblock_forward_nlc.1} parent=58 // pred_fallthru
          _
        // Predicated region
        $region64: #{resblock_forward_nlc.1} parent=58 // pred_check
          %p326 = pneg %p78
        $region65: #{resblock_forward_nlc.1} parent=58 // pred_check_branch
          %328 = sbr.rel (%p326) target = $region67
        $region66: #{resblock_forward_nlc.1} parent=58 // pred_region
          %329 = dma.done [#allocation5], 81920
        $region67: #{resblock_forward_nlc.1} parent=58 // pred_fallthru
          _
        // Predicated region
        $region68: #{resblock_forward_nlc.1} parent=58 // pred_check
          %p330 = pneg %p99
        $region69: #{resblock_forward_nlc.1} parent=58 // pred_check_branch
          %332 = sbr.rel (%p330) target = $region71
        $region70: #{resblock_forward_nlc.1} parent=58 // pred_region
          %333 = dma.done [#allocation8], 64
        $region71: #{resblock_forward_nlc.1} parent=58 // pred_fallthru
          _
        // Predicated region
        $region72: #{resblock_forward_nlc.1} parent=58 // pred_check
          %p334 = pneg %p120
        $region73: #{resblock_forward_nlc.1} parent=58 // pred_check_branch
          %336 = sbr.rel (%p334) target = $region75
        $region74: #{resblock_forward_nlc.1} parent=58 // pred_region
          %337 = dma.done [#allocation8], 81920
        $region75: #{resblock_forward_nlc.1} parent=58 // pred_fallthru
          _
        // Predicated region
        $region76: #{resblock_forward_nlc.1} parent=58 // pred_check
          %p338 = pneg %p141
        $region77: #{resblock_forward_nlc.1} parent=58 // pred_check_branch
          %340 = sbr.rel (%p338) target = $region79
        $region78: #{resblock_forward_nlc.1} parent=58 // pred_region
          %341 = dma.done [#allocation11], 64
        $region79: #{resblock_forward_nlc.1} parent=58 // pred_fallthru
          _
        %s342 = sand.u32 %s44, 1
        %s343 = sand.u32 %s44, 1
        %s344 = smul.addr %s343, 192
        %s345 = scalar_lea.vmem [#allocation3], %s344
        %p346 = pneg %p57
        %p347 = pneg %p54
        %p348 = pneg %p78
        %p349 = pneg %p75
        %p350 = pneg %p99
        %p351 = pneg %p96
        %p352 = pneg %p120
        %p353 = pneg %p117
        %p354 = pneg %p141
        %p355 = pneg %p138
        %p356 = pneg %p169
        %p357 = pneg %p166
        %s358 = sand.u32 %s156, 1
        %s359 = scalar_lea.sflag [#allocation6], %s358
        %s360 = sand.u32 %s156, 1
        %s361 = smul.addr %s360, 64
        %s362 = scalar_lea.vmem [#allocation12], %s361
        %s363 = smul.u32 2, %s26
        %s364 = smul.u32 2, %s26
        %v366 = vld [vmem:[%s322] sm:$0xff]
        %v367 = vld [vmem:[%s322 + $0x8] sm:$0xff]
        %v368 = vld [vmem:[%s322 + $0x10] sm:$0xff]
        %v369 = vld [vmem:[%s322 + $0x18] sm:$0xff]
        %v370 = vld [vmem:[%s322 + $0x20] sm:$0xff]
        %v371 = vld [vmem:[%s322 + $0x28] sm:$0xff]
        %v372 = vld [vmem:[%s322 + $0x30] sm:$0xff]
        %v373 = vld [vmem:[%s322 + $0x38] sm:$0xff]
        %v374 = vld [vmem:[%s322 + $0x40] sm:$0xf]
        %v375 = vld [vmem:[%s322 + $0x48] sm:$0xf]
        %v376 = vld [vmem:[%s322 + $0x50] sm:$0xf]
        %v377 = vld [vmem:[%s322 + $0x58] sm:$0xf]
        %v378 = vld [vmem:[%s322 + $0x60] sm:$0xff]
        %v379 = vld [vmem:[%s322 + $0x68] sm:$0xff]
        %v380 = vld [vmem:[%s322 + $0x70] sm:$0xff]
        %v381 = vld [vmem:[%s322 + $0x78] sm:$0xff]
        %v382 = vld [vmem:[%s322 + $0x80] sm:$0xff]
        %v383 = vld [vmem:[%s322 + $0x88] sm:$0xff]
        %v384 = vld [vmem:[%s322 + $0x90] sm:$0xff]
        %v385 = vld [vmem:[%s322 + $0x98] sm:$0xff]
        %v386 = vld [vmem:[%s322 + $0xa0] sm:$0xf]
        %v387 = vld [vmem:[%s322 + $0xa8] sm:$0xf]
        %v388 = vld [vmem:[%s322 + $0xb0] sm:$0xf]
        %v389 = vld [vmem:[%s322 + $0xb8] sm:$0xf]
        %v390 = vmax.f32 %v366, 0.0
        %v391 = vmax.f32 %v367, 0.0
        %v392 = vmax.f32 %v368, 0.0
        %v393 = vmax.f32 %v369, 0.0
        %v394 = vmax.f32 %v370, 0.0
        %v395 = vmax.f32 %v371, 0.0
        %v396 = vmax.f32 %v372, 0.0
        %v397 = vmax.f32 %v373, 0.0
        %v398 = vmax.f32 %v374, 0.0
        %v399 = vmax.f32 %v375, 0.0
        %v400 = vmax.f32 %v376, 0.0
        %v401 = vmax.f32 %v377, 0.0
        %v402 = vmax.f32 %v378, 0.0
        %v403 = vmax.f32 %v379, 0.0
        %v404 = vmax.f32 %v380, 0.0
        %v405 = vmax.f32 %v381, 0.0
        %v406 = vmax.f32 %v382, 0.0
        %v407 = vmax.f32 %v383, 0.0
        %v408 = vmax.f32 %v384, 0.0
        %v409 = vmax.f32 %v385, 0.0
        %v410 = vmax.f32 %v386, 0.0
        %v411 = vmax.f32 %v387, 0.0
        %v412 = vmax.f32 %v388, 0.0
        %v413 = vmax.f32 %v389, 0.0
        %v414 = vpack.c.bf16 %v394, %v390
        %v415 = vpack.c.bf16 %v395, %v391
        %v416 = vpack.c.bf16 %v396, %v392
        %v417 = vpack.c.bf16 %v397, %v393
        %v418 = vpack.c.bf16 %v398, %v398
        %v419 = vpack.c.bf16 %v399, %v399
        %v420 = vpack.c.bf16 %v400, %v400
        %v421 = vpack.c.bf16 %v401, %v401
        %v422 = vpack.c.bf16 %v406, %v402
        %v423 = vpack.c.bf16 %v407, %v403
        %v424 = vpack.c.bf16 %v408, %v404
        %v425 = vpack.c.bf16 %v409, %v405
        %v426 = vpack.c.bf16 %v410, %v410
        %v427 = vpack.c.bf16 %v411, %v411
        %v428 = vpack.c.bf16 %v412, %v412
        %v429 = vpack.c.bf16 %v413, %v413
        %v446 = vunpack.c.l.b16 %v414
        %v447 = vunpack.c.l.b16 %v415
        %v448 = vunpack.c.l.b16 %v416
        %v449 = vunpack.c.l.b16 %v417
        %v450 = vunpack.c.h.b16 %v414
        %v451 = vunpack.c.h.b16 %v415
        %v452 = vunpack.c.h.b16 %v416
        %v453 = vunpack.c.h.b16 %v417
        %v454 = vunpack.c.l.b16 %v418
        %v455 = vunpack.c.l.b16 %v419
        %v456 = vunpack.c.l.b16 %v420
        %v457 = vunpack.c.l.b16 %v421
        %v458 = vunpack.c.l.b16 %v422
        %v459 = vunpack.c.l.b16 %v423
        %v460 = vunpack.c.l.b16 %v424
        %v461 = vunpack.c.l.b16 %v425
        %v462 = vunpack.c.h.b16 %v422
        %v463 = vunpack.c.h.b16 %v423
        %v464 = vunpack.c.h.b16 %v424
        %v465 = vunpack.c.h.b16 %v425
        %v466 = vunpack.c.l.b16 %v426
        %v467 = vunpack.c.l.b16 %v427
        %v468 = vunpack.c.l.b16 %v428
        %v469 = vunpack.c.l.b16 %v429
        %v470 = vpack.c.b16 %v447, %v446
        %v471 = vpack.c.b16 %v449, %v448
        %v472 = vpack.c.b16 %v451, %v450
        %v473 = vpack.c.b16 %v453, %v452
        %v474 = vpack.c.b16 %v455, %v454
        %v475 = vpack.c.b16 %v457, %v456
        %v476 = vpack.c.b16 %v459, %v458
        %v477 = vpack.c.b16 %v461, %v460
        %v478 = vpack.c.b16 %v463, %v462
        %v479 = vpack.c.b16 %v465, %v464
        %v480 = vpack.c.b16 %v467, %v466
        %v481 = vpack.c.b16 %v469, %v468
        %494 = vst [vmem:[#allocation2] sm:$0xff] %v470
        %495 = vst [vmem:[#allocation2 + $0x8] sm:$0xff] %v471
        %496 = vst [vmem:[#allocation2 + $0x10] sm:$0xff] %v472
        %497 = vst [vmem:[#allocation2 + $0x18] sm:$0xff] %v473
        %498 = vst [vmem:[#allocation2 + $0x20] sm:$0x33] %v474
        %499 = vst [vmem:[#allocation2 + $0x28] sm:$0x33] %v475
        %500 = vst [vmem:[#allocation2 + $0x30] sm:$0xff] %v476
        %501 = vst [vmem:[#allocation2 + $0x38] sm:$0xff] %v477
        %502 = vst [vmem:[#allocation2 + $0x40] sm:$0xff] %v478
        %503 = vst [vmem:[#allocation2 + $0x48] sm:$0xff] %v479
        %504 = vst [vmem:[#allocation2 + $0x50] sm:$0x33] %v480
        %505 = vst [vmem:[#allocation2 + $0x58] sm:$0x33] %v481
        %v506 = vld [vmem:[#allocation7] sm:$0xf]
        %v508 = vlaneseq
        %v509 = vshrl.u32 %v508, 7
        %v510 = vsub.s32 0, %v509
        %v511 = vrot.slane %v506, %v510
        %v512 = vlaneseq
        %v513 = vshrl.u32 %v512, 7
        %v514 = vsub.s32 1, %v513
        %v515 = vrot.slane %v506, %v514
        %v516 = vlaneseq
        %v517 = vshrl.u32 %v516, 7
        %v518 = vsub.s32 2, %v517
        %v519 = vrot.slane %v506, %v518
        %v520 = vlaneseq
        %v521 = vshrl.u32 %v520, 7
        %v522 = vsub.s32 3, %v521
        %v523 = vrot.slane %v506, %v522
        %v528 = vld [vmem:[#allocation2] sm:$0xff]
        %v529 = vld [vmem:[#allocation2 + $0x8] sm:$0xff]
        %v530 = vld [vmem:[#allocation2 + $0x10] sm:$0xff]
        %v531 = vld [vmem:[#allocation2 + $0x18] sm:$0xff]
        %v532 = vld [vmem:[#allocation2 + $0x30] sm:$0xff]
        %v533 = vld [vmem:[#allocation2 + $0x38] sm:$0xff]
        %v534 = vld [vmem:[#allocation2 + $0x40] sm:$0xff]
        %v535 = vld [vmem:[#allocation2 + $0x48] sm:$0xff]
        %v536 = vld [vmem:[#allocation4] sm:$0xff]
        %v537 = vld [vmem:[#allocation4 + $0x8] sm:$0xff]
        %v538 = vld [vmem:[#allocation4 + $0x10] sm:$0xff]
        %v539 = vld [vmem:[#allocation4 + $0x18] sm:$0xff]
        %v540 = vld [vmem:[#allocation4 + $0x20] sm:$0xff]
        %v541 = vld [vmem:[#allocation4 + $0x28] sm:$0xff]
        %v542 = vld [vmem:[#allocation4 + $0x30] sm:$0xff]
        %v543 = vld [vmem:[#allocation4 + $0x38] sm:$0xff]
        %v544 = vld [vmem:[#allocation4 + $0x40] sm:$0xff]
        %v545 = vld [vmem:[#allocation4 + $0x48] sm:$0xff]
        %v546 = vld [vmem:[#allocation4 + $0x50] sm:$0xff]
        %v547 = vld [vmem:[#allocation4 + $0x58] sm:$0xff]
        %v548 = vld [vmem:[#allocation4 + $0x60] sm:$0xff]
        %v549 = vld [vmem:[#allocation4 + $0x68] sm:$0xff]
        %v550 = vld [vmem:[#allocation4 + $0x70] sm:$0xff]
        %v551 = vld [vmem:[#allocation4 + $0x78] sm:$0xff]
        %v552 = vld [vmem:[#allocation4 + $0x80] sm:$0xff]
        %v553 = vld [vmem:[#allocation4 + $0x88] sm:$0xff]
        %v554 = vld [vmem:[#allocation4 + $0x90] sm:$0xff]
        %v555 = vld [vmem:[#allocation4 + $0x98] sm:$0xff]
        %v556 = vld [vmem:[#allocation4 + $0xa0] sm:$0xff]
        %v557 = vld [vmem:[#allocation4 + $0xa8] sm:$0xff]
        %v558 = vld [vmem:[#allocation4 + $0xb0] sm:$0xff]
        %v559 = vld [vmem:[#allocation4 + $0xb8] sm:$0xff]
        %v560 = vld [vmem:[#allocation4 + $0xc0] sm:$0xff]
        %v561 = vld [vmem:[#allocation4 + $0xc8] sm:$0xff]
        %v562 = vld [vmem:[#allocation4 + $0xd0] sm:$0xff]
        %v563 = vld [vmem:[#allocation4 + $0xd8] sm:$0xff]
        %v564 = vld [vmem:[#allocation4 + $0xe0] sm:$0xff]
        %v565 = vld [vmem:[#allocation4 + $0xe8] sm:$0xff]
        %v566 = vld [vmem:[#allocation4 + $0xf0] sm:$0xff]
        %v567 = vld [vmem:[#allocation4 + $0xf8] sm:$0xff]
        %v568 = vld [vmem:[#allocation4 + $0x100] sm:$0xff]
        %v569 = vld [vmem:[#allocation4 + $0x108] sm:$0xff]
        %v570 = vld [vmem:[#allocation4 + $0x110] sm:$0xff]
        %v571 = vld [vmem:[#allocation4 + $0x118] sm:$0xff]
        %v572 = vld [vmem:[#allocation4 + $0x120] sm:$0xff]
        %v573 = vld [vmem:[#allocation4 + $0x128] sm:$0xff]
        %v574 = vld [vmem:[#allocation4 + $0x130] sm:$0xff]
        %v575 = vld [vmem:[#allocation4 + $0x138] sm:$0xff]
        %v576 = vld [vmem:[#allocation4 + $0x140] sm:$0xff]
        %v577 = vld [vmem:[#allocation4 + $0x148] sm:$0xff]
        %v578 = vld [vmem:[#allocation4 + $0x150] sm:$0xff]
        %v579 = vld [vmem:[#allocation4 + $0x158] sm:$0xff]
        %v580 = vld [vmem:[#allocation4 + $0x160] sm:$0xff]
        %v581 = vld [vmem:[#allocation4 + $0x168] sm:$0xff]
        %v582 = vld [vmem:[#allocation4 + $0x170] sm:$0xff]
        %v583 = vld [vmem:[#allocation4 + $0x178] sm:$0xff]
        %v584 = vld [vmem:[#allocation4 + $0x180] sm:$0xff]
        %v585 = vld [vmem:[#allocation4 + $0x188] sm:$0xff]
        %v586 = vld [vmem:[#allocation4 + $0x190] sm:$0xff]
        %v587 = vld [vmem:[#allocation4 + $0x198] sm:$0xff]
        %v588 = vld [vmem:[#allocation4 + $0x1a0] sm:$0xff]
        %v589 = vld [vmem:[#allocation4 + $0x1a8] sm:$0xff]
        %v590 = vld [vmem:[#allocation4 + $0x1b0] sm:$0xff]
        %v591 = vld [vmem:[#allocation4 + $0x1b8] sm:$0xff]
        %v592 = vld [vmem:[#allocation4 + $0x1c0] sm:$0xff]
        %v593 = vld [vmem:[#allocation4 + $0x1c8] sm:$0xff]
        %v594 = vld [vmem:[#allocation4 + $0x1d0] sm:$0xff]
        %v595 = vld [vmem:[#allocation4 + $0x1d8] sm:$0xff]
        %v596 = vld [vmem:[#allocation4 + $0x1e0] sm:$0xff]
        %v597 = vld [vmem:[#allocation4 + $0x1e8] sm:$0xff]
        %v598 = vld [vmem:[#allocation4 + $0x1f0] sm:$0xff]
        %v599 = vld [vmem:[#allocation4 + $0x1f8] sm:$0xff]
        %v600 = vld [vmem:[#allocation4 + $0x200] sm:$0xff]
        %v601 = vld [vmem:[#allocation4 + $0x208] sm:$0xff]
        %v602 = vld [vmem:[#allocation4 + $0x210] sm:$0xff]
        %v603 = vld [vmem:[#allocation4 + $0x218] sm:$0xff]
        %v604 = vld [vmem:[#allocation4 + $0x220] sm:$0xff]
        %v605 = vld [vmem:[#allocation4 + $0x228] sm:$0xff]
        %v606 = vld [vmem:[#allocation4 + $0x230] sm:$0xff]
        %v607 = vld [vmem:[#allocation4 + $0x238] sm:$0xff]
        %v608 = vld [vmem:[#allocation4 + $0x240] sm:$0xff]
        %v609 = vld [vmem:[#allocation4 + $0x248] sm:$0xff]
        %v610 = vld [vmem:[#allocation4 + $0x250] sm:$0xff]
        %v611 = vld [vmem:[#allocation4 + $0x258] sm:$0xff]
        %v612 = vld [vmem:[#allocation4 + $0x260] sm:$0xff]
        %v613 = vld [vmem:[#allocation4 + $0x268] sm:$0xff]
        %v614 = vld [vmem:[#allocation4 + $0x270] sm:$0xff]
        %v615 = vld [vmem:[#allocation4 + $0x278] sm:$0xff]
        %v616 = vld [vmem:[#allocation4 + $0x280] sm:$0xff]
        %v617 = vld [vmem:[#allocation4 + $0x288] sm:$0xff]
        %v618 = vld [vmem:[#allocation4 + $0x290] sm:$0xff]
        %v619 = vld [vmem:[#allocation4 + $0x298] sm:$0xff]
        %v620 = vld [vmem:[#allocation4 + $0x2a0] sm:$0xff]
        %v621 = vld [vmem:[#allocation4 + $0x2a8] sm:$0xff]
        %v622 = vld [vmem:[#allocation4 + $0x2b0] sm:$0xff]
        %v623 = vld [vmem:[#allocation4 + $0x2b8] sm:$0xff]
        %v624 = vld [vmem:[#allocation4 + $0x2c0] sm:$0xff]
        %v625 = vld [vmem:[#allocation4 + $0x2c8] sm:$0xff]
        %v626 = vld [vmem:[#allocation4 + $0x2d0] sm:$0xff]
        %v627 = vld [vmem:[#allocation4 + $0x2d8] sm:$0xff]
        %v628 = vld [vmem:[#allocation4 + $0x2e0] sm:$0xff]
        %v629 = vld [vmem:[#allocation4 + $0x2e8] sm:$0xff]
        %v630 = vld [vmem:[#allocation4 + $0x2f0] sm:$0xff]
        %v631 = vld [vmem:[#allocation4 + $0x2f8] sm:$0xff]
        %v632 = vld [vmem:[#allocation4 + $0x300] sm:$0xff]
        %v633 = vld [vmem:[#allocation4 + $0x308] sm:$0xff]
        %v634 = vld [vmem:[#allocation4 + $0x310] sm:$0xff]
        %v635 = vld [vmem:[#allocation4 + $0x318] sm:$0xff]
        %v636 = vld [vmem:[#allocation4 + $0x320] sm:$0xff]
        %v637 = vld [vmem:[#allocation4 + $0x328] sm:$0xff]
        %v638 = vld [vmem:[#allocation4 + $0x330] sm:$0xff]
        %v639 = vld [vmem:[#allocation4 + $0x338] sm:$0xff]
        %v640 = vld [vmem:[#allocation4 + $0x340] sm:$0xff]
        %v641 = vld [vmem:[#allocation4 + $0x348] sm:$0xff]
        %v642 = vld [vmem:[#allocation4 + $0x350] sm:$0xff]
        %v643 = vld [vmem:[#allocation4 + $0x358] sm:$0xff]
        %v644 = vld [vmem:[#allocation4 + $0x360] sm:$0xff]
        %v645 = vld [vmem:[#allocation4 + $0x368] sm:$0xff]
        %v646 = vld [vmem:[#allocation4 + $0x370] sm:$0xff]
        %v647 = vld [vmem:[#allocation4 + $0x378] sm:$0xff]
        %v648 = vld [vmem:[#allocation4 + $0x380] sm:$0xff]
        %v649 = vld [vmem:[#allocation4 + $0x388] sm:$0xff]
        %v650 = vld [vmem:[#allocation4 + $0x390] sm:$0xff]
        %v651 = vld [vmem:[#allocation4 + $0x398] sm:$0xff]
        %v652 = vld [vmem:[#allocation4 + $0x3a0] sm:$0xff]
        %v653 = vld [vmem:[#allocation4 + $0x3a8] sm:$0xff]
        %v654 = vld [vmem:[#allocation4 + $0x3b0] sm:$0xff]
        %v655 = vld [vmem:[#allocation4 + $0x3b8] sm:$0xff]
        %v656 = vld [vmem:[#allocation4 + $0x3c0] sm:$0xff]
        %v657 = vld [vmem:[#allocation4 + $0x3c8] sm:$0xff]
        %v658 = vld [vmem:[#allocation4 + $0x3d0] sm:$0xff]
        %v659 = vld [vmem:[#allocation4 + $0x3d8] sm:$0xff]
        %v660 = vld [vmem:[#allocation4 + $0x3e0] sm:$0xff]
        %v661 = vld [vmem:[#allocation4 + $0x3e8] sm:$0xff]
        %v662 = vld [vmem:[#allocation4 + $0x3f0] sm:$0xff]
        %v663 = vld [vmem:[#allocation4 + $0x3f8] sm:$0xff]
        %v672 = vunpack.c.l.b16 %v528
        %v673 = vunpack.c.h.b16 %v528
        %v674 = vunpack.c.l.b16 %v529
        %v675 = vunpack.c.h.b16 %v529
        %v676 = vunpack.c.l.b16 %v530
        %v677 = vunpack.c.h.b16 %v530
        %v678 = vunpack.c.l.b16 %v531
        %v679 = vunpack.c.h.b16 %v531
        %v680 = vunpack.c.l.b16 %v532
        %v681 = vunpack.c.h.b16 %v532
        %v682 = vunpack.c.l.b16 %v533
        %v683 = vunpack.c.h.b16 %v533
        %v684 = vunpack.c.l.b16 %v534
        %v685 = vunpack.c.h.b16 %v534
        %v686 = vunpack.c.l.b16 %v535
        %v687 = vunpack.c.h.b16 %v535
        %v688 = vpack.c.b16 %v676, %v672
        %v689 = vpack.c.b16 %v677, %v673
        %v690 = vpack.c.b16 %v678, %v674
        %v691 = vpack.c.b16 %v679, %v675
        %v692 = vpack.c.b16 %v684, %v680
        %v693 = vpack.c.b16 %v685, %v681
        %v694 = vpack.c.b16 %v686, %v682
        %v695 = vpack.c.b16 %v687, %v683
        %v832 = vunpack.c.l.b16 %v536
        %v833 = vunpack.c.h.b16 %v536
        %v834 = vunpack.c.l.b16 %v537
        %v835 = vunpack.c.h.b16 %v537
        %v836 = vunpack.c.l.b16 %v538
        %v837 = vunpack.c.h.b16 %v538
        %v838 = vunpack.c.l.b16 %v539
        %v839 = vunpack.c.h.b16 %v539
        %v840 = vunpack.c.l.b16 %v540
        %v841 = vunpack.c.h.b16 %v540
        %v842 = vunpack.c.l.b16 %v541
        %v843 = vunpack.c.h.b16 %v541
        %v844 = vunpack.c.l.b16 %v542
        %v845 = vunpack.c.h.b16 %v542
        %v846 = vunpack.c.l.b16 %v543
        %v847 = vunpack.c.h.b16 %v543
        %v848 = vunpack.c.l.b16 %v544
        %v849 = vunpack.c.h.b16 %v544
        %v850 = vunpack.c.l.b16 %v545
        %v851 = vunpack.c.h.b16 %v545
        %v852 = vunpack.c.l.b16 %v546
        %v853 = vunpack.c.h.b16 %v546
        %v854 = vunpack.c.l.b16 %v547
        %v855 = vunpack.c.h.b16 %v547
        %v856 = vunpack.c.l.b16 %v548
        %v857 = vunpack.c.h.b16 %v548
        %v858 = vunpack.c.l.b16 %v549
        %v859 = vunpack.c.h.b16 %v549
        %v860 = vunpack.c.l.b16 %v550
        %v861 = vunpack.c.h.b16 %v550
        %v862 = vunpack.c.l.b16 %v551
        %v863 = vunpack.c.h.b16 %v551
        %v864 = vunpack.c.l.b16 %v552
        %v865 = vunpack.c.h.b16 %v552
        %v866 = vunpack.c.l.b16 %v553
        %v867 = vunpack.c.h.b16 %v553
        %v868 = vunpack.c.l.b16 %v554
        %v869 = vunpack.c.h.b16 %v554
        %v870 = vunpack.c.l.b16 %v555
        %v871 = vunpack.c.h.b16 %v555
        %v872 = vunpack.c.l.b16 %v556
        %v873 = vunpack.c.h.b16 %v556
        %v874 = vunpack.c.l.b16 %v557
        %v875 = vunpack.c.h.b16 %v557
        %v876 = vunpack.c.l.b16 %v558
        %v877 = vunpack.c.h.b16 %v558
        %v878 = vunpack.c.l.b16 %v559
        %v879 = vunpack.c.h.b16 %v559
        %v880 = vunpack.c.l.b16 %v560
        %v881 = vunpack.c.h.b16 %v560
        %v882 = vunpack.c.l.b16 %v561
        %v883 = vunpack.c.h.b16 %v561
        %v884 = vunpack.c.l.b16 %v562
        %v885 = vunpack.c.h.b16 %v562
        %v886 = vunpack.c.l.b16 %v563
        %v887 = vunpack.c.h.b16 %v563
        %v888 = vunpack.c.l.b16 %v564
        %v889 = vunpack.c.h.b16 %v564
        %v890 = vunpack.c.l.b16 %v565
        %v891 = vunpack.c.h.b16 %v565
        %v892 = vunpack.c.l.b16 %v566
        %v893 = vunpack.c.h.b16 %v566
        %v894 = vunpack.c.l.b16 %v567
        %v895 = vunpack.c.h.b16 %v567
        %v896 = vunpack.c.l.b16 %v568
        %v897 = vunpack.c.h.b16 %v568
        %v898 = vunpack.c.l.b16 %v569
        %v899 = vunpack.c.h.b16 %v569
        %v900 = vunpack.c.l.b16 %v570
        %v901 = vunpack.c.h.b16 %v570
        %v902 = vunpack.c.l.b16 %v571
        %v903 = vunpack.c.h.b16 %v571
        %v904 = vunpack.c.l.b16 %v572
        %v905 = vunpack.c.h.b16 %v572
        %v906 = vunpack.c.l.b16 %v573
        %v907 = vunpack.c.h.b16 %v573
        %v908 = vunpack.c.l.b16 %v574
        %v909 = vunpack.c.h.b16 %v574
        %v910 = vunpack.c.l.b16 %v575
        %v911 = vunpack.c.h.b16 %v575
        %v912 = vunpack.c.l.b16 %v576
        %v913 = vunpack.c.h.b16 %v576
        %v914 = vunpack.c.l.b16 %v577
        %v915 = vunpack.c.h.b16 %v577
        %v916 = vunpack.c.l.b16 %v578
        %v917 = vunpack.c.h.b16 %v578
        %v918 = vunpack.c.l.b16 %v579
        %v919 = vunpack.c.h.b16 %v579
        %v920 = vunpack.c.l.b16 %v580
        %v921 = vunpack.c.h.b16 %v580
        %v922 = vunpack.c.l.b16 %v581
        %v923 = vunpack.c.h.b16 %v581
        %v924 = vunpack.c.l.b16 %v582
        %v925 = vunpack.c.h.b16 %v582
        %v926 = vunpack.c.l.b16 %v583
        %v927 = vunpack.c.h.b16 %v583
        %v928 = vunpack.c.l.b16 %v584
        %v929 = vunpack.c.h.b16 %v584
        %v930 = vunpack.c.l.b16 %v585
        %v931 = vunpack.c.h.b16 %v585
        %v932 = vunpack.c.l.b16 %v586
        %v933 = vunpack.c.h.b16 %v586
        %v934 = vunpack.c.l.b16 %v587
        %v935 = vunpack.c.h.b16 %v587
        %v936 = vunpack.c.l.b16 %v588
        %v937 = vunpack.c.h.b16 %v588
        %v938 = vunpack.c.l.b16 %v589
        %v939 = vunpack.c.h.b16 %v589
        %v940 = vunpack.c.l.b16 %v590
        %v941 = vunpack.c.h.b16 %v590
        %v942 = vunpack.c.l.b16 %v591
        %v943 = vunpack.c.h.b16 %v591
        %v944 = vunpack.c.l.b16 %v592
        %v945 = vunpack.c.h.b16 %v592
        %v946 = vunpack.c.l.b16 %v593
        %v947 = vunpack.c.h.b16 %v593
        %v948 = vunpack.c.l.b16 %v594
        %v949 = vunpack.c.h.b16 %v594
        %v950 = vunpack.c.l.b16 %v595
        %v951 = vunpack.c.h.b16 %v595
        %v952 = vunpack.c.l.b16 %v596
        %v953 = vunpack.c.h.b16 %v596
        %v954 = vunpack.c.l.b16 %v597
        %v955 = vunpack.c.h.b16 %v597
        %v956 = vunpack.c.l.b16 %v598
        %v957 = vunpack.c.h.b16 %v598
        %v958 = vunpack.c.l.b16 %v599
        %v959 = vunpack.c.h.b16 %v599
        %v960 = vunpack.c.l.b16 %v600
        %v961 = vunpack.c.h.b16 %v600
        %v962 = vunpack.c.l.b16 %v601
        %v963 = vunpack.c.h.b16 %v601
        %v964 = vunpack.c.l.b16 %v602
        %v965 = vunpack.c.h.b16 %v602
        %v966 = vunpack.c.l.b16 %v603
        %v967 = vunpack.c.h.b16 %v603
        %v968 = vunpack.c.l.b16 %v604
        %v969 = vunpack.c.h.b16 %v604
        %v970 = vunpack.c.l.b16 %v605
        %v971 = vunpack.c.h.b16 %v605
        %v972 = vunpack.c.l.b16 %v606
        %v973 = vunpack.c.h.b16 %v606
        %v974 = vunpack.c.l.b16 %v607
        %v975 = vunpack.c.h.b16 %v607
        %v976 = vunpack.c.l.b16 %v608
        %v977 = vunpack.c.h.b16 %v608
        %v978 = vunpack.c.l.b16 %v609
        %v979 = vunpack.c.h.b16 %v609
        %v980 = vunpack.c.l.b16 %v610
        %v981 = vunpack.c.h.b16 %v610
        %v982 = vunpack.c.l.b16 %v611
        %v983 = vunpack.c.h.b16 %v611
        %v984 = vunpack.c.l.b16 %v612
        %v985 = vunpack.c.h.b16 %v612
        %v986 = vunpack.c.l.b16 %v613
        %v987 = vunpack.c.h.b16 %v613
        %v988 = vunpack.c.l.b16 %v614
        %v989 = vunpack.c.h.b16 %v614
        %v990 = vunpack.c.l.b16 %v615
        %v991 = vunpack.c.h.b16 %v615
        %v992 = vunpack.c.l.b16 %v616
        %v993 = vunpack.c.h.b16 %v616
        %v994 = vunpack.c.l.b16 %v617
        %v995 = vunpack.c.h.b16 %v617
        %v996 = vunpack.c.l.b16 %v618
        %v997 = vunpack.c.h.b16 %v618
        %v998 = vunpack.c.l.b16 %v619
        %v999 = vunpack.c.h.b16 %v619
        %v1000 = vunpack.c.l.b16 %v620
        %v1001 = vunpack.c.h.b16 %v620
        %v1002 = vunpack.c.l.b16 %v621
        %v1003 = vunpack.c.h.b16 %v621
        %v1004 = vunpack.c.l.b16 %v622
        %v1005 = vunpack.c.h.b16 %v622
        %v1006 = vunpack.c.l.b16 %v623
        %v1007 = vunpack.c.h.b16 %v623
        %v1008 = vunpack.c.l.b16 %v624
        %v1009 = vunpack.c.h.b16 %v624
        %v1010 = vunpack.c.l.b16 %v625
        %v1011 = vunpack.c.h.b16 %v625
        %v1012 = vunpack.c.l.b16 %v626
        %v1013 = vunpack.c.h.b16 %v626
        %v1014 = vunpack.c.l.b16 %v627
        %v1015 = vunpack.c.h.b16 %v627
        %v1016 = vunpack.c.l.b16 %v628
        %v1017 = vunpack.c.h.b16 %v628
        %v1018 = vunpack.c.l.b16 %v629
        %v1019 = vunpack.c.h.b16 %v629
        %v1020 = vunpack.c.l.b16 %v630
        %v1021 = vunpack.c.h.b16 %v630
        %v1022 = vunpack.c.l.b16 %v631
        %v1023 = vunpack.c.h.b16 %v631
        %v1024 = vunpack.c.l.b16 %v632
        %v1025 = vunpack.c.h.b16 %v632
        %v1026 = vunpack.c.l.b16 %v633
        %v1027 = vunpack.c.h.b16 %v633
        %v1028 = vunpack.c.l.b16 %v634
        %v1029 = vunpack.c.h.b16 %v634
        %v1030 = vunpack.c.l.b16 %v635
        %v1031 = vunpack.c.h.b16 %v635
        %v1032 = vunpack.c.l.b16 %v636
        %v1033 = vunpack.c.h.b16 %v636
        %v1034 = vunpack.c.l.b16 %v637
        %v1035 = vunpack.c.h.b16 %v637
        %v1036 = vunpack.c.l.b16 %v638
        %v1037 = vunpack.c.h.b16 %v638
        %v1038 = vunpack.c.l.b16 %v639
        %v1039 = vunpack.c.h.b16 %v639
        %v1040 = vunpack.c.l.b16 %v640
        %v1041 = vunpack.c.h.b16 %v640
        %v1042 = vunpack.c.l.b16 %v641
        %v1043 = vunpack.c.h.b16 %v641
        %v1044 = vunpack.c.l.b16 %v642
        %v1045 = vunpack.c.h.b16 %v642
        %v1046 = vunpack.c.l.b16 %v643
        %v1047 = vunpack.c.h.b16 %v643
        %v1048 = vunpack.c.l.b16 %v644
        %v1049 = vunpack.c.h.b16 %v644
        %v1050 = vunpack.c.l.b16 %v645
        %v1051 = vunpack.c.h.b16 %v645
        %v1052 = vunpack.c.l.b16 %v646
        %v1053 = vunpack.c.h.b16 %v646
        %v1054 = vunpack.c.l.b16 %v647
        %v1055 = vunpack.c.h.b16 %v647
        %v1056 = vunpack.c.l.b16 %v648
        %v1057 = vunpack.c.h.b16 %v648
        %v1058 = vunpack.c.l.b16 %v649
        %v1059 = vunpack.c.h.b16 %v649
        %v1060 = vunpack.c.l.b16 %v650
        %v1061 = vunpack.c.h.b16 %v650
        %v1062 = vunpack.c.l.b16 %v651
        %v1063 = vunpack.c.h.b16 %v651
        %v1064 = vunpack.c.l.b16 %v652
        %v1065 = vunpack.c.h.b16 %v652
        %v1066 = vunpack.c.l.b16 %v653
        %v1067 = vunpack.c.h.b16 %v653
        %v1068 = vunpack.c.l.b16 %v654
        %v1069 = vunpack.c.h.b16 %v654
        %v1070 = vunpack.c.l.b16 %v655
        %v1071 = vunpack.c.h.b16 %v655
        %v1072 = vunpack.c.l.b16 %v656
        %v1073 = vunpack.c.h.b16 %v656
        %v1074 = vunpack.c.l.b16 %v657
        %v1075 = vunpack.c.h.b16 %v657
        %v1076 = vunpack.c.l.b16 %v658
        %v1077 = vunpack.c.h.b16 %v658
        %v1078 = vunpack.c.l.b16 %v659
        %v1079 = vunpack.c.h.b16 %v659
        %v1080 = vunpack.c.l.b16 %v660
        %v1081 = vunpack.c.h.b16 %v660
        %v1082 = vunpack.c.l.b16 %v661
        %v1083 = vunpack.c.h.b16 %v661
        %v1084 = vunpack.c.l.b16 %v662
        %v1085 = vunpack.c.h.b16 %v662
        %v1086 = vunpack.c.l.b16 %v663
        %v1087 = vunpack.c.h.b16 %v663
        %v1088 = vpack.c.b16 %v836, %v832
        %v1089 = vpack.c.b16 %v837, %v833
        %v1090 = vpack.c.b16 %v838, %v834
        %v1091 = vpack.c.b16 %v839, %v835
        %v1092 = vpack.c.b16 %v844, %v840
        %v1093 = vpack.c.b16 %v845, %v841
        %v1094 = vpack.c.b16 %v846, %v842
        %v1095 = vpack.c.b16 %v847, %v843
        %v1096 = vpack.c.b16 %v852, %v848
        %v1097 = vpack.c.b16 %v853, %v849
        %v1098 = vpack.c.b16 %v854, %v850
        %v1099 = vpack.c.b16 %v855, %v851
        %v1100 = vpack.c.b16 %v860, %v856
        %v1101 = vpack.c.b16 %v861, %v857
        %v1102 = vpack.c.b16 %v862, %v858
        %v1103 = vpack.c.b16 %v863, %v859
        %v1104 = vpack.c.b16 %v868, %v864
        %v1105 = vpack.c.b16 %v869, %v865
        %v1106 = vpack.c.b16 %v870, %v866
        %v1107 = vpack.c.b16 %v871, %v867
        %v1108 = vpack.c.b16 %v876, %v872
        %v1109 = vpack.c.b16 %v877, %v873
        %v1110 = vpack.c.b16 %v878, %v874
        %v1111 = vpack.c.b16 %v879, %v875
        %v1112 = vpack.c.b16 %v884, %v880
        %v1113 = vpack.c.b16 %v885, %v881
        %v1114 = vpack.c.b16 %v886, %v882
        %v1115 = vpack.c.b16 %v887, %v883
        %v1116 = vpack.c.b16 %v892, %v888
        %v1117 = vpack.c.b16 %v893, %v889
        %v1118 = vpack.c.b16 %v894, %v890
        %v1119 = vpack.c.b16 %v895, %v891
        %v1120 = vpack.c.b16 %v900, %v896
        %v1121 = vpack.c.b16 %v901, %v897
        %v1122 = vpack.c.b16 %v902, %v898
        %v1123 = vpack.c.b16 %v903, %v899
        %v1124 = vpack.c.b16 %v908, %v904
        %v1125 = vpack.c.b16 %v909, %v905
        %v1126 = vpack.c.b16 %v910, %v906
        %v1127 = vpack.c.b16 %v911, %v907
        %v1128 = vpack.c.b16 %v916, %v912
        %v1129 = vpack.c.b16 %v917, %v913
        %v1130 = vpack.c.b16 %v918, %v914
        %v1131 = vpack.c.b16 %v919, %v915
        %v1132 = vpack.c.b16 %v924, %v920
        %v1133 = vpack.c.b16 %v925, %v921
        %v1134 = vpack.c.b16 %v926, %v922
        %v1135 = vpack.c.b16 %v927, %v923
        %v1136 = vpack.c.b16 %v932, %v928
        %v1137 = vpack.c.b16 %v933, %v929
        %v1138 = vpack.c.b16 %v934, %v930
        %v1139 = vpack.c.b16 %v935, %v931
        %v1140 = vpack.c.b16 %v940, %v936
        %v1141 = vpack.c.b16 %v941, %v937
        %v1142 = vpack.c.b16 %v942, %v938
        %v1143 = vpack.c.b16 %v943, %v939
        %v1144 = vpack.c.b16 %v948, %v944
        %v1145 = vpack.c.b16 %v949, %v945
        %v1146 = vpack.c.b16 %v950, %v946
        %v1147 = vpack.c.b16 %v951, %v947
        %v1148 = vpack.c.b16 %v956, %v952
        %v1149 = vpack.c.b16 %v957, %v953
        %v1150 = vpack.c.b16 %v958, %v954
        %v1151 = vpack.c.b16 %v959, %v955
        %v1152 = vpack.c.b16 %v964, %v960
        %v1153 = vpack.c.b16 %v965, %v961
        %v1154 = vpack.c.b16 %v966, %v962
        %v1155 = vpack.c.b16 %v967, %v963
        %v1156 = vpack.c.b16 %v972, %v968
        %v1157 = vpack.c.b16 %v973, %v969
        %v1158 = vpack.c.b16 %v974, %v970
        %v1159 = vpack.c.b16 %v975, %v971
        %v1160 = vpack.c.b16 %v980, %v976
        %v1161 = vpack.c.b16 %v981, %v977
        %v1162 = vpack.c.b16 %v982, %v978
        %v1163 = vpack.c.b16 %v983, %v979
        %v1164 = vpack.c.b16 %v988, %v984
        %v1165 = vpack.c.b16 %v989, %v985
        %v1166 = vpack.c.b16 %v990, %v986
        %v1167 = vpack.c.b16 %v991, %v987
        %v1168 = vpack.c.b16 %v996, %v992
        %v1169 = vpack.c.b16 %v997, %v993
        %v1170 = vpack.c.b16 %v998, %v994
        %v1171 = vpack.c.b16 %v999, %v995
        %v1172 = vpack.c.b16 %v1004, %v1000
        %v1173 = vpack.c.b16 %v1005, %v1001
        %v1174 = vpack.c.b16 %v1006, %v1002
        %v1175 = vpack.c.b16 %v1007, %v1003
        %v1176 = vpack.c.b16 %v1012, %v1008
        %v1177 = vpack.c.b16 %v1013, %v1009
        %v1178 = vpack.c.b16 %v1014, %v1010
        %v1179 = vpack.c.b16 %v1015, %v1011
        %v1180 = vpack.c.b16 %v1020, %v1016
        %v1181 = vpack.c.b16 %v1021, %v1017
        %v1182 = vpack.c.b16 %v1022, %v1018
        %v1183 = vpack.c.b16 %v1023, %v1019
        %v1184 = vpack.c.b16 %v1028, %v1024
        %v1185 = vpack.c.b16 %v1029, %v1025
        %v1186 = vpack.c.b16 %v1030, %v1026
        %v1187 = vpack.c.b16 %v1031, %v1027
        %v1188 = vpack.c.b16 %v1036, %v1032
        %v1189 = vpack.c.b16 %v1037, %v1033
        %v1190 = vpack.c.b16 %v1038, %v1034
        %v1191 = vpack.c.b16 %v1039, %v1035
        %v1192 = vpack.c.b16 %v1044, %v1040
        %v1193 = vpack.c.b16 %v1045, %v1041
        %v1194 = vpack.c.b16 %v1046, %v1042
        %v1195 = vpack.c.b16 %v1047, %v1043
        %v1196 = vpack.c.b16 %v1052, %v1048
        %v1197 = vpack.c.b16 %v1053, %v1049
        %v1198 = vpack.c.b16 %v1054, %v1050
        %v1199 = vpack.c.b16 %v1055, %v1051
        %v1200 = vpack.c.b16 %v1060, %v1056
        %v1201 = vpack.c.b16 %v1061, %v1057
        %v1202 = vpack.c.b16 %v1062, %v1058
        %v1203 = vpack.c.b16 %v1063, %v1059
        %v1204 = vpack.c.b16 %v1068, %v1064
        %v1205 = vpack.c.b16 %v1069, %v1065
        %v1206 = vpack.c.b16 %v1070, %v1066
        %v1207 = vpack.c.b16 %v1071, %v1067
        %v1208 = vpack.c.b16 %v1076, %v1072
        %v1209 = vpack.c.b16 %v1077, %v1073
        %v1210 = vpack.c.b16 %v1078, %v1074
        %v1211 = vpack.c.b16 %v1079, %v1075
        %v1212 = vpack.c.b16 %v1084, %v1080
        %v1213 = vpack.c.b16 %v1085, %v1081
        %v1214 = vpack.c.b16 %v1086, %v1082
        %v1215 = vpack.c.b16 %v1087, %v1083
        %1344 = vmatprep.subr.bf16.mxu0 %v1117
        %1345 = vmatpush1.bf16.msra.mxu0 %v1116
        %1346 = vmatprep.subr.bf16.mxu0 %v1113
        %1347 = vmatpush1.bf16.msra.mxu0 %v1112
        %1348 = vmatprep.subr.bf16.mxu0 %v1109
        %1349 = vmatpush1.bf16.msra.mxu0 %v1108
        %1350 = vmatprep.subr.bf16.mxu0 %v1105
        %1351 = vmatpush1.bf16.msra.mxu0 %v1104
        %1352 = vmatprep.subr.bf16.mxu0 %v1101
        %1353 = vmatpush1.bf16.msra.mxu0 %v1100
        %1354 = vmatprep.subr.bf16.mxu0 %v1097
        %1355 = vmatpush1.bf16.msra.mxu0 %v1096
        %1356 = vmatprep.subr.bf16.mxu0 %v1093
        %1357 = vmatpush1.bf16.msra.mxu0 %v1092
        %1358 = vmatprep.subr.bf16.mxu0 %v1089
        %1359 = vmatpush1.bf16.msra.mxu0 %v1088
        %1360 = vmatprep.subr.bf16.mxu0 %v1149
        %1361 = vmatpush2.bf16.msra.mxu0 %v1148
        %1362 = vmatprep.subr.bf16.mxu0 %v1145
        %1363 = vmatpush2.bf16.msra.mxu0 %v1144
        %1364 = vmatprep.subr.bf16.mxu0 %v1141
        %1365 = vmatpush2.bf16.msra.mxu0 %v1140
        %1366 = vmatprep.subr.bf16.mxu0 %v1137
        %1367 = vmatpush2.bf16.msra.mxu0 %v1136
        %1368 = vmatprep.subr.bf16.mxu0 %v1133
        %1369 = vmatpush2.bf16.msra.mxu0 %v1132
        %1370 = vmatprep.subr.bf16.mxu0 %v1129
        %1371 = vmatpush2.bf16.msra.mxu0 %v1128
        %1372 = vmatprep.subr.bf16.mxu0 %v1125
        %1373 = vmatpush2.bf16.msra.mxu0 %v1124
        %1374 = vmatprep.subr.bf16.mxu0 %v1121
        %1375 = vmatpush2.bf16.msra.mxu0 %v1120
        %1376 = vmatprep.mubr.bf16.mxu0 %v689
        %1377 = vmatmul.mubr.bf16.gmra.mxu0 %v688
        %v1378 = vpop.f32.mrf.mxu0
        %v1379 = vadd.f32 0.0, %v1378
        %v1380 = vpop.f32.mrf.mxu0
        %v1381 = vadd.f32 0.0, %v1380
        %v1382 = vpop.f32.mrf.mxu0
        %v1383 = vadd.f32 0.0, %v1382
        %v1384 = vpop.f32.mrf.mxu0
        %v1385 = vadd.f32 0.0, %v1384
        %1386 = vmatprep.mubr.bf16.mxu0 %v693
        %1387 = vmatmul.mubr.bf16.gmra.mxu0 %v692
        %v1388 = vpop.f32.mrf.mxu0
        %v1389 = vadd.f32 0.0, %v1388
        %v1390 = vpop.f32.mrf.mxu0
        %v1391 = vadd.f32 0.0, %v1390
        %v1392 = vpop.f32.mrf.mxu0
        %v1393 = vadd.f32 0.0, %v1392
        %v1394 = vpop.f32.mrf.mxu0
        %v1395 = vadd.f32 0.0, %v1394
        %1396 = vdwg.mxu0
        %1397 = vmatprep.subr.bf16.mxu0 %v1181
        %1398 = vmatpush1.bf16.msra.mxu0 %v1180
        %1399 = vmatprep.subr.bf16.mxu0 %v1177
        %1400 = vmatpush1.bf16.msra.mxu0 %v1176
        %1401 = vmatprep.subr.bf16.mxu0 %v1173
        %1402 = vmatpush1.bf16.msra.mxu0 %v1172
        %1403 = vmatprep.subr.bf16.mxu0 %v1169
        %1404 = vmatpush1.bf16.msra.mxu0 %v1168
        %1405 = vmatprep.subr.bf16.mxu0 %v1165
        %1406 = vmatpush1.bf16.msra.mxu0 %v1164
        %1407 = vmatprep.subr.bf16.mxu0 %v1161
        %1408 = vmatpush1.bf16.msra.mxu0 %v1160
        %1409 = vmatprep.subr.bf16.mxu0 %v1157
        %1410 = vmatpush1.bf16.msra.mxu0 %v1156
        %1411 = vmatprep.subr.bf16.mxu0 %v1153
        %1412 = vmatpush1.bf16.msra.mxu0 %v1152
        %1413 = vmatprep.subr.bf16.mxu0 %v1213
        %1414 = vmatpush2.bf16.msra.mxu0 %v1212
        %1415 = vmatprep.subr.bf16.mxu0 %v1209
        %1416 = vmatpush2.bf16.msra.mxu0 %v1208
        %1417 = vmatprep.subr.bf16.mxu0 %v1205
        %1418 = vmatpush2.bf16.msra.mxu0 %v1204
        %1419 = vmatprep.subr.bf16.mxu0 %v1201
        %1420 = vmatpush2.bf16.msra.mxu0 %v1200
        %1421 = vmatprep.subr.bf16.mxu0 %v1197
        %1422 = vmatpush2.bf16.msra.mxu0 %v1196
        %1423 = vmatprep.subr.bf16.mxu0 %v1193
        %1424 = vmatpush2.bf16.msra.mxu0 %v1192
        %1425 = vmatprep.subr.bf16.mxu0 %v1189
        %1426 = vmatpush2.bf16.msra.mxu0 %v1188
        %1427 = vmatprep.subr.bf16.mxu0 %v1185
        %1428 = vmatpush2.bf16.msra.mxu0 %v1184
        %1429 = vmatprep.mubr.bf16.mxu0 %v691
        %1430 = vmatmul.mubr.bf16.gmra.mxu0 %v690
        %v1431 = vpop.f32.mrf.mxu0
        %v1432 = vadd.f32 %v1379, %v1431
        %v1433 = vpop.f32.mrf.mxu0
        %v1434 = vadd.f32 %v1381, %v1433
        %v1435 = vpop.f32.mrf.mxu0
        %v1436 = vadd.f32 %v1383, %v1435
        %v1437 = vpop.f32.mrf.mxu0
        %v1438 = vadd.f32 %v1385, %v1437
        %1439 = vmatprep.mubr.bf16.mxu0 %v695
        %1440 = vmatmul.mubr.bf16.gmra.mxu0 %v694
        %v1441 = vpop.f32.mrf.mxu0
        %v1442 = vadd.f32 %v1389, %v1441
        %v1443 = vpop.f32.mrf.mxu0
        %v1444 = vadd.f32 %v1391, %v1443
        %v1445 = vpop.f32.mrf.mxu0
        %v1446 = vadd.f32 %v1393, %v1445
        %v1447 = vpop.f32.mrf.mxu0
        %v1448 = vadd.f32 %v1395, %v1447
        %1449 = vdwg.mxu0
        %1450 = vmatprep.subr.bf16.mxu0 %v1119
        %1451 = vmatpush1.bf16.msra.mxu0 %v1118
        %1452 = vmatprep.subr.bf16.mxu0 %v1115
        %1453 = vmatpush1.bf16.msra.mxu0 %v1114
        %1454 = vmatprep.subr.bf16.mxu0 %v1111
        %1455 = vmatpush1.bf16.msra.mxu0 %v1110
        %1456 = vmatprep.subr.bf16.mxu0 %v1107
        %1457 = vmatpush1.bf16.msra.mxu0 %v1106
        %1458 = vmatprep.subr.bf16.mxu0 %v1103
        %1459 = vmatpush1.bf16.msra.mxu0 %v1102
        %1460 = vmatprep.subr.bf16.mxu0 %v1099
        %1461 = vmatpush1.bf16.msra.mxu0 %v1098
        %1462 = vmatprep.subr.bf16.mxu0 %v1095
        %1463 = vmatpush1.bf16.msra.mxu0 %v1094
        %1464 = vmatprep.subr.bf16.mxu0 %v1091
        %1465 = vmatpush1.bf16.msra.mxu0 %v1090
        %1466 = vmatprep.subr.bf16.mxu0 %v1151
        %1467 = vmatpush2.bf16.msra.mxu0 %v1150
        %1468 = vmatprep.subr.bf16.mxu0 %v1147
        %1469 = vmatpush2.bf16.msra.mxu0 %v1146
        %1470 = vmatprep.subr.bf16.mxu0 %v1143
        %1471 = vmatpush2.bf16.msra.mxu0 %v1142
        %1472 = vmatprep.subr.bf16.mxu0 %v1139
        %1473 = vmatpush2.bf16.msra.mxu0 %v1138
        %1474 = vmatprep.subr.bf16.mxu0 %v1135
        %1475 = vmatpush2.bf16.msra.mxu0 %v1134
        %1476 = vmatprep.subr.bf16.mxu0 %v1131
        %1477 = vmatpush2.bf16.msra.mxu0 %v1130
        %1478 = vmatprep.subr.bf16.mxu0 %v1127
        %1479 = vmatpush2.bf16.msra.mxu0 %v1126
        %1480 = vmatprep.subr.bf16.mxu0 %v1123
        %1481 = vmatpush2.bf16.msra.mxu0 %v1122
        %1482 = vmatprep.mubr.bf16.mxu0 %v689
        %1483 = vmatmul.mubr.bf16.gmra.mxu0 %v688
        %v1484 = vpop.f32.mrf.mxu0
        %v1485 = vadd.f32 0.0, %v1484
        %v1486 = vpop.f32.mrf.mxu0
        %v1487 = vadd.f32 0.0, %v1486
        %v1488 = vpop.f32.mrf.mxu0
        %v1489 = vadd.f32 0.0, %v1488
        %v1490 = vpop.f32.mrf.mxu0
        %v1491 = vadd.f32 0.0, %v1490
        %1492 = vmatprep.mubr.bf16.mxu0 %v693
        %1493 = vmatmul.mubr.bf16.gmra.mxu0 %v692
        %v1494 = vpop.f32.mrf.mxu0
        %v1495 = vadd.f32 0.0, %v1494
        %v1496 = vpop.f32.mrf.mxu0
        %v1497 = vadd.f32 0.0, %v1496
        %v1498 = vpop.f32.mrf.mxu0
        %v1499 = vadd.f32 0.0, %v1498
        %v1500 = vpop.f32.mrf.mxu0
        %v1501 = vadd.f32 0.0, %v1500
        %1502 = vdwg.mxu0
        %1503 = vmatprep.subr.bf16.mxu0 %v1183
        %1504 = vmatpush1.bf16.msra.mxu0 %v1182
        %1505 = vmatprep.subr.bf16.mxu0 %v1179
        %1506 = vmatpush1.bf16.msra.mxu0 %v1178
        %1507 = vmatprep.subr.bf16.mxu0 %v1175
        %1508 = vmatpush1.bf16.msra.mxu0 %v1174
        %1509 = vmatprep.subr.bf16.mxu0 %v1171
        %1510 = vmatpush1.bf16.msra.mxu0 %v1170
        %1511 = vmatprep.subr.bf16.mxu0 %v1167
        %1512 = vmatpush1.bf16.msra.mxu0 %v1166
        %1513 = vmatprep.subr.bf16.mxu0 %v1163
        %1514 = vmatpush1.bf16.msra.mxu0 %v1162
        %1515 = vmatprep.subr.bf16.mxu0 %v1159
        %1516 = vmatpush1.bf16.msra.mxu0 %v1158
        %1517 = vmatprep.subr.bf16.mxu0 %v1155
        %1518 = vmatpush1.bf16.msra.mxu0 %v1154
        %1519 = vmatprep.subr.bf16.mxu0 %v1215
        %1520 = vmatpush2.bf16.msra.mxu0 %v1214
        %1521 = vmatprep.subr.bf16.mxu0 %v1211
        %1522 = vmatpush2.bf16.msra.mxu0 %v1210
        %1523 = vmatprep.subr.bf16.mxu0 %v1207
        %1524 = vmatpush2.bf16.msra.mxu0 %v1206
        %1525 = vmatprep.subr.bf16.mxu0 %v1203
        %1526 = vmatpush2.bf16.msra.mxu0 %v1202
        %1527 = vmatprep.subr.bf16.mxu0 %v1199
        %1528 = vmatpush2.bf16.msra.mxu0 %v1198
        %1529 = vmatprep.subr.bf16.mxu0 %v1195
        %1530 = vmatpush2.bf16.msra.mxu0 %v1194
        %1531 = vmatprep.subr.bf16.mxu0 %v1191
        %1532 = vmatpush2.bf16.msra.mxu0 %v1190
        %1533 = vmatprep.subr.bf16.mxu0 %v1187
        %1534 = vmatpush2.bf16.msra.mxu0 %v1186
        %1535 = vmatprep.mubr.bf16.mxu0 %v691
        %1536 = vmatmul.mubr.bf16.gmra.mxu0 %v690
        %v1537 = vpop.f32.mrf.mxu0
        %v1538 = vadd.f32 %v1485, %v1537
        %v1539 = vpop.f32.mrf.mxu0
        %v1540 = vadd.f32 %v1487, %v1539
        %v1541 = vpop.f32.mrf.mxu0
        %v1542 = vadd.f32 %v1489, %v1541
        %v1543 = vpop.f32.mrf.mxu0
        %v1544 = vadd.f32 %v1491, %v1543
        %1545 = vmatprep.mubr.bf16.mxu0 %v695
        %1546 = vmatmul.mubr.bf16.gmra.mxu0 %v694
        %v1547 = vpop.f32.mrf.mxu0
        %v1548 = vadd.f32 %v1495, %v1547
        %v1549 = vpop.f32.mrf.mxu0
        %v1550 = vadd.f32 %v1497, %v1549
        %v1551 = vpop.f32.mrf.mxu0
        %v1552 = vadd.f32 %v1499, %v1551
        %v1553 = vpop.f32.mrf.mxu0
        %v1554 = vadd.f32 %v1501, %v1553
        %1555 = vdwg.mxu0
        %v1556 = vadd.f32 %v511, %v1432
        %v1557 = vadd.f32 %v515, %v1434
        %v1558 = vadd.f32 %v519, %v1538
        %v1559 = vadd.f32 %v523, %v1540
        %v1560 = vadd.f32 %v511, %v1436
        %v1561 = vadd.f32 %v515, %v1438
        %v1562 = vadd.f32 %v519, %v1542
        %v1563 = vadd.f32 %v523, %v1544
        %v1564 = vadd.f32 %v511, %v1442
        %v1565 = vadd.f32 %v515, %v1444
        %v1566 = vadd.f32 %v519, %v1548
        %v1567 = vadd.f32 %v523, %v1550
        %v1568 = vadd.f32 %v511, %v1446
        %v1569 = vadd.f32 %v515, %v1448
        %v1570 = vadd.f32 %v519, %v1552
        %v1571 = vadd.f32 %v523, %v1554
        %v1572 = vld [vmem:[#allocation2] sm:$0xff]
        %v1573 = vld [vmem:[#allocation2 + $0x8] sm:$0xff]
        %v1574 = vld [vmem:[#allocation2 + $0x10] sm:$0xff]
        %v1575 = vld [vmem:[#allocation2 + $0x18] sm:$0xff]
        %v1576 = vld [vmem:[#allocation2 + $0x20] sm:$0x11]
        %v1577 = vld [vmem:[#allocation2 + $0x28] sm:$0x11]
        %v1578 = vld [vmem:[#allocation2 + $0x30] sm:$0xff]
        %v1579 = vld [vmem:[#allocation2 + $0x38] sm:$0xff]
        %v1580 = vld [vmem:[#allocation2 + $0x40] sm:$0xff]
        %v1581 = vld [vmem:[#allocation2 + $0x48] sm:$0xff]
        %v1582 = vld [vmem:[#allocation2 + $0x50] sm:$0x11]
        %v1583 = vld [vmem:[#allocation2 + $0x58] sm:$0x11]
        %vm1584 = vsmask.f32 3328
        %vm1585 = vsmask.f32 7440
        %vm1586 = vmor %vm1584, %vm1585
        %v1588 = vshrl.u32 %v1572, 16
        %v1590 = vrot.slane %v1588, 4
        %v1591 = vshll.u32 %v1572, 16
        %v1593 = vrot.slane %v1591, 5
        %v1594 = vor.u32 %v1590, %v1593
        %v1595 = vrot.slane %v1594, 4
        %v1597 = vshll.u32 %v1574, 16
        %v1599 = vrot.slane %v1597, 5
        %v1600 = vsel %vm1586, %v1595, %v1599
        %v1602 = vshrl.u32 %v1573, 16
        %v1604 = vrot.slane %v1602, 4
        %v1605 = vshll.u32 %v1573, 16
        %v1607 = vrot.slane %v1605, 5
        %v1608 = vor.u32 %v1604, %v1607
        %v1609 = vrot.slane %v1608, 4
        %v1611 = vshll.u32 %v1575, 16
        %v1613 = vrot.slane %v1611, 5
        %v1614 = vsel %vm1586, %v1609, %v1613
        %v1615 = vshrl.u32 %v1574, 16
        %v1617 = vrot.slane %v1615, 4
        %v1618 = vor.u32 %v1617, %v1599
        %v1619 = vrot.slane %v1618, 4
        %v1621 = vshll.u32 %v1576, 16
        %v1623 = vrot.slane %v1621, 5
        %v1624 = vsel %vm1586, %v1619, %v1623
        %v1625 = vshrl.u32 %v1575, 16
        %v1627 = vrot.slane %v1625, 4
        %v1628 = vor.u32 %v1627, %v1613
        %v1629 = vrot.slane %v1628, 4
        %v1631 = vshll.u32 %v1577, 16
        %v1633 = vrot.slane %v1631, 5
        %v1634 = vsel %vm1586, %v1629, %v1633
        %v1636 = vshrl.u32 %v1578, 16
        %v1638 = vrot.slane %v1636, 4
        %v1639 = vshll.u32 %v1578, 16
        %v1641 = vrot.slane %v1639, 5
        %v1642 = vor.u32 %v1638, %v1641
        %v1643 = vrot.slane %v1642, 4
        %v1645 = vshll.u32 %v1580, 16
        %v1647 = vrot.slane %v1645, 5
        %v1648 = vsel %vm1586, %v1643, %v1647
        %v1650 = vshrl.u32 %v1579, 16
        %v1652 = vrot.slane %v1650, 4
        %v1653 = vshll.u32 %v1579, 16
        %v1655 = vrot.slane %v1653, 5
        %v1656 = vor.u32 %v1652, %v1655
        %v1657 = vrot.slane %v1656, 4
        %v1659 = vshll.u32 %v1581, 16
        %v1661 = vrot.slane %v1659, 5
        %v1662 = vsel %vm1586, %v1657, %v1661
        %v1663 = vshrl.u32 %v1580, 16
        %v1665 = vrot.slane %v1663, 4
        %v1666 = vor.u32 %v1665, %v1647
        %v1667 = vrot.slane %v1666, 4
        %v1669 = vshll.u32 %v1582, 16
        %v1671 = vrot.slane %v1669, 5
        %v1672 = vsel %vm1586, %v1667, %v1671
        %v1673 = vshrl.u32 %v1581, 16
        %v1675 = vrot.slane %v1673, 4
        %v1676 = vor.u32 %v1675, %v1661
        %v1677 = vrot.slane %v1676, 4
        %v1679 = vshll.u32 %v1583, 16
        %v1681 = vrot.slane %v1679, 5
        %v1682 = vsel %vm1586, %v1677, %v1681
        %s1683 = scalar_lea.vmem [#allocation4], 1024
        %v1684 = vld [vmem:[%s1683] sm:$0xff]
        %v1685 = vld [vmem:[%s1683 + $0x8] sm:$0xff]
        %v1686 = vld [vmem:[%s1683 + $0x10] sm:$0xff]
        %v1687 = vld [vmem:[%s1683 + $0x18] sm:$0xff]
        %v1688 = vld [vmem:[%s1683 + $0x20] sm:$0xff]
        %v1689 = vld [vmem:[%s1683 + $0x28] sm:$0xff]
        %v1690 = vld [vmem:[%s1683 + $0x30] sm:$0xff]
        %v1691 = vld [vmem:[%s1683 + $0x38] sm:$0xff]
        %v1692 = vld [vmem:[%s1683 + $0x40] sm:$0xff]
        %v1693 = vld [vmem:[%s1683 + $0x48] sm:$0xff]
        %v1694 = vld [vmem:[%s1683 + $0x50] sm:$0xff]
        %v1695 = vld [vmem:[%s1683 + $0x58] sm:$0xff]
        %v1696 = vld [vmem:[%s1683 + $0x60] sm:$0xff]
        %v1697 = vld [vmem:[%s1683 + $0x68] sm:$0xff]
        %v1698 = vld [vmem:[%s1683 + $0x70] sm:$0xff]
        %v1699 = vld [vmem:[%s1683 + $0x78] sm:$0xff]
        %v1700 = vld [vmem:[%s1683 + $0x80] sm:$0xff]
        %v1701 = vld [vmem:[%s1683 + $0x88] sm:$0xff]
        %v1702 = vld [vmem:[%s1683 + $0x90] sm:$0xff]
        %v1703 = vld [vmem:[%s1683 + $0x98] sm:$0xff]
        %v1704 = vld [vmem:[%s1683 + $0xa0] sm:$0xff]
        %v1705 = vld [vmem:[%s1683 + $0xa8] sm:$0xff]
        %v1706 = vld [vmem:[%s1683 + $0xb0] sm:$0xff]
        %v1707 = vld [vmem:[%s1683 + $0xb8] sm:$0xff]
        %v1708 = vld [vmem:[%s1683 + $0xc0] sm:$0xff]
        %v1709 = vld [vmem:[%s1683 + $0xc8] sm:$0xff]
        %v1710 = vld [vmem:[%s1683 + $0xd0] sm:$0xff]
        %v1711 = vld [vmem:[%s1683 + $0xd8] sm:$0xff]
        %v1712 = vld [vmem:[%s1683 + $0xe0] sm:$0xff]
        %v1713 = vld [vmem:[%s1683 + $0xe8] sm:$0xff]
        %v1714 = vld [vmem:[%s1683 + $0xf0] sm:$0xff]
        %v1715 = vld [vmem:[%s1683 + $0xf8] sm:$0xff]
        %v1716 = vld [vmem:[%s1683 + $0x100] sm:$0xff]
        %v1717 = vld [vmem:[%s1683 + $0x108] sm:$0xff]
        %v1718 = vld [vmem:[%s1683 + $0x110] sm:$0xff]
        %v1719 = vld [vmem:[%s1683 + $0x118] sm:$0xff]
        %v1720 = vld [vmem:[%s1683 + $0x120] sm:$0xff]
        %v1721 = vld [vmem:[%s1683 + $0x128] sm:$0xff]
        %v1722 = vld [vmem:[%s1683 + $0x130] sm:$0xff]
        %v1723 = vld [vmem:[%s1683 + $0x138] sm:$0xff]
        %v1724 = vld [vmem:[%s1683 + $0x140] sm:$0xff]
        %v1725 = vld [vmem:[%s1683 + $0x148] sm:$0xff]
        %v1726 = vld [vmem:[%s1683 + $0x150] sm:$0xff]
        %v1727 = vld [vmem:[%s1683 + $0x158] sm:$0xff]
        %v1728 = vld [vmem:[%s1683 + $0x160] sm:$0xff]
        %v1729 = vld [vmem:[%s1683 + $0x168] sm:$0xff]
        %v1730 = vld [vmem:[%s1683 + $0x170] sm:$0xff]
        %v1731 = vld [vmem:[%s1683 + $0x178] sm:$0xff]
        %v1732 = vld [vmem:[%s1683 + $0x180] sm:$0xff]
        %v1733 = vld [vmem:[%s1683 + $0x188] sm:$0xff]
        %v1734 = vld [vmem:[%s1683 + $0x190] sm:$0xff]
        %v1735 = vld [vmem:[%s1683 + $0x198] sm:$0xff]
        %v1736 = vld [vmem:[%s1683 + $0x1a0] sm:$0xff]
        %v1737 = vld [vmem:[%s1683 + $0x1a8] sm:$0xff]
        %v1738 = vld [vmem:[%s1683 + $0x1b0] sm:$0xff]
        %v1739 = vld [vmem:[%s1683 + $0x1b8] sm:$0xff]
        %v1740 = vld [vmem:[%s1683 + $0x1c0] sm:$0xff]
        %v1741 = vld [vmem:[%s1683 + $0x1c8] sm:$0xff]
        %v1742 = vld [vmem:[%s1683 + $0x1d0] sm:$0xff]
        %v1743 = vld [vmem:[%s1683 + $0x1d8] sm:$0xff]
        %v1744 = vld [vmem:[%s1683 + $0x1e0] sm:$0xff]
        %v1745 = vld [vmem:[%s1683 + $0x1e8] sm:$0xff]
        %v1746 = vld [vmem:[%s1683 + $0x1f0] sm:$0xff]
        %v1747 = vld [vmem:[%s1683 + $0x1f8] sm:$0xff]
        %v1748 = vld [vmem:[%s1683 + $0x200] sm:$0xff]
        %v1749 = vld [vmem:[%s1683 + $0x208] sm:$0xff]
        %v1750 = vld [vmem:[%s1683 + $0x210] sm:$0xff]
        %v1751 = vld [vmem:[%s1683 + $0x218] sm:$0xff]
        %v1752 = vld [vmem:[%s1683 + $0x220] sm:$0xff]
        %v1753 = vld [vmem:[%s1683 + $0x228] sm:$0xff]
        %v1754 = vld [vmem:[%s1683 + $0x230] sm:$0xff]
        %v1755 = vld [vmem:[%s1683 + $0x238] sm:$0xff]
        %v1756 = vld [vmem:[%s1683 + $0x240] sm:$0xff]
        %v1757 = vld [vmem:[%s1683 + $0x248] sm:$0xff]
        %v1758 = vld [vmem:[%s1683 + $0x250] sm:$0xff]
        %v1759 = vld [vmem:[%s1683 + $0x258] sm:$0xff]
        %v1760 = vld [vmem:[%s1683 + $0x260] sm:$0xff]
        %v1761 = vld [vmem:[%s1683 + $0x268] sm:$0xff]
        %v1762 = vld [vmem:[%s1683 + $0x270] sm:$0xff]
        %v1763 = vld [vmem:[%s1683 + $0x278] sm:$0xff]
        %v1764 = vld [vmem:[%s1683 + $0x280] sm:$0xff]
        %v1765 = vld [vmem:[%s1683 + $0x288] sm:$0xff]
        %v1766 = vld [vmem:[%s1683 + $0x290] sm:$0xff]
        %v1767 = vld [vmem:[%s1683 + $0x298] sm:$0xff]
        %v1768 = vld [vmem:[%s1683 + $0x2a0] sm:$0xff]
        %v1769 = vld [vmem:[%s1683 + $0x2a8] sm:$0xff]
        %v1770 = vld [vmem:[%s1683 + $0x2b0] sm:$0xff]
        %v1771 = vld [vmem:[%s1683 + $0x2b8] sm:$0xff]
        %v1772 = vld [vmem:[%s1683 + $0x2c0] sm:$0xff]
        %v1773 = vld [vmem:[%s1683 + $0x2c8] sm:$0xff]
        %v1774 = vld [vmem:[%s1683 + $0x2d0] sm:$0xff]
        %v1775 = vld [vmem:[%s1683 + $0x2d8] sm:$0xff]
        %v1776 = vld [vmem:[%s1683 + $0x2e0] sm:$0xff]
        %v1777 = vld [vmem:[%s1683 + $0x2e8] sm:$0xff]
        %v1778 = vld [vmem:[%s1683 + $0x2f0] sm:$0xff]
        %v1779 = vld [vmem:[%s1683 + $0x2f8] sm:$0xff]
        %v1780 = vld [vmem:[%s1683 + $0x300] sm:$0xff]
        %v1781 = vld [vmem:[%s1683 + $0x308] sm:$0xff]
        %v1782 = vld [vmem:[%s1683 + $0x310] sm:$0xff]
        %v1783 = vld [vmem:[%s1683 + $0x318] sm:$0xff]
        %v1784 = vld [vmem:[%s1683 + $0x320] sm:$0xff]
        %v1785 = vld [vmem:[%s1683 + $0x328] sm:$0xff]
        %v1786 = vld [vmem:[%s1683 + $0x330] sm:$0xff]
        %v1787 = vld [vmem:[%s1683 + $0x338] sm:$0xff]
        %v1788 = vld [vmem:[%s1683 + $0x340] sm:$0xff]
        %v1789 = vld [vmem:[%s1683 + $0x348] sm:$0xff]
        %v1790 = vld [vmem:[%s1683 + $0x350] sm:$0xff]
        %v1791 = vld [vmem:[%s1683 + $0x358] sm:$0xff]
        %v1792 = vld [vmem:[%s1683 + $0x360] sm:$0xff]
        %v1793 = vld [vmem:[%s1683 + $0x368] sm:$0xff]
        %v1794 = vld [vmem:[%s1683 + $0x370] sm:$0xff]
        %v1795 = vld [vmem:[%s1683 + $0x378] sm:$0xff]
        %v1796 = vld [vmem:[%s1683 + $0x380] sm:$0xff]
        %v1797 = vld [vmem:[%s1683 + $0x388] sm:$0xff]
        %v1798 = vld [vmem:[%s1683 + $0x390] sm:$0xff]
        %v1799 = vld [vmem:[%s1683 + $0x398] sm:$0xff]
        %v1800 = vld [vmem:[%s1683 + $0x3a0] sm:$0xff]
        %v1801 = vld [vmem:[%s1683 + $0x3a8] sm:$0xff]
        %v1802 = vld [vmem:[%s1683 + $0x3b0] sm:$0xff]
        %v1803 = vld [vmem:[%s1683 + $0x3b8] sm:$0xff]
        %v1804 = vld [vmem:[%s1683 + $0x3c0] sm:$0xff]
        %v1805 = vld [vmem:[%s1683 + $0x3c8] sm:$0xff]
        %v1806 = vld [vmem:[%s1683 + $0x3d0] sm:$0xff]
        %v1807 = vld [vmem:[%s1683 + $0x3d8] sm:$0xff]
        %v1808 = vld [vmem:[%s1683 + $0x3e0] sm:$0xff]
        %v1809 = vld [vmem:[%s1683 + $0x3e8] sm:$0xff]
        %v1810 = vld [vmem:[%s1683 + $0x3f0] sm:$0xff]
        %v1811 = vld [vmem:[%s1683 + $0x3f8] sm:$0xff]
        %v1812 = vunpack.c.l.b16 %v1600
        %v1813 = vunpack.c.h.b16 %v1600
        %v1814 = vunpack.c.l.b16 %v1614
        %v1815 = vunpack.c.h.b16 %v1614
        %v1816 = vunpack.c.l.b16 %v1624
        %v1817 = vunpack.c.h.b16 %v1624
        %v1818 = vunpack.c.l.b16 %v1634
        %v1819 = vunpack.c.h.b16 %v1634
        %v1820 = vunpack.c.l.b16 %v1648
        %v1821 = vunpack.c.h.b16 %v1648
        %v1822 = vunpack.c.l.b16 %v1662
        %v1823 = vunpack.c.h.b16 %v1662
        %v1824 = vunpack.c.l.b16 %v1672
        %v1825 = vunpack.c.h.b16 %v1672
        %v1826 = vunpack.c.l.b16 %v1682
        %v1827 = vunpack.c.h.b16 %v1682
        %v1828 = vpack.c.b16 %v1816, %v1812
        %v1829 = vpack.c.b16 %v1817, %v1813
        %v1830 = vpack.c.b16 %v1818, %v1814
        %v1831 = vpack.c.b16 %v1819, %v1815
        %v1832 = vpack.c.b16 %v1824, %v1820
        %v1833 = vpack.c.b16 %v1825, %v1821
        %v1834 = vpack.c.b16 %v1826, %v1822
        %v1835 = vpack.c.b16 %v1827, %v1823
        %v1972 = vunpack.c.l.b16 %v1684
        %v1973 = vunpack.c.h.b16 %v1684
        %v1974 = vunpack.c.l.b16 %v1685
        %v1975 = vunpack.c.h.b16 %v1685
        %v1976 = vunpack.c.l.b16 %v1686
        %v1977 = vunpack.c.h.b16 %v1686
        %v1978 = vunpack.c.l.b16 %v1687
        %v1979 = vunpack.c.h.b16 %v1687
        %v1980 = vunpack.c.l.b16 %v1688
        %v1981 = vunpack.c.h.b16 %v1688
        %v1982 = vunpack.c.l.b16 %v1689
        %v1983 = vunpack.c.h.b16 %v1689
        %v1984 = vunpack.c.l.b16 %v1690
        %v1985 = vunpack.c.h.b16 %v1690
        %v1986 = vunpack.c.l.b16 %v1691
        %v1987 = vunpack.c.h.b16 %v1691
        %v1988 = vunpack.c.l.b16 %v1692
        %v1989 = vunpack.c.h.b16 %v1692
        %v1990 = vunpack.c.l.b16 %v1693
        %v1991 = vunpack.c.h.b16 %v1693
        %v1992 = vunpack.c.l.b16 %v1694
        %v1993 = vunpack.c.h.b16 %v1694
        %v1994 = vunpack.c.l.b16 %v1695
        %v1995 = vunpack.c.h.b16 %v1695
        %v1996 = vunpack.c.l.b16 %v1696
        %v1997 = vunpack.c.h.b16 %v1696
        %v1998 = vunpack.c.l.b16 %v1697
        %v1999 = vunpack.c.h.b16 %v1697
        %v2000 = vunpack.c.l.b16 %v1698
        %v2001 = vunpack.c.h.b16 %v1698
        %v2002 = vunpack.c.l.b16 %v1699
        %v2003 = vunpack.c.h.b16 %v1699
        %v2004 = vunpack.c.l.b16 %v1700
        %v2005 = vunpack.c.h.b16 %v1700
        %v2006 = vunpack.c.l.b16 %v1701
        %v2007 = vunpack.c.h.b16 %v1701
        %v2008 = vunpack.c.l.b16 %v1702
        %v2009 = vunpack.c.h.b16 %v1702
        %v2010 = vunpack.c.l.b16 %v1703
        %v2011 = vunpack.c.h.b16 %v1703
        %v2012 = vunpack.c.l.b16 %v1704
        %v2013 = vunpack.c.h.b16 %v1704
        %v2014 = vunpack.c.l.b16 %v1705
        %v2015 = vunpack.c.h.b16 %v1705
        %v2016 = vunpack.c.l.b16 %v1706
        %v2017 = vunpack.c.h.b16 %v1706
        %v2018 = vunpack.c.l.b16 %v1707
        %v2019 = vunpack.c.h.b16 %v1707
        %v2020 = vunpack.c.l.b16 %v1708
        %v2021 = vunpack.c.h.b16 %v1708
        %v2022 = vunpack.c.l.b16 %v1709
        %v2023 = vunpack.c.h.b16 %v1709
        %v2024 = vunpack.c.l.b16 %v1710
        %v2025 = vunpack.c.h.b16 %v1710
        %v2026 = vunpack.c.l.b16 %v1711
        %v2027 = vunpack.c.h.b16 %v1711
        %v2028 = vunpack.c.l.b16 %v1712
        %v2029 = vunpack.c.h.b16 %v1712
        %v2030 = vunpack.c.l.b16 %v1713
        %v2031 = vunpack.c.h.b16 %v1713
        %v2032 = vunpack.c.l.b16 %v1714
        %v2033 = vunpack.c.h.b16 %v1714
        %v2034 = vunpack.c.l.b16 %v1715
        %v2035 = vunpack.c.h.b16 %v1715
        %v2036 = vunpack.c.l.b16 %v1716
        %v2037 = vunpack.c.h.b16 %v1716
        %v2038 = vunpack.c.l.b16 %v1717
        %v2039 = vunpack.c.h.b16 %v1717
        %v2040 = vunpack.c.l.b16 %v1718
        %v2041 = vunpack.c.h.b16 %v1718
        %v2042 = vunpack.c.l.b16 %v1719
        %v2043 = vunpack.c.h.b16 %v1719
        %v2044 = vunpack.c.l.b16 %v1720
        %v2045 = vunpack.c.h.b16 %v1720
        %v2046 = vunpack.c.l.b16 %v1721
        %v2047 = vunpack.c.h.b16 %v1721
        %v2048 = vunpack.c.l.b16 %v1722
        %v2049 = vunpack.c.h.b16 %v1722
        %v2050 = vunpack.c.l.b16 %v1723
        %v2051 = vunpack.c.h.b16 %v1723
        %v2052 = vunpack.c.l.b16 %v1724
        %v2053 = vunpack.c.h.b16 %v1724
        %v2054 = vunpack.c.l.b16 %v1725
        %v2055 = vunpack.c.h.b16 %v1725
        %v2056 = vunpack.c.l.b16 %v1726
        %v2057 = vunpack.c.h.b16 %v1726
        %v2058 = vunpack.c.l.b16 %v1727
        %v2059 = vunpack.c.h.b16 %v1727
        %v2060 = vunpack.c.l.b16 %v1728
        %v2061 = vunpack.c.h.b16 %v1728
        %v2062 = vunpack.c.l.b16 %v1729
        %v2063 = vunpack.c.h.b16 %v1729
        %v2064 = vunpack.c.l.b16 %v1730
        %v2065 = vunpack.c.h.b16 %v1730
        %v2066 = vunpack.c.l.b16 %v1731
        %v2067 = vunpack.c.h.b16 %v1731
        %v2068 = vunpack.c.l.b16 %v1732
        %v2069 = vunpack.c.h.b16 %v1732
        %v2070 = vunpack.c.l.b16 %v1733
        %v2071 = vunpack.c.h.b16 %v1733
        %v2072 = vunpack.c.l.b16 %v1734
        %v2073 = vunpack.c.h.b16 %v1734
        %v2074 = vunpack.c.l.b16 %v1735
        %v2075 = vunpack.c.h.b16 %v1735
        %v2076 = vunpack.c.l.b16 %v1736
        %v2077 = vunpack.c.h.b16 %v1736
        %v2078 = vunpack.c.l.b16 %v1737
        %v2079 = vunpack.c.h.b16 %v1737
        %v2080 = vunpack.c.l.b16 %v1738
        %v2081 = vunpack.c.h.b16 %v1738
        %v2082 = vunpack.c.l.b16 %v1739
        %v2083 = vunpack.c.h.b16 %v1739
        %v2084 = vunpack.c.l.b16 %v1740
        %v2085 = vunpack.c.h.b16 %v1740
        %v2086 = vunpack.c.l.b16 %v1741
        %v2087 = vunpack.c.h.b16 %v1741
        %v2088 = vunpack.c.l.b16 %v1742
        %v2089 = vunpack.c.h.b16 %v1742
        %v2090 = vunpack.c.l.b16 %v1743
        %v2091 = vunpack.c.h.b16 %v1743
        %v2092 = vunpack.c.l.b16 %v1744
        %v2093 = vunpack.c.h.b16 %v1744
        %v2094 = vunpack.c.l.b16 %v1745
        %v2095 = vunpack.c.h.b16 %v1745
        %v2096 = vunpack.c.l.b16 %v1746
        %v2097 = vunpack.c.h.b16 %v1746
        %v2098 = vunpack.c.l.b16 %v1747
        %v2099 = vunpack.c.h.b16 %v1747
        %v2100 = vunpack.c.l.b16 %v1748
        %v2101 = vunpack.c.h.b16 %v1748
        %v2102 = vunpack.c.l.b16 %v1749
        %v2103 = vunpack.c.h.b16 %v1749
        %v2104 = vunpack.c.l.b16 %v1750
        %v2105 = vunpack.c.h.b16 %v1750
        %v2106 = vunpack.c.l.b16 %v1751
        %v2107 = vunpack.c.h.b16 %v1751
        %v2108 = vunpack.c.l.b16 %v1752
        %v2109 = vunpack.c.h.b16 %v1752
        %v2110 = vunpack.c.l.b16 %v1753
        %v2111 = vunpack.c.h.b16 %v1753
        %v2112 = vunpack.c.l.b16 %v1754
        %v2113 = vunpack.c.h.b16 %v1754
        %v2114 = vunpack.c.l.b16 %v1755
        %v2115 = vunpack.c.h.b16 %v1755
        %v2116 = vunpack.c.l.b16 %v1756
        %v2117 = vunpack.c.h.b16 %v1756
        %v2118 = vunpack.c.l.b16 %v1757
        %v2119 = vunpack.c.h.b16 %v1757
        %v2120 = vunpack.c.l.b16 %v1758
        %v2121 = vunpack.c.h.b16 %v1758
        %v2122 = vunpack.c.l.b16 %v1759
        %v2123 = vunpack.c.h.b16 %v1759
        %v2124 = vunpack.c.l.b16 %v1760
        %v2125 = vunpack.c.h.b16 %v1760
        %v2126 = vunpack.c.l.b16 %v1761
        %v2127 = vunpack.c.h.b16 %v1761
        %v2128 = vunpack.c.l.b16 %v1762
        %v2129 = vunpack.c.h.b16 %v1762
        %v2130 = vunpack.c.l.b16 %v1763
        %v2131 = vunpack.c.h.b16 %v1763
        %v2132 = vunpack.c.l.b16 %v1764
        %v2133 = vunpack.c.h.b16 %v1764
        %v2134 = vunpack.c.l.b16 %v1765
        %v2135 = vunpack.c.h.b16 %v1765
        %v2136 = vunpack.c.l.b16 %v1766
        %v2137 = vunpack.c.h.b16 %v1766
        %v2138 = vunpack.c.l.b16 %v1767
        %v2139 = vunpack.c.h.b16 %v1767
        %v2140 = vunpack.c.l.b16 %v1768
        %v2141 = vunpack.c.h.b16 %v1768
        %v2142 = vunpack.c.l.b16 %v1769
        %v2143 = vunpack.c.h.b16 %v1769
        %v2144 = vunpack.c.l.b16 %v1770
        %v2145 = vunpack.c.h.b16 %v1770
        %v2146 = vunpack.c.l.b16 %v1771
        %v2147 = vunpack.c.h.b16 %v1771
        %v2148 = vunpack.c.l.b16 %v1772
        %v2149 = vunpack.c.h.b16 %v1772
        %v2150 = vunpack.c.l.b16 %v1773
        %v2151 = vunpack.c.h.b16 %v1773
        %v2152 = vunpack.c.l.b16 %v1774
        %v2153 = vunpack.c.h.b16 %v1774
        %v2154 = vunpack.c.l.b16 %v1775
        %v2155 = vunpack.c.h.b16 %v1775
        %v2156 = vunpack.c.l.b16 %v1776
        %v2157 = vunpack.c.h.b16 %v1776
        %v2158 = vunpack.c.l.b16 %v1777
        %v2159 = vunpack.c.h.b16 %v1777
        %v2160 = vunpack.c.l.b16 %v1778
        %v2161 = vunpack.c.h.b16 %v1778
        %v2162 = vunpack.c.l.b16 %v1779
        %v2163 = vunpack.c.h.b16 %v1779
        %v2164 = vunpack.c.l.b16 %v1780
        %v2165 = vunpack.c.h.b16 %v1780
        %v2166 = vunpack.c.l.b16 %v1781
        %v2167 = vunpack.c.h.b16 %v1781
        %v2168 = vunpack.c.l.b16 %v1782
        %v2169 = vunpack.c.h.b16 %v1782
        %v2170 = vunpack.c.l.b16 %v1783
        %v2171 = vunpack.c.h.b16 %v1783
        %v2172 = vunpack.c.l.b16 %v1784
        %v2173 = vunpack.c.h.b16 %v1784
        %v2174 = vunpack.c.l.b16 %v1785
        %v2175 = vunpack.c.h.b16 %v1785
        %v2176 = vunpack.c.l.b16 %v1786
        %v2177 = vunpack.c.h.b16 %v1786
        %v2178 = vunpack.c.l.b16 %v1787
        %v2179 = vunpack.c.h.b16 %v1787
        %v2180 = vunpack.c.l.b16 %v1788
        %v2181 = vunpack.c.h.b16 %v1788
        %v2182 = vunpack.c.l.b16 %v1789
        %v2183 = vunpack.c.h.b16 %v1789
        %v2184 = vunpack.c.l.b16 %v1790
        %v2185 = vunpack.c.h.b16 %v1790
        %v2186 = vunpack.c.l.b16 %v1791
        %v2187 = vunpack.c.h.b16 %v1791
        %v2188 = vunpack.c.l.b16 %v1792
        %v2189 = vunpack.c.h.b16 %v1792
        %v2190 = vunpack.c.l.b16 %v1793
        %v2191 = vunpack.c.h.b16 %v1793
        %v2192 = vunpack.c.l.b16 %v1794
        %v2193 = vunpack.c.h.b16 %v1794
        %v2194 = vunpack.c.l.b16 %v1795
        %v2195 = vunpack.c.h.b16 %v1795
        %v2196 = vunpack.c.l.b16 %v1796
        %v2197 = vunpack.c.h.b16 %v1796
        %v2198 = vunpack.c.l.b16 %v1797
        %v2199 = vunpack.c.h.b16 %v1797
        %v2200 = vunpack.c.l.b16 %v1798
        %v2201 = vunpack.c.h.b16 %v1798
        %v2202 = vunpack.c.l.b16 %v1799
        %v2203 = vunpack.c.h.b16 %v1799
        %v2204 = vunpack.c.l.b16 %v1800
        %v2205 = vunpack.c.h.b16 %v1800
        %v2206 = vunpack.c.l.b16 %v1801
        %v2207 = vunpack.c.h.b16 %v1801
        %v2208 = vunpack.c.l.b16 %v1802
        %v2209 = vunpack.c.h.b16 %v1802
        %v2210 = vunpack.c.l.b16 %v1803
        %v2211 = vunpack.c.h.b16 %v1803
        %v2212 = vunpack.c.l.b16 %v1804
        %v2213 = vunpack.c.h.b16 %v1804
        %v2214 = vunpack.c.l.b16 %v1805
        %v2215 = vunpack.c.h.b16 %v1805
        %v2216 = vunpack.c.l.b16 %v1806
        %v2217 = vunpack.c.h.b16 %v1806
        %v2218 = vunpack.c.l.b16 %v1807
        %v2219 = vunpack.c.h.b16 %v1807
        %v2220 = vunpack.c.l.b16 %v1808
        %v2221 = vunpack.c.h.b16 %v1808
        %v2222 = vunpack.c.l.b16 %v1809
        %v2223 = vunpack.c.h.b16 %v1809
        %v2224 = vunpack.c.l.b16 %v1810
        %v2225 = vunpack.c.h.b16 %v1810
        %v2226 = vunpack.c.l.b16 %v1811
        %v2227 = vunpack.c.h.b16 %v1811
        %v2228 = vpack.c.b16 %v1976, %v1972
        %v2229 = vpack.c.b16 %v1977, %v1973
        %v2230 = vpack.c.b16 %v1978, %v1974
        %v2231 = vpack.c.b16 %v1979, %v1975
        %v2232 = vpack.c.b16 %v1984, %v1980
        %v2233 = vpack.c.b16 %v1985, %v1981
        %v2234 = vpack.c.b16 %v1986, %v1982
        %v2235 = vpack.c.b16 %v1987, %v1983
        %v2236 = vpack.c.b16 %v1992, %v1988
        %v2237 = vpack.c.b16 %v1993, %v1989
        %v2238 = vpack.c.b16 %v1994, %v1990
        %v2239 = vpack.c.b16 %v1995, %v1991
        %v2240 = vpack.c.b16 %v2000, %v1996
        %v2241 = vpack.c.b16 %v2001, %v1997
        %v2242 = vpack.c.b16 %v2002, %v1998
        %v2243 = vpack.c.b16 %v2003, %v1999
        %v2244 = vpack.c.b16 %v2008, %v2004
        %v2245 = vpack.c.b16 %v2009, %v2005
        %v2246 = vpack.c.b16 %v2010, %v2006
        %v2247 = vpack.c.b16 %v2011, %v2007
        %v2248 = vpack.c.b16 %v2016, %v2012
        %v2249 = vpack.c.b16 %v2017, %v2013
        %v2250 = vpack.c.b16 %v2018, %v2014
        %v2251 = vpack.c.b16 %v2019, %v2015
        %v2252 = vpack.c.b16 %v2024, %v2020
        %v2253 = vpack.c.b16 %v2025, %v2021
        %v2254 = vpack.c.b16 %v2026, %v2022
        %v2255 = vpack.c.b16 %v2027, %v2023
        %v2256 = vpack.c.b16 %v2032, %v2028
        %v2257 = vpack.c.b16 %v2033, %v2029
        %v2258 = vpack.c.b16 %v2034, %v2030
        %v2259 = vpack.c.b16 %v2035, %v2031
        %v2260 = vpack.c.b16 %v2040, %v2036
        %v2261 = vpack.c.b16 %v2041, %v2037
        %v2262 = vpack.c.b16 %v2042, %v2038
        %v2263 = vpack.c.b16 %v2043, %v2039
        %v2264 = vpack.c.b16 %v2048, %v2044
        %v2265 = vpack.c.b16 %v2049, %v2045
        %v2266 = vpack.c.b16 %v2050, %v2046
        %v2267 = vpack.c.b16 %v2051, %v2047
        %v2268 = vpack.c.b16 %v2056, %v2052
        %v2269 = vpack.c.b16 %v2057, %v2053
        %v2270 = vpack.c.b16 %v2058, %v2054
        %v2271 = vpack.c.b16 %v2059, %v2055
        %v2272 = vpack.c.b16 %v2064, %v2060
        %v2273 = vpack.c.b16 %v2065, %v2061
        %v2274 = vpack.c.b16 %v2066, %v2062
        %v2275 = vpack.c.b16 %v2067, %v2063
        %v2276 = vpack.c.b16 %v2072, %v2068
        %v2277 = vpack.c.b16 %v2073, %v2069
        %v2278 = vpack.c.b16 %v2074, %v2070
        %v2279 = vpack.c.b16 %v2075, %v2071
        %v2280 = vpack.c.b16 %v2080, %v2076
        %v2281 = vpack.c.b16 %v2081, %v2077
        %v2282 = vpack.c.b16 %v2082, %v2078
        %v2283 = vpack.c.b16 %v2083, %v2079
        %v2284 = vpack.c.b16 %v2088, %v2084
        %v2285 = vpack.c.b16 %v2089, %v2085
        %v2286 = vpack.c.b16 %v2090, %v2086
        %v2287 = vpack.c.b16 %v2091, %v2087
        %v2288 = vpack.c.b16 %v2096, %v2092
        %v2289 = vpack.c.b16 %v2097, %v2093
        %v2290 = vpack.c.b16 %v2098, %v2094
        %v2291 = vpack.c.b16 %v2099, %v2095
        %v2292 = vpack.c.b16 %v2104, %v2100
        %v2293 = vpack.c.b16 %v2105, %v2101
        %v2294 = vpack.c.b16 %v2106, %v2102
        %v2295 = vpack.c.b16 %v2107, %v2103
        %v2296 = vpack.c.b16 %v2112, %v2108
        %v2297 = vpack.c.b16 %v2113, %v2109
        %v2298 = vpack.c.b16 %v2114, %v2110
        %v2299 = vpack.c.b16 %v2115, %v2111
        %v2300 = vpack.c.b16 %v2120, %v2116
        %v2301 = vpack.c.b16 %v2121, %v2117
        %v2302 = vpack.c.b16 %v2122, %v2118
        %v2303 = vpack.c.b16 %v2123, %v2119
        %v2304 = vpack.c.b16 %v2128, %v2124
        %v2305 = vpack.c.b16 %v2129, %v2125
        %v2306 = vpack.c.b16 %v2130, %v2126
        %v2307 = vpack.c.b16 %v2131, %v2127
        %v2308 = vpack.c.b16 %v2136, %v2132
        %v2309 = vpack.c.b16 %v2137, %v2133
        %v2310 = vpack.c.b16 %v2138, %v2134
        %v2311 = vpack.c.b16 %v2139, %v2135
        %v2312 = vpack.c.b16 %v2144, %v2140
        %v2313 = vpack.c.b16 %v2145, %v2141
        %v2314 = vpack.c.b16 %v2146, %v2142
        %v2315 = vpack.c.b16 %v2147, %v2143
        %v2316 = vpack.c.b16 %v2152, %v2148
        %v2317 = vpack.c.b16 %v2153, %v2149
        %v2318 = vpack.c.b16 %v2154, %v2150
        %v2319 = vpack.c.b16 %v2155, %v2151
        %v2320 = vpack.c.b16 %v2160, %v2156
        %v2321 = vpack.c.b16 %v2161, %v2157
        %v2322 = vpack.c.b16 %v2162, %v2158
        %v2323 = vpack.c.b16 %v2163, %v2159
        %v2324 = vpack.c.b16 %v2168, %v2164
        %v2325 = vpack.c.b16 %v2169, %v2165
        %v2326 = vpack.c.b16 %v2170, %v2166
        %v2327 = vpack.c.b16 %v2171, %v2167
        %v2328 = vpack.c.b16 %v2176, %v2172
        %v2329 = vpack.c.b16 %v2177, %v2173
        %v2330 = vpack.c.b16 %v2178, %v2174
        %v2331 = vpack.c.b16 %v2179, %v2175
        %v2332 = vpack.c.b16 %v2184, %v2180
        %v2333 = vpack.c.b16 %v2185, %v2181
        %v2334 = vpack.c.b16 %v2186, %v2182
        %v2335 = vpack.c.b16 %v2187, %v2183
        %v2336 = vpack.c.b16 %v2192, %v2188
        %v2337 = vpack.c.b16 %v2193, %v2189
        %v2338 = vpack.c.b16 %v2194, %v2190
        %v2339 = vpack.c.b16 %v2195, %v2191
        %v2340 = vpack.c.b16 %v2200, %v2196
        %v2341 = vpack.c.b16 %v2201, %v2197
        %v2342 = vpack.c.b16 %v2202, %v2198
        %v2343 = vpack.c.b16 %v2203, %v2199
        %v2344 = vpack.c.b16 %v2208, %v2204
        %v2345 = vpack.c.b16 %v2209, %v2205
        %v2346 = vpack.c.b16 %v2210, %v2206
        %v2347 = vpack.c.b16 %v2211, %v2207
        %v2348 = vpack.c.b16 %v2216, %v2212
        %v2349 = vpack.c.b16 %v2217, %v2213
        %v2350 = vpack.c.b16 %v2218, %v2214
        %v2351 = vpack.c.b16 %v2219, %v2215
        %v2352 = vpack.c.b16 %v2224, %v2220
        %v2353 = vpack.c.b16 %v2225, %v2221
        %v2354 = vpack.c.b16 %v2226, %v2222
        %v2355 = vpack.c.b16 %v2227, %v2223
        %2484 = vmatprep.subr.bf16.mxu0 %v2257
        %2485 = vmatpush1.bf16.msra.mxu0 %v2256
        %2486 = vmatprep.subr.bf16.mxu0 %v2253
        %2487 = vmatpush1.bf16.msra.mxu0 %v2252
        %2488 = vmatprep.subr.bf16.mxu0 %v2249
        %2489 = vmatpush1.bf16.msra.mxu0 %v2248
        %2490 = vmatprep.subr.bf16.mxu0 %v2245
        %2491 = vmatpush1.bf16.msra.mxu0 %v2244
        %2492 = vmatprep.subr.bf16.mxu0 %v2241
        %2493 = vmatpush1.bf16.msra.mxu0 %v2240
        %2494 = vmatprep.subr.bf16.mxu0 %v2237
        %2495 = vmatpush1.bf16.msra.mxu0 %v2236
        %2496 = vmatprep.subr.bf16.mxu0 %v2233
        %2497 = vmatpush1.bf16.msra.mxu0 %v2232
        %2498 = vmatprep.subr.bf16.mxu0 %v2229
        %2499 = vmatpush1.bf16.msra.mxu0 %v2228
        %2500 = vmatprep.subr.bf16.mxu0 %v2289
        %2501 = vmatpush2.bf16.msra.mxu0 %v2288
        %2502 = vmatprep.subr.bf16.mxu0 %v2285
        %2503 = vmatpush2.bf16.msra.mxu0 %v2284
        %2504 = vmatprep.subr.bf16.mxu0 %v2281
        %2505 = vmatpush2.bf16.msra.mxu0 %v2280
        %2506 = vmatprep.subr.bf16.mxu0 %v2277
        %2507 = vmatpush2.bf16.msra.mxu0 %v2276
        %2508 = vmatprep.subr.bf16.mxu0 %v2273
        %2509 = vmatpush2.bf16.msra.mxu0 %v2272
        %2510 = vmatprep.subr.bf16.mxu0 %v2269
        %2511 = vmatpush2.bf16.msra.mxu0 %v2268
        %2512 = vmatprep.subr.bf16.mxu0 %v2265
        %2513 = vmatpush2.bf16.msra.mxu0 %v2264
        %2514 = vmatprep.subr.bf16.mxu0 %v2261
        %2515 = vmatpush2.bf16.msra.mxu0 %v2260
        %2516 = vmatprep.mubr.bf16.mxu0 %v1829
        %2517 = vmatmul.mubr.bf16.gmra.mxu0 %v1828
        %v2518 = vpop.f32.mrf.mxu0
        %v2519 = vadd.f32 0.0, %v2518
        %v2520 = vpop.f32.mrf.mxu0
        %v2521 = vadd.f32 0.0, %v2520
        %v2522 = vpop.f32.mrf.mxu0
        %v2523 = vadd.f32 0.0, %v2522
        %v2524 = vpop.f32.mrf.mxu0
        %v2525 = vadd.f32 0.0, %v2524
        %2526 = vmatprep.mubr.bf16.mxu0 %v1833
        %2527 = vmatmul.mubr.bf16.gmra.mxu0 %v1832
        %v2528 = vpop.f32.mrf.mxu0
        %v2529 = vadd.f32 0.0, %v2528
        %v2530 = vpop.f32.mrf.mxu0
        %v2531 = vadd.f32 0.0, %v2530
        %v2532 = vpop.f32.mrf.mxu0
        %v2533 = vadd.f32 0.0, %v2532
        %v2534 = vpop.f32.mrf.mxu0
        %v2535 = vadd.f32 0.0, %v2534
        %2536 = vdwg.mxu0
        %2537 = vmatprep.subr.bf16.mxu0 %v2321
        %2538 = vmatpush1.bf16.msra.mxu0 %v2320
        %2539 = vmatprep.subr.bf16.mxu0 %v2317
        %2540 = vmatpush1.bf16.msra.mxu0 %v2316
        %2541 = vmatprep.subr.bf16.mxu0 %v2313
        %2542 = vmatpush1.bf16.msra.mxu0 %v2312
        %2543 = vmatprep.subr.bf16.mxu0 %v2309
        %2544 = vmatpush1.bf16.msra.mxu0 %v2308
        %2545 = vmatprep.subr.bf16.mxu0 %v2305
        %2546 = vmatpush1.bf16.msra.mxu0 %v2304
        %2547 = vmatprep.subr.bf16.mxu0 %v2301
        %2548 = vmatpush1.bf16.msra.mxu0 %v2300
        %2549 = vmatprep.subr.bf16.mxu0 %v2297
        %2550 = vmatpush1.bf16.msra.mxu0 %v2296
        %2551 = vmatprep.subr.bf16.mxu0 %v2293
        %2552 = vmatpush1.bf16.msra.mxu0 %v2292
        %2553 = vmatprep.subr.bf16.mxu0 %v2353
        %2554 = vmatpush2.bf16.msra.mxu0 %v2352
        %2555 = vmatprep.subr.bf16.mxu0 %v2349
        %2556 = vmatpush2.bf16.msra.mxu0 %v2348
        %2557 = vmatprep.subr.bf16.mxu0 %v2345
        %2558 = vmatpush2.bf16.msra.mxu0 %v2344
        %2559 = vmatprep.subr.bf16.mxu0 %v2341
        %2560 = vmatpush2.bf16.msra.mxu0 %v2340
        %2561 = vmatprep.subr.bf16.mxu0 %v2337
        %2562 = vmatpush2.bf16.msra.mxu0 %v2336
        %2563 = vmatprep.subr.bf16.mxu0 %v2333
        %2564 = vmatpush2.bf16.msra.mxu0 %v2332
        %2565 = vmatprep.subr.bf16.mxu0 %v2329
        %2566 = vmatpush2.bf16.msra.mxu0 %v2328
        %2567 = vmatprep.subr.bf16.mxu0 %v2325
        %2568 = vmatpush2.bf16.msra.mxu0 %v2324
        %2569 = vmatprep.mubr.bf16.mxu0 %v1831
        %2570 = vmatmul.mubr.bf16.gmra.mxu0 %v1830
        %v2571 = vpop.f32.mrf.mxu0
        %v2572 = vadd.f32 %v2519, %v2571
        %v2573 = vpop.f32.mrf.mxu0
        %v2574 = vadd.f32 %v2521, %v2573
        %v2575 = vpop.f32.mrf.mxu0
        %v2576 = vadd.f32 %v2523, %v2575
        %v2577 = vpop.f32.mrf.mxu0
        %v2578 = vadd.f32 %v2525, %v2577
        %2579 = vmatprep.mubr.bf16.mxu0 %v1835
        %2580 = vmatmul.mubr.bf16.gmra.mxu0 %v1834
        %v2581 = vpop.f32.mrf.mxu0
        %v2582 = vadd.f32 %v2529, %v2581
        %v2583 = vpop.f32.mrf.mxu0
        %v2584 = vadd.f32 %v2531, %v2583
        %v2585 = vpop.f32.mrf.mxu0
        %v2586 = vadd.f32 %v2533, %v2585
        %v2587 = vpop.f32.mrf.mxu0
        %v2588 = vadd.f32 %v2535, %v2587
        %2589 = vdwg.mxu0
        %2590 = vmatprep.subr.bf16.mxu0 %v2259
        %2591 = vmatpush1.bf16.msra.mxu0 %v2258
        %2592 = vmatprep.subr.bf16.mxu0 %v2255
        %2593 = vmatpush1.bf16.msra.mxu0 %v2254
        %2594 = vmatprep.subr.bf16.mxu0 %v2251
        %2595 = vmatpush1.bf16.msra.mxu0 %v2250
        %2596 = vmatprep.subr.bf16.mxu0 %v2247
        %2597 = vmatpush1.bf16.msra.mxu0 %v2246
        %2598 = vmatprep.subr.bf16.mxu0 %v2243
        %2599 = vmatpush1.bf16.msra.mxu0 %v2242
        %2600 = vmatprep.subr.bf16.mxu0 %v2239
        %2601 = vmatpush1.bf16.msra.mxu0 %v2238
        %2602 = vmatprep.subr.bf16.mxu0 %v2235
        %2603 = vmatpush1.bf16.msra.mxu0 %v2234
        %2604 = vmatprep.subr.bf16.mxu0 %v2231
        %2605 = vmatpush1.bf16.msra.mxu0 %v2230
        %2606 = vmatprep.subr.bf16.mxu0 %v2291
        %2607 = vmatpush2.bf16.msra.mxu0 %v2290
        %2608 = vmatprep.subr.bf16.mxu0 %v2287
        %2609 = vmatpush2.bf16.msra.mxu0 %v2286
        %2610 = vmatprep.subr.bf16.mxu0 %v2283
        %2611 = vmatpush2.bf16.msra.mxu0 %v2282
        %2612 = vmatprep.subr.bf16.mxu0 %v2279
        %2613 = vmatpush2.bf16.msra.mxu0 %v2278
        %2614 = vmatprep.subr.bf16.mxu0 %v2275
        %2615 = vmatpush2.bf16.msra.mxu0 %v2274
        %2616 = vmatprep.subr.bf16.mxu0 %v2271
        %2617 = vmatpush2.bf16.msra.mxu0 %v2270
        %2618 = vmatprep.subr.bf16.mxu0 %v2267
        %2619 = vmatpush2.bf16.msra.mxu0 %v2266
        %2620 = vmatprep.subr.bf16.mxu0 %v2263
        %2621 = vmatpush2.bf16.msra.mxu0 %v2262
        %2622 = vmatprep.mubr.bf16.mxu0 %v1829
        %2623 = vmatmul.mubr.bf16.gmra.mxu0 %v1828
        %v2624 = vpop.f32.mrf.mxu0
        %v2625 = vadd.f32 0.0, %v2624
        %v2626 = vpop.f32.mrf.mxu0
        %v2627 = vadd.f32 0.0, %v2626
        %v2628 = vpop.f32.mrf.mxu0
        %v2629 = vadd.f32 0.0, %v2628
        %v2630 = vpop.f32.mrf.mxu0
        %v2631 = vadd.f32 0.0, %v2630
        %2632 = vmatprep.mubr.bf16.mxu0 %v1833
        %2633 = vmatmul.mubr.bf16.gmra.mxu0 %v1832
        %v2634 = vpop.f32.mrf.mxu0
        %v2635 = vadd.f32 0.0, %v2634
        %v2636 = vpop.f32.mrf.mxu0
        %v2637 = vadd.f32 0.0, %v2636
        %v2638 = vpop.f32.mrf.mxu0
        %v2639 = vadd.f32 0.0, %v2638
        %v2640 = vpop.f32.mrf.mxu0
        %v2641 = vadd.f32 0.0, %v2640
        %2642 = vdwg.mxu0
        %2643 = vmatprep.subr.bf16.mxu0 %v2323
        %2644 = vmatpush1.bf16.msra.mxu0 %v2322
        %2645 = vmatprep.subr.bf16.mxu0 %v2319
        %2646 = vmatpush1.bf16.msra.mxu0 %v2318
        %2647 = vmatprep.subr.bf16.mxu0 %v2315
        %2648 = vmatpush1.bf16.msra.mxu0 %v2314
        %2649 = vmatprep.subr.bf16.mxu0 %v2311
        %2650 = vmatpush1.bf16.msra.mxu0 %v2310
        %2651 = vmatprep.subr.bf16.mxu0 %v2307
        %2652 = vmatpush1.bf16.msra.mxu0 %v2306
        %2653 = vmatprep.subr.bf16.mxu0 %v2303
        %2654 = vmatpush1.bf16.msra.mxu0 %v2302
        %2655 = vmatprep.subr.bf16.mxu0 %v2299
        %2656 = vmatpush1.bf16.msra.mxu0 %v2298
        %2657 = vmatprep.subr.bf16.mxu0 %v2295
        %2658 = vmatpush1.bf16.msra.mxu0 %v2294
        %2659 = vmatprep.subr.bf16.mxu0 %v2355
        %2660 = vmatpush2.bf16.msra.mxu0 %v2354
        %2661 = vmatprep.subr.bf16.mxu0 %v2351
        %2662 = vmatpush2.bf16.msra.mxu0 %v2350
        %2663 = vmatprep.subr.bf16.mxu0 %v2347
        %2664 = vmatpush2.bf16.msra.mxu0 %v2346
        %2665 = vmatprep.subr.bf16.mxu0 %v2343
        %2666 = vmatpush2.bf16.msra.mxu0 %v2342
        %2667 = vmatprep.subr.bf16.mxu0 %v2339
        %2668 = vmatpush2.bf16.msra.mxu0 %v2338
        %2669 = vmatprep.subr.bf16.mxu0 %v2335
        %2670 = vmatpush2.bf16.msra.mxu0 %v2334
        %2671 = vmatprep.subr.bf16.mxu0 %v2331
        %2672 = vmatpush2.bf16.msra.mxu0 %v2330
        %2673 = vmatprep.subr.bf16.mxu0 %v2327
        %2674 = vmatpush2.bf16.msra.mxu0 %v2326
        %2675 = vmatprep.mubr.bf16.mxu0 %v1831
        %2676 = vmatmul.mubr.bf16.gmra.mxu0 %v1830
        %v2677 = vpop.f32.mrf.mxu0
        %v2678 = vadd.f32 %v2625, %v2677
        %v2679 = vpop.f32.mrf.mxu0
        %v2680 = vadd.f32 %v2627, %v2679
        %v2681 = vpop.f32.mrf.mxu0
        %v2682 = vadd.f32 %v2629, %v2681
        %v2683 = vpop.f32.mrf.mxu0
        %v2684 = vadd.f32 %v2631, %v2683
        %2685 = vmatprep.mubr.bf16.mxu0 %v1835
        %2686 = vmatmul.mubr.bf16.gmra.mxu0 %v1834
        %v2687 = vpop.f32.mrf.mxu0
        %v2688 = vadd.f32 %v2635, %v2687
        %v2689 = vpop.f32.mrf.mxu0
        %v2690 = vadd.f32 %v2637, %v2689
        %v2691 = vpop.f32.mrf.mxu0
        %v2692 = vadd.f32 %v2639, %v2691
        %v2693 = vpop.f32.mrf.mxu0
        %v2694 = vadd.f32 %v2641, %v2693
        %2695 = vdwg.mxu0
        %v2696 = vadd.f32 %v1556, %v2572
        %v2697 = vadd.f32 %v1557, %v2574
        %v2698 = vadd.f32 %v1558, %v2678
        %v2699 = vadd.f32 %v1559, %v2680
        %v2700 = vadd.f32 %v1560, %v2576
        %v2701 = vadd.f32 %v1561, %v2578
        %v2702 = vadd.f32 %v1562, %v2682
        %v2703 = vadd.f32 %v1563, %v2684
        %v2704 = vadd.f32 %v1564, %v2582
        %v2705 = vadd.f32 %v1565, %v2584
        %v2706 = vadd.f32 %v1566, %v2688
        %v2707 = vadd.f32 %v1567, %v2690
        %v2708 = vadd.f32 %v1568, %v2586
        %v2709 = vadd.f32 %v1569, %v2588
        %v2710 = vadd.f32 %v1570, %v2692
        %v2711 = vadd.f32 %v1571, %v2694
        %v2712 = vld [vmem:[#allocation2] sm:$0xee]
        %v2713 = vld [vmem:[#allocation2 + $0x8] sm:$0xee]
        %v2714 = vld [vmem:[#allocation2 + $0x30] sm:$0xee]
        %v2715 = vld [vmem:[#allocation2 + $0x38] sm:$0xee]
        %vm2728 = vcmask 1042432
        %vm2729 = vcmask 1046532
        %vm2730 = vmor %vm2728, %vm2729
        %v2731 = vrot.slane %v2712, 5
        %v2732 = vrot.slane %v2731, 4
        %v2733 = vrot.slane %v1574, 5
        %v2734 = vsel %vm2730, %v2732, %v2733
        %v2735 = vrot.slane %v2713, 5
        %v2736 = vrot.slane %v2735, 4
        %v2737 = vrot.slane %v1575, 5
        %v2738 = vsel %vm2730, %v2736, %v2737
        %v2739 = vrot.slane %v2733, 4
        %v2740 = vrot.slane %v1576, 5
        %v2741 = vsel %vm2730, %v2739, %v2740
        %v2742 = vrot.slane %v2737, 4
        %v2743 = vrot.slane %v1577, 5
        %v2744 = vsel %vm2730, %v2742, %v2743
        %v2745 = vrot.slane %v2714, 5
        %v2746 = vrot.slane %v2745, 4
        %v2747 = vrot.slane %v1580, 5
        %v2748 = vsel %vm2730, %v2746, %v2747
        %v2749 = vrot.slane %v2715, 5
        %v2750 = vrot.slane %v2749, 4
        %v2751 = vrot.slane %v1581, 5
        %v2752 = vsel %vm2730, %v2750, %v2751
        %v2753 = vrot.slane %v2747, 4
        %v2754 = vrot.slane %v1582, 5
        %v2755 = vsel %vm2730, %v2753, %v2754
        %v2756 = vrot.slane %v2751, 4
        %v2757 = vrot.slane %v1583, 5
        %v2758 = vsel %vm2730, %v2756, %v2757
        %s2759 = scalar_lea.vmem [#allocation4], 2048
        %v2760 = vld [vmem:[%s2759] sm:$0xff]
        %v2761 = vld [vmem:[%s2759 + $0x8] sm:$0xff]
        %v2762 = vld [vmem:[%s2759 + $0x10] sm:$0xff]
        %v2763 = vld [vmem:[%s2759 + $0x18] sm:$0xff]
        %v2764 = vld [vmem:[%s2759 + $0x20] sm:$0xff]
        %v2765 = vld [vmem:[%s2759 + $0x28] sm:$0xff]
        %v2766 = vld [vmem:[%s2759 + $0x30] sm:$0xff]
        %v2767 = vld [vmem:[%s2759 + $0x38] sm:$0xff]
        %v2768 = vld [vmem:[%s2759 + $0x40] sm:$0xff]
        %v2769 = vld [vmem:[%s2759 + $0x48] sm:$0xff]
        %v2770 = vld [vmem:[%s2759 + $0x50] sm:$0xff]
        %v2771 = vld [vmem:[%s2759 + $0x58] sm:$0xff]
        %v2772 = vld [vmem:[%s2759 + $0x60] sm:$0xff]
        %v2773 = vld [vmem:[%s2759 + $0x68] sm:$0xff]
        %v2774 = vld [vmem:[%s2759 + $0x70] sm:$0xff]
        %v2775 = vld [vmem:[%s2759 + $0x78] sm:$0xff]
        %v2776 = vld [vmem:[%s2759 + $0x80] sm:$0xff]
        %v2777 = vld [vmem:[%s2759 + $0x88] sm:$0xff]
        %v2778 = vld [vmem:[%s2759 + $0x90] sm:$0xff]
        %v2779 = vld [vmem:[%s2759 + $0x98] sm:$0xff]
        %v2780 = vld [vmem:[%s2759 + $0xa0] sm:$0xff]
        %v2781 = vld [vmem:[%s2759 + $0xa8] sm:$0xff]
        %v2782 = vld [vmem:[%s2759 + $0xb0] sm:$0xff]
        %v2783 = vld [vmem:[%s2759 + $0xb8] sm:$0xff]
        %v2784 = vld [vmem:[%s2759 + $0xc0] sm:$0xff]
        %v2785 = vld [vmem:[%s2759 + $0xc8] sm:$0xff]
        %v2786 = vld [vmem:[%s2759 + $0xd0] sm:$0xff]
        %v2787 = vld [vmem:[%s2759 + $0xd8] sm:$0xff]
        %v2788 = vld [vmem:[%s2759 + $0xe0] sm:$0xff]
        %v2789 = vld [vmem:[%s2759 + $0xe8] sm:$0xff]
        %v2790 = vld [vmem:[%s2759 + $0xf0] sm:$0xff]
        %v2791 = vld [vmem:[%s2759 + $0xf8] sm:$0xff]
        %v2792 = vld [vmem:[%s2759 + $0x100] sm:$0xff]
        %v2793 = vld [vmem:[%s2759 + $0x108] sm:$0xff]
        %v2794 = vld [vmem:[%s2759 + $0x110] sm:$0xff]
        %v2795 = vld [vmem:[%s2759 + $0x118] sm:$0xff]
        %v2796 = vld [vmem:[%s2759 + $0x120] sm:$0xff]
        %v2797 = vld [vmem:[%s2759 + $0x128] sm:$0xff]
        %v2798 = vld [vmem:[%s2759 + $0x130] sm:$0xff]
        %v2799 = vld [vmem:[%s2759 + $0x138] sm:$0xff]
        %v2800 = vld [vmem:[%s2759 + $0x140] sm:$0xff]
        %v2801 = vld [vmem:[%s2759 + $0x148] sm:$0xff]
        %v2802 = vld [vmem:[%s2759 + $0x150] sm:$0xff]
        %v2803 = vld [vmem:[%s2759 + $0x158] sm:$0xff]
        %v2804 = vld [vmem:[%s2759 + $0x160] sm:$0xff]
        %v2805 = vld [vmem:[%s2759 + $0x168] sm:$0xff]
        %v2806 = vld [vmem:[%s2759 + $0x170] sm:$0xff]
        %v2807 = vld [vmem:[%s2759 + $0x178] sm:$0xff]
        %v2808 = vld [vmem:[%s2759 + $0x180] sm:$0xff]
        %v2809 = vld [vmem:[%s2759 + $0x188] sm:$0xff]
        %v2810 = vld [vmem:[%s2759 + $0x190] sm:$0xff]
        %v2811 = vld [vmem:[%s2759 + $0x198] sm:$0xff]
        %v2812 = vld [vmem:[%s2759 + $0x1a0] sm:$0xff]
        %v2813 = vld [vmem:[%s2759 + $0x1a8] sm:$0xff]
        %v2814 = vld [vmem:[%s2759 + $0x1b0] sm:$0xff]
        %v2815 = vld [vmem:[%s2759 + $0x1b8] sm:$0xff]
        %v2816 = vld [vmem:[%s2759 + $0x1c0] sm:$0xff]
        %v2817 = vld [vmem:[%s2759 + $0x1c8] sm:$0xff]
        %v2818 = vld [vmem:[%s2759 + $0x1d0] sm:$0xff]
        %v2819 = vld [vmem:[%s2759 + $0x1d8] sm:$0xff]
        %v2820 = vld [vmem:[%s2759 + $0x1e0] sm:$0xff]
        %v2821 = vld [vmem:[%s2759 + $0x1e8] sm:$0xff]
        %v2822 = vld [vmem:[%s2759 + $0x1f0] sm:$0xff]
        %v2823 = vld [vmem:[%s2759 + $0x1f8] sm:$0xff]
        %v2824 = vld [vmem:[%s2759 + $0x200] sm:$0xff]
        %v2825 = vld [vmem:[%s2759 + $0x208] sm:$0xff]
        %v2826 = vld [vmem:[%s2759 + $0x210] sm:$0xff]
        %v2827 = vld [vmem:[%s2759 + $0x218] sm:$0xff]
        %v2828 = vld [vmem:[%s2759 + $0x220] sm:$0xff]
        %v2829 = vld [vmem:[%s2759 + $0x228] sm:$0xff]
        %v2830 = vld [vmem:[%s2759 + $0x230] sm:$0xff]
        %v2831 = vld [vmem:[%s2759 + $0x238] sm:$0xff]
        %v2832 = vld [vmem:[%s2759 + $0x240] sm:$0xff]
        %v2833 = vld [vmem:[%s2759 + $0x248] sm:$0xff]
        %v2834 = vld [vmem:[%s2759 + $0x250] sm:$0xff]
        %v2835 = vld [vmem:[%s2759 + $0x258] sm:$0xff]
        %v2836 = vld [vmem:[%s2759 + $0x260] sm:$0xff]
        %v2837 = vld [vmem:[%s2759 + $0x268] sm:$0xff]
        %v2838 = vld [vmem:[%s2759 + $0x270] sm:$0xff]
        %v2839 = vld [vmem:[%s2759 + $0x278] sm:$0xff]
        %v2840 = vld [vmem:[%s2759 + $0x280] sm:$0xff]
        %v2841 = vld [vmem:[%s2759 + $0x288] sm:$0xff]
        %v2842 = vld [vmem:[%s2759 + $0x290] sm:$0xff]
        %v2843 = vld [vmem:[%s2759 + $0x298] sm:$0xff]
        %v2844 = vld [vmem:[%s2759 + $0x2a0] sm:$0xff]
        %v2845 = vld [vmem:[%s2759 + $0x2a8] sm:$0xff]
        %v2846 = vld [vmem:[%s2759 + $0x2b0] sm:$0xff]
        %v2847 = vld [vmem:[%s2759 + $0x2b8] sm:$0xff]
        %v2848 = vld [vmem:[%s2759 + $0x2c0] sm:$0xff]
        %v2849 = vld [vmem:[%s2759 + $0x2c8] sm:$0xff]
        %v2850 = vld [vmem:[%s2759 + $0x2d0] sm:$0xff]
        %v2851 = vld [vmem:[%s2759 + $0x2d8] sm:$0xff]
        %v2852 = vld [vmem:[%s2759 + $0x2e0] sm:$0xff]
        %v2853 = vld [vmem:[%s2759 + $0x2e8] sm:$0xff]
        %v2854 = vld [vmem:[%s2759 + $0x2f0] sm:$0xff]
        %v2855 = vld [vmem:[%s2759 + $0x2f8] sm:$0xff]
        %v2856 = vld [vmem:[%s2759 + $0x300] sm:$0xff]
        %v2857 = vld [vmem:[%s2759 + $0x308] sm:$0xff]
        %v2858 = vld [vmem:[%s2759 + $0x310] sm:$0xff]
        %v2859 = vld [vmem:[%s2759 + $0x318] sm:$0xff]
        %v2860 = vld [vmem:[%s2759 + $0x320] sm:$0xff]
        %v2861 = vld [vmem:[%s2759 + $0x328] sm:$0xff]
        %v2862 = vld [vmem:[%s2759 + $0x330] sm:$0xff]
        %v2863 = vld [vmem:[%s2759 + $0x338] sm:$0xff]
        %v2864 = vld [vmem:[%s2759 + $0x340] sm:$0xff]
        %v2865 = vld [vmem:[%s2759 + $0x348] sm:$0xff]
        %v2866 = vld [vmem:[%s2759 + $0x350] sm:$0xff]
        %v2867 = vld [vmem:[%s2759 + $0x358] sm:$0xff]
        %v2868 = vld [vmem:[%s2759 + $0x360] sm:$0xff]
        %v2869 = vld [vmem:[%s2759 + $0x368] sm:$0xff]
        %v2870 = vld [vmem:[%s2759 + $0x370] sm:$0xff]
        %v2871 = vld [vmem:[%s2759 + $0x378] sm:$0xff]
        %v2872 = vld [vmem:[%s2759 + $0x380] sm:$0xff]
        %v2873 = vld [vmem:[%s2759 + $0x388] sm:$0xff]
        %v2874 = vld [vmem:[%s2759 + $0x390] sm:$0xff]
        %v2875 = vld [vmem:[%s2759 + $0x398] sm:$0xff]
        %v2876 = vld [vmem:[%s2759 + $0x3a0] sm:$0xff]
        %v2877 = vld [vmem:[%s2759 + $0x3a8] sm:$0xff]
        %v2878 = vld [vmem:[%s2759 + $0x3b0] sm:$0xff]
        %v2879 = vld [vmem:[%s2759 + $0x3b8] sm:$0xff]
        %v2880 = vld [vmem:[%s2759 + $0x3c0] sm:$0xff]
        %v2881 = vld [vmem:[%s2759 + $0x3c8] sm:$0xff]
        %v2882 = vld [vmem:[%s2759 + $0x3d0] sm:$0xff]
        %v2883 = vld [vmem:[%s2759 + $0x3d8] sm:$0xff]
        %v2884 = vld [vmem:[%s2759 + $0x3e0] sm:$0xff]
        %v2885 = vld [vmem:[%s2759 + $0x3e8] sm:$0xff]
        %v2886 = vld [vmem:[%s2759 + $0x3f0] sm:$0xff]
        %v2887 = vld [vmem:[%s2759 + $0x3f8] sm:$0xff]
        %v2888 = vunpack.c.l.b16 %v2734
        %v2889 = vunpack.c.h.b16 %v2734
        %v2890 = vunpack.c.l.b16 %v2738
        %v2891 = vunpack.c.h.b16 %v2738
        %v2892 = vunpack.c.l.b16 %v2741
        %v2893 = vunpack.c.h.b16 %v2741
        %v2894 = vunpack.c.l.b16 %v2744
        %v2895 = vunpack.c.h.b16 %v2744
        %v2896 = vunpack.c.l.b16 %v2748
        %v2897 = vunpack.c.h.b16 %v2748
        %v2898 = vunpack.c.l.b16 %v2752
        %v2899 = vunpack.c.h.b16 %v2752
        %v2900 = vunpack.c.l.b16 %v2755
        %v2901 = vunpack.c.h.b16 %v2755
        %v2902 = vunpack.c.l.b16 %v2758
        %v2903 = vunpack.c.h.b16 %v2758
        %v2904 = vpack.c.b16 %v2892, %v2888
        %v2905 = vpack.c.b16 %v2893, %v2889
        %v2906 = vpack.c.b16 %v2894, %v2890
        %v2907 = vpack.c.b16 %v2895, %v2891
        %v2908 = vpack.c.b16 %v2900, %v2896
        %v2909 = vpack.c.b16 %v2901, %v2897
        %v2910 = vpack.c.b16 %v2902, %v2898
        %v2911 = vpack.c.b16 %v2903, %v2899
        %v3048 = vunpack.c.l.b16 %v2760
        %v3049 = vunpack.c.h.b16 %v2760
        %v3050 = vunpack.c.l.b16 %v2761
        %v3051 = vunpack.c.h.b16 %v2761
        %v3052 = vunpack.c.l.b16 %v2762
        %v3053 = vunpack.c.h.b16 %v2762
        %v3054 = vunpack.c.l.b16 %v2763
        %v3055 = vunpack.c.h.b16 %v2763
        %v3056 = vunpack.c.l.b16 %v2764
        %v3057 = vunpack.c.h.b16 %v2764
        %v3058 = vunpack.c.l.b16 %v2765
        %v3059 = vunpack.c.h.b16 %v2765
        %v3060 = vunpack.c.l.b16 %v2766
        %v3061 = vunpack.c.h.b16 %v2766
        %v3062 = vunpack.c.l.b16 %v2767
        %v3063 = vunpack.c.h.b16 %v2767
        %v3064 = vunpack.c.l.b16 %v2768
        %v3065 = vunpack.c.h.b16 %v2768
        %v3066 = vunpack.c.l.b16 %v2769
        %v3067 = vunpack.c.h.b16 %v2769
        %v3068 = vunpack.c.l.b16 %v2770
        %v3069 = vunpack.c.h.b16 %v2770
        %v3070 = vunpack.c.l.b16 %v2771
        %v3071 = vunpack.c.h.b16 %v2771
        %v3072 = vunpack.c.l.b16 %v2772
        %v3073 = vunpack.c.h.b16 %v2772
        %v3074 = vunpack.c.l.b16 %v2773
        %v3075 = vunpack.c.h.b16 %v2773
        %v3076 = vunpack.c.l.b16 %v2774
        %v3077 = vunpack.c.h.b16 %v2774
        %v3078 = vunpack.c.l.b16 %v2775
        %v3079 = vunpack.c.h.b16 %v2775
        %v3080 = vunpack.c.l.b16 %v2776
        %v3081 = vunpack.c.h.b16 %v2776
        %v3082 = vunpack.c.l.b16 %v2777
        %v3083 = vunpack.c.h.b16 %v2777
        %v3084 = vunpack.c.l.b16 %v2778
        %v3085 = vunpack.c.h.b16 %v2778
        %v3086 = vunpack.c.l.b16 %v2779
        %v3087 = vunpack.c.h.b16 %v2779
        %v3088 = vunpack.c.l.b16 %v2780
        %v3089 = vunpack.c.h.b16 %v2780
        %v3090 = vunpack.c.l.b16 %v2781
        %v3091 = vunpack.c.h.b16 %v2781
        %v3092 = vunpack.c.l.b16 %v2782
        %v3093 = vunpack.c.h.b16 %v2782
        %v3094 = vunpack.c.l.b16 %v2783
        %v3095 = vunpack.c.h.b16 %v2783
        %v3096 = vunpack.c.l.b16 %v2784
        %v3097 = vunpack.c.h.b16 %v2784
        %v3098 = vunpack.c.l.b16 %v2785
        %v3099 = vunpack.c.h.b16 %v2785
        %v3100 = vunpack.c.l.b16 %v2786
        %v3101 = vunpack.c.h.b16 %v2786
        %v3102 = vunpack.c.l.b16 %v2787
        %v3103 = vunpack.c.h.b16 %v2787
        %v3104 = vunpack.c.l.b16 %v2788
        %v3105 = vunpack.c.h.b16 %v2788
        %v3106 = vunpack.c.l.b16 %v2789
        %v3107 = vunpack.c.h.b16 %v2789
        %v3108 = vunpack.c.l.b16 %v2790
        %v3109 = vunpack.c.h.b16 %v2790
        %v3110 = vunpack.c.l.b16 %v2791
        %v3111 = vunpack.c.h.b16 %v2791
        %v3112 = vunpack.c.l.b16 %v2792
        %v3113 = vunpack.c.h.b16 %v2792
        %v3114 = vunpack.c.l.b16 %v2793
        %v3115 = vunpack.c.h.b16 %v2793
        %v3116 = vunpack.c.l.b16 %v2794
        %v3117 = vunpack.c.h.b16 %v2794
        %v3118 = vunpack.c.l.b16 %v2795
        %v3119 = vunpack.c.h.b16 %v2795
        %v3120 = vunpack.c.l.b16 %v2796
        %v3121 = vunpack.c.h.b16 %v2796
        %v3122 = vunpack.c.l.b16 %v2797
        %v3123 = vunpack.c.h.b16 %v2797
        %v3124 = vunpack.c.l.b16 %v2798
        %v3125 = vunpack.c.h.b16 %v2798
        %v3126 = vunpack.c.l.b16 %v2799
        %v3127 = vunpack.c.h.b16 %v2799
        %v3128 = vunpack.c.l.b16 %v2800
        %v3129 = vunpack.c.h.b16 %v2800
        %v3130 = vunpack.c.l.b16 %v2801
        %v3131 = vunpack.c.h.b16 %v2801
        %v3132 = vunpack.c.l.b16 %v2802
        %v3133 = vunpack.c.h.b16 %v2802
        %v3134 = vunpack.c.l.b16 %v2803
        %v3135 = vunpack.c.h.b16 %v2803
        %v3136 = vunpack.c.l.b16 %v2804
        %v3137 = vunpack.c.h.b16 %v2804
        %v3138 = vunpack.c.l.b16 %v2805
        %v3139 = vunpack.c.h.b16 %v2805
        %v3140 = vunpack.c.l.b16 %v2806
        %v3141 = vunpack.c.h.b16 %v2806
        %v3142 = vunpack.c.l.b16 %v2807
        %v3143 = vunpack.c.h.b16 %v2807
        %v3144 = vunpack.c.l.b16 %v2808
        %v3145 = vunpack.c.h.b16 %v2808
        %v3146 = vunpack.c.l.b16 %v2809
        %v3147 = vunpack.c.h.b16 %v2809
        %v3148 = vunpack.c.l.b16 %v2810
        %v3149 = vunpack.c.h.b16 %v2810
        %v3150 = vunpack.c.l.b16 %v2811
        %v3151 = vunpack.c.h.b16 %v2811
        %v3152 = vunpack.c.l.b16 %v2812
        %v3153 = vunpack.c.h.b16 %v2812
        %v3154 = vunpack.c.l.b16 %v2813
        %v3155 = vunpack.c.h.b16 %v2813
        %v3156 = vunpack.c.l.b16 %v2814
        %v3157 = vunpack.c.h.b16 %v2814
        %v3158 = vunpack.c.l.b16 %v2815
        %v3159 = vunpack.c.h.b16 %v2815
        %v3160 = vunpack.c.l.b16 %v2816
        %v3161 = vunpack.c.h.b16 %v2816
        %v3162 = vunpack.c.l.b16 %v2817
        %v3163 = vunpack.c.h.b16 %v2817
        %v3164 = vunpack.c.l.b16 %v2818
        %v3165 = vunpack.c.h.b16 %v2818
        %v3166 = vunpack.c.l.b16 %v2819
        %v3167 = vunpack.c.h.b16 %v2819
        %v3168 = vunpack.c.l.b16 %v2820
        %v3169 = vunpack.c.h.b16 %v2820
        %v3170 = vunpack.c.l.b16 %v2821
        %v3171 = vunpack.c.h.b16 %v2821
        %v3172 = vunpack.c.l.b16 %v2822
        %v3173 = vunpack.c.h.b16 %v2822
        %v3174 = vunpack.c.l.b16 %v2823
        %v3175 = vunpack.c.h.b16 %v2823
        %v3176 = vunpack.c.l.b16 %v2824
        %v3177 = vunpack.c.h.b16 %v2824
        %v3178 = vunpack.c.l.b16 %v2825
        %v3179 = vunpack.c.h.b16 %v2825
        %v3180 = vunpack.c.l.b16 %v2826
        %v3181 = vunpack.c.h.b16 %v2826
        %v3182 = vunpack.c.l.b16 %v2827
        %v3183 = vunpack.c.h.b16 %v2827
        %v3184 = vunpack.c.l.b16 %v2828
        %v3185 = vunpack.c.h.b16 %v2828
        %v3186 = vunpack.c.l.b16 %v2829
        %v3187 = vunpack.c.h.b16 %v2829
        %v3188 = vunpack.c.l.b16 %v2830
        %v3189 = vunpack.c.h.b16 %v2830
        %v3190 = vunpack.c.l.b16 %v2831
        %v3191 = vunpack.c.h.b16 %v2831
        %v3192 = vunpack.c.l.b16 %v2832
        %v3193 = vunpack.c.h.b16 %v2832
        %v3194 = vunpack.c.l.b16 %v2833
        %v3195 = vunpack.c.h.b16 %v2833
        %v3196 = vunpack.c.l.b16 %v2834
        %v3197 = vunpack.c.h.b16 %v2834
        %v3198 = vunpack.c.l.b16 %v2835
        %v3199 = vunpack.c.h.b16 %v2835
        %v3200 = vunpack.c.l.b16 %v2836
        %v3201 = vunpack.c.h.b16 %v2836
        %v3202 = vunpack.c.l.b16 %v2837
        %v3203 = vunpack.c.h.b16 %v2837
        %v3204 = vunpack.c.l.b16 %v2838
        %v3205 = vunpack.c.h.b16 %v2838
        %v3206 = vunpack.c.l.b16 %v2839
        %v3207 = vunpack.c.h.b16 %v2839
        %v3208 = vunpack.c.l.b16 %v2840
        %v3209 = vunpack.c.h.b16 %v2840
        %v3210 = vunpack.c.l.b16 %v2841
        %v3211 = vunpack.c.h.b16 %v2841
        %v3212 = vunpack.c.l.b16 %v2842
        %v3213 = vunpack.c.h.b16 %v2842
        %v3214 = vunpack.c.l.b16 %v2843
        %v3215 = vunpack.c.h.b16 %v2843
        %v3216 = vunpack.c.l.b16 %v2844
        %v3217 = vunpack.c.h.b16 %v2844
        %v3218 = vunpack.c.l.b16 %v2845
        %v3219 = vunpack.c.h.b16 %v2845
        %v3220 = vunpack.c.l.b16 %v2846
        %v3221 = vunpack.c.h.b16 %v2846
        %v3222 = vunpack.c.l.b16 %v2847
        %v3223 = vunpack.c.h.b16 %v2847
        %v3224 = vunpack.c.l.b16 %v2848
        %v3225 = vunpack.c.h.b16 %v2848
        %v3226 = vunpack.c.l.b16 %v2849
        %v3227 = vunpack.c.h.b16 %v2849
        %v3228 = vunpack.c.l.b16 %v2850
        %v3229 = vunpack.c.h.b16 %v2850
        %v3230 = vunpack.c.l.b16 %v2851
        %v3231 = vunpack.c.h.b16 %v2851
        %v3232 = vunpack.c.l.b16 %v2852
        %v3233 = vunpack.c.h.b16 %v2852
        %v3234 = vunpack.c.l.b16 %v2853
        %v3235 = vunpack.c.h.b16 %v2853
        %v3236 = vunpack.c.l.b16 %v2854
        %v3237 = vunpack.c.h.b16 %v2854
        %v3238 = vunpack.c.l.b16 %v2855
        %v3239 = vunpack.c.h.b16 %v2855
        %v3240 = vunpack.c.l.b16 %v2856
        %v3241 = vunpack.c.h.b16 %v2856
        %v3242 = vunpack.c.l.b16 %v2857
        %v3243 = vunpack.c.h.b16 %v2857
        %v3244 = vunpack.c.l.b16 %v2858
        %v3245 = vunpack.c.h.b16 %v2858
        %v3246 = vunpack.c.l.b16 %v2859
        %v3247 = vunpack.c.h.b16 %v2859
        %v3248 = vunpack.c.l.b16 %v2860
        %v3249 = vunpack.c.h.b16 %v2860
        %v3250 = vunpack.c.l.b16 %v2861
        %v3251 = vunpack.c.h.b16 %v2861
        %v3252 = vunpack.c.l.b16 %v2862
        %v3253 = vunpack.c.h.b16 %v2862
        %v3254 = vunpack.c.l.b16 %v2863
        %v3255 = vunpack.c.h.b16 %v2863
        %v3256 = vunpack.c.l.b16 %v2864
        %v3257 = vunpack.c.h.b16 %v2864
        %v3258 = vunpack.c.l.b16 %v2865
        %v3259 = vunpack.c.h.b16 %v2865
        %v3260 = vunpack.c.l.b16 %v2866
        %v3261 = vunpack.c.h.b16 %v2866
        %v3262 = vunpack.c.l.b16 %v2867
        %v3263 = vunpack.c.h.b16 %v2867
        %v3264 = vunpack.c.l.b16 %v2868
        %v3265 = vunpack.c.h.b16 %v2868
        %v3266 = vunpack.c.l.b16 %v2869
        %v3267 = vunpack.c.h.b16 %v2869
        %v3268 = vunpack.c.l.b16 %v2870
        %v3269 = vunpack.c.h.b16 %v2870
        %v3270 = vunpack.c.l.b16 %v2871
        %v3271 = vunpack.c.h.b16 %v2871
        %v3272 = vunpack.c.l.b16 %v2872
        %v3273 = vunpack.c.h.b16 %v2872
        %v3274 = vunpack.c.l.b16 %v2873
        %v3275 = vunpack.c.h.b16 %v2873
        %v3276 = vunpack.c.l.b16 %v2874
        %v3277 = vunpack.c.h.b16 %v2874
        %v3278 = vunpack.c.l.b16 %v2875
        %v3279 = vunpack.c.h.b16 %v2875
        %v3280 = vunpack.c.l.b16 %v2876
        %v3281 = vunpack.c.h.b16 %v2876
        %v3282 = vunpack.c.l.b16 %v2877
        %v3283 = vunpack.c.h.b16 %v2877
        %v3284 = vunpack.c.l.b16 %v2878
        %v3285 = vunpack.c.h.b16 %v2878
        %v3286 = vunpack.c.l.b16 %v2879
        %v3287 = vunpack.c.h.b16 %v2879
        %v3288 = vunpack.c.l.b16 %v2880
        %v3289 = vunpack.c.h.b16 %v2880
        %v3290 = vunpack.c.l.b16 %v2881
        %v3291 = vunpack.c.h.b16 %v2881
        %v3292 = vunpack.c.l.b16 %v2882
        %v3293 = vunpack.c.h.b16 %v2882
        %v3294 = vunpack.c.l.b16 %v2883
        %v3295 = vunpack.c.h.b16 %v2883
        %v3296 = vunpack.c.l.b16 %v2884
        %v3297 = vunpack.c.h.b16 %v2884
        %v3298 = vunpack.c.l.b16 %v2885
        %v3299 = vunpack.c.h.b16 %v2885
        %v3300 = vunpack.c.l.b16 %v2886
        %v3301 = vunpack.c.h.b16 %v2886
        %v3302 = vunpack.c.l.b16 %v2887
        %v3303 = vunpack.c.h.b16 %v2887
        %v3304 = vpack.c.b16 %v3052, %v3048
        %v3305 = vpack.c.b16 %v3053, %v3049
        %v3306 = vpack.c.b16 %v3054, %v3050
        %v3307 = vpack.c.b16 %v3055, %v3051
        %v3308 = vpack.c.b16 %v3060, %v3056
        %v3309 = vpack.c.b16 %v3061, %v3057
        %v3310 = vpack.c.b16 %v3062, %v3058
        %v3311 = vpack.c.b16 %v3063, %v3059
        %v3312 = vpack.c.b16 %v3068, %v3064
        %v3313 = vpack.c.b16 %v3069, %v3065
        %v3314 = vpack.c.b16 %v3070, %v3066
        %v3315 = vpack.c.b16 %v3071, %v3067
        %v3316 = vpack.c.b16 %v3076, %v3072
        %v3317 = vpack.c.b16 %v3077, %v3073
        %v3318 = vpack.c.b16 %v3078, %v3074
        %v3319 = vpack.c.b16 %v3079, %v3075
        %v3320 = vpack.c.b16 %v3084, %v3080
        %v3321 = vpack.c.b16 %v3085, %v3081
        %v3322 = vpack.c.b16 %v3086, %v3082
        %v3323 = vpack.c.b16 %v3087, %v3083
        %v3324 = vpack.c.b16 %v3092, %v3088
        %v3325 = vpack.c.b16 %v3093, %v3089
        %v3326 = vpack.c.b16 %v3094, %v3090
        %v3327 = vpack.c.b16 %v3095, %v3091
        %v3328 = vpack.c.b16 %v3100, %v3096
        %v3329 = vpack.c.b16 %v3101, %v3097
        %v3330 = vpack.c.b16 %v3102, %v3098
        %v3331 = vpack.c.b16 %v3103, %v3099
        %v3332 = vpack.c.b16 %v3108, %v3104
        %v3333 = vpack.c.b16 %v3109, %v3105
        %v3334 = vpack.c.b16 %v3110, %v3106
        %v3335 = vpack.c.b16 %v3111, %v3107
        %v3336 = vpack.c.b16 %v3116, %v3112
        %v3337 = vpack.c.b16 %v3117, %v3113
        %v3338 = vpack.c.b16 %v3118, %v3114
        %v3339 = vpack.c.b16 %v3119, %v3115
        %v3340 = vpack.c.b16 %v3124, %v3120
        %v3341 = vpack.c.b16 %v3125, %v3121
        %v3342 = vpack.c.b16 %v3126, %v3122
        %v3343 = vpack.c.b16 %v3127, %v3123
        %v3344 = vpack.c.b16 %v3132, %v3128
        %v3345 = vpack.c.b16 %v3133, %v3129
        %v3346 = vpack.c.b16 %v3134, %v3130
        %v3347 = vpack.c.b16 %v3135, %v3131
        %v3348 = vpack.c.b16 %v3140, %v3136
        %v3349 = vpack.c.b16 %v3141, %v3137
        %v3350 = vpack.c.b16 %v3142, %v3138
        %v3351 = vpack.c.b16 %v3143, %v3139
        %v3352 = vpack.c.b16 %v3148, %v3144
        %v3353 = vpack.c.b16 %v3149, %v3145
        %v3354 = vpack.c.b16 %v3150, %v3146
        %v3355 = vpack.c.b16 %v3151, %v3147
        %v3356 = vpack.c.b16 %v3156, %v3152
        %v3357 = vpack.c.b16 %v3157, %v3153
        %v3358 = vpack.c.b16 %v3158, %v3154
        %v3359 = vpack.c.b16 %v3159, %v3155
        %v3360 = vpack.c.b16 %v3164, %v3160
        %v3361 = vpack.c.b16 %v3165, %v3161
        %v3362 = vpack.c.b16 %v3166, %v3162
        %v3363 = vpack.c.b16 %v3167, %v3163
        %v3364 = vpack.c.b16 %v3172, %v3168
        %v3365 = vpack.c.b16 %v3173, %v3169
        %v3366 = vpack.c.b16 %v3174, %v3170
        %v3367 = vpack.c.b16 %v3175, %v3171
        %v3368 = vpack.c.b16 %v3180, %v3176
        %v3369 = vpack.c.b16 %v3181, %v3177
        %v3370 = vpack.c.b16 %v3182, %v3178
        %v3371 = vpack.c.b16 %v3183, %v3179
        %v3372 = vpack.c.b16 %v3188, %v3184
        %v3373 = vpack.c.b16 %v3189, %v3185
        %v3374 = vpack.c.b16 %v3190, %v3186
        %v3375 = vpack.c.b16 %v3191, %v3187
        %v3376 = vpack.c.b16 %v3196, %v3192
        %v3377 = vpack.c.b16 %v3197, %v3193
        %v3378 = vpack.c.b16 %v3198, %v3194
        %v3379 = vpack.c.b16 %v3199, %v3195
        %v3380 = vpack.c.b16 %v3204, %v3200
        %v3381 = vpack.c.b16 %v3205, %v3201
        %v3382 = vpack.c.b16 %v3206, %v3202
        %v3383 = vpack.c.b16 %v3207, %v3203
        %v3384 = vpack.c.b16 %v3212, %v3208
        %v3385 = vpack.c.b16 %v3213, %v3209
        %v3386 = vpack.c.b16 %v3214, %v3210
        %v3387 = vpack.c.b16 %v3215, %v3211
        %v3388 = vpack.c.b16 %v3220, %v3216
        %v3389 = vpack.c.b16 %v3221, %v3217
        %v3390 = vpack.c.b16 %v3222, %v3218
        %v3391 = vpack.c.b16 %v3223, %v3219
        %v3392 = vpack.c.b16 %v3228, %v3224
        %v3393 = vpack.c.b16 %v3229, %v3225
        %v3394 = vpack.c.b16 %v3230, %v3226
        %v3395 = vpack.c.b16 %v3231, %v3227
        %v3396 = vpack.c.b16 %v3236, %v3232
        %v3397 = vpack.c.b16 %v3237, %v3233
        %v3398 = vpack.c.b16 %v3238, %v3234
        %v3399 = vpack.c.b16 %v3239, %v3235
        %v3400 = vpack.c.b16 %v3244, %v3240
        %v3401 = vpack.c.b16 %v3245, %v3241
        %v3402 = vpack.c.b16 %v3246, %v3242
        %v3403 = vpack.c.b16 %v3247, %v3243
        %v3404 = vpack.c.b16 %v3252, %v3248
        %v3405 = vpack.c.b16 %v3253, %v3249
        %v3406 = vpack.c.b16 %v3254, %v3250
        %v3407 = vpack.c.b16 %v3255, %v3251
        %v3408 = vpack.c.b16 %v3260, %v3256
        %v3409 = vpack.c.b16 %v3261, %v3257
        %v3410 = vpack.c.b16 %v3262, %v3258
        %v3411 = vpack.c.b16 %v3263, %v3259
        %v3412 = vpack.c.b16 %v3268, %v3264
        %v3413 = vpack.c.b16 %v3269, %v3265
        %v3414 = vpack.c.b16 %v3270, %v3266
        %v3415 = vpack.c.b16 %v3271, %v3267
        %v3416 = vpack.c.b16 %v3276, %v3272
        %v3417 = vpack.c.b16 %v3277, %v3273
        %v3418 = vpack.c.b16 %v3278, %v3274
        %v3419 = vpack.c.b16 %v3279, %v3275
        %v3420 = vpack.c.b16 %v3284, %v3280
        %v3421 = vpack.c.b16 %v3285, %v3281
        %v3422 = vpack.c.b16 %v3286, %v3282
        %v3423 = vpack.c.b16 %v3287, %v3283
        %v3424 = vpack.c.b16 %v3292, %v3288
        %v3425 = vpack.c.b16 %v3293, %v3289
        %v3426 = vpack.c.b16 %v3294, %v3290
        %v3427 = vpack.c.b16 %v3295, %v3291
        %v3428 = vpack.c.b16 %v3300, %v3296
        %v3429 = vpack.c.b16 %v3301, %v3297
        %v3430 = vpack.c.b16 %v3302, %v3298
        %v3431 = vpack.c.b16 %v3303, %v3299
        %3560 = vmatprep.subr.bf16.mxu0 %v3333
        %3561 = vmatpush1.bf16.msra.mxu0 %v3332
        %3562 = vmatprep.subr.bf16.mxu0 %v3329
        %3563 = vmatpush1.bf16.msra.mxu0 %v3328
        %3564 = vmatprep.subr.bf16.mxu0 %v3325
        %3565 = vmatpush1.bf16.msra.mxu0 %v3324
        %3566 = vmatprep.subr.bf16.mxu0 %v3321
        %3567 = vmatpush1.bf16.msra.mxu0 %v3320
        %3568 = vmatprep.subr.bf16.mxu0 %v3317
        %3569 = vmatpush1.bf16.msra.mxu0 %v3316
        %3570 = vmatprep.subr.bf16.mxu0 %v3313
        %3571 = vmatpush1.bf16.msra.mxu0 %v3312
        %3572 = vmatprep.subr.bf16.mxu0 %v3309
        %3573 = vmatpush1.bf16.msra.mxu0 %v3308
        %3574 = vmatprep.subr.bf16.mxu0 %v3305
        %3575 = vmatpush1.bf16.msra.mxu0 %v3304
        %3576 = vmatprep.subr.bf16.mxu0 %v3365
        %3577 = vmatpush2.bf16.msra.mxu0 %v3364
        %3578 = vmatprep.subr.bf16.mxu0 %v3361
        %3579 = vmatpush2.bf16.msra.mxu0 %v3360
        %3580 = vmatprep.subr.bf16.mxu0 %v3357
        %3581 = vmatpush2.bf16.msra.mxu0 %v3356
        %3582 = vmatprep.subr.bf16.mxu0 %v3353
        %3583 = vmatpush2.bf16.msra.mxu0 %v3352
        %3584 = vmatprep.subr.bf16.mxu0 %v3349
        %3585 = vmatpush2.bf16.msra.mxu0 %v3348
        %3586 = vmatprep.subr.bf16.mxu0 %v3345
        %3587 = vmatpush2.bf16.msra.mxu0 %v3344
        %3588 = vmatprep.subr.bf16.mxu0 %v3341
        %3589 = vmatpush2.bf16.msra.mxu0 %v3340
        %3590 = vmatprep.subr.bf16.mxu0 %v3337
        %3591 = vmatpush2.bf16.msra.mxu0 %v3336
        %3592 = vmatprep.mubr.bf16.mxu0 %v2905
        %3593 = vmatmul.mubr.bf16.gmra.mxu0 %v2904
        %v3594 = vpop.f32.mrf.mxu0
        %v3595 = vadd.f32 0.0, %v3594
        %v3596 = vpop.f32.mrf.mxu0
        %v3597 = vadd.f32 0.0, %v3596
        %v3598 = vpop.f32.mrf.mxu0
        %v3599 = vadd.f32 0.0, %v3598
        %v3600 = vpop.f32.mrf.mxu0
        %v3601 = vadd.f32 0.0, %v3600
        %3602 = vmatprep.mubr.bf16.mxu0 %v2909
        %3603 = vmatmul.mubr.bf16.gmra.mxu0 %v2908
        %v3604 = vpop.f32.mrf.mxu0
        %v3605 = vadd.f32 0.0, %v3604
        %v3606 = vpop.f32.mrf.mxu0
        %v3607 = vadd.f32 0.0, %v3606
        %v3608 = vpop.f32.mrf.mxu0
        %v3609 = vadd.f32 0.0, %v3608
        %v3610 = vpop.f32.mrf.mxu0
        %v3611 = vadd.f32 0.0, %v3610
        %3612 = vdwg.mxu0
        %3613 = vmatprep.subr.bf16.mxu0 %v3397
        %3614 = vmatpush1.bf16.msra.mxu0 %v3396
        %3615 = vmatprep.subr.bf16.mxu0 %v3393
        %3616 = vmatpush1.bf16.msra.mxu0 %v3392
        %3617 = vmatprep.subr.bf16.mxu0 %v3389
        %3618 = vmatpush1.bf16.msra.mxu0 %v3388
        %3619 = vmatprep.subr.bf16.mxu0 %v3385
        %3620 = vmatpush1.bf16.msra.mxu0 %v3384
        %3621 = vmatprep.subr.bf16.mxu0 %v3381
        %3622 = vmatpush1.bf16.msra.mxu0 %v3380
        %3623 = vmatprep.subr.bf16.mxu0 %v3377
        %3624 = vmatpush1.bf16.msra.mxu0 %v3376
        %3625 = vmatprep.subr.bf16.mxu0 %v3373
        %3626 = vmatpush1.bf16.msra.mxu0 %v3372
        %3627 = vmatprep.subr.bf16.mxu0 %v3369
        %3628 = vmatpush1.bf16.msra.mxu0 %v3368
        %3629 = vmatprep.subr.bf16.mxu0 %v3429
        %3630 = vmatpush2.bf16.msra.mxu0 %v3428
        %3631 = vmatprep.subr.bf16.mxu0 %v3425
        %3632 = vmatpush2.bf16.msra.mxu0 %v3424
        %3633 = vmatprep.subr.bf16.mxu0 %v3421
        %3634 = vmatpush2.bf16.msra.mxu0 %v3420
        %3635 = vmatprep.subr.bf16.mxu0 %v3417
        %3636 = vmatpush2.bf16.msra.mxu0 %v3416
        %3637 = vmatprep.subr.bf16.mxu0 %v3413
        %3638 = vmatpush2.bf16.msra.mxu0 %v3412
        %3639 = vmatprep.subr.bf16.mxu0 %v3409
        %3640 = vmatpush2.bf16.msra.mxu0 %v3408
        %3641 = vmatprep.subr.bf16.mxu0 %v3405
        %3642 = vmatpush2.bf16.msra.mxu0 %v3404
        %3643 = vmatprep.subr.bf16.mxu0 %v3401
        %3644 = vmatpush2.bf16.msra.mxu0 %v3400
        %3645 = vmatprep.mubr.bf16.mxu0 %v2907
        %3646 = vmatmul.mubr.bf16.gmra.mxu0 %v2906
        %v3647 = vpop.f32.mrf.mxu0
        %v3648 = vadd.f32 %v3595, %v3647
        %v3649 = vpop.f32.mrf.mxu0
        %v3650 = vadd.f32 %v3597, %v3649
        %v3651 = vpop.f32.mrf.mxu0
        %v3652 = vadd.f32 %v3599, %v3651
        %v3653 = vpop.f32.mrf.mxu0
        %v3654 = vadd.f32 %v3601, %v3653
        %3655 = vmatprep.mubr.bf16.mxu0 %v2911
        %3656 = vmatmul.mubr.bf16.gmra.mxu0 %v2910
        %v3657 = vpop.f32.mrf.mxu0
        %v3658 = vadd.f32 %v3605, %v3657
        %v3659 = vpop.f32.mrf.mxu0
        %v3660 = vadd.f32 %v3607, %v3659
        %v3661 = vpop.f32.mrf.mxu0
        %v3662 = vadd.f32 %v3609, %v3661
        %v3663 = vpop.f32.mrf.mxu0
        %v3664 = vadd.f32 %v3611, %v3663
        %3665 = vdwg.mxu0
        %3666 = vmatprep.subr.bf16.mxu0 %v3335
        %3667 = vmatpush1.bf16.msra.mxu0 %v3334
        %3668 = vmatprep.subr.bf16.mxu0 %v3331
        %3669 = vmatpush1.bf16.msra.mxu0 %v3330
        %3670 = vmatprep.subr.bf16.mxu0 %v3327
        %3671 = vmatpush1.bf16.msra.mxu0 %v3326
        %3672 = vmatprep.subr.bf16.mxu0 %v3323
        %3673 = vmatpush1.bf16.msra.mxu0 %v3322
        %3674 = vmatprep.subr.bf16.mxu0 %v3319
        %3675 = vmatpush1.bf16.msra.mxu0 %v3318
        %3676 = vmatprep.subr.bf16.mxu0 %v3315
        %3677 = vmatpush1.bf16.msra.mxu0 %v3314
        %3678 = vmatprep.subr.bf16.mxu0 %v3311
        %3679 = vmatpush1.bf16.msra.mxu0 %v3310
        %3680 = vmatprep.subr.bf16.mxu0 %v3307
        %3681 = vmatpush1.bf16.msra.mxu0 %v3306
        %3682 = vmatprep.subr.bf16.mxu0 %v3367
        %3683 = vmatpush2.bf16.msra.mxu0 %v3366
        %3684 = vmatprep.subr.bf16.mxu0 %v3363
        %3685 = vmatpush2.bf16.msra.mxu0 %v3362
        %3686 = vmatprep.subr.bf16.mxu0 %v3359
        %3687 = vmatpush2.bf16.msra.mxu0 %v3358
        %3688 = vmatprep.subr.bf16.mxu0 %v3355
        %3689 = vmatpush2.bf16.msra.mxu0 %v3354
        %3690 = vmatprep.subr.bf16.mxu0 %v3351
        %3691 = vmatpush2.bf16.msra.mxu0 %v3350
        %3692 = vmatprep.subr.bf16.mxu0 %v3347
        %3693 = vmatpush2.bf16.msra.mxu0 %v3346
        %3694 = vmatprep.subr.bf16.mxu0 %v3343
        %3695 = vmatpush2.bf16.msra.mxu0 %v3342
        %3696 = vmatprep.subr.bf16.mxu0 %v3339
        %3697 = vmatpush2.bf16.msra.mxu0 %v3338
        %3698 = vmatprep.mubr.bf16.mxu0 %v2905
        %3699 = vmatmul.mubr.bf16.gmra.mxu0 %v2904
        %v3700 = vpop.f32.mrf.mxu0
        %v3701 = vadd.f32 0.0, %v3700
        %v3702 = vpop.f32.mrf.mxu0
        %v3703 = vadd.f32 0.0, %v3702
        %v3704 = vpop.f32.mrf.mxu0
        %v3705 = vadd.f32 0.0, %v3704
        %v3706 = vpop.f32.mrf.mxu0
        %v3707 = vadd.f32 0.0, %v3706
        %3708 = vmatprep.mubr.bf16.mxu0 %v2909
        %3709 = vmatmul.mubr.bf16.gmra.mxu0 %v2908
        %v3710 = vpop.f32.mrf.mxu0
        %v3711 = vadd.f32 0.0, %v3710
        %v3712 = vpop.f32.mrf.mxu0
        %v3713 = vadd.f32 0.0, %v3712
        %v3714 = vpop.f32.mrf.mxu0
        %v3715 = vadd.f32 0.0, %v3714
        %v3716 = vpop.f32.mrf.mxu0
        %v3717 = vadd.f32 0.0, %v3716
        %3718 = vdwg.mxu0
        %3719 = vmatprep.subr.bf16.mxu0 %v3399
        %3720 = vmatpush1.bf16.msra.mxu0 %v3398
        %3721 = vmatprep.subr.bf16.mxu0 %v3395
        %3722 = vmatpush1.bf16.msra.mxu0 %v3394
        %3723 = vmatprep.subr.bf16.mxu0 %v3391
        %3724 = vmatpush1.bf16.msra.mxu0 %v3390
        %3725 = vmatprep.subr.bf16.mxu0 %v3387
        %3726 = vmatpush1.bf16.msra.mxu0 %v3386
        %3727 = vmatprep.subr.bf16.mxu0 %v3383
        %3728 = vmatpush1.bf16.msra.mxu0 %v3382
        %3729 = vmatprep.subr.bf16.mxu0 %v3379
        %3730 = vmatpush1.bf16.msra.mxu0 %v3378
        %3731 = vmatprep.subr.bf16.mxu0 %v3375
        %3732 = vmatpush1.bf16.msra.mxu0 %v3374
        %3733 = vmatprep.subr.bf16.mxu0 %v3371
        %3734 = vmatpush1.bf16.msra.mxu0 %v3370
        %3735 = vmatprep.subr.bf16.mxu0 %v3431
        %3736 = vmatpush2.bf16.msra.mxu0 %v3430
        %3737 = vmatprep.subr.bf16.mxu0 %v3427
        %3738 = vmatpush2.bf16.msra.mxu0 %v3426
        %3739 = vmatprep.subr.bf16.mxu0 %v3423
        %3740 = vmatpush2.bf16.msra.mxu0 %v3422
        %3741 = vmatprep.subr.bf16.mxu0 %v3419
        %3742 = vmatpush2.bf16.msra.mxu0 %v3418
        %3743 = vmatprep.subr.bf16.mxu0 %v3415
        %3744 = vmatpush2.bf16.msra.mxu0 %v3414
        %3745 = vmatprep.subr.bf16.mxu0 %v3411
        %3746 = vmatpush2.bf16.msra.mxu0 %v3410
        %3747 = vmatprep.subr.bf16.mxu0 %v3407
        %3748 = vmatpush2.bf16.msra.mxu0 %v3406
        %3749 = vmatprep.subr.bf16.mxu0 %v3403
        %3750 = vmatpush2.bf16.msra.mxu0 %v3402
        %3751 = vmatprep.mubr.bf16.mxu0 %v2907
        %3752 = vmatmul.mubr.bf16.gmra.mxu0 %v2906
        %v3753 = vpop.f32.mrf.mxu0
        %v3754 = vadd.f32 %v3701, %v3753
        %v3755 = vpop.f32.mrf.mxu0
        %v3756 = vadd.f32 %v3703, %v3755
        %v3757 = vpop.f32.mrf.mxu0
        %v3758 = vadd.f32 %v3705, %v3757
        %v3759 = vpop.f32.mrf.mxu0
        %v3760 = vadd.f32 %v3707, %v3759
        %3761 = vmatprep.mubr.bf16.mxu0 %v2911
        %3762 = vmatmul.mubr.bf16.gmra.mxu0 %v2910
        %v3763 = vpop.f32.mrf.mxu0
        %v3764 = vadd.f32 %v3711, %v3763
        %v3765 = vpop.f32.mrf.mxu0
        %v3766 = vadd.f32 %v3713, %v3765
        %v3767 = vpop.f32.mrf.mxu0
        %v3768 = vadd.f32 %v3715, %v3767
        %v3769 = vpop.f32.mrf.mxu0
        %v3770 = vadd.f32 %v3717, %v3769
        %3771 = vdwg.mxu0
        %v3772 = vadd.f32 %v2696, %v3648
        %v3773 = vadd.f32 %v2697, %v3650
        %v3774 = vadd.f32 %v2698, %v3754
        %v3775 = vadd.f32 %v2699, %v3756
        %v3776 = vadd.f32 %v2700, %v3652
        %v3777 = vadd.f32 %v2701, %v3654
        %v3778 = vadd.f32 %v2702, %v3758
        %v3779 = vadd.f32 %v2703, %v3760
        %v3780 = vadd.f32 %v2704, %v3658
        %v3781 = vadd.f32 %v2705, %v3660
        %v3782 = vadd.f32 %v2706, %v3764
        %v3783 = vadd.f32 %v2707, %v3766
        %v3784 = vadd.f32 %v2708, %v3662
        %v3785 = vadd.f32 %v2709, %v3664
        %v3786 = vadd.f32 %v2710, %v3768
        %v3787 = vadd.f32 %v2711, %v3770
        %v3788 = vld [vmem:[#allocation2 + $0x20] sm:$0x33]
        %v3789 = vld [vmem:[#allocation2 + $0x28] sm:$0x33]
        %v3790 = vld [vmem:[#allocation2 + $0x50] sm:$0x33]
        %v3791 = vld [vmem:[#allocation2 + $0x58] sm:$0x33]
        %vm3792 = vsmask.f32 2304
        %vm3793 = vsmask.f32 6416
        %vm3794 = vmor %vm3792, %vm3793
        %v3796 = vshrl.u32 %v2712, 16
        %v3798 = vrot.slane %v3796, 5
        %v3799 = vshll.u32 %v2712, 16
        %v3801 = vrot.slane %v3799, 6
        %v3802 = vor.u32 %v3798, %v3801
        %v3803 = vrot.slane %v3802, 4
        %v3804 = vrot.slane %v1615, 5
        %v3805 = vrot.slane %v1597, 6
        %v3806 = vor.u32 %v3804, %v3805
        %v3807 = vsel %vm3794, %v3803, %v3806
        %v3809 = vshrl.u32 %v2713, 16
        %v3811 = vrot.slane %v3809, 5
        %v3812 = vshll.u32 %v2713, 16
        %v3814 = vrot.slane %v3812, 6
        %v3815 = vor.u32 %v3811, %v3814
        %v3816 = vrot.slane %v3815, 4
        %v3817 = vrot.slane %v1625, 5
        %v3818 = vrot.slane %v1611, 6
        %v3819 = vor.u32 %v3817, %v3818
        %v3820 = vsel %vm3794, %v3816, %v3819
        %v3821 = vrot.slane %v3806, 4
        %v3823 = vshrl.u32 %v3788, 16
        %v3825 = vrot.slane %v3823, 5
        %v3826 = vshll.u32 %v3788, 16
        %v3828 = vrot.slane %v3826, 6
        %v3829 = vor.u32 %v3825, %v3828
        %v3830 = vsel %vm3794, %v3821, %v3829
        %v3831 = vrot.slane %v3819, 4
        %v3833 = vshrl.u32 %v3789, 16
        %v3835 = vrot.slane %v3833, 5
        %v3836 = vshll.u32 %v3789, 16
        %v3838 = vrot.slane %v3836, 6
        %v3839 = vor.u32 %v3835, %v3838
        %v3840 = vsel %vm3794, %v3831, %v3839
        %v3842 = vshrl.u32 %v2714, 16
        %v3844 = vrot.slane %v3842, 5
        %v3845 = vshll.u32 %v2714, 16
        %v3847 = vrot.slane %v3845, 6
        %v3848 = vor.u32 %v3844, %v3847
        %v3849 = vrot.slane %v3848, 4
        %v3850 = vrot.slane %v1663, 5
        %v3851 = vrot.slane %v1645, 6
        %v3852 = vor.u32 %v3850, %v3851
        %v3853 = vsel %vm3794, %v3849, %v3852
        %v3855 = vshrl.u32 %v2715, 16
        %v3857 = vrot.slane %v3855, 5
        %v3858 = vshll.u32 %v2715, 16
        %v3860 = vrot.slane %v3858, 6
        %v3861 = vor.u32 %v3857, %v3860
        %v3862 = vrot.slane %v3861, 4
        %v3863 = vrot.slane %v1673, 5
        %v3864 = vrot.slane %v1659, 6
        %v3865 = vor.u32 %v3863, %v3864
        %v3866 = vsel %vm3794, %v3862, %v3865
        %v3867 = vrot.slane %v3852, 4
        %v3869 = vshrl.u32 %v3790, 16
        %v3871 = vrot.slane %v3869, 5
        %v3872 = vshll.u32 %v3790, 16
        %v3874 = vrot.slane %v3872, 6
        %v3875 = vor.u32 %v3871, %v3874
        %v3876 = vsel %vm3794, %v3867, %v3875
        %v3877 = vrot.slane %v3865, 4
        %v3879 = vshrl.u32 %v3791, 16
        %v3881 = vrot.slane %v3879, 5
        %v3882 = vshll.u32 %v3791, 16
        %v3884 = vrot.slane %v3882, 6
        %v3885 = vor.u32 %v3881, %v3884
        %v3886 = vsel %vm3794, %v3877, %v3885
        %s3887 = scalar_lea.vmem [#allocation4], 3072
        %v3888 = vld [vmem:[%s3887] sm:$0xff]
        %v3889 = vld [vmem:[%s3887 + $0x8] sm:$0xff]
        %v3890 = vld [vmem:[%s3887 + $0x10] sm:$0xff]
        %v3891 = vld [vmem:[%s3887 + $0x18] sm:$0xff]
        %v3892 = vld [vmem:[%s3887 + $0x20] sm:$0xff]
        %v3893 = vld [vmem:[%s3887 + $0x28] sm:$0xff]
        %v3894 = vld [vmem:[%s3887 + $0x30] sm:$0xff]
        %v3895 = vld [vmem:[%s3887 + $0x38] sm:$0xff]
        %v3896 = vld [vmem:[%s3887 + $0x40] sm:$0xff]
        %v3897 = vld [vmem:[%s3887 + $0x48] sm:$0xff]
        %v3898 = vld [vmem:[%s3887 + $0x50] sm:$0xff]
        %v3899 = vld [vmem:[%s3887 + $0x58] sm:$0xff]
        %v3900 = vld [vmem:[%s3887 + $0x60] sm:$0xff]
        %v3901 = vld [vmem:[%s3887 + $0x68] sm:$0xff]
        %v3902 = vld [vmem:[%s3887 + $0x70] sm:$0xff]
        %v3903 = vld [vmem:[%s3887 + $0x78] sm:$0xff]
        %v3904 = vld [vmem:[%s3887 + $0x80] sm:$0xff]
        %v3905 = vld [vmem:[%s3887 + $0x88] sm:$0xff]
        %v3906 = vld [vmem:[%s3887 + $0x90] sm:$0xff]
        %v3907 = vld [vmem:[%s3887 + $0x98] sm:$0xff]
        %v3908 = vld [vmem:[%s3887 + $0xa0] sm:$0xff]
        %v3909 = vld [vmem:[%s3887 + $0xa8] sm:$0xff]
        %v3910 = vld [vmem:[%s3887 + $0xb0] sm:$0xff]
        %v3911 = vld [vmem:[%s3887 + $0xb8] sm:$0xff]
        %v3912 = vld [vmem:[%s3887 + $0xc0] sm:$0xff]
        %v3913 = vld [vmem:[%s3887 + $0xc8] sm:$0xff]
        %v3914 = vld [vmem:[%s3887 + $0xd0] sm:$0xff]
        %v3915 = vld [vmem:[%s3887 + $0xd8] sm:$0xff]
        %v3916 = vld [vmem:[%s3887 + $0xe0] sm:$0xff]
        %v3917 = vld [vmem:[%s3887 + $0xe8] sm:$0xff]
        %v3918 = vld [vmem:[%s3887 + $0xf0] sm:$0xff]
        %v3919 = vld [vmem:[%s3887 + $0xf8] sm:$0xff]
        %v3920 = vld [vmem:[%s3887 + $0x100] sm:$0xff]
        %v3921 = vld [vmem:[%s3887 + $0x108] sm:$0xff]
        %v3922 = vld [vmem:[%s3887 + $0x110] sm:$0xff]
        %v3923 = vld [vmem:[%s3887 + $0x118] sm:$0xff]
        %v3924 = vld [vmem:[%s3887 + $0x120] sm:$0xff]
        %v3925 = vld [vmem:[%s3887 + $0x128] sm:$0xff]
        %v3926 = vld [vmem:[%s3887 + $0x130] sm:$0xff]
        %v3927 = vld [vmem:[%s3887 + $0x138] sm:$0xff]
        %v3928 = vld [vmem:[%s3887 + $0x140] sm:$0xff]
        %v3929 = vld [vmem:[%s3887 + $0x148] sm:$0xff]
        %v3930 = vld [vmem:[%s3887 + $0x150] sm:$0xff]
        %v3931 = vld [vmem:[%s3887 + $0x158] sm:$0xff]
        %v3932 = vld [vmem:[%s3887 + $0x160] sm:$0xff]
        %v3933 = vld [vmem:[%s3887 + $0x168] sm:$0xff]
        %v3934 = vld [vmem:[%s3887 + $0x170] sm:$0xff]
        %v3935 = vld [vmem:[%s3887 + $0x178] sm:$0xff]
        %v3936 = vld [vmem:[%s3887 + $0x180] sm:$0xff]
        %v3937 = vld [vmem:[%s3887 + $0x188] sm:$0xff]
        %v3938 = vld [vmem:[%s3887 + $0x190] sm:$0xff]
        %v3939 = vld [vmem:[%s3887 + $0x198] sm:$0xff]
        %v3940 = vld [vmem:[%s3887 + $0x1a0] sm:$0xff]
        %v3941 = vld [vmem:[%s3887 + $0x1a8] sm:$0xff]
        %v3942 = vld [vmem:[%s3887 + $0x1b0] sm:$0xff]
        %v3943 = vld [vmem:[%s3887 + $0x1b8] sm:$0xff]
        %v3944 = vld [vmem:[%s3887 + $0x1c0] sm:$0xff]
        %v3945 = vld [vmem:[%s3887 + $0x1c8] sm:$0xff]
        %v3946 = vld [vmem:[%s3887 + $0x1d0] sm:$0xff]
        %v3947 = vld [vmem:[%s3887 + $0x1d8] sm:$0xff]
        %v3948 = vld [vmem:[%s3887 + $0x1e0] sm:$0xff]
        %v3949 = vld [vmem:[%s3887 + $0x1e8] sm:$0xff]
        %v3950 = vld [vmem:[%s3887 + $0x1f0] sm:$0xff]
        %v3951 = vld [vmem:[%s3887 + $0x1f8] sm:$0xff]
        %v3952 = vld [vmem:[%s3887 + $0x200] sm:$0xff]
        %v3953 = vld [vmem:[%s3887 + $0x208] sm:$0xff]
        %v3954 = vld [vmem:[%s3887 + $0x210] sm:$0xff]
        %v3955 = vld [vmem:[%s3887 + $0x218] sm:$0xff]
        %v3956 = vld [vmem:[%s3887 + $0x220] sm:$0xff]
        %v3957 = vld [vmem:[%s3887 + $0x228] sm:$0xff]
        %v3958 = vld [vmem:[%s3887 + $0x230] sm:$0xff]
        %v3959 = vld [vmem:[%s3887 + $0x238] sm:$0xff]
        %v3960 = vld [vmem:[%s3887 + $0x240] sm:$0xff]
        %v3961 = vld [vmem:[%s3887 + $0x248] sm:$0xff]
        %v3962 = vld [vmem:[%s3887 + $0x250] sm:$0xff]
        %v3963 = vld [vmem:[%s3887 + $0x258] sm:$0xff]
        %v3964 = vld [vmem:[%s3887 + $0x260] sm:$0xff]
        %v3965 = vld [vmem:[%s3887 + $0x268] sm:$0xff]
        %v3966 = vld [vmem:[%s3887 + $0x270] sm:$0xff]
        %v3967 = vld [vmem:[%s3887 + $0x278] sm:$0xff]
        %v3968 = vld [vmem:[%s3887 + $0x280] sm:$0xff]
        %v3969 = vld [vmem:[%s3887 + $0x288] sm:$0xff]
        %v3970 = vld [vmem:[%s3887 + $0x290] sm:$0xff]
        %v3971 = vld [vmem:[%s3887 + $0x298] sm:$0xff]
        %v3972 = vld [vmem:[%s3887 + $0x2a0] sm:$0xff]
        %v3973 = vld [vmem:[%s3887 + $0x2a8] sm:$0xff]
        %v3974 = vld [vmem:[%s3887 + $0x2b0] sm:$0xff]
        %v3975 = vld [vmem:[%s3887 + $0x2b8] sm:$0xff]
        %v3976 = vld [vmem:[%s3887 + $0x2c0] sm:$0xff]
        %v3977 = vld [vmem:[%s3887 + $0x2c8] sm:$0xff]
        %v3978 = vld [vmem:[%s3887 + $0x2d0] sm:$0xff]
        %v3979 = vld [vmem:[%s3887 + $0x2d8] sm:$0xff]
        %v3980 = vld [vmem:[%s3887 + $0x2e0] sm:$0xff]
        %v3981 = vld [vmem:[%s3887 + $0x2e8] sm:$0xff]
        %v3982 = vld [vmem:[%s3887 + $0x2f0] sm:$0xff]
        %v3983 = vld [vmem:[%s3887 + $0x2f8] sm:$0xff]
        %v3984 = vld [vmem:[%s3887 + $0x300] sm:$0xff]
        %v3985 = vld [vmem:[%s3887 + $0x308] sm:$0xff]
        %v3986 = vld [vmem:[%s3887 + $0x310] sm:$0xff]
        %v3987 = vld [vmem:[%s3887 + $0x318] sm:$0xff]
        %v3988 = vld [vmem:[%s3887 + $0x320] sm:$0xff]
        %v3989 = vld [vmem:[%s3887 + $0x328] sm:$0xff]
        %v3990 = vld [vmem:[%s3887 + $0x330] sm:$0xff]
        %v3991 = vld [vmem:[%s3887 + $0x338] sm:$0xff]
        %v3992 = vld [vmem:[%s3887 + $0x340] sm:$0xff]
        %v3993 = vld [vmem:[%s3887 + $0x348] sm:$0xff]
        %v3994 = vld [vmem:[%s3887 + $0x350] sm:$0xff]
        %v3995 = vld [vmem:[%s3887 + $0x358] sm:$0xff]
        %v3996 = vld [vmem:[%s3887 + $0x360] sm:$0xff]
        %v3997 = vld [vmem:[%s3887 + $0x368] sm:$0xff]
        %v3998 = vld [vmem:[%s3887 + $0x370] sm:$0xff]
        %v3999 = vld [vmem:[%s3887 + $0x378] sm:$0xff]
        %v4000 = vld [vmem:[%s3887 + $0x380] sm:$0xff]
        %v4001 = vld [vmem:[%s3887 + $0x388] sm:$0xff]
        %v4002 = vld [vmem:[%s3887 + $0x390] sm:$0xff]
        %v4003 = vld [vmem:[%s3887 + $0x398] sm:$0xff]
        %v4004 = vld [vmem:[%s3887 + $0x3a0] sm:$0xff]
        %v4005 = vld [vmem:[%s3887 + $0x3a8] sm:$0xff]
        %v4006 = vld [vmem:[%s3887 + $0x3b0] sm:$0xff]
        %v4007 = vld [vmem:[%s3887 + $0x3b8] sm:$0xff]
        %v4008 = vld [vmem:[%s3887 + $0x3c0] sm:$0xff]
        %v4009 = vld [vmem:[%s3887 + $0x3c8] sm:$0xff]
        %v4010 = vld [vmem:[%s3887 + $0x3d0] sm:$0xff]
        %v4011 = vld [vmem:[%s3887 + $0x3d8] sm:$0xff]
        %v4012 = vld [vmem:[%s3887 + $0x3e0] sm:$0xff]
        %v4013 = vld [vmem:[%s3887 + $0x3e8] sm:$0xff]
        %v4014 = vld [vmem:[%s3887 + $0x3f0] sm:$0xff]
        %v4015 = vld [vmem:[%s3887 + $0x3f8] sm:$0xff]
        %v4016 = vunpack.c.l.b16 %v3807
        %v4017 = vunpack.c.h.b16 %v3807
        %v4018 = vunpack.c.l.b16 %v3820
        %v4019 = vunpack.c.h.b16 %v3820
        %v4020 = vunpack.c.l.b16 %v3830
        %v4021 = vunpack.c.h.b16 %v3830
        %v4022 = vunpack.c.l.b16 %v3840
        %v4023 = vunpack.c.h.b16 %v3840
        %v4024 = vunpack.c.l.b16 %v3853
        %v4025 = vunpack.c.h.b16 %v3853
        %v4026 = vunpack.c.l.b16 %v3866
        %v4027 = vunpack.c.h.b16 %v3866
        %v4028 = vunpack.c.l.b16 %v3876
        %v4029 = vunpack.c.h.b16 %v3876
        %v4030 = vunpack.c.l.b16 %v3886
        %v4031 = vunpack.c.h.b16 %v3886
        %v4032 = vpack.c.b16 %v4020, %v4016
        %v4033 = vpack.c.b16 %v4021, %v4017
        %v4034 = vpack.c.b16 %v4022, %v4018
        %v4035 = vpack.c.b16 %v4023, %v4019
        %v4036 = vpack.c.b16 %v4028, %v4024
        %v4037 = vpack.c.b16 %v4029, %v4025
        %v4038 = vpack.c.b16 %v4030, %v4026
        %v4039 = vpack.c.b16 %v4031, %v4027
        %v4176 = vunpack.c.l.b16 %v3888
        %v4177 = vunpack.c.h.b16 %v3888
        %v4178 = vunpack.c.l.b16 %v3889
        %v4179 = vunpack.c.h.b16 %v3889
        %v4180 = vunpack.c.l.b16 %v3890
        %v4181 = vunpack.c.h.b16 %v3890
        %v4182 = vunpack.c.l.b16 %v3891
        %v4183 = vunpack.c.h.b16 %v3891
        %v4184 = vunpack.c.l.b16 %v3892
        %v4185 = vunpack.c.h.b16 %v3892
        %v4186 = vunpack.c.l.b16 %v3893
        %v4187 = vunpack.c.h.b16 %v3893
        %v4188 = vunpack.c.l.b16 %v3894
        %v4189 = vunpack.c.h.b16 %v3894
        %v4190 = vunpack.c.l.b16 %v3895
        %v4191 = vunpack.c.h.b16 %v3895
        %v4192 = vunpack.c.l.b16 %v3896
        %v4193 = vunpack.c.h.b16 %v3896
        %v4194 = vunpack.c.l.b16 %v3897
        %v4195 = vunpack.c.h.b16 %v3897
        %v4196 = vunpack.c.l.b16 %v3898
        %v4197 = vunpack.c.h.b16 %v3898
        %v4198 = vunpack.c.l.b16 %v3899
        %v4199 = vunpack.c.h.b16 %v3899
        %v4200 = vunpack.c.l.b16 %v3900
        %v4201 = vunpack.c.h.b16 %v3900
        %v4202 = vunpack.c.l.b16 %v3901
        %v4203 = vunpack.c.h.b16 %v3901
        %v4204 = vunpack.c.l.b16 %v3902
        %v4205 = vunpack.c.h.b16 %v3902
        %v4206 = vunpack.c.l.b16 %v3903
        %v4207 = vunpack.c.h.b16 %v3903
        %v4208 = vunpack.c.l.b16 %v3904
        %v4209 = vunpack.c.h.b16 %v3904
        %v4210 = vunpack.c.l.b16 %v3905
        %v4211 = vunpack.c.h.b16 %v3905
        %v4212 = vunpack.c.l.b16 %v3906
        %v4213 = vunpack.c.h.b16 %v3906
        %v4214 = vunpack.c.l.b16 %v3907
        %v4215 = vunpack.c.h.b16 %v3907
        %v4216 = vunpack.c.l.b16 %v3908
        %v4217 = vunpack.c.h.b16 %v3908
        %v4218 = vunpack.c.l.b16 %v3909
        %v4219 = vunpack.c.h.b16 %v3909
        %v4220 = vunpack.c.l.b16 %v3910
        %v4221 = vunpack.c.h.b16 %v3910
        %v4222 = vunpack.c.l.b16 %v3911
        %v4223 = vunpack.c.h.b16 %v3911
        %v4224 = vunpack.c.l.b16 %v3912
        %v4225 = vunpack.c.h.b16 %v3912
        %v4226 = vunpack.c.l.b16 %v3913
        %v4227 = vunpack.c.h.b16 %v3913
        %v4228 = vunpack.c.l.b16 %v3914
        %v4229 = vunpack.c.h.b16 %v3914
        %v4230 = vunpack.c.l.b16 %v3915
        %v4231 = vunpack.c.h.b16 %v3915
        %v4232 = vunpack.c.l.b16 %v3916
        %v4233 = vunpack.c.h.b16 %v3916
        %v4234 = vunpack.c.l.b16 %v3917
        %v4235 = vunpack.c.h.b16 %v3917
        %v4236 = vunpack.c.l.b16 %v3918
        %v4237 = vunpack.c.h.b16 %v3918
        %v4238 = vunpack.c.l.b16 %v3919
        %v4239 = vunpack.c.h.b16 %v3919
        %v4240 = vunpack.c.l.b16 %v3920
        %v4241 = vunpack.c.h.b16 %v3920
        %v4242 = vunpack.c.l.b16 %v3921
        %v4243 = vunpack.c.h.b16 %v3921
        %v4244 = vunpack.c.l.b16 %v3922
        %v4245 = vunpack.c.h.b16 %v3922
        %v4246 = vunpack.c.l.b16 %v3923
        %v4247 = vunpack.c.h.b16 %v3923
        %v4248 = vunpack.c.l.b16 %v3924
        %v4249 = vunpack.c.h.b16 %v3924
        %v4250 = vunpack.c.l.b16 %v3925
        %v4251 = vunpack.c.h.b16 %v3925
        %v4252 = vunpack.c.l.b16 %v3926
        %v4253 = vunpack.c.h.b16 %v3926
        %v4254 = vunpack.c.l.b16 %v3927
        %v4255 = vunpack.c.h.b16 %v3927
        %v4256 = vunpack.c.l.b16 %v3928
        %v4257 = vunpack.c.h.b16 %v3928
        %v4258 = vunpack.c.l.b16 %v3929
        %v4259 = vunpack.c.h.b16 %v3929
        %v4260 = vunpack.c.l.b16 %v3930
        %v4261 = vunpack.c.h.b16 %v3930
        %v4262 = vunpack.c.l.b16 %v3931
        %v4263 = vunpack.c.h.b16 %v3931
        %v4264 = vunpack.c.l.b16 %v3932
        %v4265 = vunpack.c.h.b16 %v3932
        %v4266 = vunpack.c.l.b16 %v3933
        %v4267 = vunpack.c.h.b16 %v3933
        %v4268 = vunpack.c.l.b16 %v3934
        %v4269 = vunpack.c.h.b16 %v3934
        %v4270 = vunpack.c.l.b16 %v3935
        %v4271 = vunpack.c.h.b16 %v3935
        %v4272 = vunpack.c.l.b16 %v3936
        %v4273 = vunpack.c.h.b16 %v3936
        %v4274 = vunpack.c.l.b16 %v3937
        %v4275 = vunpack.c.h.b16 %v3937
        %v4276 = vunpack.c.l.b16 %v3938
        %v4277 = vunpack.c.h.b16 %v3938
        %v4278 = vunpack.c.l.b16 %v3939
        %v4279 = vunpack.c.h.b16 %v3939
        %v4280 = vunpack.c.l.b16 %v3940
        %v4281 = vunpack.c.h.b16 %v3940
        %v4282 = vunpack.c.l.b16 %v3941
        %v4283 = vunpack.c.h.b16 %v3941
        %v4284 = vunpack.c.l.b16 %v3942
        %v4285 = vunpack.c.h.b16 %v3942
        %v4286 = vunpack.c.l.b16 %v3943
        %v4287 = vunpack.c.h.b16 %v3943
        %v4288 = vunpack.c.l.b16 %v3944
        %v4289 = vunpack.c.h.b16 %v3944
        %v4290 = vunpack.c.l.b16 %v3945
        %v4291 = vunpack.c.h.b16 %v3945
        %v4292 = vunpack.c.l.b16 %v3946
        %v4293 = vunpack.c.h.b16 %v3946
        %v4294 = vunpack.c.l.b16 %v3947
        %v4295 = vunpack.c.h.b16 %v3947
        %v4296 = vunpack.c.l.b16 %v3948
        %v4297 = vunpack.c.h.b16 %v3948
        %v4298 = vunpack.c.l.b16 %v3949
        %v4299 = vunpack.c.h.b16 %v3949
        %v4300 = vunpack.c.l.b16 %v3950
        %v4301 = vunpack.c.h.b16 %v3950
        %v4302 = vunpack.c.l.b16 %v3951
        %v4303 = vunpack.c.h.b16 %v3951
        %v4304 = vunpack.c.l.b16 %v3952
        %v4305 = vunpack.c.h.b16 %v3952
        %v4306 = vunpack.c.l.b16 %v3953
        %v4307 = vunpack.c.h.b16 %v3953
        %v4308 = vunpack.c.l.b16 %v3954
        %v4309 = vunpack.c.h.b16 %v3954
        %v4310 = vunpack.c.l.b16 %v3955
        %v4311 = vunpack.c.h.b16 %v3955
        %v4312 = vunpack.c.l.b16 %v3956
        %v4313 = vunpack.c.h.b16 %v3956
        %v4314 = vunpack.c.l.b16 %v3957
        %v4315 = vunpack.c.h.b16 %v3957
        %v4316 = vunpack.c.l.b16 %v3958
        %v4317 = vunpack.c.h.b16 %v3958
        %v4318 = vunpack.c.l.b16 %v3959
        %v4319 = vunpack.c.h.b16 %v3959
        %v4320 = vunpack.c.l.b16 %v3960
        %v4321 = vunpack.c.h.b16 %v3960
        %v4322 = vunpack.c.l.b16 %v3961
        %v4323 = vunpack.c.h.b16 %v3961
        %v4324 = vunpack.c.l.b16 %v3962
        %v4325 = vunpack.c.h.b16 %v3962
        %v4326 = vunpack.c.l.b16 %v3963
        %v4327 = vunpack.c.h.b16 %v3963
        %v4328 = vunpack.c.l.b16 %v3964
        %v4329 = vunpack.c.h.b16 %v3964
        %v4330 = vunpack.c.l.b16 %v3965
        %v4331 = vunpack.c.h.b16 %v3965
        %v4332 = vunpack.c.l.b16 %v3966
        %v4333 = vunpack.c.h.b16 %v3966
        %v4334 = vunpack.c.l.b16 %v3967
        %v4335 = vunpack.c.h.b16 %v3967
        %v4336 = vunpack.c.l.b16 %v3968
        %v4337 = vunpack.c.h.b16 %v3968
        %v4338 = vunpack.c.l.b16 %v3969
        %v4339 = vunpack.c.h.b16 %v3969
        %v4340 = vunpack.c.l.b16 %v3970
        %v4341 = vunpack.c.h.b16 %v3970
        %v4342 = vunpack.c.l.b16 %v3971
        %v4343 = vunpack.c.h.b16 %v3971
        %v4344 = vunpack.c.l.b16 %v3972
        %v4345 = vunpack.c.h.b16 %v3972
        %v4346 = vunpack.c.l.b16 %v3973
        %v4347 = vunpack.c.h.b16 %v3973
        %v4348 = vunpack.c.l.b16 %v3974
        %v4349 = vunpack.c.h.b16 %v3974
        %v4350 = vunpack.c.l.b16 %v3975
        %v4351 = vunpack.c.h.b16 %v3975
        %v4352 = vunpack.c.l.b16 %v3976
        %v4353 = vunpack.c.h.b16 %v3976
        %v4354 = vunpack.c.l.b16 %v3977
        %v4355 = vunpack.c.h.b16 %v3977
        %v4356 = vunpack.c.l.b16 %v3978
        %v4357 = vunpack.c.h.b16 %v3978
        %v4358 = vunpack.c.l.b16 %v3979
        %v4359 = vunpack.c.h.b16 %v3979
        %v4360 = vunpack.c.l.b16 %v3980
        %v4361 = vunpack.c.h.b16 %v3980
        %v4362 = vunpack.c.l.b16 %v3981
        %v4363 = vunpack.c.h.b16 %v3981
        %v4364 = vunpack.c.l.b16 %v3982
        %v4365 = vunpack.c.h.b16 %v3982
        %v4366 = vunpack.c.l.b16 %v3983
        %v4367 = vunpack.c.h.b16 %v3983
        %v4368 = vunpack.c.l.b16 %v3984
        %v4369 = vunpack.c.h.b16 %v3984
        %v4370 = vunpack.c.l.b16 %v3985
        %v4371 = vunpack.c.h.b16 %v3985
        %v4372 = vunpack.c.l.b16 %v3986
        %v4373 = vunpack.c.h.b16 %v3986
        %v4374 = vunpack.c.l.b16 %v3987
        %v4375 = vunpack.c.h.b16 %v3987
        %v4376 = vunpack.c.l.b16 %v3988
        %v4377 = vunpack.c.h.b16 %v3988
        %v4378 = vunpack.c.l.b16 %v3989
        %v4379 = vunpack.c.h.b16 %v3989
        %v4380 = vunpack.c.l.b16 %v3990
        %v4381 = vunpack.c.h.b16 %v3990
        %v4382 = vunpack.c.l.b16 %v3991
        %v4383 = vunpack.c.h.b16 %v3991
        %v4384 = vunpack.c.l.b16 %v3992
        %v4385 = vunpack.c.h.b16 %v3992
        %v4386 = vunpack.c.l.b16 %v3993
        %v4387 = vunpack.c.h.b16 %v3993
        %v4388 = vunpack.c.l.b16 %v3994
        %v4389 = vunpack.c.h.b16 %v3994
        %v4390 = vunpack.c.l.b16 %v3995
        %v4391 = vunpack.c.h.b16 %v3995
        %v4392 = vunpack.c.l.b16 %v3996
        %v4393 = vunpack.c.h.b16 %v3996
        %v4394 = vunpack.c.l.b16 %v3997
        %v4395 = vunpack.c.h.b16 %v3997
        %v4396 = vunpack.c.l.b16 %v3998
        %v4397 = vunpack.c.h.b16 %v3998
        %v4398 = vunpack.c.l.b16 %v3999
        %v4399 = vunpack.c.h.b16 %v3999
        %v4400 = vunpack.c.l.b16 %v4000
        %v4401 = vunpack.c.h.b16 %v4000
        %v4402 = vunpack.c.l.b16 %v4001
        %v4403 = vunpack.c.h.b16 %v4001
        %v4404 = vunpack.c.l.b16 %v4002
        %v4405 = vunpack.c.h.b16 %v4002
        %v4406 = vunpack.c.l.b16 %v4003
        %v4407 = vunpack.c.h.b16 %v4003
        %v4408 = vunpack.c.l.b16 %v4004
        %v4409 = vunpack.c.h.b16 %v4004
        %v4410 = vunpack.c.l.b16 %v4005
        %v4411 = vunpack.c.h.b16 %v4005
        %v4412 = vunpack.c.l.b16 %v4006
        %v4413 = vunpack.c.h.b16 %v4006
        %v4414 = vunpack.c.l.b16 %v4007
        %v4415 = vunpack.c.h.b16 %v4007
        %v4416 = vunpack.c.l.b16 %v4008
        %v4417 = vunpack.c.h.b16 %v4008
        %v4418 = vunpack.c.l.b16 %v4009
        %v4419 = vunpack.c.h.b16 %v4009
        %v4420 = vunpack.c.l.b16 %v4010
        %v4421 = vunpack.c.h.b16 %v4010
        %v4422 = vunpack.c.l.b16 %v4011
        %v4423 = vunpack.c.h.b16 %v4011
        %v4424 = vunpack.c.l.b16 %v4012
        %v4425 = vunpack.c.h.b16 %v4012
        %v4426 = vunpack.c.l.b16 %v4013
        %v4427 = vunpack.c.h.b16 %v4013
        %v4428 = vunpack.c.l.b16 %v4014
        %v4429 = vunpack.c.h.b16 %v4014
        %v4430 = vunpack.c.l.b16 %v4015
        %v4431 = vunpack.c.h.b16 %v4015
        %v4432 = vpack.c.b16 %v4180, %v4176
        %v4433 = vpack.c.b16 %v4181, %v4177
        %v4434 = vpack.c.b16 %v4182, %v4178
        %v4435 = vpack.c.b16 %v4183, %v4179
        %v4436 = vpack.c.b16 %v4188, %v4184
        %v4437 = vpack.c.b16 %v4189, %v4185
        %v4438 = vpack.c.b16 %v4190, %v4186
        %v4439 = vpack.c.b16 %v4191, %v4187
        %v4440 = vpack.c.b16 %v4196, %v4192
        %v4441 = vpack.c.b16 %v4197, %v4193
        %v4442 = vpack.c.b16 %v4198, %v4194
        %v4443 = vpack.c.b16 %v4199, %v4195
        %v4444 = vpack.c.b16 %v4204, %v4200
        %v4445 = vpack.c.b16 %v4205, %v4201
        %v4446 = vpack.c.b16 %v4206, %v4202
        %v4447 = vpack.c.b16 %v4207, %v4203
        %v4448 = vpack.c.b16 %v4212, %v4208
        %v4449 = vpack.c.b16 %v4213, %v4209
        %v4450 = vpack.c.b16 %v4214, %v4210
        %v4451 = vpack.c.b16 %v4215, %v4211
        %v4452 = vpack.c.b16 %v4220, %v4216
        %v4453 = vpack.c.b16 %v4221, %v4217
        %v4454 = vpack.c.b16 %v4222, %v4218
        %v4455 = vpack.c.b16 %v4223, %v4219
        %v4456 = vpack.c.b16 %v4228, %v4224
        %v4457 = vpack.c.b16 %v4229, %v4225
        %v4458 = vpack.c.b16 %v4230, %v4226
        %v4459 = vpack.c.b16 %v4231, %v4227
        %v4460 = vpack.c.b16 %v4236, %v4232
        %v4461 = vpack.c.b16 %v4237, %v4233
        %v4462 = vpack.c.b16 %v4238, %v4234
        %v4463 = vpack.c.b16 %v4239, %v4235
        %v4464 = vpack.c.b16 %v4244, %v4240
        %v4465 = vpack.c.b16 %v4245, %v4241
        %v4466 = vpack.c.b16 %v4246, %v4242
        %v4467 = vpack.c.b16 %v4247, %v4243
        %v4468 = vpack.c.b16 %v4252, %v4248
        %v4469 = vpack.c.b16 %v4253, %v4249
        %v4470 = vpack.c.b16 %v4254, %v4250
        %v4471 = vpack.c.b16 %v4255, %v4251
        %v4472 = vpack.c.b16 %v4260, %v4256
        %v4473 = vpack.c.b16 %v4261, %v4257
        %v4474 = vpack.c.b16 %v4262, %v4258
        %v4475 = vpack.c.b16 %v4263, %v4259
        %v4476 = vpack.c.b16 %v4268, %v4264
        %v4477 = vpack.c.b16 %v4269, %v4265
        %v4478 = vpack.c.b16 %v4270, %v4266
        %v4479 = vpack.c.b16 %v4271, %v4267
        %v4480 = vpack.c.b16 %v4276, %v4272
        %v4481 = vpack.c.b16 %v4277, %v4273
        %v4482 = vpack.c.b16 %v4278, %v4274
        %v4483 = vpack.c.b16 %v4279, %v4275
        %v4484 = vpack.c.b16 %v4284, %v4280
        %v4485 = vpack.c.b16 %v4285, %v4281
        %v4486 = vpack.c.b16 %v4286, %v4282
        %v4487 = vpack.c.b16 %v4287, %v4283
        %v4488 = vpack.c.b16 %v4292, %v4288
        %v4489 = vpack.c.b16 %v4293, %v4289
        %v4490 = vpack.c.b16 %v4294, %v4290
        %v4491 = vpack.c.b16 %v4295, %v4291
        %v4492 = vpack.c.b16 %v4300, %v4296
        %v4493 = vpack.c.b16 %v4301, %v4297
        %v4494 = vpack.c.b16 %v4302, %v4298
        %v4495 = vpack.c.b16 %v4303, %v4299
        %v4496 = vpack.c.b16 %v4308, %v4304
        %v4497 = vpack.c.b16 %v4309, %v4305
        %v4498 = vpack.c.b16 %v4310, %v4306
        %v4499 = vpack.c.b16 %v4311, %v4307
        %v4500 = vpack.c.b16 %v4316, %v4312
        %v4501 = vpack.c.b16 %v4317, %v4313
        %v4502 = vpack.c.b16 %v4318, %v4314
        %v4503 = vpack.c.b16 %v4319, %v4315
        %v4504 = vpack.c.b16 %v4324, %v4320
        %v4505 = vpack.c.b16 %v4325, %v4321
        %v4506 = vpack.c.b16 %v4326, %v4322
        %v4507 = vpack.c.b16 %v4327, %v4323
        %v4508 = vpack.c.b16 %v4332, %v4328
        %v4509 = vpack.c.b16 %v4333, %v4329
        %v4510 = vpack.c.b16 %v4334, %v4330
        %v4511 = vpack.c.b16 %v4335, %v4331
        %v4512 = vpack.c.b16 %v4340, %v4336
        %v4513 = vpack.c.b16 %v4341, %v4337
        %v4514 = vpack.c.b16 %v4342, %v4338
        %v4515 = vpack.c.b16 %v4343, %v4339
        %v4516 = vpack.c.b16 %v4348, %v4344
        %v4517 = vpack.c.b16 %v4349, %v4345
        %v4518 = vpack.c.b16 %v4350, %v4346
        %v4519 = vpack.c.b16 %v4351, %v4347
        %v4520 = vpack.c.b16 %v4356, %v4352
        %v4521 = vpack.c.b16 %v4357, %v4353
        %v4522 = vpack.c.b16 %v4358, %v4354
        %v4523 = vpack.c.b16 %v4359, %v4355
        %v4524 = vpack.c.b16 %v4364, %v4360
        %v4525 = vpack.c.b16 %v4365, %v4361
        %v4526 = vpack.c.b16 %v4366, %v4362
        %v4527 = vpack.c.b16 %v4367, %v4363
        %v4528 = vpack.c.b16 %v4372, %v4368
        %v4529 = vpack.c.b16 %v4373, %v4369
        %v4530 = vpack.c.b16 %v4374, %v4370
        %v4531 = vpack.c.b16 %v4375, %v4371
        %v4532 = vpack.c.b16 %v4380, %v4376
        %v4533 = vpack.c.b16 %v4381, %v4377
        %v4534 = vpack.c.b16 %v4382, %v4378
        %v4535 = vpack.c.b16 %v4383, %v4379
        %v4536 = vpack.c.b16 %v4388, %v4384
        %v4537 = vpack.c.b16 %v4389, %v4385
        %v4538 = vpack.c.b16 %v4390, %v4386
        %v4539 = vpack.c.b16 %v4391, %v4387
        %v4540 = vpack.c.b16 %v4396, %v4392
        %v4541 = vpack.c.b16 %v4397, %v4393
        %v4542 = vpack.c.b16 %v4398, %v4394
        %v4543 = vpack.c.b16 %v4399, %v4395
        %v4544 = vpack.c.b16 %v4404, %v4400
        %v4545 = vpack.c.b16 %v4405, %v4401
        %v4546 = vpack.c.b16 %v4406, %v4402
        %v4547 = vpack.c.b16 %v4407, %v4403
        %v4548 = vpack.c.b16 %v4412, %v4408
        %v4549 = vpack.c.b16 %v4413, %v4409
        %v4550 = vpack.c.b16 %v4414, %v4410
        %v4551 = vpack.c.b16 %v4415, %v4411
        %v4552 = vpack.c.b16 %v4420, %v4416
        %v4553 = vpack.c.b16 %v4421, %v4417
        %v4554 = vpack.c.b16 %v4422, %v4418
        %v4555 = vpack.c.b16 %v4423, %v4419
        %v4556 = vpack.c.b16 %v4428, %v4424
        %v4557 = vpack.c.b16 %v4429, %v4425
        %v4558 = vpack.c.b16 %v4430, %v4426
        %v4559 = vpack.c.b16 %v4431, %v4427
        %4688 = vmatprep.subr.bf16.mxu0 %v4461
        %4689 = vmatpush1.bf16.msra.mxu0 %v4460
        %4690 = vmatprep.subr.bf16.mxu0 %v4457
        %4691 = vmatpush1.bf16.msra.mxu0 %v4456
        %4692 = vmatprep.subr.bf16.mxu0 %v4453
        %4693 = vmatpush1.bf16.msra.mxu0 %v4452
        %4694 = vmatprep.subr.bf16.mxu0 %v4449
        %4695 = vmatpush1.bf16.msra.mxu0 %v4448
        %4696 = vmatprep.subr.bf16.mxu0 %v4445
        %4697 = vmatpush1.bf16.msra.mxu0 %v4444
        %4698 = vmatprep.subr.bf16.mxu0 %v4441
        %4699 = vmatpush1.bf16.msra.mxu0 %v4440
        %4700 = vmatprep.subr.bf16.mxu0 %v4437
        %4701 = vmatpush1.bf16.msra.mxu0 %v4436
        %4702 = vmatprep.subr.bf16.mxu0 %v4433
        %4703 = vmatpush1.bf16.msra.mxu0 %v4432
        %4704 = vmatprep.subr.bf16.mxu0 %v4493
        %4705 = vmatpush2.bf16.msra.mxu0 %v4492
        %4706 = vmatprep.subr.bf16.mxu0 %v4489
        %4707 = vmatpush2.bf16.msra.mxu0 %v4488
        %4708 = vmatprep.subr.bf16.mxu0 %v4485
        %4709 = vmatpush2.bf16.msra.mxu0 %v4484
        %4710 = vmatprep.subr.bf16.mxu0 %v4481
        %4711 = vmatpush2.bf16.msra.mxu0 %v4480
        %4712 = vmatprep.subr.bf16.mxu0 %v4477
        %4713 = vmatpush2.bf16.msra.mxu0 %v4476
        %4714 = vmatprep.subr.bf16.mxu0 %v4473
        %4715 = vmatpush2.bf16.msra.mxu0 %v4472
        %4716 = vmatprep.subr.bf16.mxu0 %v4469
        %4717 = vmatpush2.bf16.msra.mxu0 %v4468
        %4718 = vmatprep.subr.bf16.mxu0 %v4465
        %4719 = vmatpush2.bf16.msra.mxu0 %v4464
        %4720 = vmatprep.mubr.bf16.mxu0 %v4033
        %4721 = vmatmul.mubr.bf16.gmra.mxu0 %v4032
        %v4722 = vpop.f32.mrf.mxu0
        %v4723 = vadd.f32 0.0, %v4722
        %v4724 = vpop.f32.mrf.mxu0
        %v4725 = vadd.f32 0.0, %v4724
        %v4726 = vpop.f32.mrf.mxu0
        %v4727 = vadd.f32 0.0, %v4726
        %v4728 = vpop.f32.mrf.mxu0
        %v4729 = vadd.f32 0.0, %v4728
        %4730 = vmatprep.mubr.bf16.mxu0 %v4037
        %4731 = vmatmul.mubr.bf16.gmra.mxu0 %v4036
        %v4732 = vpop.f32.mrf.mxu0
        %v4733 = vadd.f32 0.0, %v4732
        %v4734 = vpop.f32.mrf.mxu0
        %v4735 = vadd.f32 0.0, %v4734
        %v4736 = vpop.f32.mrf.mxu0
        %v4737 = vadd.f32 0.0, %v4736
        %v4738 = vpop.f32.mrf.mxu0
        %v4739 = vadd.f32 0.0, %v4738
        %4740 = vdwg.mxu0
        %4741 = vmatprep.subr.bf16.mxu0 %v4525
        %4742 = vmatpush1.bf16.msra.mxu0 %v4524
        %4743 = vmatprep.subr.bf16.mxu0 %v4521
        %4744 = vmatpush1.bf16.msra.mxu0 %v4520
        %4745 = vmatprep.subr.bf16.mxu0 %v4517
        %4746 = vmatpush1.bf16.msra.mxu0 %v4516
        %4747 = vmatprep.subr.bf16.mxu0 %v4513
        %4748 = vmatpush1.bf16.msra.mxu0 %v4512
        %4749 = vmatprep.subr.bf16.mxu0 %v4509
        %4750 = vmatpush1.bf16.msra.mxu0 %v4508
        %4751 = vmatprep.subr.bf16.mxu0 %v4505
        %4752 = vmatpush1.bf16.msra.mxu0 %v4504
        %4753 = vmatprep.subr.bf16.mxu0 %v4501
        %4754 = vmatpush1.bf16.msra.mxu0 %v4500
        %4755 = vmatprep.subr.bf16.mxu0 %v4497
        %4756 = vmatpush1.bf16.msra.mxu0 %v4496
        %4757 = vmatprep.subr.bf16.mxu0 %v4557
        %4758 = vmatpush2.bf16.msra.mxu0 %v4556
        %4759 = vmatprep.subr.bf16.mxu0 %v4553
        %4760 = vmatpush2.bf16.msra.mxu0 %v4552
        %4761 = vmatprep.subr.bf16.mxu0 %v4549
        %4762 = vmatpush2.bf16.msra.mxu0 %v4548
        %4763 = vmatprep.subr.bf16.mxu0 %v4545
        %4764 = vmatpush2.bf16.msra.mxu0 %v4544
        %4765 = vmatprep.subr.bf16.mxu0 %v4541
        %4766 = vmatpush2.bf16.msra.mxu0 %v4540
        %4767 = vmatprep.subr.bf16.mxu0 %v4537
        %4768 = vmatpush2.bf16.msra.mxu0 %v4536
        %4769 = vmatprep.subr.bf16.mxu0 %v4533
        %4770 = vmatpush2.bf16.msra.mxu0 %v4532
        %4771 = vmatprep.subr.bf16.mxu0 %v4529
        %4772 = vmatpush2.bf16.msra.mxu0 %v4528
        %4773 = vmatprep.mubr.bf16.mxu0 %v4035
        %4774 = vmatmul.mubr.bf16.gmra.mxu0 %v4034
        %v4775 = vpop.f32.mrf.mxu0
        %v4776 = vadd.f32 %v4723, %v4775
        %v4777 = vpop.f32.mrf.mxu0
        %v4778 = vadd.f32 %v4725, %v4777
        %v4779 = vpop.f32.mrf.mxu0
        %v4780 = vadd.f32 %v4727, %v4779
        %v4781 = vpop.f32.mrf.mxu0
        %v4782 = vadd.f32 %v4729, %v4781
        %4783 = vmatprep.mubr.bf16.mxu0 %v4039
        %4784 = vmatmul.mubr.bf16.gmra.mxu0 %v4038
        %v4785 = vpop.f32.mrf.mxu0
        %v4786 = vadd.f32 %v4733, %v4785
        %v4787 = vpop.f32.mrf.mxu0
        %v4788 = vadd.f32 %v4735, %v4787
        %v4789 = vpop.f32.mrf.mxu0
        %v4790 = vadd.f32 %v4737, %v4789
        %v4791 = vpop.f32.mrf.mxu0
        %v4792 = vadd.f32 %v4739, %v4791
        %4793 = vdwg.mxu0
        %4794 = vmatprep.subr.bf16.mxu0 %v4463
        %4795 = vmatpush1.bf16.msra.mxu0 %v4462
        %4796 = vmatprep.subr.bf16.mxu0 %v4459
        %4797 = vmatpush1.bf16.msra.mxu0 %v4458
        %4798 = vmatprep.subr.bf16.mxu0 %v4455
        %4799 = vmatpush1.bf16.msra.mxu0 %v4454
        %4800 = vmatprep.subr.bf16.mxu0 %v4451
        %4801 = vmatpush1.bf16.msra.mxu0 %v4450
        %4802 = vmatprep.subr.bf16.mxu0 %v4447
        %4803 = vmatpush1.bf16.msra.mxu0 %v4446
        %4804 = vmatprep.subr.bf16.mxu0 %v4443
        %4805 = vmatpush1.bf16.msra.mxu0 %v4442
        %4806 = vmatprep.subr.bf16.mxu0 %v4439
        %4807 = vmatpush1.bf16.msra.mxu0 %v4438
        %4808 = vmatprep.subr.bf16.mxu0 %v4435
        %4809 = vmatpush1.bf16.msra.mxu0 %v4434
        %4810 = vmatprep.subr.bf16.mxu0 %v4495
        %4811 = vmatpush2.bf16.msra.mxu0 %v4494
        %4812 = vmatprep.subr.bf16.mxu0 %v4491
        %4813 = vmatpush2.bf16.msra.mxu0 %v4490
        %4814 = vmatprep.subr.bf16.mxu0 %v4487
        %4815 = vmatpush2.bf16.msra.mxu0 %v4486
        %4816 = vmatprep.subr.bf16.mxu0 %v4483
        %4817 = vmatpush2.bf16.msra.mxu0 %v4482
        %4818 = vmatprep.subr.bf16.mxu0 %v4479
        %4819 = vmatpush2.bf16.msra.mxu0 %v4478
        %4820 = vmatprep.subr.bf16.mxu0 %v4475
        %4821 = vmatpush2.bf16.msra.mxu0 %v4474
        %4822 = vmatprep.subr.bf16.mxu0 %v4471
        %4823 = vmatpush2.bf16.msra.mxu0 %v4470
        %4824 = vmatprep.subr.bf16.mxu0 %v4467
        %4825 = vmatpush2.bf16.msra.mxu0 %v4466
        %4826 = vmatprep.mubr.bf16.mxu0 %v4033
        %4827 = vmatmul.mubr.bf16.gmra.mxu0 %v4032
        %v4828 = vpop.f32.mrf.mxu0
        %v4829 = vadd.f32 0.0, %v4828
        %v4830 = vpop.f32.mrf.mxu0
        %v4831 = vadd.f32 0.0, %v4830
        %v4832 = vpop.f32.mrf.mxu0
        %v4833 = vadd.f32 0.0, %v4832
        %v4834 = vpop.f32.mrf.mxu0
        %v4835 = vadd.f32 0.0, %v4834
        %4836 = vmatprep.mubr.bf16.mxu0 %v4037
        %4837 = vmatmul.mubr.bf16.gmra.mxu0 %v4036
        %v4838 = vpop.f32.mrf.mxu0
        %v4839 = vadd.f32 0.0, %v4838
        %v4840 = vpop.f32.mrf.mxu0
        %v4841 = vadd.f32 0.0, %v4840
        %v4842 = vpop.f32.mrf.mxu0
        %v4843 = vadd.f32 0.0, %v4842
        %v4844 = vpop.f32.mrf.mxu0
        %v4845 = vadd.f32 0.0, %v4844
        %4846 = vdwg.mxu0
        %4847 = vmatprep.subr.bf16.mxu0 %v4527
        %4848 = vmatpush1.bf16.msra.mxu0 %v4526
        %4849 = vmatprep.subr.bf16.mxu0 %v4523
        %4850 = vmatpush1.bf16.msra.mxu0 %v4522
        %4851 = vmatprep.subr.bf16.mxu0 %v4519
        %4852 = vmatpush1.bf16.msra.mxu0 %v4518
        %4853 = vmatprep.subr.bf16.mxu0 %v4515
        %4854 = vmatpush1.bf16.msra.mxu0 %v4514
        %4855 = vmatprep.subr.bf16.mxu0 %v4511
        %4856 = vmatpush1.bf16.msra.mxu0 %v4510
        %4857 = vmatprep.subr.bf16.mxu0 %v4507
        %4858 = vmatpush1.bf16.msra.mxu0 %v4506
        %4859 = vmatprep.subr.bf16.mxu0 %v4503
        %4860 = vmatpush1.bf16.msra.mxu0 %v4502
        %4861 = vmatprep.subr.bf16.mxu0 %v4499
        %4862 = vmatpush1.bf16.msra.mxu0 %v4498
        %4863 = vmatprep.subr.bf16.mxu0 %v4559
        %4864 = vmatpush2.bf16.msra.mxu0 %v4558
        %4865 = vmatprep.subr.bf16.mxu0 %v4555
        %4866 = vmatpush2.bf16.msra.mxu0 %v4554
        %4867 = vmatprep.subr.bf16.mxu0 %v4551
        %4868 = vmatpush2.bf16.msra.mxu0 %v4550
        %4869 = vmatprep.subr.bf16.mxu0 %v4547
        %4870 = vmatpush2.bf16.msra.mxu0 %v4546
        %4871 = vmatprep.subr.bf16.mxu0 %v4543
        %4872 = vmatpush2.bf16.msra.mxu0 %v4542
        %4873 = vmatprep.subr.bf16.mxu0 %v4539
        %4874 = vmatpush2.bf16.msra.mxu0 %v4538
        %4875 = vmatprep.subr.bf16.mxu0 %v4535
        %4876 = vmatpush2.bf16.msra.mxu0 %v4534
        %4877 = vmatprep.subr.bf16.mxu0 %v4531
        %4878 = vmatpush2.bf16.msra.mxu0 %v4530
        %4879 = vmatprep.mubr.bf16.mxu0 %v4035
        %4880 = vmatmul.mubr.bf16.gmra.mxu0 %v4034
        %v4881 = vpop.f32.mrf.mxu0
        %v4882 = vadd.f32 %v4829, %v4881
        %v4883 = vpop.f32.mrf.mxu0
        %v4884 = vadd.f32 %v4831, %v4883
        %v4885 = vpop.f32.mrf.mxu0
        %v4886 = vadd.f32 %v4833, %v4885
        %v4887 = vpop.f32.mrf.mxu0
        %v4888 = vadd.f32 %v4835, %v4887
        %4889 = vmatprep.mubr.bf16.mxu0 %v4039
        %4890 = vmatmul.mubr.bf16.gmra.mxu0 %v4038
        %v4891 = vpop.f32.mrf.mxu0
        %v4892 = vadd.f32 %v4839, %v4891
        %v4893 = vpop.f32.mrf.mxu0
        %v4894 = vadd.f32 %v4841, %v4893
        %v4895 = vpop.f32.mrf.mxu0
        %v4896 = vadd.f32 %v4843, %v4895
        %v4897 = vpop.f32.mrf.mxu0
        %v4898 = vadd.f32 %v4845, %v4897
        %4899 = vdwg.mxu0
        %v4900 = vadd.f32 %v3772, %v4776
        %v4901 = vadd.f32 %v3773, %v4778
        %v4902 = vadd.f32 %v3774, %v4882
        %v4903 = vadd.f32 %v3775, %v4884
        %v4904 = vadd.f32 %v3776, %v4780
        %v4905 = vadd.f32 %v3777, %v4782
        %v4906 = vadd.f32 %v3778, %v4886
        %v4907 = vadd.f32 %v3779, %v4888
        %v4908 = vadd.f32 %v3780, %v4786
        %v4909 = vadd.f32 %v3781, %v4788
        %v4910 = vadd.f32 %v3782, %v4892
        %v4911 = vadd.f32 %v3783, %v4894
        %v4912 = vadd.f32 %v3784, %v4790
        %v4913 = vadd.f32 %v3785, %v4792
        %v4914 = vadd.f32 %v3786, %v4896
        %v4915 = vadd.f32 %v3787, %v4898
        %v4916 = vld [vmem:[#allocation2] sm:$0xcc]
        %v4917 = vld [vmem:[#allocation2 + $0x8] sm:$0xcc]
        %v4918 = vld [vmem:[#allocation2 + $0x30] sm:$0xcc]
        %v4919 = vld [vmem:[#allocation2 + $0x38] sm:$0xcc]
        %vm4928 = vcmask 1041408
        %vm4929 = vcmask 1045508
        %vm4930 = vmor %vm4928, %vm4929
        %v4931 = vrot.slane %v4916, 6
        %v4932 = vrot.slane %v4931, 4
        %v4933 = vrot.slane %v1574, 6
        %v4934 = vsel %vm4930, %v4932, %v4933
        %v4935 = vrot.slane %v4917, 6
        %v4936 = vrot.slane %v4935, 4
        %v4937 = vrot.slane %v1575, 6
        %v4938 = vsel %vm4930, %v4936, %v4937
        %v4939 = vrot.slane %v4933, 4
        %v4940 = vrot.slane %v3788, 6
        %v4941 = vsel %vm4930, %v4939, %v4940
        %v4942 = vrot.slane %v4937, 4
        %v4943 = vrot.slane %v3789, 6
        %v4944 = vsel %vm4930, %v4942, %v4943
        %v4945 = vrot.slane %v4918, 6
        %v4946 = vrot.slane %v4945, 4
        %v4947 = vrot.slane %v1580, 6
        %v4948 = vsel %vm4930, %v4946, %v4947
        %v4949 = vrot.slane %v4919, 6
        %v4950 = vrot.slane %v4949, 4
        %v4951 = vrot.slane %v1581, 6
        %v4952 = vsel %vm4930, %v4950, %v4951
        %v4953 = vrot.slane %v4947, 4
        %v4954 = vrot.slane %v3790, 6
        %v4955 = vsel %vm4930, %v4953, %v4954
        %v4956 = vrot.slane %v4951, 4
        %v4957 = vrot.slane %v3791, 6
        %v4958 = vsel %vm4930, %v4956, %v4957
        %s4959 = scalar_lea.vmem [#allocation4], 4096
        %v4960 = vld [vmem:[%s4959] sm:$0xff]
        %v4961 = vld [vmem:[%s4959 + $0x8] sm:$0xff]
        %v4962 = vld [vmem:[%s4959 + $0x10] sm:$0xff]
        %v4963 = vld [vmem:[%s4959 + $0x18] sm:$0xff]
        %v4964 = vld [vmem:[%s4959 + $0x20] sm:$0xff]
        %v4965 = vld [vmem:[%s4959 + $0x28] sm:$0xff]
        %v4966 = vld [vmem:[%s4959 + $0x30] sm:$0xff]
        %v4967 = vld [vmem:[%s4959 + $0x38] sm:$0xff]
        %v4968 = vld [vmem:[%s4959 + $0x40] sm:$0xff]
        %v4969 = vld [vmem:[%s4959 + $0x48] sm:$0xff]
        %v4970 = vld [vmem:[%s4959 + $0x50] sm:$0xff]
        %v4971 = vld [vmem:[%s4959 + $0x58] sm:$0xff]
        %v4972 = vld [vmem:[%s4959 + $0x60] sm:$0xff]
        %v4973 = vld [vmem:[%s4959 + $0x68] sm:$0xff]
        %v4974 = vld [vmem:[%s4959 + $0x70] sm:$0xff]
        %v4975 = vld [vmem:[%s4959 + $0x78] sm:$0xff]
        %v4976 = vld [vmem:[%s4959 + $0x80] sm:$0xff]
        %v4977 = vld [vmem:[%s4959 + $0x88] sm:$0xff]
        %v4978 = vld [vmem:[%s4959 + $0x90] sm:$0xff]
        %v4979 = vld [vmem:[%s4959 + $0x98] sm:$0xff]
        %v4980 = vld [vmem:[%s4959 + $0xa0] sm:$0xff]
        %v4981 = vld [vmem:[%s4959 + $0xa8] sm:$0xff]
        %v4982 = vld [vmem:[%s4959 + $0xb0] sm:$0xff]
        %v4983 = vld [vmem:[%s4959 + $0xb8] sm:$0xff]
        %v4984 = vld [vmem:[%s4959 + $0xc0] sm:$0xff]
        %v4985 = vld [vmem:[%s4959 + $0xc8] sm:$0xff]
        %v4986 = vld [vmem:[%s4959 + $0xd0] sm:$0xff]
        %v4987 = vld [vmem:[%s4959 + $0xd8] sm:$0xff]
        %v4988 = vld [vmem:[%s4959 + $0xe0] sm:$0xff]
        %v4989 = vld [vmem:[%s4959 + $0xe8] sm:$0xff]
        %v4990 = vld [vmem:[%s4959 + $0xf0] sm:$0xff]
        %v4991 = vld [vmem:[%s4959 + $0xf8] sm:$0xff]
        %v4992 = vld [vmem:[%s4959 + $0x100] sm:$0xff]
        %v4993 = vld [vmem:[%s4959 + $0x108] sm:$0xff]
        %v4994 = vld [vmem:[%s4959 + $0x110] sm:$0xff]
        %v4995 = vld [vmem:[%s4959 + $0x118] sm:$0xff]
        %v4996 = vld [vmem:[%s4959 + $0x120] sm:$0xff]
        %v4997 = vld [vmem:[%s4959 + $0x128] sm:$0xff]
        %v4998 = vld [vmem:[%s4959 + $0x130] sm:$0xff]
        %v4999 = vld [vmem:[%s4959 + $0x138] sm:$0xff]
        %v5000 = vld [vmem:[%s4959 + $0x140] sm:$0xff]
        %v5001 = vld [vmem:[%s4959 + $0x148] sm:$0xff]
        %v5002 = vld [vmem:[%s4959 + $0x150] sm:$0xff]
        %v5003 = vld [vmem:[%s4959 + $0x158] sm:$0xff]
        %v5004 = vld [vmem:[%s4959 + $0x160] sm:$0xff]
        %v5005 = vld [vmem:[%s4959 + $0x168] sm:$0xff]
        %v5006 = vld [vmem:[%s4959 + $0x170] sm:$0xff]
        %v5007 = vld [vmem:[%s4959 + $0x178] sm:$0xff]
        %v5008 = vld [vmem:[%s4959 + $0x180] sm:$0xff]
        %v5009 = vld [vmem:[%s4959 + $0x188] sm:$0xff]
        %v5010 = vld [vmem:[%s4959 + $0x190] sm:$0xff]
        %v5011 = vld [vmem:[%s4959 + $0x198] sm:$0xff]
        %v5012 = vld [vmem:[%s4959 + $0x1a0] sm:$0xff]
        %v5013 = vld [vmem:[%s4959 + $0x1a8] sm:$0xff]
        %v5014 = vld [vmem:[%s4959 + $0x1b0] sm:$0xff]
        %v5015 = vld [vmem:[%s4959 + $0x1b8] sm:$0xff]
        %v5016 = vld [vmem:[%s4959 + $0x1c0] sm:$0xff]
        %v5017 = vld [vmem:[%s4959 + $0x1c8] sm:$0xff]
        %v5018 = vld [vmem:[%s4959 + $0x1d0] sm:$0xff]
        %v5019 = vld [vmem:[%s4959 + $0x1d8] sm:$0xff]
        %v5020 = vld [vmem:[%s4959 + $0x1e0] sm:$0xff]
        %v5021 = vld [vmem:[%s4959 + $0x1e8] sm:$0xff]
        %v5022 = vld [vmem:[%s4959 + $0x1f0] sm:$0xff]
        %v5023 = vld [vmem:[%s4959 + $0x1f8] sm:$0xff]
        %v5024 = vld [vmem:[%s4959 + $0x200] sm:$0xff]
        %v5025 = vld [vmem:[%s4959 + $0x208] sm:$0xff]
        %v5026 = vld [vmem:[%s4959 + $0x210] sm:$0xff]
        %v5027 = vld [vmem:[%s4959 + $0x218] sm:$0xff]
        %v5028 = vld [vmem:[%s4959 + $0x220] sm:$0xff]
        %v5029 = vld [vmem:[%s4959 + $0x228] sm:$0xff]
        %v5030 = vld [vmem:[%s4959 + $0x230] sm:$0xff]
        %v5031 = vld [vmem:[%s4959 + $0x238] sm:$0xff]
        %v5032 = vld [vmem:[%s4959 + $0x240] sm:$0xff]
        %v5033 = vld [vmem:[%s4959 + $0x248] sm:$0xff]
        %v5034 = vld [vmem:[%s4959 + $0x250] sm:$0xff]
        %v5035 = vld [vmem:[%s4959 + $0x258] sm:$0xff]
        %v5036 = vld [vmem:[%s4959 + $0x260] sm:$0xff]
        %v5037 = vld [vmem:[%s4959 + $0x268] sm:$0xff]
        %v5038 = vld [vmem:[%s4959 + $0x270] sm:$0xff]
        %v5039 = vld [vmem:[%s4959 + $0x278] sm:$0xff]
        %v5040 = vld [vmem:[%s4959 + $0x280] sm:$0xff]
        %v5041 = vld [vmem:[%s4959 + $0x288] sm:$0xff]
        %v5042 = vld [vmem:[%s4959 + $0x290] sm:$0xff]
        %v5043 = vld [vmem:[%s4959 + $0x298] sm:$0xff]
        %v5044 = vld [vmem:[%s4959 + $0x2a0] sm:$0xff]
        %v5045 = vld [vmem:[%s4959 + $0x2a8] sm:$0xff]
        %v5046 = vld [vmem:[%s4959 + $0x2b0] sm:$0xff]
        %v5047 = vld [vmem:[%s4959 + $0x2b8] sm:$0xff]
        %v5048 = vld [vmem:[%s4959 + $0x2c0] sm:$0xff]
        %v5049 = vld [vmem:[%s4959 + $0x2c8] sm:$0xff]
        %v5050 = vld [vmem:[%s4959 + $0x2d0] sm:$0xff]
        %v5051 = vld [vmem:[%s4959 + $0x2d8] sm:$0xff]
        %v5052 = vld [vmem:[%s4959 + $0x2e0] sm:$0xff]
        %v5053 = vld [vmem:[%s4959 + $0x2e8] sm:$0xff]
        %v5054 = vld [vmem:[%s4959 + $0x2f0] sm:$0xff]
        %v5055 = vld [vmem:[%s4959 + $0x2f8] sm:$0xff]
        %v5056 = vld [vmem:[%s4959 + $0x300] sm:$0xff]
        %v5057 = vld [vmem:[%s4959 + $0x308] sm:$0xff]
        %v5058 = vld [vmem:[%s4959 + $0x310] sm:$0xff]
        %v5059 = vld [vmem:[%s4959 + $0x318] sm:$0xff]
        %v5060 = vld [vmem:[%s4959 + $0x320] sm:$0xff]
        %v5061 = vld [vmem:[%s4959 + $0x328] sm:$0xff]
        %v5062 = vld [vmem:[%s4959 + $0x330] sm:$0xff]
        %v5063 = vld [vmem:[%s4959 + $0x338] sm:$0xff]
        %v5064 = vld [vmem:[%s4959 + $0x340] sm:$0xff]
        %v5065 = vld [vmem:[%s4959 + $0x348] sm:$0xff]
        %v5066 = vld [vmem:[%s4959 + $0x350] sm:$0xff]
        %v5067 = vld [vmem:[%s4959 + $0x358] sm:$0xff]
        %v5068 = vld [vmem:[%s4959 + $0x360] sm:$0xff]
        %v5069 = vld [vmem:[%s4959 + $0x368] sm:$0xff]
        %v5070 = vld [vmem:[%s4959 + $0x370] sm:$0xff]
        %v5071 = vld [vmem:[%s4959 + $0x378] sm:$0xff]
        %v5072 = vld [vmem:[%s4959 + $0x380] sm:$0xff]
        %v5073 = vld [vmem:[%s4959 + $0x388] sm:$0xff]
        %v5074 = vld [vmem:[%s4959 + $0x390] sm:$0xff]
        %v5075 = vld [vmem:[%s4959 + $0x398] sm:$0xff]
        %v5076 = vld [vmem:[%s4959 + $0x3a0] sm:$0xff]
        %v5077 = vld [vmem:[%s4959 + $0x3a8] sm:$0xff]
        %v5078 = vld [vmem:[%s4959 + $0x3b0] sm:$0xff]
        %v5079 = vld [vmem:[%s4959 + $0x3b8] sm:$0xff]
        %v5080 = vld [vmem:[%s4959 + $0x3c0] sm:$0xff]
        %v5081 = vld [vmem:[%s4959 + $0x3c8] sm:$0xff]
        %v5082 = vld [vmem:[%s4959 + $0x3d0] sm:$0xff]
        %v5083 = vld [vmem:[%s4959 + $0x3d8] sm:$0xff]
        %v5084 = vld [vmem:[%s4959 + $0x3e0] sm:$0xff]
        %v5085 = vld [vmem:[%s4959 + $0x3e8] sm:$0xff]
        %v5086 = vld [vmem:[%s4959 + $0x3f0] sm:$0xff]
        %v5087 = vld [vmem:[%s4959 + $0x3f8] sm:$0xff]
        %v5088 = vunpack.c.l.b16 %v4934
        %v5089 = vunpack.c.h.b16 %v4934
        %v5090 = vunpack.c.l.b16 %v4938
        %v5091 = vunpack.c.h.b16 %v4938
        %v5092 = vunpack.c.l.b16 %v4941
        %v5093 = vunpack.c.h.b16 %v4941
        %v5094 = vunpack.c.l.b16 %v4944
        %v5095 = vunpack.c.h.b16 %v4944
        %v5096 = vunpack.c.l.b16 %v4948
        %v5097 = vunpack.c.h.b16 %v4948
        %v5098 = vunpack.c.l.b16 %v4952
        %v5099 = vunpack.c.h.b16 %v4952
        %v5100 = vunpack.c.l.b16 %v4955
        %v5101 = vunpack.c.h.b16 %v4955
        %v5102 = vunpack.c.l.b16 %v4958
        %v5103 = vunpack.c.h.b16 %v4958
        %v5104 = vpack.c.b16 %v5092, %v5088
        %v5105 = vpack.c.b16 %v5093, %v5089
        %v5106 = vpack.c.b16 %v5094, %v5090
        %v5107 = vpack.c.b16 %v5095, %v5091
        %v5108 = vpack.c.b16 %v5100, %v5096
        %v5109 = vpack.c.b16 %v5101, %v5097
        %v5110 = vpack.c.b16 %v5102, %v5098
        %v5111 = vpack.c.b16 %v5103, %v5099
        %v5248 = vunpack.c.l.b16 %v4960
        %v5249 = vunpack.c.h.b16 %v4960
        %v5250 = vunpack.c.l.b16 %v4961
        %v5251 = vunpack.c.h.b16 %v4961
        %v5252 = vunpack.c.l.b16 %v4962
        %v5253 = vunpack.c.h.b16 %v4962
        %v5254 = vunpack.c.l.b16 %v4963
        %v5255 = vunpack.c.h.b16 %v4963
        %v5256 = vunpack.c.l.b16 %v4964
        %v5257 = vunpack.c.h.b16 %v4964
        %v5258 = vunpack.c.l.b16 %v4965
        %v5259 = vunpack.c.h.b16 %v4965
        %v5260 = vunpack.c.l.b16 %v4966
        %v5261 = vunpack.c.h.b16 %v4966
        %v5262 = vunpack.c.l.b16 %v4967
        %v5263 = vunpack.c.h.b16 %v4967
        %v5264 = vunpack.c.l.b16 %v4968
        %v5265 = vunpack.c.h.b16 %v4968
        %v5266 = vunpack.c.l.b16 %v4969
        %v5267 = vunpack.c.h.b16 %v4969
        %v5268 = vunpack.c.l.b16 %v4970
        %v5269 = vunpack.c.h.b16 %v4970
        %v5270 = vunpack.c.l.b16 %v4971
        %v5271 = vunpack.c.h.b16 %v4971
        %v5272 = vunpack.c.l.b16 %v4972
        %v5273 = vunpack.c.h.b16 %v4972
        %v5274 = vunpack.c.l.b16 %v4973
        %v5275 = vunpack.c.h.b16 %v4973
        %v5276 = vunpack.c.l.b16 %v4974
        %v5277 = vunpack.c.h.b16 %v4974
        %v5278 = vunpack.c.l.b16 %v4975
        %v5279 = vunpack.c.h.b16 %v4975
        %v5280 = vunpack.c.l.b16 %v4976
        %v5281 = vunpack.c.h.b16 %v4976
        %v5282 = vunpack.c.l.b16 %v4977
        %v5283 = vunpack.c.h.b16 %v4977
        %v5284 = vunpack.c.l.b16 %v4978
        %v5285 = vunpack.c.h.b16 %v4978
        %v5286 = vunpack.c.l.b16 %v4979
        %v5287 = vunpack.c.h.b16 %v4979
        %v5288 = vunpack.c.l.b16 %v4980
        %v5289 = vunpack.c.h.b16 %v4980
        %v5290 = vunpack.c.l.b16 %v4981
        %v5291 = vunpack.c.h.b16 %v4981
        %v5292 = vunpack.c.l.b16 %v4982
        %v5293 = vunpack.c.h.b16 %v4982
        %v5294 = vunpack.c.l.b16 %v4983
        %v5295 = vunpack.c.h.b16 %v4983
        %v5296 = vunpack.c.l.b16 %v4984
        %v5297 = vunpack.c.h.b16 %v4984
        %v5298 = vunpack.c.l.b16 %v4985
        %v5299 = vunpack.c.h.b16 %v4985
        %v5300 = vunpack.c.l.b16 %v4986
        %v5301 = vunpack.c.h.b16 %v4986
        %v5302 = vunpack.c.l.b16 %v4987
        %v5303 = vunpack.c.h.b16 %v4987
        %v5304 = vunpack.c.l.b16 %v4988
        %v5305 = vunpack.c.h.b16 %v4988
        %v5306 = vunpack.c.l.b16 %v4989
        %v5307 = vunpack.c.h.b16 %v4989
        %v5308 = vunpack.c.l.b16 %v4990
        %v5309 = vunpack.c.h.b16 %v4990
        %v5310 = vunpack.c.l.b16 %v4991
        %v5311 = vunpack.c.h.b16 %v4991
        %v5312 = vunpack.c.l.b16 %v4992
        %v5313 = vunpack.c.h.b16 %v4992
        %v5314 = vunpack.c.l.b16 %v4993
        %v5315 = vunpack.c.h.b16 %v4993
        %v5316 = vunpack.c.l.b16 %v4994
        %v5317 = vunpack.c.h.b16 %v4994
        %v5318 = vunpack.c.l.b16 %v4995
        %v5319 = vunpack.c.h.b16 %v4995
        %v5320 = vunpack.c.l.b16 %v4996
        %v5321 = vunpack.c.h.b16 %v4996
        %v5322 = vunpack.c.l.b16 %v4997
        %v5323 = vunpack.c.h.b16 %v4997
        %v5324 = vunpack.c.l.b16 %v4998
        %v5325 = vunpack.c.h.b16 %v4998
        %v5326 = vunpack.c.l.b16 %v4999
        %v5327 = vunpack.c.h.b16 %v4999
        %v5328 = vunpack.c.l.b16 %v5000
        %v5329 = vunpack.c.h.b16 %v5000
        %v5330 = vunpack.c.l.b16 %v5001
        %v5331 = vunpack.c.h.b16 %v5001
        %v5332 = vunpack.c.l.b16 %v5002
        %v5333 = vunpack.c.h.b16 %v5002
        %v5334 = vunpack.c.l.b16 %v5003
        %v5335 = vunpack.c.h.b16 %v5003
        %v5336 = vunpack.c.l.b16 %v5004
        %v5337 = vunpack.c.h.b16 %v5004
        %v5338 = vunpack.c.l.b16 %v5005
        %v5339 = vunpack.c.h.b16 %v5005
        %v5340 = vunpack.c.l.b16 %v5006
        %v5341 = vunpack.c.h.b16 %v5006
        %v5342 = vunpack.c.l.b16 %v5007
        %v5343 = vunpack.c.h.b16 %v5007
        %v5344 = vunpack.c.l.b16 %v5008
        %v5345 = vunpack.c.h.b16 %v5008
        %v5346 = vunpack.c.l.b16 %v5009
        %v5347 = vunpack.c.h.b16 %v5009
        %v5348 = vunpack.c.l.b16 %v5010
        %v5349 = vunpack.c.h.b16 %v5010
        %v5350 = vunpack.c.l.b16 %v5011
        %v5351 = vunpack.c.h.b16 %v5011
        %v5352 = vunpack.c.l.b16 %v5012
        %v5353 = vunpack.c.h.b16 %v5012
        %v5354 = vunpack.c.l.b16 %v5013
        %v5355 = vunpack.c.h.b16 %v5013
        %v5356 = vunpack.c.l.b16 %v5014
        %v5357 = vunpack.c.h.b16 %v5014
        %v5358 = vunpack.c.l.b16 %v5015
        %v5359 = vunpack.c.h.b16 %v5015
        %v5360 = vunpack.c.l.b16 %v5016
        %v5361 = vunpack.c.h.b16 %v5016
        %v5362 = vunpack.c.l.b16 %v5017
        %v5363 = vunpack.c.h.b16 %v5017
        %v5364 = vunpack.c.l.b16 %v5018
        %v5365 = vunpack.c.h.b16 %v5018
        %v5366 = vunpack.c.l.b16 %v5019
        %v5367 = vunpack.c.h.b16 %v5019
        %v5368 = vunpack.c.l.b16 %v5020
        %v5369 = vunpack.c.h.b16 %v5020
        %v5370 = vunpack.c.l.b16 %v5021
        %v5371 = vunpack.c.h.b16 %v5021
        %v5372 = vunpack.c.l.b16 %v5022
        %v5373 = vunpack.c.h.b16 %v5022
        %v5374 = vunpack.c.l.b16 %v5023
        %v5375 = vunpack.c.h.b16 %v5023
        %v5376 = vunpack.c.l.b16 %v5024
        %v5377 = vunpack.c.h.b16 %v5024
        %v5378 = vunpack.c.l.b16 %v5025
        %v5379 = vunpack.c.h.b16 %v5025
        %v5380 = vunpack.c.l.b16 %v5026
        %v5381 = vunpack.c.h.b16 %v5026
        %v5382 = vunpack.c.l.b16 %v5027
        %v5383 = vunpack.c.h.b16 %v5027
        %v5384 = vunpack.c.l.b16 %v5028
        %v5385 = vunpack.c.h.b16 %v5028
        %v5386 = vunpack.c.l.b16 %v5029
        %v5387 = vunpack.c.h.b16 %v5029
        %v5388 = vunpack.c.l.b16 %v5030
        %v5389 = vunpack.c.h.b16 %v5030
        %v5390 = vunpack.c.l.b16 %v5031
        %v5391 = vunpack.c.h.b16 %v5031
        %v5392 = vunpack.c.l.b16 %v5032
        %v5393 = vunpack.c.h.b16 %v5032
        %v5394 = vunpack.c.l.b16 %v5033
        %v5395 = vunpack.c.h.b16 %v5033
        %v5396 = vunpack.c.l.b16 %v5034
        %v5397 = vunpack.c.h.b16 %v5034
        %v5398 = vunpack.c.l.b16 %v5035
        %v5399 = vunpack.c.h.b16 %v5035
        %v5400 = vunpack.c.l.b16 %v5036
        %v5401 = vunpack.c.h.b16 %v5036
        %v5402 = vunpack.c.l.b16 %v5037
        %v5403 = vunpack.c.h.b16 %v5037
        %v5404 = vunpack.c.l.b16 %v5038
        %v5405 = vunpack.c.h.b16 %v5038
        %v5406 = vunpack.c.l.b16 %v5039
        %v5407 = vunpack.c.h.b16 %v5039
        %v5408 = vunpack.c.l.b16 %v5040
        %v5409 = vunpack.c.h.b16 %v5040
        %v5410 = vunpack.c.l.b16 %v5041
        %v5411 = vunpack.c.h.b16 %v5041
        %v5412 = vunpack.c.l.b16 %v5042
        %v5413 = vunpack.c.h.b16 %v5042
        %v5414 = vunpack.c.l.b16 %v5043
        %v5415 = vunpack.c.h.b16 %v5043
        %v5416 = vunpack.c.l.b16 %v5044
        %v5417 = vunpack.c.h.b16 %v5044
        %v5418 = vunpack.c.l.b16 %v5045
        %v5419 = vunpack.c.h.b16 %v5045
        %v5420 = vunpack.c.l.b16 %v5046
        %v5421 = vunpack.c.h.b16 %v5046
        %v5422 = vunpack.c.l.b16 %v5047
        %v5423 = vunpack.c.h.b16 %v5047
        %v5424 = vunpack.c.l.b16 %v5048
        %v5425 = vunpack.c.h.b16 %v5048
        %v5426 = vunpack.c.l.b16 %v5049
        %v5427 = vunpack.c.h.b16 %v5049
        %v5428 = vunpack.c.l.b16 %v5050
        %v5429 = vunpack.c.h.b16 %v5050
        %v5430 = vunpack.c.l.b16 %v5051
        %v5431 = vunpack.c.h.b16 %v5051
        %v5432 = vunpack.c.l.b16 %v5052
        %v5433 = vunpack.c.h.b16 %v5052
        %v5434 = vunpack.c.l.b16 %v5053
        %v5435 = vunpack.c.h.b16 %v5053
        %v5436 = vunpack.c.l.b16 %v5054
        %v5437 = vunpack.c.h.b16 %v5054
        %v5438 = vunpack.c.l.b16 %v5055
        %v5439 = vunpack.c.h.b16 %v5055
        %v5440 = vunpack.c.l.b16 %v5056
        %v5441 = vunpack.c.h.b16 %v5056
        %v5442 = vunpack.c.l.b16 %v5057
        %v5443 = vunpack.c.h.b16 %v5057
        %v5444 = vunpack.c.l.b16 %v5058
        %v5445 = vunpack.c.h.b16 %v5058
        %v5446 = vunpack.c.l.b16 %v5059
        %v5447 = vunpack.c.h.b16 %v5059
        %v5448 = vunpack.c.l.b16 %v5060
        %v5449 = vunpack.c.h.b16 %v5060
        %v5450 = vunpack.c.l.b16 %v5061
        %v5451 = vunpack.c.h.b16 %v5061
        %v5452 = vunpack.c.l.b16 %v5062
        %v5453 = vunpack.c.h.b16 %v5062
        %v5454 = vunpack.c.l.b16 %v5063
        %v5455 = vunpack.c.h.b16 %v5063
        %v5456 = vunpack.c.l.b16 %v5064
        %v5457 = vunpack.c.h.b16 %v5064
        %v5458 = vunpack.c.l.b16 %v5065
        %v5459 = vunpack.c.h.b16 %v5065
        %v5460 = vunpack.c.l.b16 %v5066
        %v5461 = vunpack.c.h.b16 %v5066
        %v5462 = vunpack.c.l.b16 %v5067
        %v5463 = vunpack.c.h.b16 %v5067
        %v5464 = vunpack.c.l.b16 %v5068
        %v5465 = vunpack.c.h.b16 %v5068
        %v5466 = vunpack.c.l.b16 %v5069
        %v5467 = vunpack.c.h.b16 %v5069
        %v5468 = vunpack.c.l.b16 %v5070
        %v5469 = vunpack.c.h.b16 %v5070
        %v5470 = vunpack.c.l.b16 %v5071
        %v5471 = vunpack.c.h.b16 %v5071
        %v5472 = vunpack.c.l.b16 %v5072
        %v5473 = vunpack.c.h.b16 %v5072
        %v5474 = vunpack.c.l.b16 %v5073
        %v5475 = vunpack.c.h.b16 %v5073
        %v5476 = vunpack.c.l.b16 %v5074
        %v5477 = vunpack.c.h.b16 %v5074
        %v5478 = vunpack.c.l.b16 %v5075
        %v5479 = vunpack.c.h.b16 %v5075
        %v5480 = vunpack.c.l.b16 %v5076
        %v5481 = vunpack.c.h.b16 %v5076
        %v5482 = vunpack.c.l.b16 %v5077
        %v5483 = vunpack.c.h.b16 %v5077
        %v5484 = vunpack.c.l.b16 %v5078
        %v5485 = vunpack.c.h.b16 %v5078
        %v5486 = vunpack.c.l.b16 %v5079
        %v5487 = vunpack.c.h.b16 %v5079
        %v5488 = vunpack.c.l.b16 %v5080
        %v5489 = vunpack.c.h.b16 %v5080
        %v5490 = vunpack.c.l.b16 %v5081
        %v5491 = vunpack.c.h.b16 %v5081
        %v5492 = vunpack.c.l.b16 %v5082
        %v5493 = vunpack.c.h.b16 %v5082
        %v5494 = vunpack.c.l.b16 %v5083
        %v5495 = vunpack.c.h.b16 %v5083
        %v5496 = vunpack.c.l.b16 %v5084
        %v5497 = vunpack.c.h.b16 %v5084
        %v5498 = vunpack.c.l.b16 %v5085
        %v5499 = vunpack.c.h.b16 %v5085
        %v5500 = vunpack.c.l.b16 %v5086
        %v5501 = vunpack.c.h.b16 %v5086
        %v5502 = vunpack.c.l.b16 %v5087
        %v5503 = vunpack.c.h.b16 %v5087
        %v5504 = vpack.c.b16 %v5252, %v5248
        %v5505 = vpack.c.b16 %v5253, %v5249
        %v5506 = vpack.c.b16 %v5254, %v5250
        %v5507 = vpack.c.b16 %v5255, %v5251
        %v5508 = vpack.c.b16 %v5260, %v5256
        %v5509 = vpack.c.b16 %v5261, %v5257
        %v5510 = vpack.c.b16 %v5262, %v5258
        %v5511 = vpack.c.b16 %v5263, %v5259
        %v5512 = vpack.c.b16 %v5268, %v5264
        %v5513 = vpack.c.b16 %v5269, %v5265
        %v5514 = vpack.c.b16 %v5270, %v5266
        %v5515 = vpack.c.b16 %v5271, %v5267
        %v5516 = vpack.c.b16 %v5276, %v5272
        %v5517 = vpack.c.b16 %v5277, %v5273
        %v5518 = vpack.c.b16 %v5278, %v5274
        %v5519 = vpack.c.b16 %v5279, %v5275
        %v5520 = vpack.c.b16 %v5284, %v5280
        %v5521 = vpack.c.b16 %v5285, %v5281
        %v5522 = vpack.c.b16 %v5286, %v5282
        %v5523 = vpack.c.b16 %v5287, %v5283
        %v5524 = vpack.c.b16 %v5292, %v5288
        %v5525 = vpack.c.b16 %v5293, %v5289
        %v5526 = vpack.c.b16 %v5294, %v5290
        %v5527 = vpack.c.b16 %v5295, %v5291
        %v5528 = vpack.c.b16 %v5300, %v5296
        %v5529 = vpack.c.b16 %v5301, %v5297
        %v5530 = vpack.c.b16 %v5302, %v5298
        %v5531 = vpack.c.b16 %v5303, %v5299
        %v5532 = vpack.c.b16 %v5308, %v5304
        %v5533 = vpack.c.b16 %v5309, %v5305
        %v5534 = vpack.c.b16 %v5310, %v5306
        %v5535 = vpack.c.b16 %v5311, %v5307
        %v5536 = vpack.c.b16 %v5316, %v5312
        %v5537 = vpack.c.b16 %v5317, %v5313
        %v5538 = vpack.c.b16 %v5318, %v5314
        %v5539 = vpack.c.b16 %v5319, %v5315
        %v5540 = vpack.c.b16 %v5324, %v5320
        %v5541 = vpack.c.b16 %v5325, %v5321
        %v5542 = vpack.c.b16 %v5326, %v5322
        %v5543 = vpack.c.b16 %v5327, %v5323
        %v5544 = vpack.c.b16 %v5332, %v5328
        %v5545 = vpack.c.b16 %v5333, %v5329
        %v5546 = vpack.c.b16 %v5334, %v5330
        %v5547 = vpack.c.b16 %v5335, %v5331
        %v5548 = vpack.c.b16 %v5340, %v5336
        %v5549 = vpack.c.b16 %v5341, %v5337
        %v5550 = vpack.c.b16 %v5342, %v5338
        %v5551 = vpack.c.b16 %v5343, %v5339
        %v5552 = vpack.c.b16 %v5348, %v5344
        %v5553 = vpack.c.b16 %v5349, %v5345
        %v5554 = vpack.c.b16 %v5350, %v5346
        %v5555 = vpack.c.b16 %v5351, %v5347
        %v5556 = vpack.c.b16 %v5356, %v5352
        %v5557 = vpack.c.b16 %v5357, %v5353
        %v5558 = vpack.c.b16 %v5358, %v5354
        %v5559 = vpack.c.b16 %v5359, %v5355
        %v5560 = vpack.c.b16 %v5364, %v5360
        %v5561 = vpack.c.b16 %v5365, %v5361
        %v5562 = vpack.c.b16 %v5366, %v5362
        %v5563 = vpack.c.b16 %v5367, %v5363
        %v5564 = vpack.c.b16 %v5372, %v5368
        %v5565 = vpack.c.b16 %v5373, %v5369
        %v5566 = vpack.c.b16 %v5374, %v5370
        %v5567 = vpack.c.b16 %v5375, %v5371
        %v5568 = vpack.c.b16 %v5380, %v5376
        %v5569 = vpack.c.b16 %v5381, %v5377
        %v5570 = vpack.c.b16 %v5382, %v5378
        %v5571 = vpack.c.b16 %v5383, %v5379
        %v5572 = vpack.c.b16 %v5388, %v5384
        %v5573 = vpack.c.b16 %v5389, %v5385
        %v5574 = vpack.c.b16 %v5390, %v5386
        %v5575 = vpack.c.b16 %v5391, %v5387
        %v5576 = vpack.c.b16 %v5396, %v5392
        %v5577 = vpack.c.b16 %v5397, %v5393
        %v5578 = vpack.c.b16 %v5398, %v5394
        %v5579 = vpack.c.b16 %v5399, %v5395
        %v5580 = vpack.c.b16 %v5404, %v5400
        %v5581 = vpack.c.b16 %v5405, %v5401
        %v5582 = vpack.c.b16 %v5406, %v5402
        %v5583 = vpack.c.b16 %v5407, %v5403
        %v5584 = vpack.c.b16 %v5412, %v5408
        %v5585 = vpack.c.b16 %v5413, %v5409
        %v5586 = vpack.c.b16 %v5414, %v5410
        %v5587 = vpack.c.b16 %v5415, %v5411
        %v5588 = vpack.c.b16 %v5420, %v5416
        %v5589 = vpack.c.b16 %v5421, %v5417
        %v5590 = vpack.c.b16 %v5422, %v5418
        %v5591 = vpack.c.b16 %v5423, %v5419
        %v5592 = vpack.c.b16 %v5428, %v5424
        %v5593 = vpack.c.b16 %v5429, %v5425
        %v5594 = vpack.c.b16 %v5430, %v5426
        %v5595 = vpack.c.b16 %v5431, %v5427
        %v5596 = vpack.c.b16 %v5436, %v5432
        %v5597 = vpack.c.b16 %v5437, %v5433
        %v5598 = vpack.c.b16 %v5438, %v5434
        %v5599 = vpack.c.b16 %v5439, %v5435
        %v5600 = vpack.c.b16 %v5444, %v5440
        %v5601 = vpack.c.b16 %v5445, %v5441
        %v5602 = vpack.c.b16 %v5446, %v5442
        %v5603 = vpack.c.b16 %v5447, %v5443
        %v5604 = vpack.c.b16 %v5452, %v5448
        %v5605 = vpack.c.b16 %v5453, %v5449
        %v5606 = vpack.c.b16 %v5454, %v5450
        %v5607 = vpack.c.b16 %v5455, %v5451
        %v5608 = vpack.c.b16 %v5460, %v5456
        %v5609 = vpack.c.b16 %v5461, %v5457
        %v5610 = vpack.c.b16 %v5462, %v5458
        %v5611 = vpack.c.b16 %v5463, %v5459
        %v5612 = vpack.c.b16 %v5468, %v5464
        %v5613 = vpack.c.b16 %v5469, %v5465
        %v5614 = vpack.c.b16 %v5470, %v5466
        %v5615 = vpack.c.b16 %v5471, %v5467
        %v5616 = vpack.c.b16 %v5476, %v5472
        %v5617 = vpack.c.b16 %v5477, %v5473
        %v5618 = vpack.c.b16 %v5478, %v5474
        %v5619 = vpack.c.b16 %v5479, %v5475
        %v5620 = vpack.c.b16 %v5484, %v5480
        %v5621 = vpack.c.b16 %v5485, %v5481
        %v5622 = vpack.c.b16 %v5486, %v5482
        %v5623 = vpack.c.b16 %v5487, %v5483
        %v5624 = vpack.c.b16 %v5492, %v5488
        %v5625 = vpack.c.b16 %v5493, %v5489
        %v5626 = vpack.c.b16 %v5494, %v5490
        %v5627 = vpack.c.b16 %v5495, %v5491
        %v5628 = vpack.c.b16 %v5500, %v5496
        %v5629 = vpack.c.b16 %v5501, %v5497
        %v5630 = vpack.c.b16 %v5502, %v5498
        %v5631 = vpack.c.b16 %v5503, %v5499
        %5760 = vmatprep.subr.bf16.mxu0 %v5533
        %5761 = vmatpush1.bf16.msra.mxu0 %v5532
        %5762 = vmatprep.subr.bf16.mxu0 %v5529
        %5763 = vmatpush1.bf16.msra.mxu0 %v5528
        %5764 = vmatprep.subr.bf16.mxu0 %v5525
        %5765 = vmatpush1.bf16.msra.mxu0 %v5524
        %5766 = vmatprep.subr.bf16.mxu0 %v5521
        %5767 = vmatpush1.bf16.msra.mxu0 %v5520
        %5768 = vmatprep.subr.bf16.mxu0 %v5517
        %5769 = vmatpush1.bf16.msra.mxu0 %v5516
        %5770 = vmatprep.subr.bf16.mxu0 %v5513
        %5771 = vmatpush1.bf16.msra.mxu0 %v5512
        %5772 = vmatprep.subr.bf16.mxu0 %v5509
        %5773 = vmatpush1.bf16.msra.mxu0 %v5508
        %5774 = vmatprep.subr.bf16.mxu0 %v5505
        %5775 = vmatpush1.bf16.msra.mxu0 %v5504
        %5776 = vmatprep.subr.bf16.mxu0 %v5565
        %5777 = vmatpush2.bf16.msra.mxu0 %v5564
        %5778 = vmatprep.subr.bf16.mxu0 %v5561
        %5779 = vmatpush2.bf16.msra.mxu0 %v5560
        %5780 = vmatprep.subr.bf16.mxu0 %v5557
        %5781 = vmatpush2.bf16.msra.mxu0 %v5556
        %5782 = vmatprep.subr.bf16.mxu0 %v5553
        %5783 = vmatpush2.bf16.msra.mxu0 %v5552
        %5784 = vmatprep.subr.bf16.mxu0 %v5549
        %5785 = vmatpush2.bf16.msra.mxu0 %v5548
        %5786 = vmatprep.subr.bf16.mxu0 %v5545
        %5787 = vmatpush2.bf16.msra.mxu0 %v5544
        %5788 = vmatprep.subr.bf16.mxu0 %v5541
        %5789 = vmatpush2.bf16.msra.mxu0 %v5540
        %5790 = vmatprep.subr.bf16.mxu0 %v5537
        %5791 = vmatpush2.bf16.msra.mxu0 %v5536
        %5792 = vmatprep.mubr.bf16.mxu0 %v5105
        %5793 = vmatmul.mubr.bf16.gmra.mxu0 %v5104
        %v5794 = vpop.f32.mrf.mxu0
        %v5795 = vadd.f32 0.0, %v5794
        %v5796 = vpop.f32.mrf.mxu0
        %v5797 = vadd.f32 0.0, %v5796
        %v5798 = vpop.f32.mrf.mxu0
        %v5799 = vadd.f32 0.0, %v5798
        %v5800 = vpop.f32.mrf.mxu0
        %v5801 = vadd.f32 0.0, %v5800
        %5802 = vmatprep.mubr.bf16.mxu0 %v5109
        %5803 = vmatmul.mubr.bf16.gmra.mxu0 %v5108
        %v5804 = vpop.f32.mrf.mxu0
        %v5805 = vadd.f32 0.0, %v5804
        %v5806 = vpop.f32.mrf.mxu0
        %v5807 = vadd.f32 0.0, %v5806
        %v5808 = vpop.f32.mrf.mxu0
        %v5809 = vadd.f32 0.0, %v5808
        %v5810 = vpop.f32.mrf.mxu0
        %v5811 = vadd.f32 0.0, %v5810
        %5812 = vdwg.mxu0
        %5813 = vmatprep.subr.bf16.mxu0 %v5597
        %5814 = vmatpush1.bf16.msra.mxu0 %v5596
        %5815 = vmatprep.subr.bf16.mxu0 %v5593
        %5816 = vmatpush1.bf16.msra.mxu0 %v5592
        %5817 = vmatprep.subr.bf16.mxu0 %v5589
        %5818 = vmatpush1.bf16.msra.mxu0 %v5588
        %5819 = vmatprep.subr.bf16.mxu0 %v5585
        %5820 = vmatpush1.bf16.msra.mxu0 %v5584
        %5821 = vmatprep.subr.bf16.mxu0 %v5581
        %5822 = vmatpush1.bf16.msra.mxu0 %v5580
        %5823 = vmatprep.subr.bf16.mxu0 %v5577
        %5824 = vmatpush1.bf16.msra.mxu0 %v5576
        %5825 = vmatprep.subr.bf16.mxu0 %v5573
        %5826 = vmatpush1.bf16.msra.mxu0 %v5572
        %5827 = vmatprep.subr.bf16.mxu0 %v5569
        %5828 = vmatpush1.bf16.msra.mxu0 %v5568
        %5829 = vmatprep.subr.bf16.mxu0 %v5629
        %5830 = vmatpush2.bf16.msra.mxu0 %v5628
        %5831 = vmatprep.subr.bf16.mxu0 %v5625
        %5832 = vmatpush2.bf16.msra.mxu0 %v5624
        %5833 = vmatprep.subr.bf16.mxu0 %v5621
        %5834 = vmatpush2.bf16.msra.mxu0 %v5620
        %5835 = vmatprep.subr.bf16.mxu0 %v5617
        %5836 = vmatpush2.bf16.msra.mxu0 %v5616
        %5837 = vmatprep.subr.bf16.mxu0 %v5613
        %5838 = vmatpush2.bf16.msra.mxu0 %v5612
        %5839 = vmatprep.subr.bf16.mxu0 %v5609
        %5840 = vmatpush2.bf16.msra.mxu0 %v5608
        %5841 = vmatprep.subr.bf16.mxu0 %v5605
        %5842 = vmatpush2.bf16.msra.mxu0 %v5604
        %5843 = vmatprep.subr.bf16.mxu0 %v5601
        %5844 = vmatpush2.bf16.msra.mxu0 %v5600
        %5845 = vmatprep.mubr.bf16.mxu0 %v5107
        %5846 = vmatmul.mubr.bf16.gmra.mxu0 %v5106
        %v5847 = vpop.f32.mrf.mxu0
        %v5848 = vadd.f32 %v5795, %v5847
        %v5849 = vpop.f32.mrf.mxu0
        %v5850 = vadd.f32 %v5797, %v5849
        %v5851 = vpop.f32.mrf.mxu0
        %v5852 = vadd.f32 %v5799, %v5851
        %v5853 = vpop.f32.mrf.mxu0
        %v5854 = vadd.f32 %v5801, %v5853
        %5855 = vmatprep.mubr.bf16.mxu0 %v5111
        %5856 = vmatmul.mubr.bf16.gmra.mxu0 %v5110
        %v5857 = vpop.f32.mrf.mxu0
        %v5858 = vadd.f32 %v5805, %v5857
        %v5859 = vpop.f32.mrf.mxu0
        %v5860 = vadd.f32 %v5807, %v5859
        %v5861 = vpop.f32.mrf.mxu0
        %v5862 = vadd.f32 %v5809, %v5861
        %v5863 = vpop.f32.mrf.mxu0
        %v5864 = vadd.f32 %v5811, %v5863
        %5865 = vdwg.mxu0
        %5866 = vmatprep.subr.bf16.mxu0 %v5535
        %5867 = vmatpush1.bf16.msra.mxu0 %v5534
        %5868 = vmatprep.subr.bf16.mxu0 %v5531
        %5869 = vmatpush1.bf16.msra.mxu0 %v5530
        %5870 = vmatprep.subr.bf16.mxu0 %v5527
        %5871 = vmatpush1.bf16.msra.mxu0 %v5526
        %5872 = vmatprep.subr.bf16.mxu0 %v5523
        %5873 = vmatpush1.bf16.msra.mxu0 %v5522
        %5874 = vmatprep.subr.bf16.mxu0 %v5519
        %5875 = vmatpush1.bf16.msra.mxu0 %v5518
        %5876 = vmatprep.subr.bf16.mxu0 %v5515
        %5877 = vmatpush1.bf16.msra.mxu0 %v5514
        %5878 = vmatprep.subr.bf16.mxu0 %v5511
        %5879 = vmatpush1.bf16.msra.mxu0 %v5510
        %5880 = vmatprep.subr.bf16.mxu0 %v5507
        %5881 = vmatpush1.bf16.msra.mxu0 %v5506
        %5882 = vmatprep.subr.bf16.mxu0 %v5567
        %5883 = vmatpush2.bf16.msra.mxu0 %v5566
        %5884 = vmatprep.subr.bf16.mxu0 %v5563
        %5885 = vmatpush2.bf16.msra.mxu0 %v5562
        %5886 = vmatprep.subr.bf16.mxu0 %v5559
        %5887 = vmatpush2.bf16.msra.mxu0 %v5558
        %5888 = vmatprep.subr.bf16.mxu0 %v5555
        %5889 = vmatpush2.bf16.msra.mxu0 %v5554
        %5890 = vmatprep.subr.bf16.mxu0 %v5551
        %5891 = vmatpush2.bf16.msra.mxu0 %v5550
        %5892 = vmatprep.subr.bf16.mxu0 %v5547
        %5893 = vmatpush2.bf16.msra.mxu0 %v5546
        %5894 = vmatprep.subr.bf16.mxu0 %v5543
        %5895 = vmatpush2.bf16.msra.mxu0 %v5542
        %5896 = vmatprep.subr.bf16.mxu0 %v5539
        %5897 = vmatpush2.bf16.msra.mxu0 %v5538
        %5898 = vmatprep.mubr.bf16.mxu0 %v5105
        %5899 = vmatmul.mubr.bf16.gmra.mxu0 %v5104
        %v5900 = vpop.f32.mrf.mxu0
        %v5901 = vadd.f32 0.0, %v5900
        %v5902 = vpop.f32.mrf.mxu0
        %v5903 = vadd.f32 0.0, %v5902
        %v5904 = vpop.f32.mrf.mxu0
        %v5905 = vadd.f32 0.0, %v5904
        %v5906 = vpop.f32.mrf.mxu0
        %v5907 = vadd.f32 0.0, %v5906
        %5908 = vmatprep.mubr.bf16.mxu0 %v5109
        %5909 = vmatmul.mubr.bf16.gmra.mxu0 %v5108
        %v5910 = vpop.f32.mrf.mxu0
        %v5911 = vadd.f32 0.0, %v5910
        %v5912 = vpop.f32.mrf.mxu0
        %v5913 = vadd.f32 0.0, %v5912
        %v5914 = vpop.f32.mrf.mxu0
        %v5915 = vadd.f32 0.0, %v5914
        %v5916 = vpop.f32.mrf.mxu0
        %v5917 = vadd.f32 0.0, %v5916
        %5918 = vdwg.mxu0
        %5919 = vmatprep.subr.bf16.mxu0 %v5599
        %5920 = vmatpush1.bf16.msra.mxu0 %v5598
        %5921 = vmatprep.subr.bf16.mxu0 %v5595
        %5922 = vmatpush1.bf16.msra.mxu0 %v5594
        %5923 = vmatprep.subr.bf16.mxu0 %v5591
        %5924 = vmatpush1.bf16.msra.mxu0 %v5590
        %5925 = vmatprep.subr.bf16.mxu0 %v5587
        %5926 = vmatpush1.bf16.msra.mxu0 %v5586
        %5927 = vmatprep.subr.bf16.mxu0 %v5583
        %5928 = vmatpush1.bf16.msra.mxu0 %v5582
        %5929 = vmatprep.subr.bf16.mxu0 %v5579
        %5930 = vmatpush1.bf16.msra.mxu0 %v5578
        %5931 = vmatprep.subr.bf16.mxu0 %v5575
        %5932 = vmatpush1.bf16.msra.mxu0 %v5574
        %5933 = vmatprep.subr.bf16.mxu0 %v5571
        %5934 = vmatpush1.bf16.msra.mxu0 %v5570
        %5935 = vmatprep.subr.bf16.mxu0 %v5631
        %5936 = vmatpush2.bf16.msra.mxu0 %v5630
        %5937 = vmatprep.subr.bf16.mxu0 %v5627
        %5938 = vmatpush2.bf16.msra.mxu0 %v5626
        %5939 = vmatprep.subr.bf16.mxu0 %v5623
        %5940 = vmatpush2.bf16.msra.mxu0 %v5622
        %5941 = vmatprep.subr.bf16.mxu0 %v5619
        %5942 = vmatpush2.bf16.msra.mxu0 %v5618
        %5943 = vmatprep.subr.bf16.mxu0 %v5615
        %5944 = vmatpush2.bf16.msra.mxu0 %v5614
        %5945 = vmatprep.subr.bf16.mxu0 %v5611
        %5946 = vmatpush2.bf16.msra.mxu0 %v5610
        %5947 = vmatprep.subr.bf16.mxu0 %v5607
        %5948 = vmatpush2.bf16.msra.mxu0 %v5606
        %5949 = vmatprep.subr.bf16.mxu0 %v5603
        %5950 = vmatpush2.bf16.msra.mxu0 %v5602
        %5951 = vmatprep.mubr.bf16.mxu0 %v5107
        %5952 = vmatmul.mubr.bf16.gmra.mxu0 %v5106
        %v5953 = vpop.f32.mrf.mxu0
        %v5954 = vadd.f32 %v5901, %v5953
        %v5955 = vpop.f32.mrf.mxu0
        %v5956 = vadd.f32 %v5903, %v5955
        %v5957 = vpop.f32.mrf.mxu0
        %v5958 = vadd.f32 %v5905, %v5957
        %v5959 = vpop.f32.mrf.mxu0
        %v5960 = vadd.f32 %v5907, %v5959
        %5961 = vmatprep.mubr.bf16.mxu0 %v5111
        %5962 = vmatmul.mubr.bf16.gmra.mxu0 %v5110
        %v5963 = vpop.f32.mrf.mxu0
        %v5964 = vadd.f32 %v5911, %v5963
        %v5965 = vpop.f32.mrf.mxu0
        %v5966 = vadd.f32 %v5913, %v5965
        %v5967 = vpop.f32.mrf.mxu0
        %v5968 = vadd.f32 %v5915, %v5967
        %v5969 = vpop.f32.mrf.mxu0
        %v5970 = vadd.f32 %v5917, %v5969
        %5971 = vdwg.mxu0
        %v5972 = vadd.f32 %v4900, %v5848
        %v5973 = vadd.f32 %v4901, %v5850
        %v5974 = vadd.f32 %v4902, %v5954
        %v5975 = vadd.f32 %v4903, %v5956
        %v5976 = vadd.f32 %v4904, %v5852
        %v5977 = vadd.f32 %v4905, %v5854
        %v5978 = vadd.f32 %v4906, %v5958
        %v5979 = vadd.f32 %v4907, %v5960
        %v5980 = vadd.f32 %v4908, %v5858
        %v5981 = vadd.f32 %v4909, %v5860
        %v5982 = vadd.f32 %v4910, %v5964
        %v5983 = vadd.f32 %v4911, %v5966
        %v5984 = vadd.f32 %v4912, %v5862
        %v5985 = vadd.f32 %v4913, %v5864
        %v5986 = vadd.f32 %v4914, %v5968
        %v5987 = vadd.f32 %v4915, %v5970
        %v5988 = vmax.f32 %v5972, 0.0
        %v5989 = vmax.f32 %v5973, 0.0
        %v5990 = vmax.f32 %v5974, 0.0
        %v5991 = vmax.f32 %v5975, 0.0
        %v5992 = vmax.f32 %v5976, 0.0
        %v5993 = vmax.f32 %v5977, 0.0
        %v5994 = vmax.f32 %v5978, 0.0
        %v5995 = vmax.f32 %v5979, 0.0
        %v5996 = vmax.f32 %v5980, 0.0
        %v5997 = vmax.f32 %v5981, 0.0
        %v5998 = vmax.f32 %v5982, 0.0
        %v5999 = vmax.f32 %v5983, 0.0
        %v6000 = vmax.f32 %v5984, 0.0
        %v6001 = vmax.f32 %v5985, 0.0
        %v6002 = vmax.f32 %v5986, 0.0
        %v6003 = vmax.f32 %v5987, 0.0
        %v6004 = vpack.c.bf16 %v5992, %v5988
        %v6005 = vpack.c.bf16 %v5993, %v5989
        %v6006 = vpack.c.bf16 %v5994, %v5990
        %v6007 = vpack.c.bf16 %v5995, %v5991
        %v6008 = vpack.c.bf16 %v6000, %v5996
        %v6009 = vpack.c.bf16 %v6001, %v5997
        %v6010 = vpack.c.bf16 %v6002, %v5998
        %v6011 = vpack.c.bf16 %v6003, %v5999
        %v6020 = vunpack.c.l.b16 %v6004
        %v6021 = vunpack.c.l.b16 %v6005
        %v6022 = vunpack.c.l.b16 %v6006
        %v6023 = vunpack.c.l.b16 %v6007
        %v6024 = vunpack.c.h.b16 %v6004
        %v6025 = vunpack.c.h.b16 %v6005
        %v6026 = vunpack.c.h.b16 %v6006
        %v6027 = vunpack.c.h.b16 %v6007
        %v6028 = vunpack.c.l.b16 %v6008
        %v6029 = vunpack.c.l.b16 %v6009
        %v6030 = vunpack.c.l.b16 %v6010
        %v6031 = vunpack.c.l.b16 %v6011
        %v6032 = vunpack.c.h.b16 %v6008
        %v6033 = vunpack.c.h.b16 %v6009
        %v6034 = vunpack.c.h.b16 %v6010
        %v6035 = vunpack.c.h.b16 %v6011
        %v6036 = vpack.c.b16 %v6021, %v6020
        %v6037 = vpack.c.b16 %v6023, %v6022
        %v6038 = vpack.c.b16 %v6025, %v6024
        %v6039 = vpack.c.b16 %v6027, %v6026
        %v6040 = vpack.c.b16 %v6029, %v6028
        %v6041 = vpack.c.b16 %v6031, %v6030
        %v6042 = vpack.c.b16 %v6033, %v6032
        %v6043 = vpack.c.b16 %v6035, %v6034
        %6052 = vst [vmem:[#allocation2] sm:$0xff] %v6036
        %6053 = vst [vmem:[#allocation2 + $0x8] sm:$0xff] %v6037
        %6054 = vst [vmem:[#allocation2 + $0x10] sm:$0xff] %v6038
        %6055 = vst [vmem:[#allocation2 + $0x18] sm:$0xff] %v6039
        %6056 = vst [vmem:[#allocation2 + $0x30] sm:$0xff] %v6040
        %6057 = vst [vmem:[#allocation2 + $0x38] sm:$0xff] %v6041
        %6058 = vst [vmem:[#allocation2 + $0x40] sm:$0xff] %v6042
        %6059 = vst [vmem:[#allocation2 + $0x48] sm:$0xff] %v6043
        %p6060 = scmp.eq.s32.totalorder %s27, 0
        // Predicated region
        $region80: #{resblock_forward_nlc.1} parent=58 // pred_check
          %p6061 = pneg %p6060
        $region81: #{resblock_forward_nlc.1} parent=58 // pred_check_branch
          %6063 = sbr.rel (%p6061) target = $region83
        $region82: #{resblock_forward_nlc.1} parent=58 // pred_region
          %6064 = vst [vmem:[#allocation2] sm:$0x33] 0
          %6065 = vst [vmem:[#allocation2 + $0x8] sm:$0x33] 0
          %6066 = vst [vmem:[#allocation2 + $0x30] sm:$0x33] 0
          %6067 = vst [vmem:[#allocation2 + $0x38] sm:$0x33] 0
        $region83: #{resblock_forward_nlc.1} parent=58 // pred_fallthru
          _
        %p6068 = scmp.eq.s32.totalorder %s27, 1
        // Predicated region
        $region84: #{resblock_forward_nlc.1} parent=58 // pred_check
          %p6069 = pneg %p6068
        $region85: #{resblock_forward_nlc.1} parent=58 // pred_check_branch
          %6071 = sbr.rel (%p6069) target = $region87
        $region86: #{resblock_forward_nlc.1} parent=58 // pred_region
          %6072 = vst [vmem:[#allocation2 + $0x10] sm:$0xcc] 0
          %6073 = vst [vmem:[#allocation2 + $0x18] sm:$0xcc] 0
          %6074 = vst [vmem:[#allocation2 + $0x40] sm:$0xcc] 0
          %6075 = vst [vmem:[#allocation2 + $0x48] sm:$0xcc] 0
        $region87: #{resblock_forward_nlc.1} parent=58 // pred_fallthru
          _
        %v6076 = vld [vmem:[#allocation10] sm:$0xf]
        %v6078 = vlaneseq
        %v6079 = vshrl.u32 %v6078, 7
        %v6080 = vsub.s32 0, %v6079
        %v6081 = vrot.slane %v6076, %v6080
        %v6082 = vlaneseq
        %v6083 = vshrl.u32 %v6082, 7
        %v6084 = vsub.s32 1, %v6083
        %v6085 = vrot.slane %v6076, %v6084
        %v6086 = vlaneseq
        %v6087 = vshrl.u32 %v6086, 7
        %v6088 = vsub.s32 2, %v6087
        %v6089 = vrot.slane %v6076, %v6088
        %v6090 = vlaneseq
        %v6091 = vshrl.u32 %v6090, 7
        %v6092 = vsub.s32 3, %v6091
        %v6093 = vrot.slane %v6076, %v6092
        %v6098 = vld [vmem:[#allocation2] sm:$0xee]
        %v6099 = vld [vmem:[#allocation2 + $0x8] sm:$0xee]
        %v6100 = vld [vmem:[#allocation2 + $0x10] sm:$0x11]
        %v6101 = vld [vmem:[#allocation2 + $0x18] sm:$0x11]
        %v6102 = vld [vmem:[#allocation2 + $0x30] sm:$0xee]
        %v6103 = vld [vmem:[#allocation2 + $0x38] sm:$0xee]
        %v6104 = vld [vmem:[#allocation2 + $0x40] sm:$0x11]
        %v6105 = vld [vmem:[#allocation2 + $0x48] sm:$0x11]
        %v6114 = vrot.slane %v6098, 5
        %v6115 = vrot.slane %v6114, 4
        %v6116 = vrot.slane %v6100, 5
        %v6117 = vsel %vm2730, %v6115, %v6116
        %v6118 = vrot.slane %v6099, 5
        %v6119 = vrot.slane %v6118, 4
        %v6120 = vrot.slane %v6101, 5
        %v6121 = vsel %vm2730, %v6119, %v6120
        %v6122 = vrot.slane %v6102, 5
        %v6123 = vrot.slane %v6122, 4
        %v6124 = vrot.slane %v6104, 5
        %v6125 = vsel %vm2730, %v6123, %v6124
        %v6126 = vrot.slane %v6103, 5
        %v6127 = vrot.slane %v6126, 4
        %v6128 = vrot.slane %v6105, 5
        %v6129 = vsel %vm2730, %v6127, %v6128
        %v6130 = vld [vmem:[#allocation9] sm:$0xff]
        %v6131 = vld [vmem:[#allocation9 + $0x8] sm:$0xff]
        %v6132 = vld [vmem:[#allocation9 + $0x10] sm:$0xff]
        %v6133 = vld [vmem:[#allocation9 + $0x18] sm:$0xff]
        %v6134 = vld [vmem:[#allocation9 + $0x20] sm:$0xff]
        %v6135 = vld [vmem:[#allocation9 + $0x28] sm:$0xff]
        %v6136 = vld [vmem:[#allocation9 + $0x30] sm:$0xff]
        %v6137 = vld [vmem:[#allocation9 + $0x38] sm:$0xff]
        %v6138 = vld [vmem:[#allocation9 + $0x40] sm:$0xff]
        %v6139 = vld [vmem:[#allocation9 + $0x48] sm:$0xff]
        %v6140 = vld [vmem:[#allocation9 + $0x50] sm:$0xff]
        %v6141 = vld [vmem:[#allocation9 + $0x58] sm:$0xff]
        %v6142 = vld [vmem:[#allocation9 + $0x60] sm:$0xff]
        %v6143 = vld [vmem:[#allocation9 + $0x68] sm:$0xff]
        %v6144 = vld [vmem:[#allocation9 + $0x70] sm:$0xff]
        %v6145 = vld [vmem:[#allocation9 + $0x78] sm:$0xff]
        %v6146 = vld [vmem:[#allocation9 + $0x80] sm:$0xff]
        %v6147 = vld [vmem:[#allocation9 + $0x88] sm:$0xff]
        %v6148 = vld [vmem:[#allocation9 + $0x90] sm:$0xff]
        %v6149 = vld [vmem:[#allocation9 + $0x98] sm:$0xff]
        %v6150 = vld [vmem:[#allocation9 + $0xa0] sm:$0xff]
        %v6151 = vld [vmem:[#allocation9 + $0xa8] sm:$0xff]
        %v6152 = vld [vmem:[#allocation9 + $0xb0] sm:$0xff]
        %v6153 = vld [vmem:[#allocation9 + $0xb8] sm:$0xff]
        %v6154 = vld [vmem:[#allocation9 + $0xc0] sm:$0xff]
        %v6155 = vld [vmem:[#allocation9 + $0xc8] sm:$0xff]
        %v6156 = vld [vmem:[#allocation9 + $0xd0] sm:$0xff]
        %v6157 = vld [vmem:[#allocation9 + $0xd8] sm:$0xff]
        %v6158 = vld [vmem:[#allocation9 + $0xe0] sm:$0xff]
        %v6159 = vld [vmem:[#allocation9 + $0xe8] sm:$0xff]
        %v6160 = vld [vmem:[#allocation9 + $0xf0] sm:$0xff]
        %v6161 = vld [vmem:[#allocation9 + $0xf8] sm:$0xff]
        %v6162 = vld [vmem:[#allocation9 + $0x100] sm:$0xff]
        %v6163 = vld [vmem:[#allocation9 + $0x108] sm:$0xff]
        %v6164 = vld [vmem:[#allocation9 + $0x110] sm:$0xff]
        %v6165 = vld [vmem:[#allocation9 + $0x118] sm:$0xff]
        %v6166 = vld [vmem:[#allocation9 + $0x120] sm:$0xff]
        %v6167 = vld [vmem:[#allocation9 + $0x128] sm:$0xff]
        %v6168 = vld [vmem:[#allocation9 + $0x130] sm:$0xff]
        %v6169 = vld [vmem:[#allocation9 + $0x138] sm:$0xff]
        %v6170 = vld [vmem:[#allocation9 + $0x140] sm:$0xff]
        %v6171 = vld [vmem:[#allocation9 + $0x148] sm:$0xff]
        %v6172 = vld [vmem:[#allocation9 + $0x150] sm:$0xff]
        %v6173 = vld [vmem:[#allocation9 + $0x158] sm:$0xff]
        %v6174 = vld [vmem:[#allocation9 + $0x160] sm:$0xff]
        %v6175 = vld [vmem:[#allocation9 + $0x168] sm:$0xff]
        %v6176 = vld [vmem:[#allocation9 + $0x170] sm:$0xff]
        %v6177 = vld [vmem:[#allocation9 + $0x178] sm:$0xff]
        %v6178 = vld [vmem:[#allocation9 + $0x180] sm:$0xff]
        %v6179 = vld [vmem:[#allocation9 + $0x188] sm:$0xff]
        %v6180 = vld [vmem:[#allocation9 + $0x190] sm:$0xff]
        %v6181 = vld [vmem:[#allocation9 + $0x198] sm:$0xff]
        %v6182 = vld [vmem:[#allocation9 + $0x1a0] sm:$0xff]
        %v6183 = vld [vmem:[#allocation9 + $0x1a8] sm:$0xff]
        %v6184 = vld [vmem:[#allocation9 + $0x1b0] sm:$0xff]
        %v6185 = vld [vmem:[#allocation9 + $0x1b8] sm:$0xff]
        %v6186 = vld [vmem:[#allocation9 + $0x1c0] sm:$0xff]
        %v6187 = vld [vmem:[#allocation9 + $0x1c8] sm:$0xff]
        %v6188 = vld [vmem:[#allocation9 + $0x1d0] sm:$0xff]
        %v6189 = vld [vmem:[#allocation9 + $0x1d8] sm:$0xff]
        %v6190 = vld [vmem:[#allocation9 + $0x1e0] sm:$0xff]
        %v6191 = vld [vmem:[#allocation9 + $0x1e8] sm:$0xff]
        %v6192 = vld [vmem:[#allocation9 + $0x1f0] sm:$0xff]
        %v6193 = vld [vmem:[#allocation9 + $0x1f8] sm:$0xff]
        %v6194 = vld [vmem:[#allocation9 + $0x200] sm:$0xff]
        %v6195 = vld [vmem:[#allocation9 + $0x208] sm:$0xff]
        %v6196 = vld [vmem:[#allocation9 + $0x210] sm:$0xff]
        %v6197 = vld [vmem:[#allocation9 + $0x218] sm:$0xff]
        %v6198 = vld [vmem:[#allocation9 + $0x220] sm:$0xff]
        %v6199 = vld [vmem:[#allocation9 + $0x228] sm:$0xff]
        %v6200 = vld [vmem:[#allocation9 + $0x230] sm:$0xff]
        %v6201 = vld [vmem:[#allocation9 + $0x238] sm:$0xff]
        %v6202 = vld [vmem:[#allocation9 + $0x240] sm:$0xff]
        %v6203 = vld [vmem:[#allocation9 + $0x248] sm:$0xff]
        %v6204 = vld [vmem:[#allocation9 + $0x250] sm:$0xff]
        %v6205 = vld [vmem:[#allocation9 + $0x258] sm:$0xff]
        %v6206 = vld [vmem:[#allocation9 + $0x260] sm:$0xff]
        %v6207 = vld [vmem:[#allocation9 + $0x268] sm:$0xff]
        %v6208 = vld [vmem:[#allocation9 + $0x270] sm:$0xff]
        %v6209 = vld [vmem:[#allocation9 + $0x278] sm:$0xff]
        %v6210 = vld [vmem:[#allocation9 + $0x280] sm:$0xff]
        %v6211 = vld [vmem:[#allocation9 + $0x288] sm:$0xff]
        %v6212 = vld [vmem:[#allocation9 + $0x290] sm:$0xff]
        %v6213 = vld [vmem:[#allocation9 + $0x298] sm:$0xff]
        %v6214 = vld [vmem:[#allocation9 + $0x2a0] sm:$0xff]
        %v6215 = vld [vmem:[#allocation9 + $0x2a8] sm:$0xff]
        %v6216 = vld [vmem:[#allocation9 + $0x2b0] sm:$0xff]
        %v6217 = vld [vmem:[#allocation9 + $0x2b8] sm:$0xff]
        %v6218 = vld [vmem:[#allocation9 + $0x2c0] sm:$0xff]
        %v6219 = vld [vmem:[#allocation9 + $0x2c8] sm:$0xff]
        %v6220 = vld [vmem:[#allocation9 + $0x2d0] sm:$0xff]
        %v6221 = vld [vmem:[#allocation9 + $0x2d8] sm:$0xff]
        %v6222 = vld [vmem:[#allocation9 + $0x2e0] sm:$0xff]
        %v6223 = vld [vmem:[#allocation9 + $0x2e8] sm:$0xff]
        %v6224 = vld [vmem:[#allocation9 + $0x2f0] sm:$0xff]
        %v6225 = vld [vmem:[#allocation9 + $0x2f8] sm:$0xff]
        %v6226 = vld [vmem:[#allocation9 + $0x300] sm:$0xff]
        %v6227 = vld [vmem:[#allocation9 + $0x308] sm:$0xff]
        %v6228 = vld [vmem:[#allocation9 + $0x310] sm:$0xff]
        %v6229 = vld [vmem:[#allocation9 + $0x318] sm:$0xff]
        %v6230 = vld [vmem:[#allocation9 + $0x320] sm:$0xff]
        %v6231 = vld [vmem:[#allocation9 + $0x328] sm:$0xff]
        %v6232 = vld [vmem:[#allocation9 + $0x330] sm:$0xff]
        %v6233 = vld [vmem:[#allocation9 + $0x338] sm:$0xff]
        %v6234 = vld [vmem:[#allocation9 + $0x340] sm:$0xff]
        %v6235 = vld [vmem:[#allocation9 + $0x348] sm:$0xff]
        %v6236 = vld [vmem:[#allocation9 + $0x350] sm:$0xff]
        %v6237 = vld [vmem:[#allocation9 + $0x358] sm:$0xff]
        %v6238 = vld [vmem:[#allocation9 + $0x360] sm:$0xff]
        %v6239 = vld [vmem:[#allocation9 + $0x368] sm:$0xff]
        %v6240 = vld [vmem:[#allocation9 + $0x370] sm:$0xff]
        %v6241 = vld [vmem:[#allocation9 + $0x378] sm:$0xff]
        %v6242 = vld [vmem:[#allocation9 + $0x380] sm:$0xff]
        %v6243 = vld [vmem:[#allocation9 + $0x388] sm:$0xff]
        %v6244 = vld [vmem:[#allocation9 + $0x390] sm:$0xff]
        %v6245 = vld [vmem:[#allocation9 + $0x398] sm:$0xff]
        %v6246 = vld [vmem:[#allocation9 + $0x3a0] sm:$0xff]
        %v6247 = vld [vmem:[#allocation9 + $0x3a8] sm:$0xff]
        %v6248 = vld [vmem:[#allocation9 + $0x3b0] sm:$0xff]
        %v6249 = vld [vmem:[#allocation9 + $0x3b8] sm:$0xff]
        %v6250 = vld [vmem:[#allocation9 + $0x3c0] sm:$0xff]
        %v6251 = vld [vmem:[#allocation9 + $0x3c8] sm:$0xff]
        %v6252 = vld [vmem:[#allocation9 + $0x3d0] sm:$0xff]
        %v6253 = vld [vmem:[#allocation9 + $0x3d8] sm:$0xff]
        %v6254 = vld [vmem:[#allocation9 + $0x3e0] sm:$0xff]
        %v6255 = vld [vmem:[#allocation9 + $0x3e8] sm:$0xff]
        %v6256 = vld [vmem:[#allocation9 + $0x3f0] sm:$0xff]
        %v6257 = vld [vmem:[#allocation9 + $0x3f8] sm:$0xff]
        %v6258 = vunpack.c.l.b16 %v6117
        %v6259 = vunpack.c.h.b16 %v6117
        %v6260 = vunpack.c.l.b16 %v6121
        %v6261 = vunpack.c.h.b16 %v6121
        %v6262 = vunpack.c.l.b16 %v6125
        %v6263 = vunpack.c.h.b16 %v6125
        %v6264 = vunpack.c.l.b16 %v6129
        %v6265 = vunpack.c.h.b16 %v6129
        %v6266 = vpack.c.b16 %v6262, %v6258
        %v6267 = vpack.c.b16 %v6263, %v6259
        %v6268 = vpack.c.b16 %v6264, %v6260
        %v6269 = vpack.c.b16 %v6265, %v6261
        %v6402 = vunpack.c.l.b16 %v6130
        %v6403 = vunpack.c.h.b16 %v6130
        %v6404 = vunpack.c.l.b16 %v6131
        %v6405 = vunpack.c.h.b16 %v6131
        %v6406 = vunpack.c.l.b16 %v6132
        %v6407 = vunpack.c.h.b16 %v6132
        %v6408 = vunpack.c.l.b16 %v6133
        %v6409 = vunpack.c.h.b16 %v6133
        %v6410 = vunpack.c.l.b16 %v6134
        %v6411 = vunpack.c.h.b16 %v6134
        %v6412 = vunpack.c.l.b16 %v6135
        %v6413 = vunpack.c.h.b16 %v6135
        %v6414 = vunpack.c.l.b16 %v6136
        %v6415 = vunpack.c.h.b16 %v6136
        %v6416 = vunpack.c.l.b16 %v6137
        %v6417 = vunpack.c.h.b16 %v6137
        %v6418 = vunpack.c.l.b16 %v6138
        %v6419 = vunpack.c.h.b16 %v6138
        %v6420 = vunpack.c.l.b16 %v6139
        %v6421 = vunpack.c.h.b16 %v6139
        %v6422 = vunpack.c.l.b16 %v6140
        %v6423 = vunpack.c.h.b16 %v6140
        %v6424 = vunpack.c.l.b16 %v6141
        %v6425 = vunpack.c.h.b16 %v6141
        %v6426 = vunpack.c.l.b16 %v6142
        %v6427 = vunpack.c.h.b16 %v6142
        %v6428 = vunpack.c.l.b16 %v6143
        %v6429 = vunpack.c.h.b16 %v6143
        %v6430 = vunpack.c.l.b16 %v6144
        %v6431 = vunpack.c.h.b16 %v6144
        %v6432 = vunpack.c.l.b16 %v6145
        %v6433 = vunpack.c.h.b16 %v6145
        %v6434 = vunpack.c.l.b16 %v6146
        %v6435 = vunpack.c.h.b16 %v6146
        %v6436 = vunpack.c.l.b16 %v6147
        %v6437 = vunpack.c.h.b16 %v6147
        %v6438 = vunpack.c.l.b16 %v6148
        %v6439 = vunpack.c.h.b16 %v6148
        %v6440 = vunpack.c.l.b16 %v6149
        %v6441 = vunpack.c.h.b16 %v6149
        %v6442 = vunpack.c.l.b16 %v6150
        %v6443 = vunpack.c.h.b16 %v6150
        %v6444 = vunpack.c.l.b16 %v6151
        %v6445 = vunpack.c.h.b16 %v6151
        %v6446 = vunpack.c.l.b16 %v6152
        %v6447 = vunpack.c.h.b16 %v6152
        %v6448 = vunpack.c.l.b16 %v6153
        %v6449 = vunpack.c.h.b16 %v6153
        %v6450 = vunpack.c.l.b16 %v6154
        %v6451 = vunpack.c.h.b16 %v6154
        %v6452 = vunpack.c.l.b16 %v6155
        %v6453 = vunpack.c.h.b16 %v6155
        %v6454 = vunpack.c.l.b16 %v6156
        %v6455 = vunpack.c.h.b16 %v6156
        %v6456 = vunpack.c.l.b16 %v6157
        %v6457 = vunpack.c.h.b16 %v6157
        %v6458 = vunpack.c.l.b16 %v6158
        %v6459 = vunpack.c.h.b16 %v6158
        %v6460 = vunpack.c.l.b16 %v6159
        %v6461 = vunpack.c.h.b16 %v6159
        %v6462 = vunpack.c.l.b16 %v6160
        %v6463 = vunpack.c.h.b16 %v6160
        %v6464 = vunpack.c.l.b16 %v6161
        %v6465 = vunpack.c.h.b16 %v6161
        %v6466 = vunpack.c.l.b16 %v6162
        %v6467 = vunpack.c.h.b16 %v6162
        %v6468 = vunpack.c.l.b16 %v6163
        %v6469 = vunpack.c.h.b16 %v6163
        %v6470 = vunpack.c.l.b16 %v6164
        %v6471 = vunpack.c.h.b16 %v6164
        %v6472 = vunpack.c.l.b16 %v6165
        %v6473 = vunpack.c.h.b16 %v6165
        %v6474 = vunpack.c.l.b16 %v6166
        %v6475 = vunpack.c.h.b16 %v6166
        %v6476 = vunpack.c.l.b16 %v6167
        %v6477 = vunpack.c.h.b16 %v6167
        %v6478 = vunpack.c.l.b16 %v6168
        %v6479 = vunpack.c.h.b16 %v6168
        %v6480 = vunpack.c.l.b16 %v6169
        %v6481 = vunpack.c.h.b16 %v6169
        %v6482 = vunpack.c.l.b16 %v6170
        %v6483 = vunpack.c.h.b16 %v6170
        %v6484 = vunpack.c.l.b16 %v6171
        %v6485 = vunpack.c.h.b16 %v6171
        %v6486 = vunpack.c.l.b16 %v6172
        %v6487 = vunpack.c.h.b16 %v6172
        %v6488 = vunpack.c.l.b16 %v6173
        %v6489 = vunpack.c.h.b16 %v6173
        %v6490 = vunpack.c.l.b16 %v6174
        %v6491 = vunpack.c.h.b16 %v6174
        %v6492 = vunpack.c.l.b16 %v6175
        %v6493 = vunpack.c.h.b16 %v6175
        %v6494 = vunpack.c.l.b16 %v6176
        %v6495 = vunpack.c.h.b16 %v6176
        %v6496 = vunpack.c.l.b16 %v6177
        %v6497 = vunpack.c.h.b16 %v6177
        %v6498 = vunpack.c.l.b16 %v6178
        %v6499 = vunpack.c.h.b16 %v6178
        %v6500 = vunpack.c.l.b16 %v6179
        %v6501 = vunpack.c.h.b16 %v6179
        %v6502 = vunpack.c.l.b16 %v6180
        %v6503 = vunpack.c.h.b16 %v6180
        %v6504 = vunpack.c.l.b16 %v6181
        %v6505 = vunpack.c.h.b16 %v6181
        %v6506 = vunpack.c.l.b16 %v6182
        %v6507 = vunpack.c.h.b16 %v6182
        %v6508 = vunpack.c.l.b16 %v6183
        %v6509 = vunpack.c.h.b16 %v6183
        %v6510 = vunpack.c.l.b16 %v6184
        %v6511 = vunpack.c.h.b16 %v6184
        %v6512 = vunpack.c.l.b16 %v6185
        %v6513 = vunpack.c.h.b16 %v6185
        %v6514 = vunpack.c.l.b16 %v6186
        %v6515 = vunpack.c.h.b16 %v6186
        %v6516 = vunpack.c.l.b16 %v6187
        %v6517 = vunpack.c.h.b16 %v6187
        %v6518 = vunpack.c.l.b16 %v6188
        %v6519 = vunpack.c.h.b16 %v6188
        %v6520 = vunpack.c.l.b16 %v6189
        %v6521 = vunpack.c.h.b16 %v6189
        %v6522 = vunpack.c.l.b16 %v6190
        %v6523 = vunpack.c.h.b16 %v6190
        %v6524 = vunpack.c.l.b16 %v6191
        %v6525 = vunpack.c.h.b16 %v6191
        %v6526 = vunpack.c.l.b16 %v6192
        %v6527 = vunpack.c.h.b16 %v6192
        %v6528 = vunpack.c.l.b16 %v6193
        %v6529 = vunpack.c.h.b16 %v6193
        %v6530 = vunpack.c.l.b16 %v6194
        %v6531 = vunpack.c.h.b16 %v6194
        %v6532 = vunpack.c.l.b16 %v6195
        %v6533 = vunpack.c.h.b16 %v6195
        %v6534 = vunpack.c.l.b16 %v6196
        %v6535 = vunpack.c.h.b16 %v6196
        %v6536 = vunpack.c.l.b16 %v6197
        %v6537 = vunpack.c.h.b16 %v6197
        %v6538 = vunpack.c.l.b16 %v6198
        %v6539 = vunpack.c.h.b16 %v6198
        %v6540 = vunpack.c.l.b16 %v6199
        %v6541 = vunpack.c.h.b16 %v6199
        %v6542 = vunpack.c.l.b16 %v6200
        %v6543 = vunpack.c.h.b16 %v6200
        %v6544 = vunpack.c.l.b16 %v6201
        %v6545 = vunpack.c.h.b16 %v6201
        %v6546 = vunpack.c.l.b16 %v6202
        %v6547 = vunpack.c.h.b16 %v6202
        %v6548 = vunpack.c.l.b16 %v6203
        %v6549 = vunpack.c.h.b16 %v6203
        %v6550 = vunpack.c.l.b16 %v6204
        %v6551 = vunpack.c.h.b16 %v6204
        %v6552 = vunpack.c.l.b16 %v6205
        %v6553 = vunpack.c.h.b16 %v6205
        %v6554 = vunpack.c.l.b16 %v6206
        %v6555 = vunpack.c.h.b16 %v6206
        %v6556 = vunpack.c.l.b16 %v6207
        %v6557 = vunpack.c.h.b16 %v6207
        %v6558 = vunpack.c.l.b16 %v6208
        %v6559 = vunpack.c.h.b16 %v6208
        %v6560 = vunpack.c.l.b16 %v6209
        %v6561 = vunpack.c.h.b16 %v6209
        %v6562 = vunpack.c.l.b16 %v6210
        %v6563 = vunpack.c.h.b16 %v6210
        %v6564 = vunpack.c.l.b16 %v6211
        %v6565 = vunpack.c.h.b16 %v6211
        %v6566 = vunpack.c.l.b16 %v6212
        %v6567 = vunpack.c.h.b16 %v6212
        %v6568 = vunpack.c.l.b16 %v6213
        %v6569 = vunpack.c.h.b16 %v6213
        %v6570 = vunpack.c.l.b16 %v6214
        %v6571 = vunpack.c.h.b16 %v6214
        %v6572 = vunpack.c.l.b16 %v6215
        %v6573 = vunpack.c.h.b16 %v6215
        %v6574 = vunpack.c.l.b16 %v6216
        %v6575 = vunpack.c.h.b16 %v6216
        %v6576 = vunpack.c.l.b16 %v6217
        %v6577 = vunpack.c.h.b16 %v6217
        %v6578 = vunpack.c.l.b16 %v6218
        %v6579 = vunpack.c.h.b16 %v6218
        %v6580 = vunpack.c.l.b16 %v6219
        %v6581 = vunpack.c.h.b16 %v6219
        %v6582 = vunpack.c.l.b16 %v6220
        %v6583 = vunpack.c.h.b16 %v6220
        %v6584 = vunpack.c.l.b16 %v6221
        %v6585 = vunpack.c.h.b16 %v6221
        %v6586 = vunpack.c.l.b16 %v6222
        %v6587 = vunpack.c.h.b16 %v6222
        %v6588 = vunpack.c.l.b16 %v6223
        %v6589 = vunpack.c.h.b16 %v6223
        %v6590 = vunpack.c.l.b16 %v6224
        %v6591 = vunpack.c.h.b16 %v6224
        %v6592 = vunpack.c.l.b16 %v6225
        %v6593 = vunpack.c.h.b16 %v6225
        %v6594 = vunpack.c.l.b16 %v6226
        %v6595 = vunpack.c.h.b16 %v6226
        %v6596 = vunpack.c.l.b16 %v6227
        %v6597 = vunpack.c.h.b16 %v6227
        %v6598 = vunpack.c.l.b16 %v6228
        %v6599 = vunpack.c.h.b16 %v6228
        %v6600 = vunpack.c.l.b16 %v6229
        %v6601 = vunpack.c.h.b16 %v6229
        %v6602 = vunpack.c.l.b16 %v6230
        %v6603 = vunpack.c.h.b16 %v6230
        %v6604 = vunpack.c.l.b16 %v6231
        %v6605 = vunpack.c.h.b16 %v6231
        %v6606 = vunpack.c.l.b16 %v6232
        %v6607 = vunpack.c.h.b16 %v6232
        %v6608 = vunpack.c.l.b16 %v6233
        %v6609 = vunpack.c.h.b16 %v6233
        %v6610 = vunpack.c.l.b16 %v6234
        %v6611 = vunpack.c.h.b16 %v6234
        %v6612 = vunpack.c.l.b16 %v6235
        %v6613 = vunpack.c.h.b16 %v6235
        %v6614 = vunpack.c.l.b16 %v6236
        %v6615 = vunpack.c.h.b16 %v6236
        %v6616 = vunpack.c.l.b16 %v6237
        %v6617 = vunpack.c.h.b16 %v6237
        %v6618 = vunpack.c.l.b16 %v6238
        %v6619 = vunpack.c.h.b16 %v6238
        %v6620 = vunpack.c.l.b16 %v6239
        %v6621 = vunpack.c.h.b16 %v6239
        %v6622 = vunpack.c.l.b16 %v6240
        %v6623 = vunpack.c.h.b16 %v6240
        %v6624 = vunpack.c.l.b16 %v6241
        %v6625 = vunpack.c.h.b16 %v6241
        %v6626 = vunpack.c.l.b16 %v6242
        %v6627 = vunpack.c.h.b16 %v6242
        %v6628 = vunpack.c.l.b16 %v6243
        %v6629 = vunpack.c.h.b16 %v6243
        %v6630 = vunpack.c.l.b16 %v6244
        %v6631 = vunpack.c.h.b16 %v6244
        %v6632 = vunpack.c.l.b16 %v6245
        %v6633 = vunpack.c.h.b16 %v6245
        %v6634 = vunpack.c.l.b16 %v6246
        %v6635 = vunpack.c.h.b16 %v6246
        %v6636 = vunpack.c.l.b16 %v6247
        %v6637 = vunpack.c.h.b16 %v6247
        %v6638 = vunpack.c.l.b16 %v6248
        %v6639 = vunpack.c.h.b16 %v6248
        %v6640 = vunpack.c.l.b16 %v6249
        %v6641 = vunpack.c.h.b16 %v6249
        %v6642 = vunpack.c.l.b16 %v6250
        %v6643 = vunpack.c.h.b16 %v6250
        %v6644 = vunpack.c.l.b16 %v6251
        %v6645 = vunpack.c.h.b16 %v6251
        %v6646 = vunpack.c.l.b16 %v6252
        %v6647 = vunpack.c.h.b16 %v6252
        %v6648 = vunpack.c.l.b16 %v6253
        %v6649 = vunpack.c.h.b16 %v6253
        %v6650 = vunpack.c.l.b16 %v6254
        %v6651 = vunpack.c.h.b16 %v6254
        %v6652 = vunpack.c.l.b16 %v6255
        %v6653 = vunpack.c.h.b16 %v6255
        %v6654 = vunpack.c.l.b16 %v6256
        %v6655 = vunpack.c.h.b16 %v6256
        %v6656 = vunpack.c.l.b16 %v6257
        %v6657 = vunpack.c.h.b16 %v6257
        %v6658 = vpack.c.b16 %v6406, %v6402
        %v6659 = vpack.c.b16 %v6407, %v6403
        %v6660 = vpack.c.b16 %v6408, %v6404
        %v6661 = vpack.c.b16 %v6409, %v6405
        %v6662 = vpack.c.b16 %v6414, %v6410
        %v6663 = vpack.c.b16 %v6415, %v6411
        %v6664 = vpack.c.b16 %v6416, %v6412
        %v6665 = vpack.c.b16 %v6417, %v6413
        %v6666 = vpack.c.b16 %v6422, %v6418
        %v6667 = vpack.c.b16 %v6423, %v6419
        %v6668 = vpack.c.b16 %v6424, %v6420
        %v6669 = vpack.c.b16 %v6425, %v6421
        %v6670 = vpack.c.b16 %v6430, %v6426
        %v6671 = vpack.c.b16 %v6431, %v6427
        %v6672 = vpack.c.b16 %v6432, %v6428
        %v6673 = vpack.c.b16 %v6433, %v6429
        %v6674 = vpack.c.b16 %v6438, %v6434
        %v6675 = vpack.c.b16 %v6439, %v6435
        %v6676 = vpack.c.b16 %v6440, %v6436
        %v6677 = vpack.c.b16 %v6441, %v6437
        %v6678 = vpack.c.b16 %v6446, %v6442
        %v6679 = vpack.c.b16 %v6447, %v6443
        %v6680 = vpack.c.b16 %v6448, %v6444
        %v6681 = vpack.c.b16 %v6449, %v6445
        %v6682 = vpack.c.b16 %v6454, %v6450
        %v6683 = vpack.c.b16 %v6455, %v6451
        %v6684 = vpack.c.b16 %v6456, %v6452
        %v6685 = vpack.c.b16 %v6457, %v6453
        %v6686 = vpack.c.b16 %v6462, %v6458
        %v6687 = vpack.c.b16 %v6463, %v6459
        %v6688 = vpack.c.b16 %v6464, %v6460
        %v6689 = vpack.c.b16 %v6465, %v6461
        %v6690 = vpack.c.b16 %v6470, %v6466
        %v6691 = vpack.c.b16 %v6471, %v6467
        %v6692 = vpack.c.b16 %v6472, %v6468
        %v6693 = vpack.c.b16 %v6473, %v6469
        %v6694 = vpack.c.b16 %v6478, %v6474
        %v6695 = vpack.c.b16 %v6479, %v6475
        %v6696 = vpack.c.b16 %v6480, %v6476
        %v6697 = vpack.c.b16 %v6481, %v6477
        %v6698 = vpack.c.b16 %v6486, %v6482
        %v6699 = vpack.c.b16 %v6487, %v6483
        %v6700 = vpack.c.b16 %v6488, %v6484
        %v6701 = vpack.c.b16 %v6489, %v6485
        %v6702 = vpack.c.b16 %v6494, %v6490
        %v6703 = vpack.c.b16 %v6495, %v6491
        %v6704 = vpack.c.b16 %v6496, %v6492
        %v6705 = vpack.c.b16 %v6497, %v6493
        %v6706 = vpack.c.b16 %v6502, %v6498
        %v6707 = vpack.c.b16 %v6503, %v6499
        %v6708 = vpack.c.b16 %v6504, %v6500
        %v6709 = vpack.c.b16 %v6505, %v6501
        %v6710 = vpack.c.b16 %v6510, %v6506
        %v6711 = vpack.c.b16 %v6511, %v6507
        %v6712 = vpack.c.b16 %v6512, %v6508
        %v6713 = vpack.c.b16 %v6513, %v6509
        %v6714 = vpack.c.b16 %v6518, %v6514
        %v6715 = vpack.c.b16 %v6519, %v6515
        %v6716 = vpack.c.b16 %v6520, %v6516
        %v6717 = vpack.c.b16 %v6521, %v6517
        %v6718 = vpack.c.b16 %v6526, %v6522
        %v6719 = vpack.c.b16 %v6527, %v6523
        %v6720 = vpack.c.b16 %v6528, %v6524
        %v6721 = vpack.c.b16 %v6529, %v6525
        %v6722 = vpack.c.b16 %v6534, %v6530
        %v6723 = vpack.c.b16 %v6535, %v6531
        %v6724 = vpack.c.b16 %v6536, %v6532
        %v6725 = vpack.c.b16 %v6537, %v6533
        %v6726 = vpack.c.b16 %v6542, %v6538
        %v6727 = vpack.c.b16 %v6543, %v6539
        %v6728 = vpack.c.b16 %v6544, %v6540
        %v6729 = vpack.c.b16 %v6545, %v6541
        %v6730 = vpack.c.b16 %v6550, %v6546
        %v6731 = vpack.c.b16 %v6551, %v6547
        %v6732 = vpack.c.b16 %v6552, %v6548
        %v6733 = vpack.c.b16 %v6553, %v6549
        %v6734 = vpack.c.b16 %v6558, %v6554
        %v6735 = vpack.c.b16 %v6559, %v6555
        %v6736 = vpack.c.b16 %v6560, %v6556
        %v6737 = vpack.c.b16 %v6561, %v6557
        %v6738 = vpack.c.b16 %v6566, %v6562
        %v6739 = vpack.c.b16 %v6567, %v6563
        %v6740 = vpack.c.b16 %v6568, %v6564
        %v6741 = vpack.c.b16 %v6569, %v6565
        %v6742 = vpack.c.b16 %v6574, %v6570
        %v6743 = vpack.c.b16 %v6575, %v6571
        %v6744 = vpack.c.b16 %v6576, %v6572
        %v6745 = vpack.c.b16 %v6577, %v6573
        %v6746 = vpack.c.b16 %v6582, %v6578
        %v6747 = vpack.c.b16 %v6583, %v6579
        %v6748 = vpack.c.b16 %v6584, %v6580
        %v6749 = vpack.c.b16 %v6585, %v6581
        %v6750 = vpack.c.b16 %v6590, %v6586
        %v6751 = vpack.c.b16 %v6591, %v6587
        %v6752 = vpack.c.b16 %v6592, %v6588
        %v6753 = vpack.c.b16 %v6593, %v6589
        %v6754 = vpack.c.b16 %v6598, %v6594
        %v6755 = vpack.c.b16 %v6599, %v6595
        %v6756 = vpack.c.b16 %v6600, %v6596
        %v6757 = vpack.c.b16 %v6601, %v6597
        %v6758 = vpack.c.b16 %v6606, %v6602
        %v6759 = vpack.c.b16 %v6607, %v6603
        %v6760 = vpack.c.b16 %v6608, %v6604
        %v6761 = vpack.c.b16 %v6609, %v6605
        %v6762 = vpack.c.b16 %v6614, %v6610
        %v6763 = vpack.c.b16 %v6615, %v6611
        %v6764 = vpack.c.b16 %v6616, %v6612
        %v6765 = vpack.c.b16 %v6617, %v6613
        %v6766 = vpack.c.b16 %v6622, %v6618
        %v6767 = vpack.c.b16 %v6623, %v6619
        %v6768 = vpack.c.b16 %v6624, %v6620
        %v6769 = vpack.c.b16 %v6625, %v6621
        %v6770 = vpack.c.b16 %v6630, %v6626
        %v6771 = vpack.c.b16 %v6631, %v6627
        %v6772 = vpack.c.b16 %v6632, %v6628
        %v6773 = vpack.c.b16 %v6633, %v6629
        %v6774 = vpack.c.b16 %v6638, %v6634
        %v6775 = vpack.c.b16 %v6639, %v6635
        %v6776 = vpack.c.b16 %v6640, %v6636
        %v6777 = vpack.c.b16 %v6641, %v6637
        %v6778 = vpack.c.b16 %v6646, %v6642
        %v6779 = vpack.c.b16 %v6647, %v6643
        %v6780 = vpack.c.b16 %v6648, %v6644
        %v6781 = vpack.c.b16 %v6649, %v6645
        %v6782 = vpack.c.b16 %v6654, %v6650
        %v6783 = vpack.c.b16 %v6655, %v6651
        %v6784 = vpack.c.b16 %v6656, %v6652
        %v6785 = vpack.c.b16 %v6657, %v6653
        %6914 = vmatprep.subr.bf16.mxu0 %v6687
        %6915 = vmatpush1.bf16.msra.mxu0 %v6686
        %6916 = vmatprep.subr.bf16.mxu0 %v6683
        %6917 = vmatpush1.bf16.msra.mxu0 %v6682
        %6918 = vmatprep.subr.bf16.mxu0 %v6679
        %6919 = vmatpush1.bf16.msra.mxu0 %v6678
        %6920 = vmatprep.subr.bf16.mxu0 %v6675
        %6921 = vmatpush1.bf16.msra.mxu0 %v6674
        %6922 = vmatprep.subr.bf16.mxu0 %v6671
        %6923 = vmatpush1.bf16.msra.mxu0 %v6670
        %6924 = vmatprep.subr.bf16.mxu0 %v6667
        %6925 = vmatpush1.bf16.msra.mxu0 %v6666
        %6926 = vmatprep.subr.bf16.mxu0 %v6663
        %6927 = vmatpush1.bf16.msra.mxu0 %v6662
        %6928 = vmatprep.subr.bf16.mxu0 %v6659
        %6929 = vmatpush1.bf16.msra.mxu0 %v6658
        %6930 = vmatprep.subr.bf16.mxu0 %v6719
        %6931 = vmatpush2.bf16.msra.mxu0 %v6718
        %6932 = vmatprep.subr.bf16.mxu0 %v6715
        %6933 = vmatpush2.bf16.msra.mxu0 %v6714
        %6934 = vmatprep.subr.bf16.mxu0 %v6711
        %6935 = vmatpush2.bf16.msra.mxu0 %v6710
        %6936 = vmatprep.subr.bf16.mxu0 %v6707
        %6937 = vmatpush2.bf16.msra.mxu0 %v6706
        %6938 = vmatprep.subr.bf16.mxu0 %v6703
        %6939 = vmatpush2.bf16.msra.mxu0 %v6702
        %6940 = vmatprep.subr.bf16.mxu0 %v6699
        %6941 = vmatpush2.bf16.msra.mxu0 %v6698
        %6942 = vmatprep.subr.bf16.mxu0 %v6695
        %6943 = vmatpush2.bf16.msra.mxu0 %v6694
        %6944 = vmatprep.subr.bf16.mxu0 %v6691
        %6945 = vmatpush2.bf16.msra.mxu0 %v6690
        %6946 = vmatprep.mubr.bf16.mxu0 %v6267
        %6947 = vmatmul.mubr.bf16.gmra.mxu0 %v6266
        %v6948 = vpop.f32.mrf.mxu0
        %v6949 = vadd.f32 0.0, %v6948
        %v6950 = vpop.f32.mrf.mxu0
        %v6951 = vadd.f32 0.0, %v6950
        %v6952 = vpop.f32.mrf.mxu0
        %v6953 = vadd.f32 0.0, %v6952
        %v6954 = vpop.f32.mrf.mxu0
        %v6955 = vadd.f32 0.0, %v6954
        %6956 = vdwg.mxu0
        %6957 = vmatprep.subr.bf16.mxu0 %v6751
        %6958 = vmatpush1.bf16.msra.mxu0 %v6750
        %6959 = vmatprep.subr.bf16.mxu0 %v6747
        %6960 = vmatpush1.bf16.msra.mxu0 %v6746
        %6961 = vmatprep.subr.bf16.mxu0 %v6743
        %6962 = vmatpush1.bf16.msra.mxu0 %v6742
        %6963 = vmatprep.subr.bf16.mxu0 %v6739
        %6964 = vmatpush1.bf16.msra.mxu0 %v6738
        %6965 = vmatprep.subr.bf16.mxu0 %v6735
        %6966 = vmatpush1.bf16.msra.mxu0 %v6734
        %6967 = vmatprep.subr.bf16.mxu0 %v6731
        %6968 = vmatpush1.bf16.msra.mxu0 %v6730
        %6969 = vmatprep.subr.bf16.mxu0 %v6727
        %6970 = vmatpush1.bf16.msra.mxu0 %v6726
        %6971 = vmatprep.subr.bf16.mxu0 %v6723
        %6972 = vmatpush1.bf16.msra.mxu0 %v6722
        %6973 = vmatprep.subr.bf16.mxu0 %v6783
        %6974 = vmatpush2.bf16.msra.mxu0 %v6782
        %6975 = vmatprep.subr.bf16.mxu0 %v6779
        %6976 = vmatpush2.bf16.msra.mxu0 %v6778
        %6977 = vmatprep.subr.bf16.mxu0 %v6775
        %6978 = vmatpush2.bf16.msra.mxu0 %v6774
        %6979 = vmatprep.subr.bf16.mxu0 %v6771
        %6980 = vmatpush2.bf16.msra.mxu0 %v6770
        %6981 = vmatprep.subr.bf16.mxu0 %v6767
        %6982 = vmatpush2.bf16.msra.mxu0 %v6766
        %6983 = vmatprep.subr.bf16.mxu0 %v6763
        %6984 = vmatpush2.bf16.msra.mxu0 %v6762
        %6985 = vmatprep.subr.bf16.mxu0 %v6759
        %6986 = vmatpush2.bf16.msra.mxu0 %v6758
        %6987 = vmatprep.subr.bf16.mxu0 %v6755
        %6988 = vmatpush2.bf16.msra.mxu0 %v6754
        %6989 = vmatprep.mubr.bf16.mxu0 %v6269
        %6990 = vmatmul.mubr.bf16.gmra.mxu0 %v6268
        %v6991 = vpop.f32.mrf.mxu0
        %v6992 = vadd.f32 %v6949, %v6991
        %v6993 = vpop.f32.mrf.mxu0
        %v6994 = vadd.f32 %v6951, %v6993
        %v6995 = vpop.f32.mrf.mxu0
        %v6996 = vadd.f32 %v6953, %v6995
        %v6997 = vpop.f32.mrf.mxu0
        %v6998 = vadd.f32 %v6955, %v6997
        %6999 = vdwg.mxu0
        %7000 = vmatprep.subr.bf16.mxu0 %v6689
        %7001 = vmatpush1.bf16.msra.mxu0 %v6688
        %7002 = vmatprep.subr.bf16.mxu0 %v6685
        %7003 = vmatpush1.bf16.msra.mxu0 %v6684
        %7004 = vmatprep.subr.bf16.mxu0 %v6681
        %7005 = vmatpush1.bf16.msra.mxu0 %v6680
        %7006 = vmatprep.subr.bf16.mxu0 %v6677
        %7007 = vmatpush1.bf16.msra.mxu0 %v6676
        %7008 = vmatprep.subr.bf16.mxu0 %v6673
        %7009 = vmatpush1.bf16.msra.mxu0 %v6672
        %7010 = vmatprep.subr.bf16.mxu0 %v6669
        %7011 = vmatpush1.bf16.msra.mxu0 %v6668
        %7012 = vmatprep.subr.bf16.mxu0 %v6665
        %7013 = vmatpush1.bf16.msra.mxu0 %v6664
        %7014 = vmatprep.subr.bf16.mxu0 %v6661
        %7015 = vmatpush1.bf16.msra.mxu0 %v6660
        %7016 = vmatprep.subr.bf16.mxu0 %v6721
        %7017 = vmatpush2.bf16.msra.mxu0 %v6720
        %7018 = vmatprep.subr.bf16.mxu0 %v6717
        %7019 = vmatpush2.bf16.msra.mxu0 %v6716
        %7020 = vmatprep.subr.bf16.mxu0 %v6713
        %7021 = vmatpush2.bf16.msra.mxu0 %v6712
        %7022 = vmatprep.subr.bf16.mxu0 %v6709
        %7023 = vmatpush2.bf16.msra.mxu0 %v6708
        %7024 = vmatprep.subr.bf16.mxu0 %v6705
        %7025 = vmatpush2.bf16.msra.mxu0 %v6704
        %7026 = vmatprep.subr.bf16.mxu0 %v6701
        %7027 = vmatpush2.bf16.msra.mxu0 %v6700
        %7028 = vmatprep.subr.bf16.mxu0 %v6697
        %7029 = vmatpush2.bf16.msra.mxu0 %v6696
        %7030 = vmatprep.subr.bf16.mxu0 %v6693
        %7031 = vmatpush2.bf16.msra.mxu0 %v6692
        %7032 = vmatprep.mubr.bf16.mxu0 %v6267
        %7033 = vmatmul.mubr.bf16.gmra.mxu0 %v6266
        %v7034 = vpop.f32.mrf.mxu0
        %v7035 = vadd.f32 0.0, %v7034
        %v7036 = vpop.f32.mrf.mxu0
        %v7037 = vadd.f32 0.0, %v7036
        %v7038 = vpop.f32.mrf.mxu0
        %v7039 = vadd.f32 0.0, %v7038
        %v7040 = vpop.f32.mrf.mxu0
        %v7041 = vadd.f32 0.0, %v7040
        %7042 = vdwg.mxu0
        %7043 = vmatprep.subr.bf16.mxu0 %v6753
        %7044 = vmatpush1.bf16.msra.mxu0 %v6752
        %7045 = vmatprep.subr.bf16.mxu0 %v6749
        %7046 = vmatpush1.bf16.msra.mxu0 %v6748
        %7047 = vmatprep.subr.bf16.mxu0 %v6745
        %7048 = vmatpush1.bf16.msra.mxu0 %v6744
        %7049 = vmatprep.subr.bf16.mxu0 %v6741
        %7050 = vmatpush1.bf16.msra.mxu0 %v6740
        %7051 = vmatprep.subr.bf16.mxu0 %v6737
        %7052 = vmatpush1.bf16.msra.mxu0 %v6736
        %7053 = vmatprep.subr.bf16.mxu0 %v6733
        %7054 = vmatpush1.bf16.msra.mxu0 %v6732
        %7055 = vmatprep.subr.bf16.mxu0 %v6729
        %7056 = vmatpush1.bf16.msra.mxu0 %v6728
        %7057 = vmatprep.subr.bf16.mxu0 %v6725
        %7058 = vmatpush1.bf16.msra.mxu0 %v6724
        %7059 = vmatprep.subr.bf16.mxu0 %v6785
        %7060 = vmatpush2.bf16.msra.mxu0 %v6784
        %7061 = vmatprep.subr.bf16.mxu0 %v6781
        %7062 = vmatpush2.bf16.msra.mxu0 %v6780
        %7063 = vmatprep.subr.bf16.mxu0 %v6777
        %7064 = vmatpush2.bf16.msra.mxu0 %v6776
        %7065 = vmatprep.subr.bf16.mxu0 %v6773
        %7066 = vmatpush2.bf16.msra.mxu0 %v6772
        %7067 = vmatprep.subr.bf16.mxu0 %v6769
        %7068 = vmatpush2.bf16.msra.mxu0 %v6768
        %7069 = vmatprep.subr.bf16.mxu0 %v6765
        %7070 = vmatpush2.bf16.msra.mxu0 %v6764
        %7071 = vmatprep.subr.bf16.mxu0 %v6761
        %7072 = vmatpush2.bf16.msra.mxu0 %v6760
        %7073 = vmatprep.subr.bf16.mxu0 %v6757
        %7074 = vmatpush2.bf16.msra.mxu0 %v6756
        %7075 = vmatprep.mubr.bf16.mxu0 %v6269
        %7076 = vmatmul.mubr.bf16.gmra.mxu0 %v6268
        %v7077 = vpop.f32.mrf.mxu0
        %v7078 = vadd.f32 %v7035, %v7077
        %v7079 = vpop.f32.mrf.mxu0
        %v7080 = vadd.f32 %v7037, %v7079
        %v7081 = vpop.f32.mrf.mxu0
        %v7082 = vadd.f32 %v7039, %v7081
        %v7083 = vpop.f32.mrf.mxu0
        %v7084 = vadd.f32 %v7041, %v7083
        %7085 = vdwg.mxu0
        %v7086 = vadd.f32 %v6081, %v6992
        %v7087 = vadd.f32 %v6085, %v6994
        %v7088 = vadd.f32 %v6089, %v7078
        %v7089 = vadd.f32 %v6093, %v7080
        %v7090 = vadd.f32 %v6081, %v6996
        %v7091 = vadd.f32 %v6085, %v6998
        %v7092 = vadd.f32 %v6089, %v7082
        %v7093 = vadd.f32 %v6093, %v7084
        %v7094 = vld [vmem:[#allocation2 + $0x10] sm:$0x33]
        %v7095 = vld [vmem:[#allocation2 + $0x18] sm:$0x33]
        %v7096 = vld [vmem:[#allocation2 + $0x40] sm:$0x33]
        %v7097 = vld [vmem:[#allocation2 + $0x48] sm:$0x33]
        %v7099 = vshrl.u32 %v6098, 16
        %v7101 = vrot.slane %v7099, 5
        %v7102 = vshll.u32 %v6098, 16
        %v7104 = vrot.slane %v7102, 6
        %v7105 = vor.u32 %v7101, %v7104
        %v7106 = vrot.slane %v7105, 4
        %v7108 = vshrl.u32 %v7094, 16
        %v7110 = vrot.slane %v7108, 5
        %v7111 = vshll.u32 %v7094, 16
        %v7113 = vrot.slane %v7111, 6
        %v7114 = vor.u32 %v7110, %v7113
        %v7115 = vsel %vm3794, %v7106, %v7114
        %v7117 = vshrl.u32 %v6099, 16
        %v7119 = vrot.slane %v7117, 5
        %v7120 = vshll.u32 %v6099, 16
        %v7122 = vrot.slane %v7120, 6
        %v7123 = vor.u32 %v7119, %v7122
        %v7124 = vrot.slane %v7123, 4
        %v7126 = vshrl.u32 %v7095, 16
        %v7128 = vrot.slane %v7126, 5
        %v7129 = vshll.u32 %v7095, 16
        %v7131 = vrot.slane %v7129, 6
        %v7132 = vor.u32 %v7128, %v7131
        %v7133 = vsel %vm3794, %v7124, %v7132
        %v7135 = vshrl.u32 %v6102, 16
        %v7137 = vrot.slane %v7135, 5
        %v7138 = vshll.u32 %v6102, 16
        %v7140 = vrot.slane %v7138, 6
        %v7141 = vor.u32 %v7137, %v7140
        %v7142 = vrot.slane %v7141, 4
        %v7144 = vshrl.u32 %v7096, 16
        %v7146 = vrot.slane %v7144, 5
        %v7147 = vshll.u32 %v7096, 16
        %v7149 = vrot.slane %v7147, 6
        %v7150 = vor.u32 %v7146, %v7149
        %v7151 = vsel %vm3794, %v7142, %v7150
        %v7153 = vshrl.u32 %v6103, 16
        %v7155 = vrot.slane %v7153, 5
        %v7156 = vshll.u32 %v6103, 16
        %v7158 = vrot.slane %v7156, 6
        %v7159 = vor.u32 %v7155, %v7158
        %v7160 = vrot.slane %v7159, 4
        %v7162 = vshrl.u32 %v7097, 16
        %v7164 = vrot.slane %v7162, 5
        %v7165 = vshll.u32 %v7097, 16
        %v7167 = vrot.slane %v7165, 6
        %v7168 = vor.u32 %v7164, %v7167
        %v7169 = vsel %vm3794, %v7160, %v7168
        %s7170 = scalar_lea.vmem [#allocation9], 1024
        %v7171 = vld [vmem:[%s7170] sm:$0xff]
        %v7172 = vld [vmem:[%s7170 + $0x8] sm:$0xff]
        %v7173 = vld [vmem:[%s7170 + $0x10] sm:$0xff]
        %v7174 = vld [vmem:[%s7170 + $0x18] sm:$0xff]
        %v7175 = vld [vmem:[%s7170 + $0x20] sm:$0xff]
        %v7176 = vld [vmem:[%s7170 + $0x28] sm:$0xff]
        %v7177 = vld [vmem:[%s7170 + $0x30] sm:$0xff]
        %v7178 = vld [vmem:[%s7170 + $0x38] sm:$0xff]
        %v7179 = vld [vmem:[%s7170 + $0x40] sm:$0xff]
        %v7180 = vld [vmem:[%s7170 + $0x48] sm:$0xff]
        %v7181 = vld [vmem:[%s7170 + $0x50] sm:$0xff]
        %v7182 = vld [vmem:[%s7170 + $0x58] sm:$0xff]
        %v7183 = vld [vmem:[%s7170 + $0x60] sm:$0xff]
        %v7184 = vld [vmem:[%s7170 + $0x68] sm:$0xff]
        %v7185 = vld [vmem:[%s7170 + $0x70] sm:$0xff]
        %v7186 = vld [vmem:[%s7170 + $0x78] sm:$0xff]
        %v7187 = vld [vmem:[%s7170 + $0x80] sm:$0xff]
        %v7188 = vld [vmem:[%s7170 + $0x88] sm:$0xff]
        %v7189 = vld [vmem:[%s7170 + $0x90] sm:$0xff]
        %v7190 = vld [vmem:[%s7170 + $0x98] sm:$0xff]
        %v7191 = vld [vmem:[%s7170 + $0xa0] sm:$0xff]
        %v7192 = vld [vmem:[%s7170 + $0xa8] sm:$0xff]
        %v7193 = vld [vmem:[%s7170 + $0xb0] sm:$0xff]
        %v7194 = vld [vmem:[%s7170 + $0xb8] sm:$0xff]
        %v7195 = vld [vmem:[%s7170 + $0xc0] sm:$0xff]
        %v7196 = vld [vmem:[%s7170 + $0xc8] sm:$0xff]
        %v7197 = vld [vmem:[%s7170 + $0xd0] sm:$0xff]
        %v7198 = vld [vmem:[%s7170 + $0xd8] sm:$0xff]
        %v7199 = vld [vmem:[%s7170 + $0xe0] sm:$0xff]
        %v7200 = vld [vmem:[%s7170 + $0xe8] sm:$0xff]
        %v7201 = vld [vmem:[%s7170 + $0xf0] sm:$0xff]
        %v7202 = vld [vmem:[%s7170 + $0xf8] sm:$0xff]
        %v7203 = vld [vmem:[%s7170 + $0x100] sm:$0xff]
        %v7204 = vld [vmem:[%s7170 + $0x108] sm:$0xff]
        %v7205 = vld [vmem:[%s7170 + $0x110] sm:$0xff]
        %v7206 = vld [vmem:[%s7170 + $0x118] sm:$0xff]
        %v7207 = vld [vmem:[%s7170 + $0x120] sm:$0xff]
        %v7208 = vld [vmem:[%s7170 + $0x128] sm:$0xff]
        %v7209 = vld [vmem:[%s7170 + $0x130] sm:$0xff]
        %v7210 = vld [vmem:[%s7170 + $0x138] sm:$0xff]
        %v7211 = vld [vmem:[%s7170 + $0x140] sm:$0xff]
        %v7212 = vld [vmem:[%s7170 + $0x148] sm:$0xff]
        %v7213 = vld [vmem:[%s7170 + $0x150] sm:$0xff]
        %v7214 = vld [vmem:[%s7170 + $0x158] sm:$0xff]
        %v7215 = vld [vmem:[%s7170 + $0x160] sm:$0xff]
        %v7216 = vld [vmem:[%s7170 + $0x168] sm:$0xff]
        %v7217 = vld [vmem:[%s7170 + $0x170] sm:$0xff]
        %v7218 = vld [vmem:[%s7170 + $0x178] sm:$0xff]
        %v7219 = vld [vmem:[%s7170 + $0x180] sm:$0xff]
        %v7220 = vld [vmem:[%s7170 + $0x188] sm:$0xff]
        %v7221 = vld [vmem:[%s7170 + $0x190] sm:$0xff]
        %v7222 = vld [vmem:[%s7170 + $0x198] sm:$0xff]
        %v7223 = vld [vmem:[%s7170 + $0x1a0] sm:$0xff]
        %v7224 = vld [vmem:[%s7170 + $0x1a8] sm:$0xff]
        %v7225 = vld [vmem:[%s7170 + $0x1b0] sm:$0xff]
        %v7226 = vld [vmem:[%s7170 + $0x1b8] sm:$0xff]
        %v7227 = vld [vmem:[%s7170 + $0x1c0] sm:$0xff]
        %v7228 = vld [vmem:[%s7170 + $0x1c8] sm:$0xff]
        %v7229 = vld [vmem:[%s7170 + $0x1d0] sm:$0xff]
        %v7230 = vld [vmem:[%s7170 + $0x1d8] sm:$0xff]
        %v7231 = vld [vmem:[%s7170 + $0x1e0] sm:$0xff]
        %v7232 = vld [vmem:[%s7170 + $0x1e8] sm:$0xff]
        %v7233 = vld [vmem:[%s7170 + $0x1f0] sm:$0xff]
        %v7234 = vld [vmem:[%s7170 + $0x1f8] sm:$0xff]
        %v7235 = vld [vmem:[%s7170 + $0x200] sm:$0xff]
        %v7236 = vld [vmem:[%s7170 + $0x208] sm:$0xff]
        %v7237 = vld [vmem:[%s7170 + $0x210] sm:$0xff]
        %v7238 = vld [vmem:[%s7170 + $0x218] sm:$0xff]
        %v7239 = vld [vmem:[%s7170 + $0x220] sm:$0xff]
        %v7240 = vld [vmem:[%s7170 + $0x228] sm:$0xff]
        %v7241 = vld [vmem:[%s7170 + $0x230] sm:$0xff]
        %v7242 = vld [vmem:[%s7170 + $0x238] sm:$0xff]
        %v7243 = vld [vmem:[%s7170 + $0x240] sm:$0xff]
        %v7244 = vld [vmem:[%s7170 + $0x248] sm:$0xff]
        %v7245 = vld [vmem:[%s7170 + $0x250] sm:$0xff]
        %v7246 = vld [vmem:[%s7170 + $0x258] sm:$0xff]
        %v7247 = vld [vmem:[%s7170 + $0x260] sm:$0xff]
        %v7248 = vld [vmem:[%s7170 + $0x268] sm:$0xff]
        %v7249 = vld [vmem:[%s7170 + $0x270] sm:$0xff]
        %v7250 = vld [vmem:[%s7170 + $0x278] sm:$0xff]
        %v7251 = vld [vmem:[%s7170 + $0x280] sm:$0xff]
        %v7252 = vld [vmem:[%s7170 + $0x288] sm:$0xff]
        %v7253 = vld [vmem:[%s7170 + $0x290] sm:$0xff]
        %v7254 = vld [vmem:[%s7170 + $0x298] sm:$0xff]
        %v7255 = vld [vmem:[%s7170 + $0x2a0] sm:$0xff]
        %v7256 = vld [vmem:[%s7170 + $0x2a8] sm:$0xff]
        %v7257 = vld [vmem:[%s7170 + $0x2b0] sm:$0xff]
        %v7258 = vld [vmem:[%s7170 + $0x2b8] sm:$0xff]
        %v7259 = vld [vmem:[%s7170 + $0x2c0] sm:$0xff]
        %v7260 = vld [vmem:[%s7170 + $0x2c8] sm:$0xff]
        %v7261 = vld [vmem:[%s7170 + $0x2d0] sm:$0xff]
        %v7262 = vld [vmem:[%s7170 + $0x2d8] sm:$0xff]
        %v7263 = vld [vmem:[%s7170 + $0x2e0] sm:$0xff]
        %v7264 = vld [vmem:[%s7170 + $0x2e8] sm:$0xff]
        %v7265 = vld [vmem:[%s7170 + $0x2f0] sm:$0xff]
        %v7266 = vld [vmem:[%s7170 + $0x2f8] sm:$0xff]
        %v7267 = vld [vmem:[%s7170 + $0x300] sm:$0xff]
        %v7268 = vld [vmem:[%s7170 + $0x308] sm:$0xff]
        %v7269 = vld [vmem:[%s7170 + $0x310] sm:$0xff]
        %v7270 = vld [vmem:[%s7170 + $0x318] sm:$0xff]
        %v7271 = vld [vmem:[%s7170 + $0x320] sm:$0xff]
        %v7272 = vld [vmem:[%s7170 + $0x328] sm:$0xff]
        %v7273 = vld [vmem:[%s7170 + $0x330] sm:$0xff]
        %v7274 = vld [vmem:[%s7170 + $0x338] sm:$0xff]
        %v7275 = vld [vmem:[%s7170 + $0x340] sm:$0xff]
        %v7276 = vld [vmem:[%s7170 + $0x348] sm:$0xff]
        %v7277 = vld [vmem:[%s7170 + $0x350] sm:$0xff]
        %v7278 = vld [vmem:[%s7170 + $0x358] sm:$0xff]
        %v7279 = vld [vmem:[%s7170 + $0x360] sm:$0xff]
        %v7280 = vld [vmem:[%s7170 + $0x368] sm:$0xff]
        %v7281 = vld [vmem:[%s7170 + $0x370] sm:$0xff]
        %v7282 = vld [vmem:[%s7170 + $0x378] sm:$0xff]
        %v7283 = vld [vmem:[%s7170 + $0x380] sm:$0xff]
        %v7284 = vld [vmem:[%s7170 + $0x388] sm:$0xff]
        %v7285 = vld [vmem:[%s7170 + $0x390] sm:$0xff]
        %v7286 = vld [vmem:[%s7170 + $0x398] sm:$0xff]
        %v7287 = vld [vmem:[%s7170 + $0x3a0] sm:$0xff]
        %v7288 = vld [vmem:[%s7170 + $0x3a8] sm:$0xff]
        %v7289 = vld [vmem:[%s7170 + $0x3b0] sm:$0xff]
        %v7290 = vld [vmem:[%s7170 + $0x3b8] sm:$0xff]
        %v7291 = vld [vmem:[%s7170 + $0x3c0] sm:$0xff]
        %v7292 = vld [vmem:[%s7170 + $0x3c8] sm:$0xff]
        %v7293 = vld [vmem:[%s7170 + $0x3d0] sm:$0xff]
        %v7294 = vld [vmem:[%s7170 + $0x3d8] sm:$0xff]
        %v7295 = vld [vmem:[%s7170 + $0x3e0] sm:$0xff]
        %v7296 = vld [vmem:[%s7170 + $0x3e8] sm:$0xff]
        %v7297 = vld [vmem:[%s7170 + $0x3f0] sm:$0xff]
        %v7298 = vld [vmem:[%s7170 + $0x3f8] sm:$0xff]
        %v7299 = vunpack.c.l.b16 %v7115
        %v7300 = vunpack.c.h.b16 %v7115
        %v7301 = vunpack.c.l.b16 %v7133
        %v7302 = vunpack.c.h.b16 %v7133
        %v7303 = vunpack.c.l.b16 %v7151
        %v7304 = vunpack.c.h.b16 %v7151
        %v7305 = vunpack.c.l.b16 %v7169
        %v7306 = vunpack.c.h.b16 %v7169
        %v7307 = vpack.c.b16 %v7303, %v7299
        %v7308 = vpack.c.b16 %v7304, %v7300
        %v7309 = vpack.c.b16 %v7305, %v7301
        %v7310 = vpack.c.b16 %v7306, %v7302
        %v7443 = vunpack.c.l.b16 %v7171
        %v7444 = vunpack.c.h.b16 %v7171
        %v7445 = vunpack.c.l.b16 %v7172
        %v7446 = vunpack.c.h.b16 %v7172
        %v7447 = vunpack.c.l.b16 %v7173
        %v7448 = vunpack.c.h.b16 %v7173
        %v7449 = vunpack.c.l.b16 %v7174
        %v7450 = vunpack.c.h.b16 %v7174
        %v7451 = vunpack.c.l.b16 %v7175
        %v7452 = vunpack.c.h.b16 %v7175
        %v7453 = vunpack.c.l.b16 %v7176
        %v7454 = vunpack.c.h.b16 %v7176
        %v7455 = vunpack.c.l.b16 %v7177
        %v7456 = vunpack.c.h.b16 %v7177
        %v7457 = vunpack.c.l.b16 %v7178
        %v7458 = vunpack.c.h.b16 %v7178
        %v7459 = vunpack.c.l.b16 %v7179
        %v7460 = vunpack.c.h.b16 %v7179
        %v7461 = vunpack.c.l.b16 %v7180
        %v7462 = vunpack.c.h.b16 %v7180
        %v7463 = vunpack.c.l.b16 %v7181
        %v7464 = vunpack.c.h.b16 %v7181
        %v7465 = vunpack.c.l.b16 %v7182
        %v7466 = vunpack.c.h.b16 %v7182
        %v7467 = vunpack.c.l.b16 %v7183
        %v7468 = vunpack.c.h.b16 %v7183
        %v7469 = vunpack.c.l.b16 %v7184
        %v7470 = vunpack.c.h.b16 %v7184
        %v7471 = vunpack.c.l.b16 %v7185
        %v7472 = vunpack.c.h.b16 %v7185
        %v7473 = vunpack.c.l.b16 %v7186
        %v7474 = vunpack.c.h.b16 %v7186
        %v7475 = vunpack.c.l.b16 %v7187
        %v7476 = vunpack.c.h.b16 %v7187
        %v7477 = vunpack.c.l.b16 %v7188
        %v7478 = vunpack.c.h.b16 %v7188
        %v7479 = vunpack.c.l.b16 %v7189
        %v7480 = vunpack.c.h.b16 %v7189
        %v7481 = vunpack.c.l.b16 %v7190
        %v7482 = vunpack.c.h.b16 %v7190
        %v7483 = vunpack.c.l.b16 %v7191
        %v7484 = vunpack.c.h.b16 %v7191
        %v7485 = vunpack.c.l.b16 %v7192
        %v7486 = vunpack.c.h.b16 %v7192
        %v7487 = vunpack.c.l.b16 %v7193
        %v7488 = vunpack.c.h.b16 %v7193
        %v7489 = vunpack.c.l.b16 %v7194
        %v7490 = vunpack.c.h.b16 %v7194
        %v7491 = vunpack.c.l.b16 %v7195
        %v7492 = vunpack.c.h.b16 %v7195
        %v7493 = vunpack.c.l.b16 %v7196
        %v7494 = vunpack.c.h.b16 %v7196
        %v7495 = vunpack.c.l.b16 %v7197
        %v7496 = vunpack.c.h.b16 %v7197
        %v7497 = vunpack.c.l.b16 %v7198
        %v7498 = vunpack.c.h.b16 %v7198
        %v7499 = vunpack.c.l.b16 %v7199
        %v7500 = vunpack.c.h.b16 %v7199
        %v7501 = vunpack.c.l.b16 %v7200
        %v7502 = vunpack.c.h.b16 %v7200
        %v7503 = vunpack.c.l.b16 %v7201
        %v7504 = vunpack.c.h.b16 %v7201
        %v7505 = vunpack.c.l.b16 %v7202
        %v7506 = vunpack.c.h.b16 %v7202
        %v7507 = vunpack.c.l.b16 %v7203
        %v7508 = vunpack.c.h.b16 %v7203
        %v7509 = vunpack.c.l.b16 %v7204
        %v7510 = vunpack.c.h.b16 %v7204
        %v7511 = vunpack.c.l.b16 %v7205
        %v7512 = vunpack.c.h.b16 %v7205
        %v7513 = vunpack.c.l.b16 %v7206
        %v7514 = vunpack.c.h.b16 %v7206
        %v7515 = vunpack.c.l.b16 %v7207
        %v7516 = vunpack.c.h.b16 %v7207
        %v7517 = vunpack.c.l.b16 %v7208
        %v7518 = vunpack.c.h.b16 %v7208
        %v7519 = vunpack.c.l.b16 %v7209
        %v7520 = vunpack.c.h.b16 %v7209
        %v7521 = vunpack.c.l.b16 %v7210
        %v7522 = vunpack.c.h.b16 %v7210
        %v7523 = vunpack.c.l.b16 %v7211
        %v7524 = vunpack.c.h.b16 %v7211
        %v7525 = vunpack.c.l.b16 %v7212
        %v7526 = vunpack.c.h.b16 %v7212
        %v7527 = vunpack.c.l.b16 %v7213
        %v7528 = vunpack.c.h.b16 %v7213
        %v7529 = vunpack.c.l.b16 %v7214
        %v7530 = vunpack.c.h.b16 %v7214
        %v7531 = vunpack.c.l.b16 %v7215
        %v7532 = vunpack.c.h.b16 %v7215
        %v7533 = vunpack.c.l.b16 %v7216
        %v7534 = vunpack.c.h.b16 %v7216
        %v7535 = vunpack.c.l.b16 %v7217
        %v7536 = vunpack.c.h.b16 %v7217
        %v7537 = vunpack.c.l.b16 %v7218
        %v7538 = vunpack.c.h.b16 %v7218
        %v7539 = vunpack.c.l.b16 %v7219
        %v7540 = vunpack.c.h.b16 %v7219
        %v7541 = vunpack.c.l.b16 %v7220
        %v7542 = vunpack.c.h.b16 %v7220
        %v7543 = vunpack.c.l.b16 %v7221
        %v7544 = vunpack.c.h.b16 %v7221
        %v7545 = vunpack.c.l.b16 %v7222
        %v7546 = vunpack.c.h.b16 %v7222
        %v7547 = vunpack.c.l.b16 %v7223
        %v7548 = vunpack.c.h.b16 %v7223
        %v7549 = vunpack.c.l.b16 %v7224
        %v7550 = vunpack.c.h.b16 %v7224
        %v7551 = vunpack.c.l.b16 %v7225
        %v7552 = vunpack.c.h.b16 %v7225
        %v7553 = vunpack.c.l.b16 %v7226
        %v7554 = vunpack.c.h.b16 %v7226
        %v7555 = vunpack.c.l.b16 %v7227
        %v7556 = vunpack.c.h.b16 %v7227
        %v7557 = vunpack.c.l.b16 %v7228
        %v7558 = vunpack.c.h.b16 %v7228
        %v7559 = vunpack.c.l.b16 %v7229
        %v7560 = vunpack.c.h.b16 %v7229
        %v7561 = vunpack.c.l.b16 %v7230
        %v7562 = vunpack.c.h.b16 %v7230
        %v7563 = vunpack.c.l.b16 %v7231
        %v7564 = vunpack.c.h.b16 %v7231
        %v7565 = vunpack.c.l.b16 %v7232
        %v7566 = vunpack.c.h.b16 %v7232
        %v7567 = vunpack.c.l.b16 %v7233
        %v7568 = vunpack.c.h.b16 %v7233
        %v7569 = vunpack.c.l.b16 %v7234
        %v7570 = vunpack.c.h.b16 %v7234
        %v7571 = vunpack.c.l.b16 %v7235
        %v7572 = vunpack.c.h.b16 %v7235
        %v7573 = vunpack.c.l.b16 %v7236
        %v7574 = vunpack.c.h.b16 %v7236
        %v7575 = vunpack.c.l.b16 %v7237
        %v7576 = vunpack.c.h.b16 %v7237
        %v7577 = vunpack.c.l.b16 %v7238
        %v7578 = vunpack.c.h.b16 %v7238
        %v7579 = vunpack.c.l.b16 %v7239
        %v7580 = vunpack.c.h.b16 %v7239
        %v7581 = vunpack.c.l.b16 %v7240
        %v7582 = vunpack.c.h.b16 %v7240
        %v7583 = vunpack.c.l.b16 %v7241
        %v7584 = vunpack.c.h.b16 %v7241
        %v7585 = vunpack.c.l.b16 %v7242
        %v7586 = vunpack.c.h.b16 %v7242
        %v7587 = vunpack.c.l.b16 %v7243
        %v7588 = vunpack.c.h.b16 %v7243
        %v7589 = vunpack.c.l.b16 %v7244
        %v7590 = vunpack.c.h.b16 %v7244
        %v7591 = vunpack.c.l.b16 %v7245
        %v7592 = vunpack.c.h.b16 %v7245
        %v7593 = vunpack.c.l.b16 %v7246
        %v7594 = vunpack.c.h.b16 %v7246
        %v7595 = vunpack.c.l.b16 %v7247
        %v7596 = vunpack.c.h.b16 %v7247
        %v7597 = vunpack.c.l.b16 %v7248
        %v7598 = vunpack.c.h.b16 %v7248
        %v7599 = vunpack.c.l.b16 %v7249
        %v7600 = vunpack.c.h.b16 %v7249
        %v7601 = vunpack.c.l.b16 %v7250
        %v7602 = vunpack.c.h.b16 %v7250
        %v7603 = vunpack.c.l.b16 %v7251
        %v7604 = vunpack.c.h.b16 %v7251
        %v7605 = vunpack.c.l.b16 %v7252
        %v7606 = vunpack.c.h.b16 %v7252
        %v7607 = vunpack.c.l.b16 %v7253
        %v7608 = vunpack.c.h.b16 %v7253
        %v7609 = vunpack.c.l.b16 %v7254
        %v7610 = vunpack.c.h.b16 %v7254
        %v7611 = vunpack.c.l.b16 %v7255
        %v7612 = vunpack.c.h.b16 %v7255
        %v7613 = vunpack.c.l.b16 %v7256
        %v7614 = vunpack.c.h.b16 %v7256
        %v7615 = vunpack.c.l.b16 %v7257
        %v7616 = vunpack.c.h.b16 %v7257
        %v7617 = vunpack.c.l.b16 %v7258
        %v7618 = vunpack.c.h.b16 %v7258
        %v7619 = vunpack.c.l.b16 %v7259
        %v7620 = vunpack.c.h.b16 %v7259
        %v7621 = vunpack.c.l.b16 %v7260
        %v7622 = vunpack.c.h.b16 %v7260
        %v7623 = vunpack.c.l.b16 %v7261
        %v7624 = vunpack.c.h.b16 %v7261
        %v7625 = vunpack.c.l.b16 %v7262
        %v7626 = vunpack.c.h.b16 %v7262
        %v7627 = vunpack.c.l.b16 %v7263
        %v7628 = vunpack.c.h.b16 %v7263
        %v7629 = vunpack.c.l.b16 %v7264
        %v7630 = vunpack.c.h.b16 %v7264
        %v7631 = vunpack.c.l.b16 %v7265
        %v7632 = vunpack.c.h.b16 %v7265
        %v7633 = vunpack.c.l.b16 %v7266
        %v7634 = vunpack.c.h.b16 %v7266
        %v7635 = vunpack.c.l.b16 %v7267
        %v7636 = vunpack.c.h.b16 %v7267
        %v7637 = vunpack.c.l.b16 %v7268
        %v7638 = vunpack.c.h.b16 %v7268
        %v7639 = vunpack.c.l.b16 %v7269
        %v7640 = vunpack.c.h.b16 %v7269
        %v7641 = vunpack.c.l.b16 %v7270
        %v7642 = vunpack.c.h.b16 %v7270
        %v7643 = vunpack.c.l.b16 %v7271
        %v7644 = vunpack.c.h.b16 %v7271
        %v7645 = vunpack.c.l.b16 %v7272
        %v7646 = vunpack.c.h.b16 %v7272
        %v7647 = vunpack.c.l.b16 %v7273
        %v7648 = vunpack.c.h.b16 %v7273
        %v7649 = vunpack.c.l.b16 %v7274
        %v7650 = vunpack.c.h.b16 %v7274
        %v7651 = vunpack.c.l.b16 %v7275
        %v7652 = vunpack.c.h.b16 %v7275
        %v7653 = vunpack.c.l.b16 %v7276
        %v7654 = vunpack.c.h.b16 %v7276
        %v7655 = vunpack.c.l.b16 %v7277
        %v7656 = vunpack.c.h.b16 %v7277
        %v7657 = vunpack.c.l.b16 %v7278
        %v7658 = vunpack.c.h.b16 %v7278
        %v7659 = vunpack.c.l.b16 %v7279
        %v7660 = vunpack.c.h.b16 %v7279
        %v7661 = vunpack.c.l.b16 %v7280
        %v7662 = vunpack.c.h.b16 %v7280
        %v7663 = vunpack.c.l.b16 %v7281
        %v7664 = vunpack.c.h.b16 %v7281
        %v7665 = vunpack.c.l.b16 %v7282
        %v7666 = vunpack.c.h.b16 %v7282
        %v7667 = vunpack.c.l.b16 %v7283
        %v7668 = vunpack.c.h.b16 %v7283
        %v7669 = vunpack.c.l.b16 %v7284
        %v7670 = vunpack.c.h.b16 %v7284
        %v7671 = vunpack.c.l.b16 %v7285
        %v7672 = vunpack.c.h.b16 %v7285
        %v7673 = vunpack.c.l.b16 %v7286
        %v7674 = vunpack.c.h.b16 %v7286
        %v7675 = vunpack.c.l.b16 %v7287
        %v7676 = vunpack.c.h.b16 %v7287
        %v7677 = vunpack.c.l.b16 %v7288
        %v7678 = vunpack.c.h.b16 %v7288
        %v7679 = vunpack.c.l.b16 %v7289
        %v7680 = vunpack.c.h.b16 %v7289
        %v7681 = vunpack.c.l.b16 %v7290
        %v7682 = vunpack.c.h.b16 %v7290
        %v7683 = vunpack.c.l.b16 %v7291
        %v7684 = vunpack.c.h.b16 %v7291
        %v7685 = vunpack.c.l.b16 %v7292
        %v7686 = vunpack.c.h.b16 %v7292
        %v7687 = vunpack.c.l.b16 %v7293
        %v7688 = vunpack.c.h.b16 %v7293
        %v7689 = vunpack.c.l.b16 %v7294
        %v7690 = vunpack.c.h.b16 %v7294
        %v7691 = vunpack.c.l.b16 %v7295
        %v7692 = vunpack.c.h.b16 %v7295
        %v7693 = vunpack.c.l.b16 %v7296
        %v7694 = vunpack.c.h.b16 %v7296
        %v7695 = vunpack.c.l.b16 %v7297
        %v7696 = vunpack.c.h.b16 %v7297
        %v7697 = vunpack.c.l.b16 %v7298
        %v7698 = vunpack.c.h.b16 %v7298
        %v7699 = vpack.c.b16 %v7447, %v7443
        %v7700 = vpack.c.b16 %v7448, %v7444
        %v7701 = vpack.c.b16 %v7449, %v7445
        %v7702 = vpack.c.b16 %v7450, %v7446
        %v7703 = vpack.c.b16 %v7455, %v7451
        %v7704 = vpack.c.b16 %v7456, %v7452
        %v7705 = vpack.c.b16 %v7457, %v7453
        %v7706 = vpack.c.b16 %v7458, %v7454
        %v7707 = vpack.c.b16 %v7463, %v7459
        %v7708 = vpack.c.b16 %v7464, %v7460
        %v7709 = vpack.c.b16 %v7465, %v7461
        %v7710 = vpack.c.b16 %v7466, %v7462
        %v7711 = vpack.c.b16 %v7471, %v7467
        %v7712 = vpack.c.b16 %v7472, %v7468
        %v7713 = vpack.c.b16 %v7473, %v7469
        %v7714 = vpack.c.b16 %v7474, %v7470
        %v7715 = vpack.c.b16 %v7479, %v7475
        %v7716 = vpack.c.b16 %v7480, %v7476
        %v7717 = vpack.c.b16 %v7481, %v7477
        %v7718 = vpack.c.b16 %v7482, %v7478
        %v7719 = vpack.c.b16 %v7487, %v7483
        %v7720 = vpack.c.b16 %v7488, %v7484
        %v7721 = vpack.c.b16 %v7489, %v7485
        %v7722 = vpack.c.b16 %v7490, %v7486
        %v7723 = vpack.c.b16 %v7495, %v7491
        %v7724 = vpack.c.b16 %v7496, %v7492
        %v7725 = vpack.c.b16 %v7497, %v7493
        %v7726 = vpack.c.b16 %v7498, %v7494
        %v7727 = vpack.c.b16 %v7503, %v7499
        %v7728 = vpack.c.b16 %v7504, %v7500
        %v7729 = vpack.c.b16 %v7505, %v7501
        %v7730 = vpack.c.b16 %v7506, %v7502
        %v7731 = vpack.c.b16 %v7511, %v7507
        %v7732 = vpack.c.b16 %v7512, %v7508
        %v7733 = vpack.c.b16 %v7513, %v7509
        %v7734 = vpack.c.b16 %v7514, %v7510
        %v7735 = vpack.c.b16 %v7519, %v7515
        %v7736 = vpack.c.b16 %v7520, %v7516
        %v7737 = vpack.c.b16 %v7521, %v7517
        %v7738 = vpack.c.b16 %v7522, %v7518
        %v7739 = vpack.c.b16 %v7527, %v7523
        %v7740 = vpack.c.b16 %v7528, %v7524
        %v7741 = vpack.c.b16 %v7529, %v7525
        %v7742 = vpack.c.b16 %v7530, %v7526
        %v7743 = vpack.c.b16 %v7535, %v7531
        %v7744 = vpack.c.b16 %v7536, %v7532
        %v7745 = vpack.c.b16 %v7537, %v7533
        %v7746 = vpack.c.b16 %v7538, %v7534
        %v7747 = vpack.c.b16 %v7543, %v7539
        %v7748 = vpack.c.b16 %v7544, %v7540
        %v7749 = vpack.c.b16 %v7545, %v7541
        %v7750 = vpack.c.b16 %v7546, %v7542
        %v7751 = vpack.c.b16 %v7551, %v7547
        %v7752 = vpack.c.b16 %v7552, %v7548
        %v7753 = vpack.c.b16 %v7553, %v7549
        %v7754 = vpack.c.b16 %v7554, %v7550
        %v7755 = vpack.c.b16 %v7559, %v7555
        %v7756 = vpack.c.b16 %v7560, %v7556
        %v7757 = vpack.c.b16 %v7561, %v7557
        %v7758 = vpack.c.b16 %v7562, %v7558
        %v7759 = vpack.c.b16 %v7567, %v7563
        %v7760 = vpack.c.b16 %v7568, %v7564
        %v7761 = vpack.c.b16 %v7569, %v7565
        %v7762 = vpack.c.b16 %v7570, %v7566
        %v7763 = vpack.c.b16 %v7575, %v7571
        %v7764 = vpack.c.b16 %v7576, %v7572
        %v7765 = vpack.c.b16 %v7577, %v7573
        %v7766 = vpack.c.b16 %v7578, %v7574
        %v7767 = vpack.c.b16 %v7583, %v7579
        %v7768 = vpack.c.b16 %v7584, %v7580
        %v7769 = vpack.c.b16 %v7585, %v7581
        %v7770 = vpack.c.b16 %v7586, %v7582
        %v7771 = vpack.c.b16 %v7591, %v7587
        %v7772 = vpack.c.b16 %v7592, %v7588
        %v7773 = vpack.c.b16 %v7593, %v7589
        %v7774 = vpack.c.b16 %v7594, %v7590
        %v7775 = vpack.c.b16 %v7599, %v7595
        %v7776 = vpack.c.b16 %v7600, %v7596
        %v7777 = vpack.c.b16 %v7601, %v7597
        %v7778 = vpack.c.b16 %v7602, %v7598
        %v7779 = vpack.c.b16 %v7607, %v7603
        %v7780 = vpack.c.b16 %v7608, %v7604
        %v7781 = vpack.c.b16 %v7609, %v7605
        %v7782 = vpack.c.b16 %v7610, %v7606
        %v7783 = vpack.c.b16 %v7615, %v7611
        %v7784 = vpack.c.b16 %v7616, %v7612
        %v7785 = vpack.c.b16 %v7617, %v7613
        %v7786 = vpack.c.b16 %v7618, %v7614
        %v7787 = vpack.c.b16 %v7623, %v7619
        %v7788 = vpack.c.b16 %v7624, %v7620
        %v7789 = vpack.c.b16 %v7625, %v7621
        %v7790 = vpack.c.b16 %v7626, %v7622
        %v7791 = vpack.c.b16 %v7631, %v7627
        %v7792 = vpack.c.b16 %v7632, %v7628
        %v7793 = vpack.c.b16 %v7633, %v7629
        %v7794 = vpack.c.b16 %v7634, %v7630
        %v7795 = vpack.c.b16 %v7639, %v7635
        %v7796 = vpack.c.b16 %v7640, %v7636
        %v7797 = vpack.c.b16 %v7641, %v7637
        %v7798 = vpack.c.b16 %v7642, %v7638
        %v7799 = vpack.c.b16 %v7647, %v7643
        %v7800 = vpack.c.b16 %v7648, %v7644
        %v7801 = vpack.c.b16 %v7649, %v7645
        %v7802 = vpack.c.b16 %v7650, %v7646
        %v7803 = vpack.c.b16 %v7655, %v7651
        %v7804 = vpack.c.b16 %v7656, %v7652
        %v7805 = vpack.c.b16 %v7657, %v7653
        %v7806 = vpack.c.b16 %v7658, %v7654
        %v7807 = vpack.c.b16 %v7663, %v7659
        %v7808 = vpack.c.b16 %v7664, %v7660
        %v7809 = vpack.c.b16 %v7665, %v7661
        %v7810 = vpack.c.b16 %v7666, %v7662
        %v7811 = vpack.c.b16 %v7671, %v7667
        %v7812 = vpack.c.b16 %v7672, %v7668
        %v7813 = vpack.c.b16 %v7673, %v7669
        %v7814 = vpack.c.b16 %v7674, %v7670
        %v7815 = vpack.c.b16 %v7679, %v7675
        %v7816 = vpack.c.b16 %v7680, %v7676
        %v7817 = vpack.c.b16 %v7681, %v7677
        %v7818 = vpack.c.b16 %v7682, %v7678
        %v7819 = vpack.c.b16 %v7687, %v7683
        %v7820 = vpack.c.b16 %v7688, %v7684
        %v7821 = vpack.c.b16 %v7689, %v7685
        %v7822 = vpack.c.b16 %v7690, %v7686
        %v7823 = vpack.c.b16 %v7695, %v7691
        %v7824 = vpack.c.b16 %v7696, %v7692
        %v7825 = vpack.c.b16 %v7697, %v7693
        %v7826 = vpack.c.b16 %v7698, %v7694
        %7955 = vmatprep.subr.bf16.mxu0 %v7728
        %7956 = vmatpush1.bf16.msra.mxu0 %v7727
        %7957 = vmatprep.subr.bf16.mxu0 %v7724
        %7958 = vmatpush1.bf16.msra.mxu0 %v7723
        %7959 = vmatprep.subr.bf16.mxu0 %v7720
        %7960 = vmatpush1.bf16.msra.mxu0 %v7719
        %7961 = vmatprep.subr.bf16.mxu0 %v7716
        %7962 = vmatpush1.bf16.msra.mxu0 %v7715
        %7963 = vmatprep.subr.bf16.mxu0 %v7712
        %7964 = vmatpush1.bf16.msra.mxu0 %v7711
        %7965 = vmatprep.subr.bf16.mxu0 %v7708
        %7966 = vmatpush1.bf16.msra.mxu0 %v7707
        %7967 = vmatprep.subr.bf16.mxu0 %v7704
        %7968 = vmatpush1.bf16.msra.mxu0 %v7703
        %7969 = vmatprep.subr.bf16.mxu0 %v7700
        %7970 = vmatpush1.bf16.msra.mxu0 %v7699
        %7971 = vmatprep.subr.bf16.mxu0 %v7760
        %7972 = vmatpush2.bf16.msra.mxu0 %v7759
        %7973 = vmatprep.subr.bf16.mxu0 %v7756
        %7974 = vmatpush2.bf16.msra.mxu0 %v7755
        %7975 = vmatprep.subr.bf16.mxu0 %v7752
        %7976 = vmatpush2.bf16.msra.mxu0 %v7751
        %7977 = vmatprep.subr.bf16.mxu0 %v7748
        %7978 = vmatpush2.bf16.msra.mxu0 %v7747
        %7979 = vmatprep.subr.bf16.mxu0 %v7744
        %7980 = vmatpush2.bf16.msra.mxu0 %v7743
        %7981 = vmatprep.subr.bf16.mxu0 %v7740
        %7982 = vmatpush2.bf16.msra.mxu0 %v7739
        %7983 = vmatprep.subr.bf16.mxu0 %v7736
        %7984 = vmatpush2.bf16.msra.mxu0 %v7735
        %7985 = vmatprep.subr.bf16.mxu0 %v7732
        %7986 = vmatpush2.bf16.msra.mxu0 %v7731
        %7987 = vmatprep.mubr.bf16.mxu0 %v7308
        %7988 = vmatmul.mubr.bf16.gmra.mxu0 %v7307
        %v7989 = vpop.f32.mrf.mxu0
        %v7990 = vadd.f32 0.0, %v7989
        %v7991 = vpop.f32.mrf.mxu0
        %v7992 = vadd.f32 0.0, %v7991
        %v7993 = vpop.f32.mrf.mxu0
        %v7994 = vadd.f32 0.0, %v7993
        %v7995 = vpop.f32.mrf.mxu0
        %v7996 = vadd.f32 0.0, %v7995
        %7997 = vdwg.mxu0
        %7998 = vmatprep.subr.bf16.mxu0 %v7792
        %7999 = vmatpush1.bf16.msra.mxu0 %v7791
        %8000 = vmatprep.subr.bf16.mxu0 %v7788
        %8001 = vmatpush1.bf16.msra.mxu0 %v7787
        %8002 = vmatprep.subr.bf16.mxu0 %v7784
        %8003 = vmatpush1.bf16.msra.mxu0 %v7783
        %8004 = vmatprep.subr.bf16.mxu0 %v7780
        %8005 = vmatpush1.bf16.msra.mxu0 %v7779
        %8006 = vmatprep.subr.bf16.mxu0 %v7776
        %8007 = vmatpush1.bf16.msra.mxu0 %v7775
        %8008 = vmatprep.subr.bf16.mxu0 %v7772
        %8009 = vmatpush1.bf16.msra.mxu0 %v7771
        %8010 = vmatprep.subr.bf16.mxu0 %v7768
        %8011 = vmatpush1.bf16.msra.mxu0 %v7767
        %8012 = vmatprep.subr.bf16.mxu0 %v7764
        %8013 = vmatpush1.bf16.msra.mxu0 %v7763
        %8014 = vmatprep.subr.bf16.mxu0 %v7824
        %8015 = vmatpush2.bf16.msra.mxu0 %v7823
        %8016 = vmatprep.subr.bf16.mxu0 %v7820
        %8017 = vmatpush2.bf16.msra.mxu0 %v7819
        %8018 = vmatprep.subr.bf16.mxu0 %v7816
        %8019 = vmatpush2.bf16.msra.mxu0 %v7815
        %8020 = vmatprep.subr.bf16.mxu0 %v7812
        %8021 = vmatpush2.bf16.msra.mxu0 %v7811
        %8022 = vmatprep.subr.bf16.mxu0 %v7808
        %8023 = vmatpush2.bf16.msra.mxu0 %v7807
        %8024 = vmatprep.subr.bf16.mxu0 %v7804
        %8025 = vmatpush2.bf16.msra.mxu0 %v7803
        %8026 = vmatprep.subr.bf16.mxu0 %v7800
        %8027 = vmatpush2.bf16.msra.mxu0 %v7799
        %8028 = vmatprep.subr.bf16.mxu0 %v7796
        %8029 = vmatpush2.bf16.msra.mxu0 %v7795
        %8030 = vmatprep.mubr.bf16.mxu0 %v7310
        %8031 = vmatmul.mubr.bf16.gmra.mxu0 %v7309
        %v8032 = vpop.f32.mrf.mxu0
        %v8033 = vadd.f32 %v7990, %v8032
        %v8034 = vpop.f32.mrf.mxu0
        %v8035 = vadd.f32 %v7992, %v8034
        %v8036 = vpop.f32.mrf.mxu0
        %v8037 = vadd.f32 %v7994, %v8036
        %v8038 = vpop.f32.mrf.mxu0
        %v8039 = vadd.f32 %v7996, %v8038
        %8040 = vdwg.mxu0
        %8041 = vmatprep.subr.bf16.mxu0 %v7730
        %8042 = vmatpush1.bf16.msra.mxu0 %v7729
        %8043 = vmatprep.subr.bf16.mxu0 %v7726
        %8044 = vmatpush1.bf16.msra.mxu0 %v7725
        %8045 = vmatprep.subr.bf16.mxu0 %v7722
        %8046 = vmatpush1.bf16.msra.mxu0 %v7721
        %8047 = vmatprep.subr.bf16.mxu0 %v7718
        %8048 = vmatpush1.bf16.msra.mxu0 %v7717
        %8049 = vmatprep.subr.bf16.mxu0 %v7714
        %8050 = vmatpush1.bf16.msra.mxu0 %v7713
        %8051 = vmatprep.subr.bf16.mxu0 %v7710
        %8052 = vmatpush1.bf16.msra.mxu0 %v7709
        %8053 = vmatprep.subr.bf16.mxu0 %v7706
        %8054 = vmatpush1.bf16.msra.mxu0 %v7705
        %8055 = vmatprep.subr.bf16.mxu0 %v7702
        %8056 = vmatpush1.bf16.msra.mxu0 %v7701
        %8057 = vmatprep.subr.bf16.mxu0 %v7762
        %8058 = vmatpush2.bf16.msra.mxu0 %v7761
        %8059 = vmatprep.subr.bf16.mxu0 %v7758
        %8060 = vmatpush2.bf16.msra.mxu0 %v7757
        %8061 = vmatprep.subr.bf16.mxu0 %v7754
        %8062 = vmatpush2.bf16.msra.mxu0 %v7753
        %8063 = vmatprep.subr.bf16.mxu0 %v7750
        %8064 = vmatpush2.bf16.msra.mxu0 %v7749
        %8065 = vmatprep.subr.bf16.mxu0 %v7746
        %8066 = vmatpush2.bf16.msra.mxu0 %v7745
        %8067 = vmatprep.subr.bf16.mxu0 %v7742
        %8068 = vmatpush2.bf16.msra.mxu0 %v7741
        %8069 = vmatprep.subr.bf16.mxu0 %v7738
        %8070 = vmatpush2.bf16.msra.mxu0 %v7737
        %8071 = vmatprep.subr.bf16.mxu0 %v7734
        %8072 = vmatpush2.bf16.msra.mxu0 %v7733
        %8073 = vmatprep.mubr.bf16.mxu0 %v7308
        %8074 = vmatmul.mubr.bf16.gmra.mxu0 %v7307
        %v8075 = vpop.f32.mrf.mxu0
        %v8076 = vadd.f32 0.0, %v8075
        %v8077 = vpop.f32.mrf.mxu0
        %v8078 = vadd.f32 0.0, %v8077
        %v8079 = vpop.f32.mrf.mxu0
        %v8080 = vadd.f32 0.0, %v8079
        %v8081 = vpop.f32.mrf.mxu0
        %v8082 = vadd.f32 0.0, %v8081
        %8083 = vdwg.mxu0
        %8084 = vmatprep.subr.bf16.mxu0 %v7794
        %8085 = vmatpush1.bf16.msra.mxu0 %v7793
        %8086 = vmatprep.subr.bf16.mxu0 %v7790
        %8087 = vmatpush1.bf16.msra.mxu0 %v7789
        %8088 = vmatprep.subr.bf16.mxu0 %v7786
        %8089 = vmatpush1.bf16.msra.mxu0 %v7785
        %8090 = vmatprep.subr.bf16.mxu0 %v7782
        %8091 = vmatpush1.bf16.msra.mxu0 %v7781
        %8092 = vmatprep.subr.bf16.mxu0 %v7778
        %8093 = vmatpush1.bf16.msra.mxu0 %v7777
        %8094 = vmatprep.subr.bf16.mxu0 %v7774
        %8095 = vmatpush1.bf16.msra.mxu0 %v7773
        %8096 = vmatprep.subr.bf16.mxu0 %v7770
        %8097 = vmatpush1.bf16.msra.mxu0 %v7769
        %8098 = vmatprep.subr.bf16.mxu0 %v7766
        %8099 = vmatpush1.bf16.msra.mxu0 %v7765
        %8100 = vmatprep.subr.bf16.mxu0 %v7826
        %8101 = vmatpush2.bf16.msra.mxu0 %v7825
        %8102 = vmatprep.subr.bf16.mxu0 %v7822
        %8103 = vmatpush2.bf16.msra.mxu0 %v7821
        %8104 = vmatprep.subr.bf16.mxu0 %v7818
        %8105 = vmatpush2.bf16.msra.mxu0 %v7817
        %8106 = vmatprep.subr.bf16.mxu0 %v7814
        %8107 = vmatpush2.bf16.msra.mxu0 %v7813
        %8108 = vmatprep.subr.bf16.mxu0 %v7810
        %8109 = vmatpush2.bf16.msra.mxu0 %v7809
        %8110 = vmatprep.subr.bf16.mxu0 %v7806
        %8111 = vmatpush2.bf16.msra.mxu0 %v7805
        %8112 = vmatprep.subr.bf16.mxu0 %v7802
        %8113 = vmatpush2.bf16.msra.mxu0 %v7801
        %8114 = vmatprep.subr.bf16.mxu0 %v7798
        %8115 = vmatpush2.bf16.msra.mxu0 %v7797
        %8116 = vmatprep.mubr.bf16.mxu0 %v7310
        %8117 = vmatmul.mubr.bf16.gmra.mxu0 %v7309
        %v8118 = vpop.f32.mrf.mxu0
        %v8119 = vadd.f32 %v8076, %v8118
        %v8120 = vpop.f32.mrf.mxu0
        %v8121 = vadd.f32 %v8078, %v8120
        %v8122 = vpop.f32.mrf.mxu0
        %v8123 = vadd.f32 %v8080, %v8122
        %v8124 = vpop.f32.mrf.mxu0
        %v8125 = vadd.f32 %v8082, %v8124
        %8126 = vdwg.mxu0
        %v8127 = vadd.f32 %v7086, %v8033
        %v8128 = vadd.f32 %v7087, %v8035
        %v8129 = vadd.f32 %v7088, %v8119
        %v8130 = vadd.f32 %v7089, %v8121
        %v8131 = vadd.f32 %v7090, %v8037
        %v8132 = vadd.f32 %v7091, %v8039
        %v8133 = vadd.f32 %v7092, %v8123
        %v8134 = vadd.f32 %v7093, %v8125
        %v8135 = vld [vmem:[#allocation2] sm:$0xcc]
        %v8136 = vld [vmem:[#allocation2 + $0x8] sm:$0xcc]
        %v8137 = vld [vmem:[#allocation2 + $0x30] sm:$0xcc]
        %v8138 = vld [vmem:[#allocation2 + $0x38] sm:$0xcc]
        %v8147 = vrot.slane %v8135, 6
        %v8148 = vrot.slane %v8147, 4
        %v8149 = vrot.slane %v7094, 6
        %v8150 = vsel %vm4930, %v8148, %v8149
        %v8151 = vrot.slane %v8136, 6
        %v8152 = vrot.slane %v8151, 4
        %v8153 = vrot.slane %v7095, 6
        %v8154 = vsel %vm4930, %v8152, %v8153
        %v8155 = vrot.slane %v8137, 6
        %v8156 = vrot.slane %v8155, 4
        %v8157 = vrot.slane %v7096, 6
        %v8158 = vsel %vm4930, %v8156, %v8157
        %v8159 = vrot.slane %v8138, 6
        %v8160 = vrot.slane %v8159, 4
        %v8161 = vrot.slane %v7097, 6
        %v8162 = vsel %vm4930, %v8160, %v8161
        %s8163 = scalar_lea.vmem [#allocation9], 2048
        %v8164 = vld [vmem:[%s8163] sm:$0xff]
        %v8165 = vld [vmem:[%s8163 + $0x8] sm:$0xff]
        %v8166 = vld [vmem:[%s8163 + $0x10] sm:$0xff]
        %v8167 = vld [vmem:[%s8163 + $0x18] sm:$0xff]
        %v8168 = vld [vmem:[%s8163 + $0x20] sm:$0xff]
        %v8169 = vld [vmem:[%s8163 + $0x28] sm:$0xff]
        %v8170 = vld [vmem:[%s8163 + $0x30] sm:$0xff]
        %v8171 = vld [vmem:[%s8163 + $0x38] sm:$0xff]
        %v8172 = vld [vmem:[%s8163 + $0x40] sm:$0xff]
        %v8173 = vld [vmem:[%s8163 + $0x48] sm:$0xff]
        %v8174 = vld [vmem:[%s8163 + $0x50] sm:$0xff]
        %v8175 = vld [vmem:[%s8163 + $0x58] sm:$0xff]
        %v8176 = vld [vmem:[%s8163 + $0x60] sm:$0xff]
        %v8177 = vld [vmem:[%s8163 + $0x68] sm:$0xff]
        %v8178 = vld [vmem:[%s8163 + $0x70] sm:$0xff]
        %v8179 = vld [vmem:[%s8163 + $0x78] sm:$0xff]
        %v8180 = vld [vmem:[%s8163 + $0x80] sm:$0xff]
        %v8181 = vld [vmem:[%s8163 + $0x88] sm:$0xff]
        %v8182 = vld [vmem:[%s8163 + $0x90] sm:$0xff]
        %v8183 = vld [vmem:[%s8163 + $0x98] sm:$0xff]
        %v8184 = vld [vmem:[%s8163 + $0xa0] sm:$0xff]
        %v8185 = vld [vmem:[%s8163 + $0xa8] sm:$0xff]
        %v8186 = vld [vmem:[%s8163 + $0xb0] sm:$0xff]
        %v8187 = vld [vmem:[%s8163 + $0xb8] sm:$0xff]
        %v8188 = vld [vmem:[%s8163 + $0xc0] sm:$0xff]
        %v8189 = vld [vmem:[%s8163 + $0xc8] sm:$0xff]
        %v8190 = vld [vmem:[%s8163 + $0xd0] sm:$0xff]
        %v8191 = vld [vmem:[%s8163 + $0xd8] sm:$0xff]
        %v8192 = vld [vmem:[%s8163 + $0xe0] sm:$0xff]
        %v8193 = vld [vmem:[%s8163 + $0xe8] sm:$0xff]
        %v8194 = vld [vmem:[%s8163 + $0xf0] sm:$0xff]
        %v8195 = vld [vmem:[%s8163 + $0xf8] sm:$0xff]
        %v8196 = vld [vmem:[%s8163 + $0x100] sm:$0xff]
        %v8197 = vld [vmem:[%s8163 + $0x108] sm:$0xff]
        %v8198 = vld [vmem:[%s8163 + $0x110] sm:$0xff]
        %v8199 = vld [vmem:[%s8163 + $0x118] sm:$0xff]
        %v8200 = vld [vmem:[%s8163 + $0x120] sm:$0xff]
        %v8201 = vld [vmem:[%s8163 + $0x128] sm:$0xff]
        %v8202 = vld [vmem:[%s8163 + $0x130] sm:$0xff]
        %v8203 = vld [vmem:[%s8163 + $0x138] sm:$0xff]
        %v8204 = vld [vmem:[%s8163 + $0x140] sm:$0xff]
        %v8205 = vld [vmem:[%s8163 + $0x148] sm:$0xff]
        %v8206 = vld [vmem:[%s8163 + $0x150] sm:$0xff]
        %v8207 = vld [vmem:[%s8163 + $0x158] sm:$0xff]
        %v8208 = vld [vmem:[%s8163 + $0x160] sm:$0xff]
        %v8209 = vld [vmem:[%s8163 + $0x168] sm:$0xff]
        %v8210 = vld [vmem:[%s8163 + $0x170] sm:$0xff]
        %v8211 = vld [vmem:[%s8163 + $0x178] sm:$0xff]
        %v8212 = vld [vmem:[%s8163 + $0x180] sm:$0xff]
        %v8213 = vld [vmem:[%s8163 + $0x188] sm:$0xff]
        %v8214 = vld [vmem:[%s8163 + $0x190] sm:$0xff]
        %v8215 = vld [vmem:[%s8163 + $0x198] sm:$0xff]
        %v8216 = vld [vmem:[%s8163 + $0x1a0] sm:$0xff]
        %v8217 = vld [vmem:[%s8163 + $0x1a8] sm:$0xff]
        %v8218 = vld [vmem:[%s8163 + $0x1b0] sm:$0xff]
        %v8219 = vld [vmem:[%s8163 + $0x1b8] sm:$0xff]
        %v8220 = vld [vmem:[%s8163 + $0x1c0] sm:$0xff]
        %v8221 = vld [vmem:[%s8163 + $0x1c8] sm:$0xff]
        %v8222 = vld [vmem:[%s8163 + $0x1d0] sm:$0xff]
        %v8223 = vld [vmem:[%s8163 + $0x1d8] sm:$0xff]
        %v8224 = vld [vmem:[%s8163 + $0x1e0] sm:$0xff]
        %v8225 = vld [vmem:[%s8163 + $0x1e8] sm:$0xff]
        %v8226 = vld [vmem:[%s8163 + $0x1f0] sm:$0xff]
        %v8227 = vld [vmem:[%s8163 + $0x1f8] sm:$0xff]
        %v8228 = vld [vmem:[%s8163 + $0x200] sm:$0xff]
        %v8229 = vld [vmem:[%s8163 + $0x208] sm:$0xff]
        %v8230 = vld [vmem:[%s8163 + $0x210] sm:$0xff]
        %v8231 = vld [vmem:[%s8163 + $0x218] sm:$0xff]
        %v8232 = vld [vmem:[%s8163 + $0x220] sm:$0xff]
        %v8233 = vld [vmem:[%s8163 + $0x228] sm:$0xff]
        %v8234 = vld [vmem:[%s8163 + $0x230] sm:$0xff]
        %v8235 = vld [vmem:[%s8163 + $0x238] sm:$0xff]
        %v8236 = vld [vmem:[%s8163 + $0x240] sm:$0xff]
        %v8237 = vld [vmem:[%s8163 + $0x248] sm:$0xff]
        %v8238 = vld [vmem:[%s8163 + $0x250] sm:$0xff]
        %v8239 = vld [vmem:[%s8163 + $0x258] sm:$0xff]
        %v8240 = vld [vmem:[%s8163 + $0x260] sm:$0xff]
        %v8241 = vld [vmem:[%s8163 + $0x268] sm:$0xff]
        %v8242 = vld [vmem:[%s8163 + $0x270] sm:$0xff]
        %v8243 = vld [vmem:[%s8163 + $0x278] sm:$0xff]
        %v8244 = vld [vmem:[%s8163 + $0x280] sm:$0xff]
        %v8245 = vld [vmem:[%s8163 + $0x288] sm:$0xff]
        %v8246 = vld [vmem:[%s8163 + $0x290] sm:$0xff]
        %v8247 = vld [vmem:[%s8163 + $0x298] sm:$0xff]
        %v8248 = vld [vmem:[%s8163 + $0x2a0] sm:$0xff]
        %v8249 = vld [vmem:[%s8163 + $0x2a8] sm:$0xff]
        %v8250 = vld [vmem:[%s8163 + $0x2b0] sm:$0xff]
        %v8251 = vld [vmem:[%s8163 + $0x2b8] sm:$0xff]
        %v8252 = vld [vmem:[%s8163 + $0x2c0] sm:$0xff]
        %v8253 = vld [vmem:[%s8163 + $0x2c8] sm:$0xff]
        %v8254 = vld [vmem:[%s8163 + $0x2d0] sm:$0xff]
        %v8255 = vld [vmem:[%s8163 + $0x2d8] sm:$0xff]
        %v8256 = vld [vmem:[%s8163 + $0x2e0] sm:$0xff]
        %v8257 = vld [vmem:[%s8163 + $0x2e8] sm:$0xff]
        %v8258 = vld [vmem:[%s8163 + $0x2f0] sm:$0xff]
        %v8259 = vld [vmem:[%s8163 + $0x2f8] sm:$0xff]
        %v8260 = vld [vmem:[%s8163 + $0x300] sm:$0xff]
        %v8261 = vld [vmem:[%s8163 + $0x308] sm:$0xff]
        %v8262 = vld [vmem:[%s8163 + $0x310] sm:$0xff]
        %v8263 = vld [vmem:[%s8163 + $0x318] sm:$0xff]
        %v8264 = vld [vmem:[%s8163 + $0x320] sm:$0xff]
        %v8265 = vld [vmem:[%s8163 + $0x328] sm:$0xff]
        %v8266 = vld [vmem:[%s8163 + $0x330] sm:$0xff]
        %v8267 = vld [vmem:[%s8163 + $0x338] sm:$0xff]
        %v8268 = vld [vmem:[%s8163 + $0x340] sm:$0xff]
        %v8269 = vld [vmem:[%s8163 + $0x348] sm:$0xff]
        %v8270 = vld [vmem:[%s8163 + $0x350] sm:$0xff]
        %v8271 = vld [vmem:[%s8163 + $0x358] sm:$0xff]
        %v8272 = vld [vmem:[%s8163 + $0x360] sm:$0xff]
        %v8273 = vld [vmem:[%s8163 + $0x368] sm:$0xff]
        %v8274 = vld [vmem:[%s8163 + $0x370] sm:$0xff]
        %v8275 = vld [vmem:[%s8163 + $0x378] sm:$0xff]
        %v8276 = vld [vmem:[%s8163 + $0x380] sm:$0xff]
        %v8277 = vld [vmem:[%s8163 + $0x388] sm:$0xff]
        %v8278 = vld [vmem:[%s8163 + $0x390] sm:$0xff]
        %v8279 = vld [vmem:[%s8163 + $0x398] sm:$0xff]
        %v8280 = vld [vmem:[%s8163 + $0x3a0] sm:$0xff]
        %v8281 = vld [vmem:[%s8163 + $0x3a8] sm:$0xff]
        %v8282 = vld [vmem:[%s8163 + $0x3b0] sm:$0xff]
        %v8283 = vld [vmem:[%s8163 + $0x3b8] sm:$0xff]
        %v8284 = vld [vmem:[%s8163 + $0x3c0] sm:$0xff]
        %v8285 = vld [vmem:[%s8163 + $0x3c8] sm:$0xff]
        %v8286 = vld [vmem:[%s8163 + $0x3d0] sm:$0xff]
        %v8287 = vld [vmem:[%s8163 + $0x3d8] sm:$0xff]
        %v8288 = vld [vmem:[%s8163 + $0x3e0] sm:$0xff]
        %v8289 = vld [vmem:[%s8163 + $0x3e8] sm:$0xff]
        %v8290 = vld [vmem:[%s8163 + $0x3f0] sm:$0xff]
        %v8291 = vld [vmem:[%s8163 + $0x3f8] sm:$0xff]
        %v8292 = vunpack.c.l.b16 %v8150
        %v8293 = vunpack.c.h.b16 %v8150
        %v8294 = vunpack.c.l.b16 %v8154
        %v8295 = vunpack.c.h.b16 %v8154
        %v8296 = vunpack.c.l.b16 %v8158
        %v8297 = vunpack.c.h.b16 %v8158
        %v8298 = vunpack.c.l.b16 %v8162
        %v8299 = vunpack.c.h.b16 %v8162
        %v8300 = vpack.c.b16 %v8296, %v8292
        %v8301 = vpack.c.b16 %v8297, %v8293
        %v8302 = vpack.c.b16 %v8298, %v8294
        %v8303 = vpack.c.b16 %v8299, %v8295
        %v8436 = vunpack.c.l.b16 %v8164
        %v8437 = vunpack.c.h.b16 %v8164
        %v8438 = vunpack.c.l.b16 %v8165
        %v8439 = vunpack.c.h.b16 %v8165
        %v8440 = vunpack.c.l.b16 %v8166
        %v8441 = vunpack.c.h.b16 %v8166
        %v8442 = vunpack.c.l.b16 %v8167
        %v8443 = vunpack.c.h.b16 %v8167
        %v8444 = vunpack.c.l.b16 %v8168
        %v8445 = vunpack.c.h.b16 %v8168
        %v8446 = vunpack.c.l.b16 %v8169
        %v8447 = vunpack.c.h.b16 %v8169
        %v8448 = vunpack.c.l.b16 %v8170
        %v8449 = vunpack.c.h.b16 %v8170
        %v8450 = vunpack.c.l.b16 %v8171
        %v8451 = vunpack.c.h.b16 %v8171
        %v8452 = vunpack.c.l.b16 %v8172
        %v8453 = vunpack.c.h.b16 %v8172
        %v8454 = vunpack.c.l.b16 %v8173
        %v8455 = vunpack.c.h.b16 %v8173
        %v8456 = vunpack.c.l.b16 %v8174
        %v8457 = vunpack.c.h.b16 %v8174
        %v8458 = vunpack.c.l.b16 %v8175
        %v8459 = vunpack.c.h.b16 %v8175
        %v8460 = vunpack.c.l.b16 %v8176
        %v8461 = vunpack.c.h.b16 %v8176
        %v8462 = vunpack.c.l.b16 %v8177
        %v8463 = vunpack.c.h.b16 %v8177
        %v8464 = vunpack.c.l.b16 %v8178
        %v8465 = vunpack.c.h.b16 %v8178
        %v8466 = vunpack.c.l.b16 %v8179
        %v8467 = vunpack.c.h.b16 %v8179
        %v8468 = vunpack.c.l.b16 %v8180
        %v8469 = vunpack.c.h.b16 %v8180
        %v8470 = vunpack.c.l.b16 %v8181
        %v8471 = vunpack.c.h.b16 %v8181
        %v8472 = vunpack.c.l.b16 %v8182
        %v8473 = vunpack.c.h.b16 %v8182
        %v8474 = vunpack.c.l.b16 %v8183
        %v8475 = vunpack.c.h.b16 %v8183
        %v8476 = vunpack.c.l.b16 %v8184
        %v8477 = vunpack.c.h.b16 %v8184
        %v8478 = vunpack.c.l.b16 %v8185
        %v8479 = vunpack.c.h.b16 %v8185
        %v8480 = vunpack.c.l.b16 %v8186
        %v8481 = vunpack.c.h.b16 %v8186
        %v8482 = vunpack.c.l.b16 %v8187
        %v8483 = vunpack.c.h.b16 %v8187
        %v8484 = vunpack.c.l.b16 %v8188
        %v8485 = vunpack.c.h.b16 %v8188
        %v8486 = vunpack.c.l.b16 %v8189
        %v8487 = vunpack.c.h.b16 %v8189
        %v8488 = vunpack.c.l.b16 %v8190
        %v8489 = vunpack.c.h.b16 %v8190
        %v8490 = vunpack.c.l.b16 %v8191
        %v8491 = vunpack.c.h.b16 %v8191
        %v8492 = vunpack.c.l.b16 %v8192
        %v8493 = vunpack.c.h.b16 %v8192
        %v8494 = vunpack.c.l.b16 %v8193
        %v8495 = vunpack.c.h.b16 %v8193
        %v8496 = vunpack.c.l.b16 %v8194
        %v8497 = vunpack.c.h.b16 %v8194
        %v8498 = vunpack.c.l.b16 %v8195
        %v8499 = vunpack.c.h.b16 %v8195
        %v8500 = vunpack.c.l.b16 %v8196
        %v8501 = vunpack.c.h.b16 %v8196
        %v8502 = vunpack.c.l.b16 %v8197
        %v8503 = vunpack.c.h.b16 %v8197
        %v8504 = vunpack.c.l.b16 %v8198
        %v8505 = vunpack.c.h.b16 %v8198
        %v8506 = vunpack.c.l.b16 %v8199
        %v8507 = vunpack.c.h.b16 %v8199
        %v8508 = vunpack.c.l.b16 %v8200
        %v8509 = vunpack.c.h.b16 %v8200
        %v8510 = vunpack.c.l.b16 %v8201
        %v8511 = vunpack.c.h.b16 %v8201
        %v8512 = vunpack.c.l.b16 %v8202
        %v8513 = vunpack.c.h.b16 %v8202
        %v8514 = vunpack.c.l.b16 %v8203
        %v8515 = vunpack.c.h.b16 %v8203
        %v8516 = vunpack.c.l.b16 %v8204
        %v8517 = vunpack.c.h.b16 %v8204
        %v8518 = vunpack.c.l.b16 %v8205
        %v8519 = vunpack.c.h.b16 %v8205
        %v8520 = vunpack.c.l.b16 %v8206
        %v8521 = vunpack.c.h.b16 %v8206
        %v8522 = vunpack.c.l.b16 %v8207
        %v8523 = vunpack.c.h.b16 %v8207
        %v8524 = vunpack.c.l.b16 %v8208
        %v8525 = vunpack.c.h.b16 %v8208
        %v8526 = vunpack.c.l.b16 %v8209
        %v8527 = vunpack.c.h.b16 %v8209
        %v8528 = vunpack.c.l.b16 %v8210
        %v8529 = vunpack.c.h.b16 %v8210
        %v8530 = vunpack.c.l.b16 %v8211
        %v8531 = vunpack.c.h.b16 %v8211
        %v8532 = vunpack.c.l.b16 %v8212
        %v8533 = vunpack.c.h.b16 %v8212
        %v8534 = vunpack.c.l.b16 %v8213
        %v8535 = vunpack.c.h.b16 %v8213
        %v8536 = vunpack.c.l.b16 %v8214
        %v8537 = vunpack.c.h.b16 %v8214
        %v8538 = vunpack.c.l.b16 %v8215
        %v8539 = vunpack.c.h.b16 %v8215
        %v8540 = vunpack.c.l.b16 %v8216
        %v8541 = vunpack.c.h.b16 %v8216
        %v8542 = vunpack.c.l.b16 %v8217
        %v8543 = vunpack.c.h.b16 %v8217
        %v8544 = vunpack.c.l.b16 %v8218
        %v8545 = vunpack.c.h.b16 %v8218
        %v8546 = vunpack.c.l.b16 %v8219
        %v8547 = vunpack.c.h.b16 %v8219
        %v8548 = vunpack.c.l.b16 %v8220
        %v8549 = vunpack.c.h.b16 %v8220
        %v8550 = vunpack.c.l.b16 %v8221
        %v8551 = vunpack.c.h.b16 %v8221
        %v8552 = vunpack.c.l.b16 %v8222
        %v8553 = vunpack.c.h.b16 %v8222
        %v8554 = vunpack.c.l.b16 %v8223
        %v8555 = vunpack.c.h.b16 %v8223
        %v8556 = vunpack.c.l.b16 %v8224
        %v8557 = vunpack.c.h.b16 %v8224
        %v8558 = vunpack.c.l.b16 %v8225
        %v8559 = vunpack.c.h.b16 %v8225
        %v8560 = vunpack.c.l.b16 %v8226
        %v8561 = vunpack.c.h.b16 %v8226
        %v8562 = vunpack.c.l.b16 %v8227
        %v8563 = vunpack.c.h.b16 %v8227
        %v8564 = vunpack.c.l.b16 %v8228
        %v8565 = vunpack.c.h.b16 %v8228
        %v8566 = vunpack.c.l.b16 %v8229
        %v8567 = vunpack.c.h.b16 %v8229
        %v8568 = vunpack.c.l.b16 %v8230
        %v8569 = vunpack.c.h.b16 %v8230
        %v8570 = vunpack.c.l.b16 %v8231
        %v8571 = vunpack.c.h.b16 %v8231
        %v8572 = vunpack.c.l.b16 %v8232
        %v8573 = vunpack.c.h.b16 %v8232
        %v8574 = vunpack.c.l.b16 %v8233
        %v8575 = vunpack.c.h.b16 %v8233
        %v8576 = vunpack.c.l.b16 %v8234
        %v8577 = vunpack.c.h.b16 %v8234
        %v8578 = vunpack.c.l.b16 %v8235
        %v8579 = vunpack.c.h.b16 %v8235
        %v8580 = vunpack.c.l.b16 %v8236
        %v8581 = vunpack.c.h.b16 %v8236
        %v8582 = vunpack.c.l.b16 %v8237
        %v8583 = vunpack.c.h.b16 %v8237
        %v8584 = vunpack.c.l.b16 %v8238
        %v8585 = vunpack.c.h.b16 %v8238
        %v8586 = vunpack.c.l.b16 %v8239
        %v8587 = vunpack.c.h.b16 %v8239
        %v8588 = vunpack.c.l.b16 %v8240
        %v8589 = vunpack.c.h.b16 %v8240
        %v8590 = vunpack.c.l.b16 %v8241
        %v8591 = vunpack.c.h.b16 %v8241
        %v8592 = vunpack.c.l.b16 %v8242
        %v8593 = vunpack.c.h.b16 %v8242
        %v8594 = vunpack.c.l.b16 %v8243
        %v8595 = vunpack.c.h.b16 %v8243
        %v8596 = vunpack.c.l.b16 %v8244
        %v8597 = vunpack.c.h.b16 %v8244
        %v8598 = vunpack.c.l.b16 %v8245
        %v8599 = vunpack.c.h.b16 %v8245
        %v8600 = vunpack.c.l.b16 %v8246
        %v8601 = vunpack.c.h.b16 %v8246
        %v8602 = vunpack.c.l.b16 %v8247
        %v8603 = vunpack.c.h.b16 %v8247
        %v8604 = vunpack.c.l.b16 %v8248
        %v8605 = vunpack.c.h.b16 %v8248
        %v8606 = vunpack.c.l.b16 %v8249
        %v8607 = vunpack.c.h.b16 %v8249
        %v8608 = vunpack.c.l.b16 %v8250
        %v8609 = vunpack.c.h.b16 %v8250
        %v8610 = vunpack.c.l.b16 %v8251
        %v8611 = vunpack.c.h.b16 %v8251
        %v8612 = vunpack.c.l.b16 %v8252
        %v8613 = vunpack.c.h.b16 %v8252
        %v8614 = vunpack.c.l.b16 %v8253
        %v8615 = vunpack.c.h.b16 %v8253
        %v8616 = vunpack.c.l.b16 %v8254
        %v8617 = vunpack.c.h.b16 %v8254
        %v8618 = vunpack.c.l.b16 %v8255
        %v8619 = vunpack.c.h.b16 %v8255
        %v8620 = vunpack.c.l.b16 %v8256
        %v8621 = vunpack.c.h.b16 %v8256
        %v8622 = vunpack.c.l.b16 %v8257
        %v8623 = vunpack.c.h.b16 %v8257
        %v8624 = vunpack.c.l.b16 %v8258
        %v8625 = vunpack.c.h.b16 %v8258
        %v8626 = vunpack.c.l.b16 %v8259
        %v8627 = vunpack.c.h.b16 %v8259
        %v8628 = vunpack.c.l.b16 %v8260
        %v8629 = vunpack.c.h.b16 %v8260
        %v8630 = vunpack.c.l.b16 %v8261
        %v8631 = vunpack.c.h.b16 %v8261
        %v8632 = vunpack.c.l.b16 %v8262
        %v8633 = vunpack.c.h.b16 %v8262
        %v8634 = vunpack.c.l.b16 %v8263
        %v8635 = vunpack.c.h.b16 %v8263
        %v8636 = vunpack.c.l.b16 %v8264
        %v8637 = vunpack.c.h.b16 %v8264
        %v8638 = vunpack.c.l.b16 %v8265
        %v8639 = vunpack.c.h.b16 %v8265
        %v8640 = vunpack.c.l.b16 %v8266
        %v8641 = vunpack.c.h.b16 %v8266
        %v8642 = vunpack.c.l.b16 %v8267
        %v8643 = vunpack.c.h.b16 %v8267
        %v8644 = vunpack.c.l.b16 %v8268
        %v8645 = vunpack.c.h.b16 %v8268
        %v8646 = vunpack.c.l.b16 %v8269
        %v8647 = vunpack.c.h.b16 %v8269
        %v8648 = vunpack.c.l.b16 %v8270
        %v8649 = vunpack.c.h.b16 %v8270
        %v8650 = vunpack.c.l.b16 %v8271
        %v8651 = vunpack.c.h.b16 %v8271
        %v8652 = vunpack.c.l.b16 %v8272
        %v8653 = vunpack.c.h.b16 %v8272
        %v8654 = vunpack.c.l.b16 %v8273
        %v8655 = vunpack.c.h.b16 %v8273
        %v8656 = vunpack.c.l.b16 %v8274
        %v8657 = vunpack.c.h.b16 %v8274
        %v8658 = vunpack.c.l.b16 %v8275
        %v8659 = vunpack.c.h.b16 %v8275
        %v8660 = vunpack.c.l.b16 %v8276
        %v8661 = vunpack.c.h.b16 %v8276
        %v8662 = vunpack.c.l.b16 %v8277
        %v8663 = vunpack.c.h.b16 %v8277
        %v8664 = vunpack.c.l.b16 %v8278
        %v8665 = vunpack.c.h.b16 %v8278
        %v8666 = vunpack.c.l.b16 %v8279
        %v8667 = vunpack.c.h.b16 %v8279
        %v8668 = vunpack.c.l.b16 %v8280
        %v8669 = vunpack.c.h.b16 %v8280
        %v8670 = vunpack.c.l.b16 %v8281
        %v8671 = vunpack.c.h.b16 %v8281
        %v8672 = vunpack.c.l.b16 %v8282
        %v8673 = vunpack.c.h.b16 %v8282
        %v8674 = vunpack.c.l.b16 %v8283
        %v8675 = vunpack.c.h.b16 %v8283
        %v8676 = vunpack.c.l.b16 %v8284
        %v8677 = vunpack.c.h.b16 %v8284
        %v8678 = vunpack.c.l.b16 %v8285
        %v8679 = vunpack.c.h.b16 %v8285
        %v8680 = vunpack.c.l.b16 %v8286
        %v8681 = vunpack.c.h.b16 %v8286
        %v8682 = vunpack.c.l.b16 %v8287
        %v8683 = vunpack.c.h.b16 %v8287
        %v8684 = vunpack.c.l.b16 %v8288
        %v8685 = vunpack.c.h.b16 %v8288
        %v8686 = vunpack.c.l.b16 %v8289
        %v8687 = vunpack.c.h.b16 %v8289
        %v8688 = vunpack.c.l.b16 %v8290
        %v8689 = vunpack.c.h.b16 %v8290
        %v8690 = vunpack.c.l.b16 %v8291
        %v8691 = vunpack.c.h.b16 %v8291
        %v8692 = vpack.c.b16 %v8440, %v8436
        %v8693 = vpack.c.b16 %v8441, %v8437
        %v8694 = vpack.c.b16 %v8442, %v8438
        %v8695 = vpack.c.b16 %v8443, %v8439
        %v8696 = vpack.c.b16 %v8448, %v8444
        %v8697 = vpack.c.b16 %v8449, %v8445
        %v8698 = vpack.c.b16 %v8450, %v8446
        %v8699 = vpack.c.b16 %v8451, %v8447
        %v8700 = vpack.c.b16 %v8456, %v8452
        %v8701 = vpack.c.b16 %v8457, %v8453
        %v8702 = vpack.c.b16 %v8458, %v8454
        %v8703 = vpack.c.b16 %v8459, %v8455
        %v8704 = vpack.c.b16 %v8464, %v8460
        %v8705 = vpack.c.b16 %v8465, %v8461
        %v8706 = vpack.c.b16 %v8466, %v8462
        %v8707 = vpack.c.b16 %v8467, %v8463
        %v8708 = vpack.c.b16 %v8472, %v8468
        %v8709 = vpack.c.b16 %v8473, %v8469
        %v8710 = vpack.c.b16 %v8474, %v8470
        %v8711 = vpack.c.b16 %v8475, %v8471
        %v8712 = vpack.c.b16 %v8480, %v8476
        %v8713 = vpack.c.b16 %v8481, %v8477
        %v8714 = vpack.c.b16 %v8482, %v8478
        %v8715 = vpack.c.b16 %v8483, %v8479
        %v8716 = vpack.c.b16 %v8488, %v8484
        %v8717 = vpack.c.b16 %v8489, %v8485
        %v8718 = vpack.c.b16 %v8490, %v8486
        %v8719 = vpack.c.b16 %v8491, %v8487
        %v8720 = vpack.c.b16 %v8496, %v8492
        %v8721 = vpack.c.b16 %v8497, %v8493
        %v8722 = vpack.c.b16 %v8498, %v8494
        %v8723 = vpack.c.b16 %v8499, %v8495
        %v8724 = vpack.c.b16 %v8504, %v8500
        %v8725 = vpack.c.b16 %v8505, %v8501
        %v8726 = vpack.c.b16 %v8506, %v8502
        %v8727 = vpack.c.b16 %v8507, %v8503
        %v8728 = vpack.c.b16 %v8512, %v8508
        %v8729 = vpack.c.b16 %v8513, %v8509
        %v8730 = vpack.c.b16 %v8514, %v8510
        %v8731 = vpack.c.b16 %v8515, %v8511
        %v8732 = vpack.c.b16 %v8520, %v8516
        %v8733 = vpack.c.b16 %v8521, %v8517
        %v8734 = vpack.c.b16 %v8522, %v8518
        %v8735 = vpack.c.b16 %v8523, %v8519
        %v8736 = vpack.c.b16 %v8528, %v8524
        %v8737 = vpack.c.b16 %v8529, %v8525
        %v8738 = vpack.c.b16 %v8530, %v8526
        %v8739 = vpack.c.b16 %v8531, %v8527
        %v8740 = vpack.c.b16 %v8536, %v8532
        %v8741 = vpack.c.b16 %v8537, %v8533
        %v8742 = vpack.c.b16 %v8538, %v8534
        %v8743 = vpack.c.b16 %v8539, %v8535
        %v8744 = vpack.c.b16 %v8544, %v8540
        %v8745 = vpack.c.b16 %v8545, %v8541
        %v8746 = vpack.c.b16 %v8546, %v8542
        %v8747 = vpack.c.b16 %v8547, %v8543
        %v8748 = vpack.c.b16 %v8552, %v8548
        %v8749 = vpack.c.b16 %v8553, %v8549
        %v8750 = vpack.c.b16 %v8554, %v8550
        %v8751 = vpack.c.b16 %v8555, %v8551
        %v8752 = vpack.c.b16 %v8560, %v8556
        %v8753 = vpack.c.b16 %v8561, %v8557
        %v8754 = vpack.c.b16 %v8562, %v8558
        %v8755 = vpack.c.b16 %v8563, %v8559
        %v8756 = vpack.c.b16 %v8568, %v8564
        %v8757 = vpack.c.b16 %v8569, %v8565
        %v8758 = vpack.c.b16 %v8570, %v8566
        %v8759 = vpack.c.b16 %v8571, %v8567
        %v8760 = vpack.c.b16 %v8576, %v8572
        %v8761 = vpack.c.b16 %v8577, %v8573
        %v8762 = vpack.c.b16 %v8578, %v8574
        %v8763 = vpack.c.b16 %v8579, %v8575
        %v8764 = vpack.c.b16 %v8584, %v8580
        %v8765 = vpack.c.b16 %v8585, %v8581
        %v8766 = vpack.c.b16 %v8586, %v8582
        %v8767 = vpack.c.b16 %v8587, %v8583
        %v8768 = vpack.c.b16 %v8592, %v8588
        %v8769 = vpack.c.b16 %v8593, %v8589
        %v8770 = vpack.c.b16 %v8594, %v8590
        %v8771 = vpack.c.b16 %v8595, %v8591
        %v8772 = vpack.c.b16 %v8600, %v8596
        %v8773 = vpack.c.b16 %v8601, %v8597
        %v8774 = vpack.c.b16 %v8602, %v8598
        %v8775 = vpack.c.b16 %v8603, %v8599
        %v8776 = vpack.c.b16 %v8608, %v8604
        %v8777 = vpack.c.b16 %v8609, %v8605
        %v8778 = vpack.c.b16 %v8610, %v8606
        %v8779 = vpack.c.b16 %v8611, %v8607
        %v8780 = vpack.c.b16 %v8616, %v8612
        %v8781 = vpack.c.b16 %v8617, %v8613
        %v8782 = vpack.c.b16 %v8618, %v8614
        %v8783 = vpack.c.b16 %v8619, %v8615
        %v8784 = vpack.c.b16 %v8624, %v8620
        %v8785 = vpack.c.b16 %v8625, %v8621
        %v8786 = vpack.c.b16 %v8626, %v8622
        %v8787 = vpack.c.b16 %v8627, %v8623
        %v8788 = vpack.c.b16 %v8632, %v8628
        %v8789 = vpack.c.b16 %v8633, %v8629
        %v8790 = vpack.c.b16 %v8634, %v8630
        %v8791 = vpack.c.b16 %v8635, %v8631
        %v8792 = vpack.c.b16 %v8640, %v8636
        %v8793 = vpack.c.b16 %v8641, %v8637
        %v8794 = vpack.c.b16 %v8642, %v8638
        %v8795 = vpack.c.b16 %v8643, %v8639
        %v8796 = vpack.c.b16 %v8648, %v8644
        %v8797 = vpack.c.b16 %v8649, %v8645
        %v8798 = vpack.c.b16 %v8650, %v8646
        %v8799 = vpack.c.b16 %v8651, %v8647
        %v8800 = vpack.c.b16 %v8656, %v8652
        %v8801 = vpack.c.b16 %v8657, %v8653
        %v8802 = vpack.c.b16 %v8658, %v8654
        %v8803 = vpack.c.b16 %v8659, %v8655
        %v8804 = vpack.c.b16 %v8664, %v8660
        %v8805 = vpack.c.b16 %v8665, %v8661
        %v8806 = vpack.c.b16 %v8666, %v8662
        %v8807 = vpack.c.b16 %v8667, %v8663
        %v8808 = vpack.c.b16 %v8672, %v8668
        %v8809 = vpack.c.b16 %v8673, %v8669
        %v8810 = vpack.c.b16 %v8674, %v8670
        %v8811 = vpack.c.b16 %v8675, %v8671
        %v8812 = vpack.c.b16 %v8680, %v8676
        %v8813 = vpack.c.b16 %v8681, %v8677
        %v8814 = vpack.c.b16 %v8682, %v8678
        %v8815 = vpack.c.b16 %v8683, %v8679
        %v8816 = vpack.c.b16 %v8688, %v8684
        %v8817 = vpack.c.b16 %v8689, %v8685
        %v8818 = vpack.c.b16 %v8690, %v8686
        %v8819 = vpack.c.b16 %v8691, %v8687
        %8948 = vmatprep.subr.bf16.mxu0 %v8721
        %8949 = vmatpush1.bf16.msra.mxu0 %v8720
        %8950 = vmatprep.subr.bf16.mxu0 %v8717
        %8951 = vmatpush1.bf16.msra.mxu0 %v8716
        %8952 = vmatprep.subr.bf16.mxu0 %v8713
        %8953 = vmatpush1.bf16.msra.mxu0 %v8712
        %8954 = vmatprep.subr.bf16.mxu0 %v8709
        %8955 = vmatpush1.bf16.msra.mxu0 %v8708
        %8956 = vmatprep.subr.bf16.mxu0 %v8705
        %8957 = vmatpush1.bf16.msra.mxu0 %v8704
        %8958 = vmatprep.subr.bf16.mxu0 %v8701
        %8959 = vmatpush1.bf16.msra.mxu0 %v8700
        %8960 = vmatprep.subr.bf16.mxu0 %v8697
        %8961 = vmatpush1.bf16.msra.mxu0 %v8696
        %8962 = vmatprep.subr.bf16.mxu0 %v8693
        %8963 = vmatpush1.bf16.msra.mxu0 %v8692
        %8964 = vmatprep.subr.bf16.mxu0 %v8753
        %8965 = vmatpush2.bf16.msra.mxu0 %v8752
        %8966 = vmatprep.subr.bf16.mxu0 %v8749
        %8967 = vmatpush2.bf16.msra.mxu0 %v8748
        %8968 = vmatprep.subr.bf16.mxu0 %v8745
        %8969 = vmatpush2.bf16.msra.mxu0 %v8744
        %8970 = vmatprep.subr.bf16.mxu0 %v8741
        %8971 = vmatpush2.bf16.msra.mxu0 %v8740
        %8972 = vmatprep.subr.bf16.mxu0 %v8737
        %8973 = vmatpush2.bf16.msra.mxu0 %v8736
        %8974 = vmatprep.subr.bf16.mxu0 %v8733
        %8975 = vmatpush2.bf16.msra.mxu0 %v8732
        %8976 = vmatprep.subr.bf16.mxu0 %v8729
        %8977 = vmatpush2.bf16.msra.mxu0 %v8728
        %8978 = vmatprep.subr.bf16.mxu0 %v8725
        %8979 = vmatpush2.bf16.msra.mxu0 %v8724
        %8980 = vmatprep.mubr.bf16.mxu0 %v8301
        %8981 = vmatmul.mubr.bf16.gmra.mxu0 %v8300
        %v8982 = vpop.f32.mrf.mxu0
        %v8983 = vadd.f32 0.0, %v8982
        %v8984 = vpop.f32.mrf.mxu0
        %v8985 = vadd.f32 0.0, %v8984
        %v8986 = vpop.f32.mrf.mxu0
        %v8987 = vadd.f32 0.0, %v8986
        %v8988 = vpop.f32.mrf.mxu0
        %v8989 = vadd.f32 0.0, %v8988
        %8990 = vdwg.mxu0
        %8991 = vmatprep.subr.bf16.mxu0 %v8785
        %8992 = vmatpush1.bf16.msra.mxu0 %v8784
        %8993 = vmatprep.subr.bf16.mxu0 %v8781
        %8994 = vmatpush1.bf16.msra.mxu0 %v8780
        %8995 = vmatprep.subr.bf16.mxu0 %v8777
        %8996 = vmatpush1.bf16.msra.mxu0 %v8776
        %8997 = vmatprep.subr.bf16.mxu0 %v8773
        %8998 = vmatpush1.bf16.msra.mxu0 %v8772
        %8999 = vmatprep.subr.bf16.mxu0 %v8769
        %9000 = vmatpush1.bf16.msra.mxu0 %v8768
        %9001 = vmatprep.subr.bf16.mxu0 %v8765
        %9002 = vmatpush1.bf16.msra.mxu0 %v8764
        %9003 = vmatprep.subr.bf16.mxu0 %v8761
        %9004 = vmatpush1.bf16.msra.mxu0 %v8760
        %9005 = vmatprep.subr.bf16.mxu0 %v8757
        %9006 = vmatpush1.bf16.msra.mxu0 %v8756
        %9007 = vmatprep.subr.bf16.mxu0 %v8817
        %9008 = vmatpush2.bf16.msra.mxu0 %v8816
        %9009 = vmatprep.subr.bf16.mxu0 %v8813
        %9010 = vmatpush2.bf16.msra.mxu0 %v8812
        %9011 = vmatprep.subr.bf16.mxu0 %v8809
        %9012 = vmatpush2.bf16.msra.mxu0 %v8808
        %9013 = vmatprep.subr.bf16.mxu0 %v8805
        %9014 = vmatpush2.bf16.msra.mxu0 %v8804
        %9015 = vmatprep.subr.bf16.mxu0 %v8801
        %9016 = vmatpush2.bf16.msra.mxu0 %v8800
        %9017 = vmatprep.subr.bf16.mxu0 %v8797
        %9018 = vmatpush2.bf16.msra.mxu0 %v8796
        %9019 = vmatprep.subr.bf16.mxu0 %v8793
        %9020 = vmatpush2.bf16.msra.mxu0 %v8792
        %9021 = vmatprep.subr.bf16.mxu0 %v8789
        %9022 = vmatpush2.bf16.msra.mxu0 %v8788
        %9023 = vmatprep.mubr.bf16.mxu0 %v8303
        %9024 = vmatmul.mubr.bf16.gmra.mxu0 %v8302
        %v9025 = vpop.f32.mrf.mxu0
        %v9026 = vadd.f32 %v8983, %v9025
        %v9027 = vpop.f32.mrf.mxu0
        %v9028 = vadd.f32 %v8985, %v9027
        %v9029 = vpop.f32.mrf.mxu0
        %v9030 = vadd.f32 %v8987, %v9029
        %v9031 = vpop.f32.mrf.mxu0
        %v9032 = vadd.f32 %v8989, %v9031
        %9033 = vdwg.mxu0
        %9034 = vmatprep.subr.bf16.mxu0 %v8723
        %9035 = vmatpush1.bf16.msra.mxu0 %v8722
        %9036 = vmatprep.subr.bf16.mxu0 %v8719
        %9037 = vmatpush1.bf16.msra.mxu0 %v8718
        %9038 = vmatprep.subr.bf16.mxu0 %v8715
        %9039 = vmatpush1.bf16.msra.mxu0 %v8714
        %9040 = vmatprep.subr.bf16.mxu0 %v8711
        %9041 = vmatpush1.bf16.msra.mxu0 %v8710
        %9042 = vmatprep.subr.bf16.mxu0 %v8707
        %9043 = vmatpush1.bf16.msra.mxu0 %v8706
        %9044 = vmatprep.subr.bf16.mxu0 %v8703
        %9045 = vmatpush1.bf16.msra.mxu0 %v8702
        %9046 = vmatprep.subr.bf16.mxu0 %v8699
        %9047 = vmatpush1.bf16.msra.mxu0 %v8698
        %9048 = vmatprep.subr.bf16.mxu0 %v8695
        %9049 = vmatpush1.bf16.msra.mxu0 %v8694
        %9050 = vmatprep.subr.bf16.mxu0 %v8755
        %9051 = vmatpush2.bf16.msra.mxu0 %v8754
        %9052 = vmatprep.subr.bf16.mxu0 %v8751
        %9053 = vmatpush2.bf16.msra.mxu0 %v8750
        %9054 = vmatprep.subr.bf16.mxu0 %v8747
        %9055 = vmatpush2.bf16.msra.mxu0 %v8746
        %9056 = vmatprep.subr.bf16.mxu0 %v8743
        %9057 = vmatpush2.bf16.msra.mxu0 %v8742
        %9058 = vmatprep.subr.bf16.mxu0 %v8739
        %9059 = vmatpush2.bf16.msra.mxu0 %v8738
        %9060 = vmatprep.subr.bf16.mxu0 %v8735
        %9061 = vmatpush2.bf16.msra.mxu0 %v8734
        %9062 = vmatprep.subr.bf16.mxu0 %v8731
        %9063 = vmatpush2.bf16.msra.mxu0 %v8730
        %9064 = vmatprep.subr.bf16.mxu0 %v8727
        %9065 = vmatpush2.bf16.msra.mxu0 %v8726
        %9066 = vmatprep.mubr.bf16.mxu0 %v8301
        %9067 = vmatmul.mubr.bf16.gmra.mxu0 %v8300
        %v9068 = vpop.f32.mrf.mxu0
        %v9069 = vadd.f32 0.0, %v9068
        %v9070 = vpop.f32.mrf.mxu0
        %v9071 = vadd.f32 0.0, %v9070
        %v9072 = vpop.f32.mrf.mxu0
        %v9073 = vadd.f32 0.0, %v9072
        %v9074 = vpop.f32.mrf.mxu0
        %v9075 = vadd.f32 0.0, %v9074
        %9076 = vdwg.mxu0
        %9077 = vmatprep.subr.bf16.mxu0 %v8787
        %9078 = vmatpush1.bf16.msra.mxu0 %v8786
        %9079 = vmatprep.subr.bf16.mxu0 %v8783
        %9080 = vmatpush1.bf16.msra.mxu0 %v8782
        %9081 = vmatprep.subr.bf16.mxu0 %v8779
        %9082 = vmatpush1.bf16.msra.mxu0 %v8778
        %9083 = vmatprep.subr.bf16.mxu0 %v8775
        %9084 = vmatpush1.bf16.msra.mxu0 %v8774
        %9085 = vmatprep.subr.bf16.mxu0 %v8771
        %9086 = vmatpush1.bf16.msra.mxu0 %v8770
        %9087 = vmatprep.subr.bf16.mxu0 %v8767
        %9088 = vmatpush1.bf16.msra.mxu0 %v8766
        %9089 = vmatprep.subr.bf16.mxu0 %v8763
        %9090 = vmatpush1.bf16.msra.mxu0 %v8762
        %9091 = vmatprep.subr.bf16.mxu0 %v8759
        %9092 = vmatpush1.bf16.msra.mxu0 %v8758
        %9093 = vmatprep.subr.bf16.mxu0 %v8819
        %9094 = vmatpush2.bf16.msra.mxu0 %v8818
        %9095 = vmatprep.subr.bf16.mxu0 %v8815
        %9096 = vmatpush2.bf16.msra.mxu0 %v8814
        %9097 = vmatprep.subr.bf16.mxu0 %v8811
        %9098 = vmatpush2.bf16.msra.mxu0 %v8810
        %9099 = vmatprep.subr.bf16.mxu0 %v8807
        %9100 = vmatpush2.bf16.msra.mxu0 %v8806
        %9101 = vmatprep.subr.bf16.mxu0 %v8803
        %9102 = vmatpush2.bf16.msra.mxu0 %v8802
        %9103 = vmatprep.subr.bf16.mxu0 %v8799
        %9104 = vmatpush2.bf16.msra.mxu0 %v8798
        %9105 = vmatprep.subr.bf16.mxu0 %v8795
        %9106 = vmatpush2.bf16.msra.mxu0 %v8794
        %9107 = vmatprep.subr.bf16.mxu0 %v8791
        %9108 = vmatpush2.bf16.msra.mxu0 %v8790
        %9109 = vmatprep.mubr.bf16.mxu0 %v8303
        %9110 = vmatmul.mubr.bf16.gmra.mxu0 %v8302
        %v9111 = vpop.f32.mrf.mxu0
        %v9112 = vadd.f32 %v9069, %v9111
        %v9113 = vpop.f32.mrf.mxu0
        %v9114 = vadd.f32 %v9071, %v9113
        %v9115 = vpop.f32.mrf.mxu0
        %v9116 = vadd.f32 %v9073, %v9115
        %v9117 = vpop.f32.mrf.mxu0
        %v9118 = vadd.f32 %v9075, %v9117
        %9119 = vdwg.mxu0
        %v9120 = vadd.f32 %v8127, %v9026
        %v9121 = vadd.f32 %v8128, %v9028
        %v9122 = vadd.f32 %v8129, %v9112
        %v9123 = vadd.f32 %v8130, %v9114
        %v9124 = vadd.f32 %v8131, %v9030
        %v9125 = vadd.f32 %v8132, %v9032
        %v9126 = vadd.f32 %v8133, %v9116
        %v9127 = vadd.f32 %v8134, %v9118
        %v9128 = vld [vmem:[#allocation2 + $0x10] sm:$0x77]
        %v9129 = vld [vmem:[#allocation2 + $0x18] sm:$0x77]
        %v9130 = vld [vmem:[#allocation2 + $0x40] sm:$0x77]
        %v9131 = vld [vmem:[#allocation2 + $0x48] sm:$0x77]
        %vm9132 = vsmask.f32 1280
        %vm9133 = vsmask.f32 5392
        %vm9134 = vmor %vm9132, %vm9133
        %v9136 = vshrl.u32 %v8135, 16
        %v9138 = vrot.slane %v9136, 6
        %v9139 = vshll.u32 %v8135, 16
        %v9141 = vrot.slane %v9139, 7
        %v9142 = vor.u32 %v9138, %v9141
        %v9143 = vrot.slane %v9142, 4
        %v9145 = vshrl.u32 %v9128, 16
        %v9147 = vrot.slane %v9145, 6
        %v9148 = vshll.u32 %v9128, 16
        %v9150 = vrot.slane %v9148, 7
        %v9151 = vor.u32 %v9147, %v9150
        %v9152 = vsel %vm9134, %v9143, %v9151
        %v9154 = vshrl.u32 %v8136, 16
        %v9156 = vrot.slane %v9154, 6
        %v9157 = vshll.u32 %v8136, 16
        %v9159 = vrot.slane %v9157, 7
        %v9160 = vor.u32 %v9156, %v9159
        %v9161 = vrot.slane %v9160, 4
        %v9163 = vshrl.u32 %v9129, 16
        %v9165 = vrot.slane %v9163, 6
        %v9166 = vshll.u32 %v9129, 16
        %v9168 = vrot.slane %v9166, 7
        %v9169 = vor.u32 %v9165, %v9168
        %v9170 = vsel %vm9134, %v9161, %v9169
        %v9172 = vshrl.u32 %v8137, 16
        %v9174 = vrot.slane %v9172, 6
        %v9175 = vshll.u32 %v8137, 16
        %v9177 = vrot.slane %v9175, 7
        %v9178 = vor.u32 %v9174, %v9177
        %v9179 = vrot.slane %v9178, 4
        %v9181 = vshrl.u32 %v9130, 16
        %v9183 = vrot.slane %v9181, 6
        %v9184 = vshll.u32 %v9130, 16
        %v9186 = vrot.slane %v9184, 7
        %v9187 = vor.u32 %v9183, %v9186
        %v9188 = vsel %vm9134, %v9179, %v9187
        %v9190 = vshrl.u32 %v8138, 16
        %v9192 = vrot.slane %v9190, 6
        %v9193 = vshll.u32 %v8138, 16
        %v9195 = vrot.slane %v9193, 7
        %v9196 = vor.u32 %v9192, %v9195
        %v9197 = vrot.slane %v9196, 4
        %v9199 = vshrl.u32 %v9131, 16
        %v9201 = vrot.slane %v9199, 6
        %v9202 = vshll.u32 %v9131, 16
        %v9204 = vrot.slane %v9202, 7
        %v9205 = vor.u32 %v9201, %v9204
        %v9206 = vsel %vm9134, %v9197, %v9205
        %s9207 = scalar_lea.vmem [#allocation9], 3072
        %v9208 = vld [vmem:[%s9207] sm:$0xff]
        %v9209 = vld [vmem:[%s9207 + $0x8] sm:$0xff]
        %v9210 = vld [vmem:[%s9207 + $0x10] sm:$0xff]
        %v9211 = vld [vmem:[%s9207 + $0x18] sm:$0xff]
        %v9212 = vld [vmem:[%s9207 + $0x20] sm:$0xff]
        %v9213 = vld [vmem:[%s9207 + $0x28] sm:$0xff]
        %v9214 = vld [vmem:[%s9207 + $0x30] sm:$0xff]
        %v9215 = vld [vmem:[%s9207 + $0x38] sm:$0xff]
        %v9216 = vld [vmem:[%s9207 + $0x40] sm:$0xff]
        %v9217 = vld [vmem:[%s9207 + $0x48] sm:$0xff]
        %v9218 = vld [vmem:[%s9207 + $0x50] sm:$0xff]
        %v9219 = vld [vmem:[%s9207 + $0x58] sm:$0xff]
        %v9220 = vld [vmem:[%s9207 + $0x60] sm:$0xff]
        %v9221 = vld [vmem:[%s9207 + $0x68] sm:$0xff]
        %v9222 = vld [vmem:[%s9207 + $0x70] sm:$0xff]
        %v9223 = vld [vmem:[%s9207 + $0x78] sm:$0xff]
        %v9224 = vld [vmem:[%s9207 + $0x80] sm:$0xff]
        %v9225 = vld [vmem:[%s9207 + $0x88] sm:$0xff]
        %v9226 = vld [vmem:[%s9207 + $0x90] sm:$0xff]
        %v9227 = vld [vmem:[%s9207 + $0x98] sm:$0xff]
        %v9228 = vld [vmem:[%s9207 + $0xa0] sm:$0xff]
        %v9229 = vld [vmem:[%s9207 + $0xa8] sm:$0xff]
        %v9230 = vld [vmem:[%s9207 + $0xb0] sm:$0xff]
        %v9231 = vld [vmem:[%s9207 + $0xb8] sm:$0xff]
        %v9232 = vld [vmem:[%s9207 + $0xc0] sm:$0xff]
        %v9233 = vld [vmem:[%s9207 + $0xc8] sm:$0xff]
        %v9234 = vld [vmem:[%s9207 + $0xd0] sm:$0xff]
        %v9235 = vld [vmem:[%s9207 + $0xd8] sm:$0xff]
        %v9236 = vld [vmem:[%s9207 + $0xe0] sm:$0xff]
        %v9237 = vld [vmem:[%s9207 + $0xe8] sm:$0xff]
        %v9238 = vld [vmem:[%s9207 + $0xf0] sm:$0xff]
        %v9239 = vld [vmem:[%s9207 + $0xf8] sm:$0xff]
        %v9240 = vld [vmem:[%s9207 + $0x100] sm:$0xff]
        %v9241 = vld [vmem:[%s9207 + $0x108] sm:$0xff]
        %v9242 = vld [vmem:[%s9207 + $0x110] sm:$0xff]
        %v9243 = vld [vmem:[%s9207 + $0x118] sm:$0xff]
        %v9244 = vld [vmem:[%s9207 + $0x120] sm:$0xff]
        %v9245 = vld [vmem:[%s9207 + $0x128] sm:$0xff]
        %v9246 = vld [vmem:[%s9207 + $0x130] sm:$0xff]
        %v9247 = vld [vmem:[%s9207 + $0x138] sm:$0xff]
        %v9248 = vld [vmem:[%s9207 + $0x140] sm:$0xff]
        %v9249 = vld [vmem:[%s9207 + $0x148] sm:$0xff]
        %v9250 = vld [vmem:[%s9207 + $0x150] sm:$0xff]
        %v9251 = vld [vmem:[%s9207 + $0x158] sm:$0xff]
        %v9252 = vld [vmem:[%s9207 + $0x160] sm:$0xff]
        %v9253 = vld [vmem:[%s9207 + $0x168] sm:$0xff]
        %v9254 = vld [vmem:[%s9207 + $0x170] sm:$0xff]
        %v9255 = vld [vmem:[%s9207 + $0x178] sm:$0xff]
        %v9256 = vld [vmem:[%s9207 + $0x180] sm:$0xff]
        %v9257 = vld [vmem:[%s9207 + $0x188] sm:$0xff]
        %v9258 = vld [vmem:[%s9207 + $0x190] sm:$0xff]
        %v9259 = vld [vmem:[%s9207 + $0x198] sm:$0xff]
        %v9260 = vld [vmem:[%s9207 + $0x1a0] sm:$0xff]
        %v9261 = vld [vmem:[%s9207 + $0x1a8] sm:$0xff]
        %v9262 = vld [vmem:[%s9207 + $0x1b0] sm:$0xff]
        %v9263 = vld [vmem:[%s9207 + $0x1b8] sm:$0xff]
        %v9264 = vld [vmem:[%s9207 + $0x1c0] sm:$0xff]
        %v9265 = vld [vmem:[%s9207 + $0x1c8] sm:$0xff]
        %v9266 = vld [vmem:[%s9207 + $0x1d0] sm:$0xff]
        %v9267 = vld [vmem:[%s9207 + $0x1d8] sm:$0xff]
        %v9268 = vld [vmem:[%s9207 + $0x1e0] sm:$0xff]
        %v9269 = vld [vmem:[%s9207 + $0x1e8] sm:$0xff]
        %v9270 = vld [vmem:[%s9207 + $0x1f0] sm:$0xff]
        %v9271 = vld [vmem:[%s9207 + $0x1f8] sm:$0xff]
        %v9272 = vld [vmem:[%s9207 + $0x200] sm:$0xff]
        %v9273 = vld [vmem:[%s9207 + $0x208] sm:$0xff]
        %v9274 = vld [vmem:[%s9207 + $0x210] sm:$0xff]
        %v9275 = vld [vmem:[%s9207 + $0x218] sm:$0xff]
        %v9276 = vld [vmem:[%s9207 + $0x220] sm:$0xff]
        %v9277 = vld [vmem:[%s9207 + $0x228] sm:$0xff]
        %v9278 = vld [vmem:[%s9207 + $0x230] sm:$0xff]
        %v9279 = vld [vmem:[%s9207 + $0x238] sm:$0xff]
        %v9280 = vld [vmem:[%s9207 + $0x240] sm:$0xff]
        %v9281 = vld [vmem:[%s9207 + $0x248] sm:$0xff]
        %v9282 = vld [vmem:[%s9207 + $0x250] sm:$0xff]
        %v9283 = vld [vmem:[%s9207 + $0x258] sm:$0xff]
        %v9284 = vld [vmem:[%s9207 + $0x260] sm:$0xff]
        %v9285 = vld [vmem:[%s9207 + $0x268] sm:$0xff]
        %v9286 = vld [vmem:[%s9207 + $0x270] sm:$0xff]
        %v9287 = vld [vmem:[%s9207 + $0x278] sm:$0xff]
        %v9288 = vld [vmem:[%s9207 + $0x280] sm:$0xff]
        %v9289 = vld [vmem:[%s9207 + $0x288] sm:$0xff]
        %v9290 = vld [vmem:[%s9207 + $0x290] sm:$0xff]
        %v9291 = vld [vmem:[%s9207 + $0x298] sm:$0xff]
        %v9292 = vld [vmem:[%s9207 + $0x2a0] sm:$0xff]
        %v9293 = vld [vmem:[%s9207 + $0x2a8] sm:$0xff]
        %v9294 = vld [vmem:[%s9207 + $0x2b0] sm:$0xff]
        %v9295 = vld [vmem:[%s9207 + $0x2b8] sm:$0xff]
        %v9296 = vld [vmem:[%s9207 + $0x2c0] sm:$0xff]
        %v9297 = vld [vmem:[%s9207 + $0x2c8] sm:$0xff]
        %v9298 = vld [vmem:[%s9207 + $0x2d0] sm:$0xff]
        %v9299 = vld [vmem:[%s9207 + $0x2d8] sm:$0xff]
        %v9300 = vld [vmem:[%s9207 + $0x2e0] sm:$0xff]
        %v9301 = vld [vmem:[%s9207 + $0x2e8] sm:$0xff]
        %v9302 = vld [vmem:[%s9207 + $0x2f0] sm:$0xff]
        %v9303 = vld [vmem:[%s9207 + $0x2f8] sm:$0xff]
        %v9304 = vld [vmem:[%s9207 + $0x300] sm:$0xff]
        %v9305 = vld [vmem:[%s9207 + $0x308] sm:$0xff]
        %v9306 = vld [vmem:[%s9207 + $0x310] sm:$0xff]
        %v9307 = vld [vmem:[%s9207 + $0x318] sm:$0xff]
        %v9308 = vld [vmem:[%s9207 + $0x320] sm:$0xff]
        %v9309 = vld [vmem:[%s9207 + $0x328] sm:$0xff]
        %v9310 = vld [vmem:[%s9207 + $0x330] sm:$0xff]
        %v9311 = vld [vmem:[%s9207 + $0x338] sm:$0xff]
        %v9312 = vld [vmem:[%s9207 + $0x340] sm:$0xff]
        %v9313 = vld [vmem:[%s9207 + $0x348] sm:$0xff]
        %v9314 = vld [vmem:[%s9207 + $0x350] sm:$0xff]
        %v9315 = vld [vmem:[%s9207 + $0x358] sm:$0xff]
        %v9316 = vld [vmem:[%s9207 + $0x360] sm:$0xff]
        %v9317 = vld [vmem:[%s9207 + $0x368] sm:$0xff]
        %v9318 = vld [vmem:[%s9207 + $0x370] sm:$0xff]
        %v9319 = vld [vmem:[%s9207 + $0x378] sm:$0xff]
        %v9320 = vld [vmem:[%s9207 + $0x380] sm:$0xff]
        %v9321 = vld [vmem:[%s9207 + $0x388] sm:$0xff]
        %v9322 = vld [vmem:[%s9207 + $0x390] sm:$0xff]
        %v9323 = vld [vmem:[%s9207 + $0x398] sm:$0xff]
        %v9324 = vld [vmem:[%s9207 + $0x3a0] sm:$0xff]
        %v9325 = vld [vmem:[%s9207 + $0x3a8] sm:$0xff]
        %v9326 = vld [vmem:[%s9207 + $0x3b0] sm:$0xff]
        %v9327 = vld [vmem:[%s9207 + $0x3b8] sm:$0xff]
        %v9328 = vld [vmem:[%s9207 + $0x3c0] sm:$0xff]
        %v9329 = vld [vmem:[%s9207 + $0x3c8] sm:$0xff]
        %v9330 = vld [vmem:[%s9207 + $0x3d0] sm:$0xff]
        %v9331 = vld [vmem:[%s9207 + $0x3d8] sm:$0xff]
        %v9332 = vld [vmem:[%s9207 + $0x3e0] sm:$0xff]
        %v9333 = vld [vmem:[%s9207 + $0x3e8] sm:$0xff]
        %v9334 = vld [vmem:[%s9207 + $0x3f0] sm:$0xff]
        %v9335 = vld [vmem:[%s9207 + $0x3f8] sm:$0xff]
        %v9336 = vunpack.c.l.b16 %v9152
        %v9337 = vunpack.c.h.b16 %v9152
        %v9338 = vunpack.c.l.b16 %v9170
        %v9339 = vunpack.c.h.b16 %v9170
        %v9340 = vunpack.c.l.b16 %v9188
        %v9341 = vunpack.c.h.b16 %v9188
        %v9342 = vunpack.c.l.b16 %v9206
        %v9343 = vunpack.c.h.b16 %v9206
        %v9344 = vpack.c.b16 %v9340, %v9336
        %v9345 = vpack.c.b16 %v9341, %v9337
        %v9346 = vpack.c.b16 %v9342, %v9338
        %v9347 = vpack.c.b16 %v9343, %v9339
        %v9480 = vunpack.c.l.b16 %v9208
        %v9481 = vunpack.c.h.b16 %v9208
        %v9482 = vunpack.c.l.b16 %v9209
        %v9483 = vunpack.c.h.b16 %v9209
        %v9484 = vunpack.c.l.b16 %v9210
        %v9485 = vunpack.c.h.b16 %v9210
        %v9486 = vunpack.c.l.b16 %v9211
        %v9487 = vunpack.c.h.b16 %v9211
        %v9488 = vunpack.c.l.b16 %v9212
        %v9489 = vunpack.c.h.b16 %v9212
        %v9490 = vunpack.c.l.b16 %v9213
        %v9491 = vunpack.c.h.b16 %v9213
        %v9492 = vunpack.c.l.b16 %v9214
        %v9493 = vunpack.c.h.b16 %v9214
        %v9494 = vunpack.c.l.b16 %v9215
        %v9495 = vunpack.c.h.b16 %v9215
        %v9496 = vunpack.c.l.b16 %v9216
        %v9497 = vunpack.c.h.b16 %v9216
        %v9498 = vunpack.c.l.b16 %v9217
        %v9499 = vunpack.c.h.b16 %v9217
        %v9500 = vunpack.c.l.b16 %v9218
        %v9501 = vunpack.c.h.b16 %v9218
        %v9502 = vunpack.c.l.b16 %v9219
        %v9503 = vunpack.c.h.b16 %v9219
        %v9504 = vunpack.c.l.b16 %v9220
        %v9505 = vunpack.c.h.b16 %v9220
        %v9506 = vunpack.c.l.b16 %v9221
        %v9507 = vunpack.c.h.b16 %v9221
        %v9508 = vunpack.c.l.b16 %v9222
        %v9509 = vunpack.c.h.b16 %v9222
        %v9510 = vunpack.c.l.b16 %v9223
        %v9511 = vunpack.c.h.b16 %v9223
        %v9512 = vunpack.c.l.b16 %v9224
        %v9513 = vunpack.c.h.b16 %v9224
        %v9514 = vunpack.c.l.b16 %v9225
        %v9515 = vunpack.c.h.b16 %v9225
        %v9516 = vunpack.c.l.b16 %v9226
        %v9517 = vunpack.c.h.b16 %v9226
        %v9518 = vunpack.c.l.b16 %v9227
        %v9519 = vunpack.c.h.b16 %v9227
        %v9520 = vunpack.c.l.b16 %v9228
        %v9521 = vunpack.c.h.b16 %v9228
        %v9522 = vunpack.c.l.b16 %v9229
        %v9523 = vunpack.c.h.b16 %v9229
        %v9524 = vunpack.c.l.b16 %v9230
        %v9525 = vunpack.c.h.b16 %v9230
        %v9526 = vunpack.c.l.b16 %v9231
        %v9527 = vunpack.c.h.b16 %v9231
        %v9528 = vunpack.c.l.b16 %v9232
        %v9529 = vunpack.c.h.b16 %v9232
        %v9530 = vunpack.c.l.b16 %v9233
        %v9531 = vunpack.c.h.b16 %v9233
        %v9532 = vunpack.c.l.b16 %v9234
        %v9533 = vunpack.c.h.b16 %v9234
        %v9534 = vunpack.c.l.b16 %v9235
        %v9535 = vunpack.c.h.b16 %v9235
        %v9536 = vunpack.c.l.b16 %v9236
        %v9537 = vunpack.c.h.b16 %v9236
        %v9538 = vunpack.c.l.b16 %v9237
        %v9539 = vunpack.c.h.b16 %v9237
        %v9540 = vunpack.c.l.b16 %v9238
        %v9541 = vunpack.c.h.b16 %v9238
        %v9542 = vunpack.c.l.b16 %v9239
        %v9543 = vunpack.c.h.b16 %v9239
        %v9544 = vunpack.c.l.b16 %v9240
        %v9545 = vunpack.c.h.b16 %v9240
        %v9546 = vunpack.c.l.b16 %v9241
        %v9547 = vunpack.c.h.b16 %v9241
        %v9548 = vunpack.c.l.b16 %v9242
        %v9549 = vunpack.c.h.b16 %v9242
        %v9550 = vunpack.c.l.b16 %v9243
        %v9551 = vunpack.c.h.b16 %v9243
        %v9552 = vunpack.c.l.b16 %v9244
        %v9553 = vunpack.c.h.b16 %v9244
        %v9554 = vunpack.c.l.b16 %v9245
        %v9555 = vunpack.c.h.b16 %v9245
        %v9556 = vunpack.c.l.b16 %v9246
        %v9557 = vunpack.c.h.b16 %v9246
        %v9558 = vunpack.c.l.b16 %v9247
        %v9559 = vunpack.c.h.b16 %v9247
        %v9560 = vunpack.c.l.b16 %v9248
        %v9561 = vunpack.c.h.b16 %v9248
        %v9562 = vunpack.c.l.b16 %v9249
        %v9563 = vunpack.c.h.b16 %v9249
        %v9564 = vunpack.c.l.b16 %v9250
        %v9565 = vunpack.c.h.b16 %v9250
        %v9566 = vunpack.c.l.b16 %v9251
        %v9567 = vunpack.c.h.b16 %v9251
        %v9568 = vunpack.c.l.b16 %v9252
        %v9569 = vunpack.c.h.b16 %v9252
        %v9570 = vunpack.c.l.b16 %v9253
        %v9571 = vunpack.c.h.b16 %v9253
        %v9572 = vunpack.c.l.b16 %v9254
        %v9573 = vunpack.c.h.b16 %v9254
        %v9574 = vunpack.c.l.b16 %v9255
        %v9575 = vunpack.c.h.b16 %v9255
        %v9576 = vunpack.c.l.b16 %v9256
        %v9577 = vunpack.c.h.b16 %v9256
        %v9578 = vunpack.c.l.b16 %v9257
        %v9579 = vunpack.c.h.b16 %v9257
        %v9580 = vunpack.c.l.b16 %v9258
        %v9581 = vunpack.c.h.b16 %v9258
        %v9582 = vunpack.c.l.b16 %v9259
        %v9583 = vunpack.c.h.b16 %v9259
        %v9584 = vunpack.c.l.b16 %v9260
        %v9585 = vunpack.c.h.b16 %v9260
        %v9586 = vunpack.c.l.b16 %v9261
        %v9587 = vunpack.c.h.b16 %v9261
        %v9588 = vunpack.c.l.b16 %v9262
        %v9589 = vunpack.c.h.b16 %v9262
        %v9590 = vunpack.c.l.b16 %v9263
        %v9591 = vunpack.c.h.b16 %v9263
        %v9592 = vunpack.c.l.b16 %v9264
        %v9593 = vunpack.c.h.b16 %v9264
        %v9594 = vunpack.c.l.b16 %v9265
        %v9595 = vunpack.c.h.b16 %v9265
        %v9596 = vunpack.c.l.b16 %v9266
        %v9597 = vunpack.c.h.b16 %v9266
        %v9598 = vunpack.c.l.b16 %v9267
        %v9599 = vunpack.c.h.b16 %v9267
        %v9600 = vunpack.c.l.b16 %v9268
        %v9601 = vunpack.c.h.b16 %v9268
        %v9602 = vunpack.c.l.b16 %v9269
        %v9603 = vunpack.c.h.b16 %v9269
        %v9604 = vunpack.c.l.b16 %v9270
        %v9605 = vunpack.c.h.b16 %v9270
        %v9606 = vunpack.c.l.b16 %v9271
        %v9607 = vunpack.c.h.b16 %v9271
        %v9608 = vunpack.c.l.b16 %v9272
        %v9609 = vunpack.c.h.b16 %v9272
        %v9610 = vunpack.c.l.b16 %v9273
        %v9611 = vunpack.c.h.b16 %v9273
        %v9612 = vunpack.c.l.b16 %v9274
        %v9613 = vunpack.c.h.b16 %v9274
        %v9614 = vunpack.c.l.b16 %v9275
        %v9615 = vunpack.c.h.b16 %v9275
        %v9616 = vunpack.c.l.b16 %v9276
        %v9617 = vunpack.c.h.b16 %v9276
        %v9618 = vunpack.c.l.b16 %v9277
        %v9619 = vunpack.c.h.b16 %v9277
        %v9620 = vunpack.c.l.b16 %v9278
        %v9621 = vunpack.c.h.b16 %v9278
        %v9622 = vunpack.c.l.b16 %v9279
        %v9623 = vunpack.c.h.b16 %v9279
        %v9624 = vunpack.c.l.b16 %v9280
        %v9625 = vunpack.c.h.b16 %v9280
        %v9626 = vunpack.c.l.b16 %v9281
        %v9627 = vunpack.c.h.b16 %v9281
        %v9628 = vunpack.c.l.b16 %v9282
        %v9629 = vunpack.c.h.b16 %v9282
        %v9630 = vunpack.c.l.b16 %v9283
        %v9631 = vunpack.c.h.b16 %v9283
        %v9632 = vunpack.c.l.b16 %v9284
        %v9633 = vunpack.c.h.b16 %v9284
        %v9634 = vunpack.c.l.b16 %v9285
        %v9635 = vunpack.c.h.b16 %v9285
        %v9636 = vunpack.c.l.b16 %v9286
        %v9637 = vunpack.c.h.b16 %v9286
        %v9638 = vunpack.c.l.b16 %v9287
        %v9639 = vunpack.c.h.b16 %v9287
        %v9640 = vunpack.c.l.b16 %v9288
        %v9641 = vunpack.c.h.b16 %v9288
        %v9642 = vunpack.c.l.b16 %v9289
        %v9643 = vunpack.c.h.b16 %v9289
        %v9644 = vunpack.c.l.b16 %v9290
        %v9645 = vunpack.c.h.b16 %v9290
        %v9646 = vunpack.c.l.b16 %v9291
        %v9647 = vunpack.c.h.b16 %v9291
        %v9648 = vunpack.c.l.b16 %v9292
        %v9649 = vunpack.c.h.b16 %v9292
        %v9650 = vunpack.c.l.b16 %v9293
        %v9651 = vunpack.c.h.b16 %v9293
        %v9652 = vunpack.c.l.b16 %v9294
        %v9653 = vunpack.c.h.b16 %v9294
        %v9654 = vunpack.c.l.b16 %v9295
        %v9655 = vunpack.c.h.b16 %v9295
        %v9656 = vunpack.c.l.b16 %v9296
        %v9657 = vunpack.c.h.b16 %v9296
        %v9658 = vunpack.c.l.b16 %v9297
        %v9659 = vunpack.c.h.b16 %v9297
        %v9660 = vunpack.c.l.b16 %v9298
        %v9661 = vunpack.c.h.b16 %v9298
        %v9662 = vunpack.c.l.b16 %v9299
        %v9663 = vunpack.c.h.b16 %v9299
        %v9664 = vunpack.c.l.b16 %v9300
        %v9665 = vunpack.c.h.b16 %v9300
        %v9666 = vunpack.c.l.b16 %v9301
        %v9667 = vunpack.c.h.b16 %v9301
        %v9668 = vunpack.c.l.b16 %v9302
        %v9669 = vunpack.c.h.b16 %v9302
        %v9670 = vunpack.c.l.b16 %v9303
        %v9671 = vunpack.c.h.b16 %v9303
        %v9672 = vunpack.c.l.b16 %v9304
        %v9673 = vunpack.c.h.b16 %v9304
        %v9674 = vunpack.c.l.b16 %v9305
        %v9675 = vunpack.c.h.b16 %v9305
        %v9676 = vunpack.c.l.b16 %v9306
        %v9677 = vunpack.c.h.b16 %v9306
        %v9678 = vunpack.c.l.b16 %v9307
        %v9679 = vunpack.c.h.b16 %v9307
        %v9680 = vunpack.c.l.b16 %v9308
        %v9681 = vunpack.c.h.b16 %v9308
        %v9682 = vunpack.c.l.b16 %v9309
        %v9683 = vunpack.c.h.b16 %v9309
        %v9684 = vunpack.c.l.b16 %v9310
        %v9685 = vunpack.c.h.b16 %v9310
        %v9686 = vunpack.c.l.b16 %v9311
        %v9687 = vunpack.c.h.b16 %v9311
        %v9688 = vunpack.c.l.b16 %v9312
        %v9689 = vunpack.c.h.b16 %v9312
        %v9690 = vunpack.c.l.b16 %v9313
        %v9691 = vunpack.c.h.b16 %v9313
        %v9692 = vunpack.c.l.b16 %v9314
        %v9693 = vunpack.c.h.b16 %v9314
        %v9694 = vunpack.c.l.b16 %v9315
        %v9695 = vunpack.c.h.b16 %v9315
        %v9696 = vunpack.c.l.b16 %v9316
        %v9697 = vunpack.c.h.b16 %v9316
        %v9698 = vunpack.c.l.b16 %v9317
        %v9699 = vunpack.c.h.b16 %v9317
        %v9700 = vunpack.c.l.b16 %v9318
        %v9701 = vunpack.c.h.b16 %v9318
        %v9702 = vunpack.c.l.b16 %v9319
        %v9703 = vunpack.c.h.b16 %v9319
        %v9704 = vunpack.c.l.b16 %v9320
        %v9705 = vunpack.c.h.b16 %v9320
        %v9706 = vunpack.c.l.b16 %v9321
        %v9707 = vunpack.c.h.b16 %v9321
        %v9708 = vunpack.c.l.b16 %v9322
        %v9709 = vunpack.c.h.b16 %v9322
        %v9710 = vunpack.c.l.b16 %v9323
        %v9711 = vunpack.c.h.b16 %v9323
        %v9712 = vunpack.c.l.b16 %v9324
        %v9713 = vunpack.c.h.b16 %v9324
        %v9714 = vunpack.c.l.b16 %v9325
        %v9715 = vunpack.c.h.b16 %v9325
        %v9716 = vunpack.c.l.b16 %v9326
        %v9717 = vunpack.c.h.b16 %v9326
        %v9718 = vunpack.c.l.b16 %v9327
        %v9719 = vunpack.c.h.b16 %v9327
        %v9720 = vunpack.c.l.b16 %v9328
        %v9721 = vunpack.c.h.b16 %v9328
        %v9722 = vunpack.c.l.b16 %v9329
        %v9723 = vunpack.c.h.b16 %v9329
        %v9724 = vunpack.c.l.b16 %v9330
        %v9725 = vunpack.c.h.b16 %v9330
        %v9726 = vunpack.c.l.b16 %v9331
        %v9727 = vunpack.c.h.b16 %v9331
        %v9728 = vunpack.c.l.b16 %v9332
        %v9729 = vunpack.c.h.b16 %v9332
        %v9730 = vunpack.c.l.b16 %v9333
        %v9731 = vunpack.c.h.b16 %v9333
        %v9732 = vunpack.c.l.b16 %v9334
        %v9733 = vunpack.c.h.b16 %v9334
        %v9734 = vunpack.c.l.b16 %v9335
        %v9735 = vunpack.c.h.b16 %v9335
        %v9736 = vpack.c.b16 %v9484, %v9480
        %v9737 = vpack.c.b16 %v9485, %v9481
        %v9738 = vpack.c.b16 %v9486, %v9482
        %v9739 = vpack.c.b16 %v9487, %v9483
        %v9740 = vpack.c.b16 %v9492, %v9488
        %v9741 = vpack.c.b16 %v9493, %v9489
        %v9742 = vpack.c.b16 %v9494, %v9490
        %v9743 = vpack.c.b16 %v9495, %v9491
        %v9744 = vpack.c.b16 %v9500, %v9496
        %v9745 = vpack.c.b16 %v9501, %v9497
        %v9746 = vpack.c.b16 %v9502, %v9498
        %v9747 = vpack.c.b16 %v9503, %v9499
        %v9748 = vpack.c.b16 %v9508, %v9504
        %v9749 = vpack.c.b16 %v9509, %v9505
        %v9750 = vpack.c.b16 %v9510, %v9506
        %v9751 = vpack.c.b16 %v9511, %v9507
        %v9752 = vpack.c.b16 %v9516, %v9512
        %v9753 = vpack.c.b16 %v9517, %v9513
        %v9754 = vpack.c.b16 %v9518, %v9514
        %v9755 = vpack.c.b16 %v9519, %v9515
        %v9756 = vpack.c.b16 %v9524, %v9520
        %v9757 = vpack.c.b16 %v9525, %v9521
        %v9758 = vpack.c.b16 %v9526, %v9522
        %v9759 = vpack.c.b16 %v9527, %v9523
        %v9760 = vpack.c.b16 %v9532, %v9528
        %v9761 = vpack.c.b16 %v9533, %v9529
        %v9762 = vpack.c.b16 %v9534, %v9530
        %v9763 = vpack.c.b16 %v9535, %v9531
        %v9764 = vpack.c.b16 %v9540, %v9536
        %v9765 = vpack.c.b16 %v9541, %v9537
        %v9766 = vpack.c.b16 %v9542, %v9538
        %v9767 = vpack.c.b16 %v9543, %v9539
        %v9768 = vpack.c.b16 %v9548, %v9544
        %v9769 = vpack.c.b16 %v9549, %v9545
        %v9770 = vpack.c.b16 %v9550, %v9546
        %v9771 = vpack.c.b16 %v9551, %v9547
        %v9772 = vpack.c.b16 %v9556, %v9552
        %v9773 = vpack.c.b16 %v9557, %v9553
        %v9774 = vpack.c.b16 %v9558, %v9554
        %v9775 = vpack.c.b16 %v9559, %v9555
        %v9776 = vpack.c.b16 %v9564, %v9560
        %v9777 = vpack.c.b16 %v9565, %v9561
        %v9778 = vpack.c.b16 %v9566, %v9562
        %v9779 = vpack.c.b16 %v9567, %v9563
        %v9780 = vpack.c.b16 %v9572, %v9568
        %v9781 = vpack.c.b16 %v9573, %v9569
        %v9782 = vpack.c.b16 %v9574, %v9570
        %v9783 = vpack.c.b16 %v9575, %v9571
        %v9784 = vpack.c.b16 %v9580, %v9576
        %v9785 = vpack.c.b16 %v9581, %v9577
        %v9786 = vpack.c.b16 %v9582, %v9578
        %v9787 = vpack.c.b16 %v9583, %v9579
        %v9788 = vpack.c.b16 %v9588, %v9584
        %v9789 = vpack.c.b16 %v9589, %v9585
        %v9790 = vpack.c.b16 %v9590, %v9586
        %v9791 = vpack.c.b16 %v9591, %v9587
        %v9792 = vpack.c.b16 %v9596, %v9592
        %v9793 = vpack.c.b16 %v9597, %v9593
        %v9794 = vpack.c.b16 %v9598, %v9594
        %v9795 = vpack.c.b16 %v9599, %v9595
        %v9796 = vpack.c.b16 %v9604, %v9600
        %v9797 = vpack.c.b16 %v9605, %v9601
        %v9798 = vpack.c.b16 %v9606, %v9602
        %v9799 = vpack.c.b16 %v9607, %v9603
        %v9800 = vpack.c.b16 %v9612, %v9608
        %v9801 = vpack.c.b16 %v9613, %v9609
        %v9802 = vpack.c.b16 %v9614, %v9610
        %v9803 = vpack.c.b16 %v9615, %v9611
        %v9804 = vpack.c.b16 %v9620, %v9616
        %v9805 = vpack.c.b16 %v9621, %v9617
        %v9806 = vpack.c.b16 %v9622, %v9618
        %v9807 = vpack.c.b16 %v9623, %v9619
        %v9808 = vpack.c.b16 %v9628, %v9624
        %v9809 = vpack.c.b16 %v9629, %v9625
        %v9810 = vpack.c.b16 %v9630, %v9626
        %v9811 = vpack.c.b16 %v9631, %v9627
        %v9812 = vpack.c.b16 %v9636, %v9632
        %v9813 = vpack.c.b16 %v9637, %v9633
        %v9814 = vpack.c.b16 %v9638, %v9634
        %v9815 = vpack.c.b16 %v9639, %v9635
        %v9816 = vpack.c.b16 %v9644, %v9640
        %v9817 = vpack.c.b16 %v9645, %v9641
        %v9818 = vpack.c.b16 %v9646, %v9642
        %v9819 = vpack.c.b16 %v9647, %v9643
        %v9820 = vpack.c.b16 %v9652, %v9648
        %v9821 = vpack.c.b16 %v9653, %v9649
        %v9822 = vpack.c.b16 %v9654, %v9650
        %v9823 = vpack.c.b16 %v9655, %v9651
        %v9824 = vpack.c.b16 %v9660, %v9656
        %v9825 = vpack.c.b16 %v9661, %v9657
        %v9826 = vpack.c.b16 %v9662, %v9658
        %v9827 = vpack.c.b16 %v9663, %v9659
        %v9828 = vpack.c.b16 %v9668, %v9664
        %v9829 = vpack.c.b16 %v9669, %v9665
        %v9830 = vpack.c.b16 %v9670, %v9666
        %v9831 = vpack.c.b16 %v9671, %v9667
        %v9832 = vpack.c.b16 %v9676, %v9672
        %v9833 = vpack.c.b16 %v9677, %v9673
        %v9834 = vpack.c.b16 %v9678, %v9674
        %v9835 = vpack.c.b16 %v9679, %v9675
        %v9836 = vpack.c.b16 %v9684, %v9680
        %v9837 = vpack.c.b16 %v9685, %v9681
        %v9838 = vpack.c.b16 %v9686, %v9682
        %v9839 = vpack.c.b16 %v9687, %v9683
        %v9840 = vpack.c.b16 %v9692, %v9688
        %v9841 = vpack.c.b16 %v9693, %v9689
        %v9842 = vpack.c.b16 %v9694, %v9690
        %v9843 = vpack.c.b16 %v9695, %v9691
        %v9844 = vpack.c.b16 %v9700, %v9696
        %v9845 = vpack.c.b16 %v9701, %v9697
        %v9846 = vpack.c.b16 %v9702, %v9698
        %v9847 = vpack.c.b16 %v9703, %v9699
        %v9848 = vpack.c.b16 %v9708, %v9704
        %v9849 = vpack.c.b16 %v9709, %v9705
        %v9850 = vpack.c.b16 %v9710, %v9706
        %v9851 = vpack.c.b16 %v9711, %v9707
        %v9852 = vpack.c.b16 %v9716, %v9712
        %v9853 = vpack.c.b16 %v9717, %v9713
        %v9854 = vpack.c.b16 %v9718, %v9714
        %v9855 = vpack.c.b16 %v9719, %v9715
        %v9856 = vpack.c.b16 %v9724, %v9720
        %v9857 = vpack.c.b16 %v9725, %v9721
        %v9858 = vpack.c.b16 %v9726, %v9722
        %v9859 = vpack.c.b16 %v9727, %v9723
        %v9860 = vpack.c.b16 %v9732, %v9728
        %v9861 = vpack.c.b16 %v9733, %v9729
        %v9862 = vpack.c.b16 %v9734, %v9730
        %v9863 = vpack.c.b16 %v9735, %v9731
        %9992 = vmatprep.subr.bf16.mxu0 %v9765
        %9993 = vmatpush1.bf16.msra.mxu0 %v9764
        %9994 = vmatprep.subr.bf16.mxu0 %v9761
        %9995 = vmatpush1.bf16.msra.mxu0 %v9760
        %9996 = vmatprep.subr.bf16.mxu0 %v9757
        %9997 = vmatpush1.bf16.msra.mxu0 %v9756
        %9998 = vmatprep.subr.bf16.mxu0 %v9753
        %9999 = vmatpush1.bf16.msra.mxu0 %v9752
        %10000 = vmatprep.subr.bf16.mxu0 %v9749
        %10001 = vmatpush1.bf16.msra.mxu0 %v9748
        %10002 = vmatprep.subr.bf16.mxu0 %v9745
        %10003 = vmatpush1.bf16.msra.mxu0 %v9744
        %10004 = vmatprep.subr.bf16.mxu0 %v9741
        %10005 = vmatpush1.bf16.msra.mxu0 %v9740
        %10006 = vmatprep.subr.bf16.mxu0 %v9737
        %10007 = vmatpush1.bf16.msra.mxu0 %v9736
        %10008 = vmatprep.subr.bf16.mxu0 %v9797
        %10009 = vmatpush2.bf16.msra.mxu0 %v9796
        %10010 = vmatprep.subr.bf16.mxu0 %v9793
        %10011 = vmatpush2.bf16.msra.mxu0 %v9792
        %10012 = vmatprep.subr.bf16.mxu0 %v9789
        %10013 = vmatpush2.bf16.msra.mxu0 %v9788
        %10014 = vmatprep.subr.bf16.mxu0 %v9785
        %10015 = vmatpush2.bf16.msra.mxu0 %v9784
        %10016 = vmatprep.subr.bf16.mxu0 %v9781
        %10017 = vmatpush2.bf16.msra.mxu0 %v9780
        %10018 = vmatprep.subr.bf16.mxu0 %v9777
        %10019 = vmatpush2.bf16.msra.mxu0 %v9776
        %10020 = vmatprep.subr.bf16.mxu0 %v9773
        %10021 = vmatpush2.bf16.msra.mxu0 %v9772
        %10022 = vmatprep.subr.bf16.mxu0 %v9769
        %10023 = vmatpush2.bf16.msra.mxu0 %v9768
        %10024 = vmatprep.mubr.bf16.mxu0 %v9345
        %10025 = vmatmul.mubr.bf16.gmra.mxu0 %v9344
        %v10026 = vpop.f32.mrf.mxu0
        %v10027 = vadd.f32 0.0, %v10026
        %v10028 = vpop.f32.mrf.mxu0
        %v10029 = vadd.f32 0.0, %v10028
        %v10030 = vpop.f32.mrf.mxu0
        %v10031 = vadd.f32 0.0, %v10030
        %v10032 = vpop.f32.mrf.mxu0
        %v10033 = vadd.f32 0.0, %v10032
        %10034 = vdwg.mxu0
        %10035 = vmatprep.subr.bf16.mxu0 %v9829
        %10036 = vmatpush1.bf16.msra.mxu0 %v9828
        %10037 = vmatprep.subr.bf16.mxu0 %v9825
        %10038 = vmatpush1.bf16.msra.mxu0 %v9824
        %10039 = vmatprep.subr.bf16.mxu0 %v9821
        %10040 = vmatpush1.bf16.msra.mxu0 %v9820
        %10041 = vmatprep.subr.bf16.mxu0 %v9817
        %10042 = vmatpush1.bf16.msra.mxu0 %v9816
        %10043 = vmatprep.subr.bf16.mxu0 %v9813
        %10044 = vmatpush1.bf16.msra.mxu0 %v9812
        %10045 = vmatprep.subr.bf16.mxu0 %v9809
        %10046 = vmatpush1.bf16.msra.mxu0 %v9808
        %10047 = vmatprep.subr.bf16.mxu0 %v9805
        %10048 = vmatpush1.bf16.msra.mxu0 %v9804
        %10049 = vmatprep.subr.bf16.mxu0 %v9801
        %10050 = vmatpush1.bf16.msra.mxu0 %v9800
        %10051 = vmatprep.subr.bf16.mxu0 %v9861
        %10052 = vmatpush2.bf16.msra.mxu0 %v9860
        %10053 = vmatprep.subr.bf16.mxu0 %v9857
        %10054 = vmatpush2.bf16.msra.mxu0 %v9856
        %10055 = vmatprep.subr.bf16.mxu0 %v9853
        %10056 = vmatpush2.bf16.msra.mxu0 %v9852
        %10057 = vmatprep.subr.bf16.mxu0 %v9849
        %10058 = vmatpush2.bf16.msra.mxu0 %v9848
        %10059 = vmatprep.subr.bf16.mxu0 %v9845
        %10060 = vmatpush2.bf16.msra.mxu0 %v9844
        %10061 = vmatprep.subr.bf16.mxu0 %v9841
        %10062 = vmatpush2.bf16.msra.mxu0 %v9840
        %10063 = vmatprep.subr.bf16.mxu0 %v9837
        %10064 = vmatpush2.bf16.msra.mxu0 %v9836
        %10065 = vmatprep.subr.bf16.mxu0 %v9833
        %10066 = vmatpush2.bf16.msra.mxu0 %v9832
        %10067 = vmatprep.mubr.bf16.mxu0 %v9347
        %10068 = vmatmul.mubr.bf16.gmra.mxu0 %v9346
        %v10069 = vpop.f32.mrf.mxu0
        %v10070 = vadd.f32 %v10027, %v10069
        %v10071 = vpop.f32.mrf.mxu0
        %v10072 = vadd.f32 %v10029, %v10071
        %v10073 = vpop.f32.mrf.mxu0
        %v10074 = vadd.f32 %v10031, %v10073
        %v10075 = vpop.f32.mrf.mxu0
        %v10076 = vadd.f32 %v10033, %v10075
        %10077 = vdwg.mxu0
        %10078 = vmatprep.subr.bf16.mxu0 %v9767
        %10079 = vmatpush1.bf16.msra.mxu0 %v9766
        %10080 = vmatprep.subr.bf16.mxu0 %v9763
        %10081 = vmatpush1.bf16.msra.mxu0 %v9762
        %10082 = vmatprep.subr.bf16.mxu0 %v9759
        %10083 = vmatpush1.bf16.msra.mxu0 %v9758
        %10084 = vmatprep.subr.bf16.mxu0 %v9755
        %10085 = vmatpush1.bf16.msra.mxu0 %v9754
        %10086 = vmatprep.subr.bf16.mxu0 %v9751
        %10087 = vmatpush1.bf16.msra.mxu0 %v9750
        %10088 = vmatprep.subr.bf16.mxu0 %v9747
        %10089 = vmatpush1.bf16.msra.mxu0 %v9746
        %10090 = vmatprep.subr.bf16.mxu0 %v9743
        %10091 = vmatpush1.bf16.msra.mxu0 %v9742
        %10092 = vmatprep.subr.bf16.mxu0 %v9739
        %10093 = vmatpush1.bf16.msra.mxu0 %v9738
        %10094 = vmatprep.subr.bf16.mxu0 %v9799
        %10095 = vmatpush2.bf16.msra.mxu0 %v9798
        %10096 = vmatprep.subr.bf16.mxu0 %v9795
        %10097 = vmatpush2.bf16.msra.mxu0 %v9794
        %10098 = vmatprep.subr.bf16.mxu0 %v9791
        %10099 = vmatpush2.bf16.msra.mxu0 %v9790
        %10100 = vmatprep.subr.bf16.mxu0 %v9787
        %10101 = vmatpush2.bf16.msra.mxu0 %v9786
        %10102 = vmatprep.subr.bf16.mxu0 %v9783
        %10103 = vmatpush2.bf16.msra.mxu0 %v9782
        %10104 = vmatprep.subr.bf16.mxu0 %v9779
        %10105 = vmatpush2.bf16.msra.mxu0 %v9778
        %10106 = vmatprep.subr.bf16.mxu0 %v9775
        %10107 = vmatpush2.bf16.msra.mxu0 %v9774
        %10108 = vmatprep.subr.bf16.mxu0 %v9771
        %10109 = vmatpush2.bf16.msra.mxu0 %v9770
        %10110 = vmatprep.mubr.bf16.mxu0 %v9345
        %10111 = vmatmul.mubr.bf16.gmra.mxu0 %v9344
        %v10112 = vpop.f32.mrf.mxu0
        %v10113 = vadd.f32 0.0, %v10112
        %v10114 = vpop.f32.mrf.mxu0
        %v10115 = vadd.f32 0.0, %v10114
        %v10116 = vpop.f32.mrf.mxu0
        %v10117 = vadd.f32 0.0, %v10116
        %v10118 = vpop.f32.mrf.mxu0
        %v10119 = vadd.f32 0.0, %v10118
        %10120 = vdwg.mxu0
        %10121 = vmatprep.subr.bf16.mxu0 %v9831
        %10122 = vmatpush1.bf16.msra.mxu0 %v9830
        %10123 = vmatprep.subr.bf16.mxu0 %v9827
        %10124 = vmatpush1.bf16.msra.mxu0 %v9826
        %10125 = vmatprep.subr.bf16.mxu0 %v9823
        %10126 = vmatpush1.bf16.msra.mxu0 %v9822
        %10127 = vmatprep.subr.bf16.mxu0 %v9819
        %10128 = vmatpush1.bf16.msra.mxu0 %v9818
        %10129 = vmatprep.subr.bf16.mxu0 %v9815
        %10130 = vmatpush1.bf16.msra.mxu0 %v9814
        %10131 = vmatprep.subr.bf16.mxu0 %v9811
        %10132 = vmatpush1.bf16.msra.mxu0 %v9810
        %10133 = vmatprep.subr.bf16.mxu0 %v9807
        %10134 = vmatpush1.bf16.msra.mxu0 %v9806
        %10135 = vmatprep.subr.bf16.mxu0 %v9803
        %10136 = vmatpush1.bf16.msra.mxu0 %v9802
        %10137 = vmatprep.subr.bf16.mxu0 %v9863
        %10138 = vmatpush2.bf16.msra.mxu0 %v9862
        %10139 = vmatprep.subr.bf16.mxu0 %v9859
        %10140 = vmatpush2.bf16.msra.mxu0 %v9858
        %10141 = vmatprep.subr.bf16.mxu0 %v9855
        %10142 = vmatpush2.bf16.msra.mxu0 %v9854
        %10143 = vmatprep.subr.bf16.mxu0 %v9851
        %10144 = vmatpush2.bf16.msra.mxu0 %v9850
        %10145 = vmatprep.subr.bf16.mxu0 %v9847
        %10146 = vmatpush2.bf16.msra.mxu0 %v9846
        %10147 = vmatprep.subr.bf16.mxu0 %v9843
        %10148 = vmatpush2.bf16.msra.mxu0 %v9842
        %10149 = vmatprep.subr.bf16.mxu0 %v9839
        %10150 = vmatpush2.bf16.msra.mxu0 %v9838
        %10151 = vmatprep.subr.bf16.mxu0 %v9835
        %10152 = vmatpush2.bf16.msra.mxu0 %v9834
        %10153 = vmatprep.mubr.bf16.mxu0 %v9347
        %10154 = vmatmul.mubr.bf16.gmra.mxu0 %v9346
        %v10155 = vpop.f32.mrf.mxu0
        %v10156 = vadd.f32 %v10113, %v10155
        %v10157 = vpop.f32.mrf.mxu0
        %v10158 = vadd.f32 %v10115, %v10157
        %v10159 = vpop.f32.mrf.mxu0
        %v10160 = vadd.f32 %v10117, %v10159
        %v10161 = vpop.f32.mrf.mxu0
        %v10162 = vadd.f32 %v10119, %v10161
        %10163 = vdwg.mxu0
        %v10164 = vadd.f32 %v9120, %v10070
        %v10165 = vadd.f32 %v9121, %v10072
        %v10166 = vadd.f32 %v9122, %v10156
        %v10167 = vadd.f32 %v9123, %v10158
        %v10168 = vadd.f32 %v9124, %v10074
        %v10169 = vadd.f32 %v9125, %v10076
        %v10170 = vadd.f32 %v9126, %v10160
        %v10171 = vadd.f32 %v9127, %v10162
        %v10172 = vld [vmem:[#allocation2] sm:$0x88]
        %v10173 = vld [vmem:[#allocation2 + $0x8] sm:$0x88]
        %v10174 = vld [vmem:[#allocation2 + $0x30] sm:$0x88]
        %v10175 = vld [vmem:[#allocation2 + $0x38] sm:$0x88]
        %vm10184 = vcmask 1040384
        %vm10185 = vcmask 1044484
        %vm10186 = vmor %vm10184, %vm10185
        %v10187 = vrot.slane %v10172, 7
        %v10188 = vrot.slane %v10187, 4
        %v10189 = vrot.slane %v9128, 7
        %v10190 = vsel %vm10186, %v10188, %v10189
        %v10191 = vrot.slane %v10173, 7
        %v10192 = vrot.slane %v10191, 4
        %v10193 = vrot.slane %v9129, 7
        %v10194 = vsel %vm10186, %v10192, %v10193
        %v10195 = vrot.slane %v10174, 7
        %v10196 = vrot.slane %v10195, 4
        %v10197 = vrot.slane %v9130, 7
        %v10198 = vsel %vm10186, %v10196, %v10197
        %v10199 = vrot.slane %v10175, 7
        %v10200 = vrot.slane %v10199, 4
        %v10201 = vrot.slane %v9131, 7
        %v10202 = vsel %vm10186, %v10200, %v10201
        %s10203 = scalar_lea.vmem [#allocation9], 4096
        %v10204 = vld [vmem:[%s10203] sm:$0xff]
        %v10205 = vld [vmem:[%s10203 + $0x8] sm:$0xff]
        %v10206 = vld [vmem:[%s10203 + $0x10] sm:$0xff]
        %v10207 = vld [vmem:[%s10203 + $0x18] sm:$0xff]
        %v10208 = vld [vmem:[%s10203 + $0x20] sm:$0xff]
        %v10209 = vld [vmem:[%s10203 + $0x28] sm:$0xff]
        %v10210 = vld [vmem:[%s10203 + $0x30] sm:$0xff]
        %v10211 = vld [vmem:[%s10203 + $0x38] sm:$0xff]
        %v10212 = vld [vmem:[%s10203 + $0x40] sm:$0xff]
        %v10213 = vld [vmem:[%s10203 + $0x48] sm:$0xff]
        %v10214 = vld [vmem:[%s10203 + $0x50] sm:$0xff]
        %v10215 = vld [vmem:[%s10203 + $0x58] sm:$0xff]
        %v10216 = vld [vmem:[%s10203 + $0x60] sm:$0xff]
        %v10217 = vld [vmem:[%s10203 + $0x68] sm:$0xff]
        %v10218 = vld [vmem:[%s10203 + $0x70] sm:$0xff]
        %v10219 = vld [vmem:[%s10203 + $0x78] sm:$0xff]
        %v10220 = vld [vmem:[%s10203 + $0x80] sm:$0xff]
        %v10221 = vld [vmem:[%s10203 + $0x88] sm:$0xff]
        %v10222 = vld [vmem:[%s10203 + $0x90] sm:$0xff]
        %v10223 = vld [vmem:[%s10203 + $0x98] sm:$0xff]
        %v10224 = vld [vmem:[%s10203 + $0xa0] sm:$0xff]
        %v10225 = vld [vmem:[%s10203 + $0xa8] sm:$0xff]
        %v10226 = vld [vmem:[%s10203 + $0xb0] sm:$0xff]
        %v10227 = vld [vmem:[%s10203 + $0xb8] sm:$0xff]
        %v10228 = vld [vmem:[%s10203 + $0xc0] sm:$0xff]
        %v10229 = vld [vmem:[%s10203 + $0xc8] sm:$0xff]
        %v10230 = vld [vmem:[%s10203 + $0xd0] sm:$0xff]
        %v10231 = vld [vmem:[%s10203 + $0xd8] sm:$0xff]
        %v10232 = vld [vmem:[%s10203 + $0xe0] sm:$0xff]
        %v10233 = vld [vmem:[%s10203 + $0xe8] sm:$0xff]
        %v10234 = vld [vmem:[%s10203 + $0xf0] sm:$0xff]
        %v10235 = vld [vmem:[%s10203 + $0xf8] sm:$0xff]
        %v10236 = vld [vmem:[%s10203 + $0x100] sm:$0xff]
        %v10237 = vld [vmem:[%s10203 + $0x108] sm:$0xff]
        %v10238 = vld [vmem:[%s10203 + $0x110] sm:$0xff]
        %v10239 = vld [vmem:[%s10203 + $0x118] sm:$0xff]
        %v10240 = vld [vmem:[%s10203 + $0x120] sm:$0xff]
        %v10241 = vld [vmem:[%s10203 + $0x128] sm:$0xff]
        %v10242 = vld [vmem:[%s10203 + $0x130] sm:$0xff]
        %v10243 = vld [vmem:[%s10203 + $0x138] sm:$0xff]
        %v10244 = vld [vmem:[%s10203 + $0x140] sm:$0xff]
        %v10245 = vld [vmem:[%s10203 + $0x148] sm:$0xff]
        %v10246 = vld [vmem:[%s10203 + $0x150] sm:$0xff]
        %v10247 = vld [vmem:[%s10203 + $0x158] sm:$0xff]
        %v10248 = vld [vmem:[%s10203 + $0x160] sm:$0xff]
        %v10249 = vld [vmem:[%s10203 + $0x168] sm:$0xff]
        %v10250 = vld [vmem:[%s10203 + $0x170] sm:$0xff]
        %v10251 = vld [vmem:[%s10203 + $0x178] sm:$0xff]
        %v10252 = vld [vmem:[%s10203 + $0x180] sm:$0xff]
        %v10253 = vld [vmem:[%s10203 + $0x188] sm:$0xff]
        %v10254 = vld [vmem:[%s10203 + $0x190] sm:$0xff]
        %v10255 = vld [vmem:[%s10203 + $0x198] sm:$0xff]
        %v10256 = vld [vmem:[%s10203 + $0x1a0] sm:$0xff]
        %v10257 = vld [vmem:[%s10203 + $0x1a8] sm:$0xff]
        %v10258 = vld [vmem:[%s10203 + $0x1b0] sm:$0xff]
        %v10259 = vld [vmem:[%s10203 + $0x1b8] sm:$0xff]
        %v10260 = vld [vmem:[%s10203 + $0x1c0] sm:$0xff]
        %v10261 = vld [vmem:[%s10203 + $0x1c8] sm:$0xff]
        %v10262 = vld [vmem:[%s10203 + $0x1d0] sm:$0xff]
        %v10263 = vld [vmem:[%s10203 + $0x1d8] sm:$0xff]
        %v10264 = vld [vmem:[%s10203 + $0x1e0] sm:$0xff]
        %v10265 = vld [vmem:[%s10203 + $0x1e8] sm:$0xff]
        %v10266 = vld [vmem:[%s10203 + $0x1f0] sm:$0xff]
        %v10267 = vld [vmem:[%s10203 + $0x1f8] sm:$0xff]
        %v10268 = vld [vmem:[%s10203 + $0x200] sm:$0xff]
        %v10269 = vld [vmem:[%s10203 + $0x208] sm:$0xff]
        %v10270 = vld [vmem:[%s10203 + $0x210] sm:$0xff]
        %v10271 = vld [vmem:[%s10203 + $0x218] sm:$0xff]
        %v10272 = vld [vmem:[%s10203 + $0x220] sm:$0xff]
        %v10273 = vld [vmem:[%s10203 + $0x228] sm:$0xff]
        %v10274 = vld [vmem:[%s10203 + $0x230] sm:$0xff]
        %v10275 = vld [vmem:[%s10203 + $0x238] sm:$0xff]
        %v10276 = vld [vmem:[%s10203 + $0x240] sm:$0xff]
        %v10277 = vld [vmem:[%s10203 + $0x248] sm:$0xff]
        %v10278 = vld [vmem:[%s10203 + $0x250] sm:$0xff]
        %v10279 = vld [vmem:[%s10203 + $0x258] sm:$0xff]
        %v10280 = vld [vmem:[%s10203 + $0x260] sm:$0xff]
        %v10281 = vld [vmem:[%s10203 + $0x268] sm:$0xff]
        %v10282 = vld [vmem:[%s10203 + $0x270] sm:$0xff]
        %v10283 = vld [vmem:[%s10203 + $0x278] sm:$0xff]
        %v10284 = vld [vmem:[%s10203 + $0x280] sm:$0xff]
        %v10285 = vld [vmem:[%s10203 + $0x288] sm:$0xff]
        %v10286 = vld [vmem:[%s10203 + $0x290] sm:$0xff]
        %v10287 = vld [vmem:[%s10203 + $0x298] sm:$0xff]
        %v10288 = vld [vmem:[%s10203 + $0x2a0] sm:$0xff]
        %v10289 = vld [vmem:[%s10203 + $0x2a8] sm:$0xff]
        %v10290 = vld [vmem:[%s10203 + $0x2b0] sm:$0xff]
        %v10291 = vld [vmem:[%s10203 + $0x2b8] sm:$0xff]
        %v10292 = vld [vmem:[%s10203 + $0x2c0] sm:$0xff]
        %v10293 = vld [vmem:[%s10203 + $0x2c8] sm:$0xff]
        %v10294 = vld [vmem:[%s10203 + $0x2d0] sm:$0xff]
        %v10295 = vld [vmem:[%s10203 + $0x2d8] sm:$0xff]
        %v10296 = vld [vmem:[%s10203 + $0x2e0] sm:$0xff]
        %v10297 = vld [vmem:[%s10203 + $0x2e8] sm:$0xff]
        %v10298 = vld [vmem:[%s10203 + $0x2f0] sm:$0xff]
        %v10299 = vld [vmem:[%s10203 + $0x2f8] sm:$0xff]
        %v10300 = vld [vmem:[%s10203 + $0x300] sm:$0xff]
        %v10301 = vld [vmem:[%s10203 + $0x308] sm:$0xff]
        %v10302 = vld [vmem:[%s10203 + $0x310] sm:$0xff]
        %v10303 = vld [vmem:[%s10203 + $0x318] sm:$0xff]
        %v10304 = vld [vmem:[%s10203 + $0x320] sm:$0xff]
        %v10305 = vld [vmem:[%s10203 + $0x328] sm:$0xff]
        %v10306 = vld [vmem:[%s10203 + $0x330] sm:$0xff]
        %v10307 = vld [vmem:[%s10203 + $0x338] sm:$0xff]
        %v10308 = vld [vmem:[%s10203 + $0x340] sm:$0xff]
        %v10309 = vld [vmem:[%s10203 + $0x348] sm:$0xff]
        %v10310 = vld [vmem:[%s10203 + $0x350] sm:$0xff]
        %v10311 = vld [vmem:[%s10203 + $0x358] sm:$0xff]
        %v10312 = vld [vmem:[%s10203 + $0x360] sm:$0xff]
        %v10313 = vld [vmem:[%s10203 + $0x368] sm:$0xff]
        %v10314 = vld [vmem:[%s10203 + $0x370] sm:$0xff]
        %v10315 = vld [vmem:[%s10203 + $0x378] sm:$0xff]
        %v10316 = vld [vmem:[%s10203 + $0x380] sm:$0xff]
        %v10317 = vld [vmem:[%s10203 + $0x388] sm:$0xff]
        %v10318 = vld [vmem:[%s10203 + $0x390] sm:$0xff]
        %v10319 = vld [vmem:[%s10203 + $0x398] sm:$0xff]
        %v10320 = vld [vmem:[%s10203 + $0x3a0] sm:$0xff]
        %v10321 = vld [vmem:[%s10203 + $0x3a8] sm:$0xff]
        %v10322 = vld [vmem:[%s10203 + $0x3b0] sm:$0xff]
        %v10323 = vld [vmem:[%s10203 + $0x3b8] sm:$0xff]
        %v10324 = vld [vmem:[%s10203 + $0x3c0] sm:$0xff]
        %v10325 = vld [vmem:[%s10203 + $0x3c8] sm:$0xff]
        %v10326 = vld [vmem:[%s10203 + $0x3d0] sm:$0xff]
        %v10327 = vld [vmem:[%s10203 + $0x3d8] sm:$0xff]
        %v10328 = vld [vmem:[%s10203 + $0x3e0] sm:$0xff]
        %v10329 = vld [vmem:[%s10203 + $0x3e8] sm:$0xff]
        %v10330 = vld [vmem:[%s10203 + $0x3f0] sm:$0xff]
        %v10331 = vld [vmem:[%s10203 + $0x3f8] sm:$0xff]
        %v10332 = vunpack.c.l.b16 %v10190
        %v10333 = vunpack.c.h.b16 %v10190
        %v10334 = vunpack.c.l.b16 %v10194
        %v10335 = vunpack.c.h.b16 %v10194
        %v10336 = vunpack.c.l.b16 %v10198
        %v10337 = vunpack.c.h.b16 %v10198
        %v10338 = vunpack.c.l.b16 %v10202
        %v10339 = vunpack.c.h.b16 %v10202
        %v10340 = vpack.c.b16 %v10336, %v10332
        %v10341 = vpack.c.b16 %v10337, %v10333
        %v10342 = vpack.c.b16 %v10338, %v10334
        %v10343 = vpack.c.b16 %v10339, %v10335
        %v10476 = vunpack.c.l.b16 %v10204
        %v10477 = vunpack.c.h.b16 %v10204
        %v10478 = vunpack.c.l.b16 %v10205
        %v10479 = vunpack.c.h.b16 %v10205
        %v10480 = vunpack.c.l.b16 %v10206
        %v10481 = vunpack.c.h.b16 %v10206
        %v10482 = vunpack.c.l.b16 %v10207
        %v10483 = vunpack.c.h.b16 %v10207
        %v10484 = vunpack.c.l.b16 %v10208
        %v10485 = vunpack.c.h.b16 %v10208
        %v10486 = vunpack.c.l.b16 %v10209
        %v10487 = vunpack.c.h.b16 %v10209
        %v10488 = vunpack.c.l.b16 %v10210
        %v10489 = vunpack.c.h.b16 %v10210
        %v10490 = vunpack.c.l.b16 %v10211
        %v10491 = vunpack.c.h.b16 %v10211
        %v10492 = vunpack.c.l.b16 %v10212
        %v10493 = vunpack.c.h.b16 %v10212
        %v10494 = vunpack.c.l.b16 %v10213
        %v10495 = vunpack.c.h.b16 %v10213
        %v10496 = vunpack.c.l.b16 %v10214
        %v10497 = vunpack.c.h.b16 %v10214
        %v10498 = vunpack.c.l.b16 %v10215
        %v10499 = vunpack.c.h.b16 %v10215
        %v10500 = vunpack.c.l.b16 %v10216
        %v10501 = vunpack.c.h.b16 %v10216
        %v10502 = vunpack.c.l.b16 %v10217
        %v10503 = vunpack.c.h.b16 %v10217
        %v10504 = vunpack.c.l.b16 %v10218
        %v10505 = vunpack.c.h.b16 %v10218
        %v10506 = vunpack.c.l.b16 %v10219
        %v10507 = vunpack.c.h.b16 %v10219
        %v10508 = vunpack.c.l.b16 %v10220
        %v10509 = vunpack.c.h.b16 %v10220
        %v10510 = vunpack.c.l.b16 %v10221
        %v10511 = vunpack.c.h.b16 %v10221
        %v10512 = vunpack.c.l.b16 %v10222
        %v10513 = vunpack.c.h.b16 %v10222
        %v10514 = vunpack.c.l.b16 %v10223
        %v10515 = vunpack.c.h.b16 %v10223
        %v10516 = vunpack.c.l.b16 %v10224
        %v10517 = vunpack.c.h.b16 %v10224
        %v10518 = vunpack.c.l.b16 %v10225
        %v10519 = vunpack.c.h.b16 %v10225
        %v10520 = vunpack.c.l.b16 %v10226
        %v10521 = vunpack.c.h.b16 %v10226
        %v10522 = vunpack.c.l.b16 %v10227
        %v10523 = vunpack.c.h.b16 %v10227
        %v10524 = vunpack.c.l.b16 %v10228
        %v10525 = vunpack.c.h.b16 %v10228
        %v10526 = vunpack.c.l.b16 %v10229
        %v10527 = vunpack.c.h.b16 %v10229
        %v10528 = vunpack.c.l.b16 %v10230
        %v10529 = vunpack.c.h.b16 %v10230
        %v10530 = vunpack.c.l.b16 %v10231
        %v10531 = vunpack.c.h.b16 %v10231
        %v10532 = vunpack.c.l.b16 %v10232
        %v10533 = vunpack.c.h.b16 %v10232
        %v10534 = vunpack.c.l.b16 %v10233
        %v10535 = vunpack.c.h.b16 %v10233
        %v10536 = vunpack.c.l.b16 %v10234
        %v10537 = vunpack.c.h.b16 %v10234
        %v10538 = vunpack.c.l.b16 %v10235
        %v10539 = vunpack.c.h.b16 %v10235
        %v10540 = vunpack.c.l.b16 %v10236
        %v10541 = vunpack.c.h.b16 %v10236
        %v10542 = vunpack.c.l.b16 %v10237
        %v10543 = vunpack.c.h.b16 %v10237
        %v10544 = vunpack.c.l.b16 %v10238
        %v10545 = vunpack.c.h.b16 %v10238
        %v10546 = vunpack.c.l.b16 %v10239
        %v10547 = vunpack.c.h.b16 %v10239
        %v10548 = vunpack.c.l.b16 %v10240
        %v10549 = vunpack.c.h.b16 %v10240
        %v10550 = vunpack.c.l.b16 %v10241
        %v10551 = vunpack.c.h.b16 %v10241
        %v10552 = vunpack.c.l.b16 %v10242
        %v10553 = vunpack.c.h.b16 %v10242
        %v10554 = vunpack.c.l.b16 %v10243
        %v10555 = vunpack.c.h.b16 %v10243
        %v10556 = vunpack.c.l.b16 %v10244
        %v10557 = vunpack.c.h.b16 %v10244
        %v10558 = vunpack.c.l.b16 %v10245
        %v10559 = vunpack.c.h.b16 %v10245
        %v10560 = vunpack.c.l.b16 %v10246
        %v10561 = vunpack.c.h.b16 %v10246
        %v10562 = vunpack.c.l.b16 %v10247
        %v10563 = vunpack.c.h.b16 %v10247
        %v10564 = vunpack.c.l.b16 %v10248
        %v10565 = vunpack.c.h.b16 %v10248
        %v10566 = vunpack.c.l.b16 %v10249
        %v10567 = vunpack.c.h.b16 %v10249
        %v10568 = vunpack.c.l.b16 %v10250
        %v10569 = vunpack.c.h.b16 %v10250
        %v10570 = vunpack.c.l.b16 %v10251
        %v10571 = vunpack.c.h.b16 %v10251
        %v10572 = vunpack.c.l.b16 %v10252
        %v10573 = vunpack.c.h.b16 %v10252
        %v10574 = vunpack.c.l.b16 %v10253
        %v10575 = vunpack.c.h.b16 %v10253
        %v10576 = vunpack.c.l.b16 %v10254
        %v10577 = vunpack.c.h.b16 %v10254
        %v10578 = vunpack.c.l.b16 %v10255
        %v10579 = vunpack.c.h.b16 %v10255
        %v10580 = vunpack.c.l.b16 %v10256
        %v10581 = vunpack.c.h.b16 %v10256
        %v10582 = vunpack.c.l.b16 %v10257
        %v10583 = vunpack.c.h.b16 %v10257
        %v10584 = vunpack.c.l.b16 %v10258
        %v10585 = vunpack.c.h.b16 %v10258
        %v10586 = vunpack.c.l.b16 %v10259
        %v10587 = vunpack.c.h.b16 %v10259
        %v10588 = vunpack.c.l.b16 %v10260
        %v10589 = vunpack.c.h.b16 %v10260
        %v10590 = vunpack.c.l.b16 %v10261
        %v10591 = vunpack.c.h.b16 %v10261
        %v10592 = vunpack.c.l.b16 %v10262
        %v10593 = vunpack.c.h.b16 %v10262
        %v10594 = vunpack.c.l.b16 %v10263
        %v10595 = vunpack.c.h.b16 %v10263
        %v10596 = vunpack.c.l.b16 %v10264
        %v10597 = vunpack.c.h.b16 %v10264
        %v10598 = vunpack.c.l.b16 %v10265
        %v10599 = vunpack.c.h.b16 %v10265
        %v10600 = vunpack.c.l.b16 %v10266
        %v10601 = vunpack.c.h.b16 %v10266
        %v10602 = vunpack.c.l.b16 %v10267
        %v10603 = vunpack.c.h.b16 %v10267
        %v10604 = vunpack.c.l.b16 %v10268
        %v10605 = vunpack.c.h.b16 %v10268
        %v10606 = vunpack.c.l.b16 %v10269
        %v10607 = vunpack.c.h.b16 %v10269
        %v10608 = vunpack.c.l.b16 %v10270
        %v10609 = vunpack.c.h.b16 %v10270
        %v10610 = vunpack.c.l.b16 %v10271
        %v10611 = vunpack.c.h.b16 %v10271
        %v10612 = vunpack.c.l.b16 %v10272
        %v10613 = vunpack.c.h.b16 %v10272
        %v10614 = vunpack.c.l.b16 %v10273
        %v10615 = vunpack.c.h.b16 %v10273
        %v10616 = vunpack.c.l.b16 %v10274
        %v10617 = vunpack.c.h.b16 %v10274
        %v10618 = vunpack.c.l.b16 %v10275
        %v10619 = vunpack.c.h.b16 %v10275
        %v10620 = vunpack.c.l.b16 %v10276
        %v10621 = vunpack.c.h.b16 %v10276
        %v10622 = vunpack.c.l.b16 %v10277
        %v10623 = vunpack.c.h.b16 %v10277
        %v10624 = vunpack.c.l.b16 %v10278
        %v10625 = vunpack.c.h.b16 %v10278
        %v10626 = vunpack.c.l.b16 %v10279
        %v10627 = vunpack.c.h.b16 %v10279
        %v10628 = vunpack.c.l.b16 %v10280
        %v10629 = vunpack.c.h.b16 %v10280
        %v10630 = vunpack.c.l.b16 %v10281
        %v10631 = vunpack.c.h.b16 %v10281
        %v10632 = vunpack.c.l.b16 %v10282
        %v10633 = vunpack.c.h.b16 %v10282
        %v10634 = vunpack.c.l.b16 %v10283
        %v10635 = vunpack.c.h.b16 %v10283
        %v10636 = vunpack.c.l.b16 %v10284
        %v10637 = vunpack.c.h.b16 %v10284
        %v10638 = vunpack.c.l.b16 %v10285
        %v10639 = vunpack.c.h.b16 %v10285
        %v10640 = vunpack.c.l.b16 %v10286
        %v10641 = vunpack.c.h.b16 %v10286
        %v10642 = vunpack.c.l.b16 %v10287
        %v10643 = vunpack.c.h.b16 %v10287
        %v10644 = vunpack.c.l.b16 %v10288
        %v10645 = vunpack.c.h.b16 %v10288
        %v10646 = vunpack.c.l.b16 %v10289
        %v10647 = vunpack.c.h.b16 %v10289
        %v10648 = vunpack.c.l.b16 %v10290
        %v10649 = vunpack.c.h.b16 %v10290
        %v10650 = vunpack.c.l.b16 %v10291
        %v10651 = vunpack.c.h.b16 %v10291
        %v10652 = vunpack.c.l.b16 %v10292
        %v10653 = vunpack.c.h.b16 %v10292
        %v10654 = vunpack.c.l.b16 %v10293
        %v10655 = vunpack.c.h.b16 %v10293
        %v10656 = vunpack.c.l.b16 %v10294
        %v10657 = vunpack.c.h.b16 %v10294
        %v10658 = vunpack.c.l.b16 %v10295
        %v10659 = vunpack.c.h.b16 %v10295
        %v10660 = vunpack.c.l.b16 %v10296
        %v10661 = vunpack.c.h.b16 %v10296
        %v10662 = vunpack.c.l.b16 %v10297
        %v10663 = vunpack.c.h.b16 %v10297
        %v10664 = vunpack.c.l.b16 %v10298
        %v10665 = vunpack.c.h.b16 %v10298
        %v10666 = vunpack.c.l.b16 %v10299
        %v10667 = vunpack.c.h.b16 %v10299
        %v10668 = vunpack.c.l.b16 %v10300
        %v10669 = vunpack.c.h.b16 %v10300
        %v10670 = vunpack.c.l.b16 %v10301
        %v10671 = vunpack.c.h.b16 %v10301
        %v10672 = vunpack.c.l.b16 %v10302
        %v10673 = vunpack.c.h.b16 %v10302
        %v10674 = vunpack.c.l.b16 %v10303
        %v10675 = vunpack.c.h.b16 %v10303
        %v10676 = vunpack.c.l.b16 %v10304
        %v10677 = vunpack.c.h.b16 %v10304
        %v10678 = vunpack.c.l.b16 %v10305
        %v10679 = vunpack.c.h.b16 %v10305
        %v10680 = vunpack.c.l.b16 %v10306
        %v10681 = vunpack.c.h.b16 %v10306
        %v10682 = vunpack.c.l.b16 %v10307
        %v10683 = vunpack.c.h.b16 %v10307
        %v10684 = vunpack.c.l.b16 %v10308
        %v10685 = vunpack.c.h.b16 %v10308
        %v10686 = vunpack.c.l.b16 %v10309
        %v10687 = vunpack.c.h.b16 %v10309
        %v10688 = vunpack.c.l.b16 %v10310
        %v10689 = vunpack.c.h.b16 %v10310
        %v10690 = vunpack.c.l.b16 %v10311
        %v10691 = vunpack.c.h.b16 %v10311
        %v10692 = vunpack.c.l.b16 %v10312
        %v10693 = vunpack.c.h.b16 %v10312
        %v10694 = vunpack.c.l.b16 %v10313
        %v10695 = vunpack.c.h.b16 %v10313
        %v10696 = vunpack.c.l.b16 %v10314
        %v10697 = vunpack.c.h.b16 %v10314
        %v10698 = vunpack.c.l.b16 %v10315
        %v10699 = vunpack.c.h.b16 %v10315
        %v10700 = vunpack.c.l.b16 %v10316
        %v10701 = vunpack.c.h.b16 %v10316
        %v10702 = vunpack.c.l.b16 %v10317
        %v10703 = vunpack.c.h.b16 %v10317
        %v10704 = vunpack.c.l.b16 %v10318
        %v10705 = vunpack.c.h.b16 %v10318
        %v10706 = vunpack.c.l.b16 %v10319
        %v10707 = vunpack.c.h.b16 %v10319
        %v10708 = vunpack.c.l.b16 %v10320
        %v10709 = vunpack.c.h.b16 %v10320
        %v10710 = vunpack.c.l.b16 %v10321
        %v10711 = vunpack.c.h.b16 %v10321
        %v10712 = vunpack.c.l.b16 %v10322
        %v10713 = vunpack.c.h.b16 %v10322
        %v10714 = vunpack.c.l.b16 %v10323
        %v10715 = vunpack.c.h.b16 %v10323
        %v10716 = vunpack.c.l.b16 %v10324
        %v10717 = vunpack.c.h.b16 %v10324
        %v10718 = vunpack.c.l.b16 %v10325
        %v10719 = vunpack.c.h.b16 %v10325
        %v10720 = vunpack.c.l.b16 %v10326
        %v10721 = vunpack.c.h.b16 %v10326
        %v10722 = vunpack.c.l.b16 %v10327
        %v10723 = vunpack.c.h.b16 %v10327
        %v10724 = vunpack.c.l.b16 %v10328
        %v10725 = vunpack.c.h.b16 %v10328
        %v10726 = vunpack.c.l.b16 %v10329
        %v10727 = vunpack.c.h.b16 %v10329
        %v10728 = vunpack.c.l.b16 %v10330
        %v10729 = vunpack.c.h.b16 %v10330
        %v10730 = vunpack.c.l.b16 %v10331
        %v10731 = vunpack.c.h.b16 %v10331
        %v10732 = vpack.c.b16 %v10480, %v10476
        %v10733 = vpack.c.b16 %v10481, %v10477
        %v10734 = vpack.c.b16 %v10482, %v10478
        %v10735 = vpack.c.b16 %v10483, %v10479
        %v10736 = vpack.c.b16 %v10488, %v10484
        %v10737 = vpack.c.b16 %v10489, %v10485
        %v10738 = vpack.c.b16 %v10490, %v10486
        %v10739 = vpack.c.b16 %v10491, %v10487
        %v10740 = vpack.c.b16 %v10496, %v10492
        %v10741 = vpack.c.b16 %v10497, %v10493
        %v10742 = vpack.c.b16 %v10498, %v10494
        %v10743 = vpack.c.b16 %v10499, %v10495
        %v10744 = vpack.c.b16 %v10504, %v10500
        %v10745 = vpack.c.b16 %v10505, %v10501
        %v10746 = vpack.c.b16 %v10506, %v10502
        %v10747 = vpack.c.b16 %v10507, %v10503
        %v10748 = vpack.c.b16 %v10512, %v10508
        %v10749 = vpack.c.b16 %v10513, %v10509
        %v10750 = vpack.c.b16 %v10514, %v10510
        %v10751 = vpack.c.b16 %v10515, %v10511
        %v10752 = vpack.c.b16 %v10520, %v10516
        %v10753 = vpack.c.b16 %v10521, %v10517
        %v10754 = vpack.c.b16 %v10522, %v10518
        %v10755 = vpack.c.b16 %v10523, %v10519
        %v10756 = vpack.c.b16 %v10528, %v10524
        %v10757 = vpack.c.b16 %v10529, %v10525
        %v10758 = vpack.c.b16 %v10530, %v10526
        %v10759 = vpack.c.b16 %v10531, %v10527
        %v10760 = vpack.c.b16 %v10536, %v10532
        %v10761 = vpack.c.b16 %v10537, %v10533
        %v10762 = vpack.c.b16 %v10538, %v10534
        %v10763 = vpack.c.b16 %v10539, %v10535
        %v10764 = vpack.c.b16 %v10544, %v10540
        %v10765 = vpack.c.b16 %v10545, %v10541
        %v10766 = vpack.c.b16 %v10546, %v10542
        %v10767 = vpack.c.b16 %v10547, %v10543
        %v10768 = vpack.c.b16 %v10552, %v10548
        %v10769 = vpack.c.b16 %v10553, %v10549
        %v10770 = vpack.c.b16 %v10554, %v10550
        %v10771 = vpack.c.b16 %v10555, %v10551
        %v10772 = vpack.c.b16 %v10560, %v10556
        %v10773 = vpack.c.b16 %v10561, %v10557
        %v10774 = vpack.c.b16 %v10562, %v10558
        %v10775 = vpack.c.b16 %v10563, %v10559
        %v10776 = vpack.c.b16 %v10568, %v10564
        %v10777 = vpack.c.b16 %v10569, %v10565
        %v10778 = vpack.c.b16 %v10570, %v10566
        %v10779 = vpack.c.b16 %v10571, %v10567
        %v10780 = vpack.c.b16 %v10576, %v10572
        %v10781 = vpack.c.b16 %v10577, %v10573
        %v10782 = vpack.c.b16 %v10578, %v10574
        %v10783 = vpack.c.b16 %v10579, %v10575
        %v10784 = vpack.c.b16 %v10584, %v10580
        %v10785 = vpack.c.b16 %v10585, %v10581
        %v10786 = vpack.c.b16 %v10586, %v10582
        %v10787 = vpack.c.b16 %v10587, %v10583
        %v10788 = vpack.c.b16 %v10592, %v10588
        %v10789 = vpack.c.b16 %v10593, %v10589
        %v10790 = vpack.c.b16 %v10594, %v10590
        %v10791 = vpack.c.b16 %v10595, %v10591
        %v10792 = vpack.c.b16 %v10600, %v10596
        %v10793 = vpack.c.b16 %v10601, %v10597
        %v10794 = vpack.c.b16 %v10602, %v10598
        %v10795 = vpack.c.b16 %v10603, %v10599
        %v10796 = vpack.c.b16 %v10608, %v10604
        %v10797 = vpack.c.b16 %v10609, %v10605
        %v10798 = vpack.c.b16 %v10610, %v10606
        %v10799 = vpack.c.b16 %v10611, %v10607
        %v10800 = vpack.c.b16 %v10616, %v10612
        %v10801 = vpack.c.b16 %v10617, %v10613
        %v10802 = vpack.c.b16 %v10618, %v10614
        %v10803 = vpack.c.b16 %v10619, %v10615
        %v10804 = vpack.c.b16 %v10624, %v10620
        %v10805 = vpack.c.b16 %v10625, %v10621
        %v10806 = vpack.c.b16 %v10626, %v10622
        %v10807 = vpack.c.b16 %v10627, %v10623
        %v10808 = vpack.c.b16 %v10632, %v10628
        %v10809 = vpack.c.b16 %v10633, %v10629
        %v10810 = vpack.c.b16 %v10634, %v10630
        %v10811 = vpack.c.b16 %v10635, %v10631
        %v10812 = vpack.c.b16 %v10640, %v10636
        %v10813 = vpack.c.b16 %v10641, %v10637
        %v10814 = vpack.c.b16 %v10642, %v10638
        %v10815 = vpack.c.b16 %v10643, %v10639
        %v10816 = vpack.c.b16 %v10648, %v10644
        %v10817 = vpack.c.b16 %v10649, %v10645
        %v10818 = vpack.c.b16 %v10650, %v10646
        %v10819 = vpack.c.b16 %v10651, %v10647
        %v10820 = vpack.c.b16 %v10656, %v10652
        %v10821 = vpack.c.b16 %v10657, %v10653
        %v10822 = vpack.c.b16 %v10658, %v10654
        %v10823 = vpack.c.b16 %v10659, %v10655
        %v10824 = vpack.c.b16 %v10664, %v10660
        %v10825 = vpack.c.b16 %v10665, %v10661
        %v10826 = vpack.c.b16 %v10666, %v10662
        %v10827 = vpack.c.b16 %v10667, %v10663
        %v10828 = vpack.c.b16 %v10672, %v10668
        %v10829 = vpack.c.b16 %v10673, %v10669
        %v10830 = vpack.c.b16 %v10674, %v10670
        %v10831 = vpack.c.b16 %v10675, %v10671
        %v10832 = vpack.c.b16 %v10680, %v10676
        %v10833 = vpack.c.b16 %v10681, %v10677
        %v10834 = vpack.c.b16 %v10682, %v10678
        %v10835 = vpack.c.b16 %v10683, %v10679
        %v10836 = vpack.c.b16 %v10688, %v10684
        %v10837 = vpack.c.b16 %v10689, %v10685
        %v10838 = vpack.c.b16 %v10690, %v10686
        %v10839 = vpack.c.b16 %v10691, %v10687
        %v10840 = vpack.c.b16 %v10696, %v10692
        %v10841 = vpack.c.b16 %v10697, %v10693
        %v10842 = vpack.c.b16 %v10698, %v10694
        %v10843 = vpack.c.b16 %v10699, %v10695
        %v10844 = vpack.c.b16 %v10704, %v10700
        %v10845 = vpack.c.b16 %v10705, %v10701
        %v10846 = vpack.c.b16 %v10706, %v10702
        %v10847 = vpack.c.b16 %v10707, %v10703
        %v10848 = vpack.c.b16 %v10712, %v10708
        %v10849 = vpack.c.b16 %v10713, %v10709
        %v10850 = vpack.c.b16 %v10714, %v10710
        %v10851 = vpack.c.b16 %v10715, %v10711
        %v10852 = vpack.c.b16 %v10720, %v10716
        %v10853 = vpack.c.b16 %v10721, %v10717
        %v10854 = vpack.c.b16 %v10722, %v10718
        %v10855 = vpack.c.b16 %v10723, %v10719
        %v10856 = vpack.c.b16 %v10728, %v10724
        %v10857 = vpack.c.b16 %v10729, %v10725
        %v10858 = vpack.c.b16 %v10730, %v10726
        %v10859 = vpack.c.b16 %v10731, %v10727
        %10988 = vmatprep.subr.bf16.mxu0 %v10761
        %10989 = vmatpush1.bf16.msra.mxu0 %v10760
        %10990 = vmatprep.subr.bf16.mxu0 %v10757
        %10991 = vmatpush1.bf16.msra.mxu0 %v10756
        %10992 = vmatprep.subr.bf16.mxu0 %v10753
        %10993 = vmatpush1.bf16.msra.mxu0 %v10752
        %10994 = vmatprep.subr.bf16.mxu0 %v10749
        %10995 = vmatpush1.bf16.msra.mxu0 %v10748
        %10996 = vmatprep.subr.bf16.mxu0 %v10745
        %10997 = vmatpush1.bf16.msra.mxu0 %v10744
        %10998 = vmatprep.subr.bf16.mxu0 %v10741
        %10999 = vmatpush1.bf16.msra.mxu0 %v10740
        %11000 = vmatprep.subr.bf16.mxu0 %v10737
        %11001 = vmatpush1.bf16.msra.mxu0 %v10736
        %11002 = vmatprep.subr.bf16.mxu0 %v10733
        %11003 = vmatpush1.bf16.msra.mxu0 %v10732
        %11004 = vmatprep.subr.bf16.mxu0 %v10793
        %11005 = vmatpush2.bf16.msra.mxu0 %v10792
        %11006 = vmatprep.subr.bf16.mxu0 %v10789
        %11007 = vmatpush2.bf16.msra.mxu0 %v10788
        %11008 = vmatprep.subr.bf16.mxu0 %v10785
        %11009 = vmatpush2.bf16.msra.mxu0 %v10784
        %11010 = vmatprep.subr.bf16.mxu0 %v10781
        %11011 = vmatpush2.bf16.msra.mxu0 %v10780
        %11012 = vmatprep.subr.bf16.mxu0 %v10777
        %11013 = vmatpush2.bf16.msra.mxu0 %v10776
        %11014 = vmatprep.subr.bf16.mxu0 %v10773
        %11015 = vmatpush2.bf16.msra.mxu0 %v10772
        %11016 = vmatprep.subr.bf16.mxu0 %v10769
        %11017 = vmatpush2.bf16.msra.mxu0 %v10768
        %11018 = vmatprep.subr.bf16.mxu0 %v10765
        %11019 = vmatpush2.bf16.msra.mxu0 %v10764
        %11020 = vmatprep.mubr.bf16.mxu0 %v10341
        %11021 = vmatmul.mubr.bf16.gmra.mxu0 %v10340
        %v11022 = vpop.f32.mrf.mxu0
        %v11023 = vadd.f32 0.0, %v11022
        %v11024 = vpop.f32.mrf.mxu0
        %v11025 = vadd.f32 0.0, %v11024
        %v11026 = vpop.f32.mrf.mxu0
        %v11027 = vadd.f32 0.0, %v11026
        %v11028 = vpop.f32.mrf.mxu0
        %v11029 = vadd.f32 0.0, %v11028
        %11030 = vdwg.mxu0
        %11031 = vmatprep.subr.bf16.mxu0 %v10825
        %11032 = vmatpush1.bf16.msra.mxu0 %v10824
        %11033 = vmatprep.subr.bf16.mxu0 %v10821
        %11034 = vmatpush1.bf16.msra.mxu0 %v10820
        %11035 = vmatprep.subr.bf16.mxu0 %v10817
        %11036 = vmatpush1.bf16.msra.mxu0 %v10816
        %11037 = vmatprep.subr.bf16.mxu0 %v10813
        %11038 = vmatpush1.bf16.msra.mxu0 %v10812
        %11039 = vmatprep.subr.bf16.mxu0 %v10809
        %11040 = vmatpush1.bf16.msra.mxu0 %v10808
        %11041 = vmatprep.subr.bf16.mxu0 %v10805
        %11042 = vmatpush1.bf16.msra.mxu0 %v10804
        %11043 = vmatprep.subr.bf16.mxu0 %v10801
        %11044 = vmatpush1.bf16.msra.mxu0 %v10800
        %11045 = vmatprep.subr.bf16.mxu0 %v10797
        %11046 = vmatpush1.bf16.msra.mxu0 %v10796
        %11047 = vmatprep.subr.bf16.mxu0 %v10857
        %11048 = vmatpush2.bf16.msra.mxu0 %v10856
        %11049 = vmatprep.subr.bf16.mxu0 %v10853
        %11050 = vmatpush2.bf16.msra.mxu0 %v10852
        %11051 = vmatprep.subr.bf16.mxu0 %v10849
        %11052 = vmatpush2.bf16.msra.mxu0 %v10848
        %11053 = vmatprep.subr.bf16.mxu0 %v10845
        %11054 = vmatpush2.bf16.msra.mxu0 %v10844
        %11055 = vmatprep.subr.bf16.mxu0 %v10841
        %11056 = vmatpush2.bf16.msra.mxu0 %v10840
        %11057 = vmatprep.subr.bf16.mxu0 %v10837
        %11058 = vmatpush2.bf16.msra.mxu0 %v10836
        %11059 = vmatprep.subr.bf16.mxu0 %v10833
        %11060 = vmatpush2.bf16.msra.mxu0 %v10832
        %11061 = vmatprep.subr.bf16.mxu0 %v10829
        %11062 = vmatpush2.bf16.msra.mxu0 %v10828
        %11063 = vmatprep.mubr.bf16.mxu0 %v10343
        %11064 = vmatmul.mubr.bf16.gmra.mxu0 %v10342
        %v11065 = vpop.f32.mrf.mxu0
        %v11066 = vadd.f32 %v11023, %v11065
        %v11067 = vpop.f32.mrf.mxu0
        %v11068 = vadd.f32 %v11025, %v11067
        %v11069 = vpop.f32.mrf.mxu0
        %v11070 = vadd.f32 %v11027, %v11069
        %v11071 = vpop.f32.mrf.mxu0
        %v11072 = vadd.f32 %v11029, %v11071
        %11073 = vdwg.mxu0
        %11074 = vmatprep.subr.bf16.mxu0 %v10763
        %11075 = vmatpush1.bf16.msra.mxu0 %v10762
        %11076 = vmatprep.subr.bf16.mxu0 %v10759
        %11077 = vmatpush1.bf16.msra.mxu0 %v10758
        %11078 = vmatprep.subr.bf16.mxu0 %v10755
        %11079 = vmatpush1.bf16.msra.mxu0 %v10754
        %11080 = vmatprep.subr.bf16.mxu0 %v10751
        %11081 = vmatpush1.bf16.msra.mxu0 %v10750
        %11082 = vmatprep.subr.bf16.mxu0 %v10747
        %11083 = vmatpush1.bf16.msra.mxu0 %v10746
        %11084 = vmatprep.subr.bf16.mxu0 %v10743
        %11085 = vmatpush1.bf16.msra.mxu0 %v10742
        %11086 = vmatprep.subr.bf16.mxu0 %v10739
        %11087 = vmatpush1.bf16.msra.mxu0 %v10738
        %11088 = vmatprep.subr.bf16.mxu0 %v10735
        %11089 = vmatpush1.bf16.msra.mxu0 %v10734
        %11090 = vmatprep.subr.bf16.mxu0 %v10795
        %11091 = vmatpush2.bf16.msra.mxu0 %v10794
        %11092 = vmatprep.subr.bf16.mxu0 %v10791
        %11093 = vmatpush2.bf16.msra.mxu0 %v10790
        %11094 = vmatprep.subr.bf16.mxu0 %v10787
        %11095 = vmatpush2.bf16.msra.mxu0 %v10786
        %11096 = vmatprep.subr.bf16.mxu0 %v10783
        %11097 = vmatpush2.bf16.msra.mxu0 %v10782
        %11098 = vmatprep.subr.bf16.mxu0 %v10779
        %11099 = vmatpush2.bf16.msra.mxu0 %v10778
        %11100 = vmatprep.subr.bf16.mxu0 %v10775
        %11101 = vmatpush2.bf16.msra.mxu0 %v10774
        %11102 = vmatprep.subr.bf16.mxu0 %v10771
        %11103 = vmatpush2.bf16.msra.mxu0 %v10770
        %11104 = vmatprep.subr.bf16.mxu0 %v10767
        %11105 = vmatpush2.bf16.msra.mxu0 %v10766
        %11106 = vmatprep.mubr.bf16.mxu0 %v10341
        %11107 = vmatmul.mubr.bf16.gmra.mxu0 %v10340
        %v11108 = vpop.f32.mrf.mxu0
        %v11109 = vadd.f32 0.0, %v11108
        %v11110 = vpop.f32.mrf.mxu0
        %v11111 = vadd.f32 0.0, %v11110
        %v11112 = vpop.f32.mrf.mxu0
        %v11113 = vadd.f32 0.0, %v11112
        %v11114 = vpop.f32.mrf.mxu0
        %v11115 = vadd.f32 0.0, %v11114
        %11116 = vdwg.mxu0
        %11117 = vmatprep.subr.bf16.mxu0 %v10827
        %11118 = vmatpush1.bf16.msra.mxu0 %v10826
        %11119 = vmatprep.subr.bf16.mxu0 %v10823
        %11120 = vmatpush1.bf16.msra.mxu0 %v10822
        %11121 = vmatprep.subr.bf16.mxu0 %v10819
        %11122 = vmatpush1.bf16.msra.mxu0 %v10818
        %11123 = vmatprep.subr.bf16.mxu0 %v10815
        %11124 = vmatpush1.bf16.msra.mxu0 %v10814
        %11125 = vmatprep.subr.bf16.mxu0 %v10811
        %11126 = vmatpush1.bf16.msra.mxu0 %v10810
        %11127 = vmatprep.subr.bf16.mxu0 %v10807
        %11128 = vmatpush1.bf16.msra.mxu0 %v10806
        %11129 = vmatprep.subr.bf16.mxu0 %v10803
        %11130 = vmatpush1.bf16.msra.mxu0 %v10802
        %11131 = vmatprep.subr.bf16.mxu0 %v10799
        %11132 = vmatpush1.bf16.msra.mxu0 %v10798
        %11133 = vmatprep.subr.bf16.mxu0 %v10859
        %11134 = vmatpush2.bf16.msra.mxu0 %v10858
        %11135 = vmatprep.subr.bf16.mxu0 %v10855
        %11136 = vmatpush2.bf16.msra.mxu0 %v10854
        %11137 = vmatprep.subr.bf16.mxu0 %v10851
        %11138 = vmatpush2.bf16.msra.mxu0 %v10850
        %11139 = vmatprep.subr.bf16.mxu0 %v10847
        %11140 = vmatpush2.bf16.msra.mxu0 %v10846
        %11141 = vmatprep.subr.bf16.mxu0 %v10843
        %11142 = vmatpush2.bf16.msra.mxu0 %v10842
        %11143 = vmatprep.subr.bf16.mxu0 %v10839
        %11144 = vmatpush2.bf16.msra.mxu0 %v10838
        %11145 = vmatprep.subr.bf16.mxu0 %v10835
        %11146 = vmatpush2.bf16.msra.mxu0 %v10834
        %11147 = vmatprep.subr.bf16.mxu0 %v10831
        %11148 = vmatpush2.bf16.msra.mxu0 %v10830
        %11149 = vmatprep.mubr.bf16.mxu0 %v10343
        %11150 = vmatmul.mubr.bf16.gmra.mxu0 %v10342
        %v11151 = vpop.f32.mrf.mxu0
        %v11152 = vadd.f32 %v11109, %v11151
        %v11153 = vpop.f32.mrf.mxu0
        %v11154 = vadd.f32 %v11111, %v11153
        %v11155 = vpop.f32.mrf.mxu0
        %v11156 = vadd.f32 %v11113, %v11155
        %v11157 = vpop.f32.mrf.mxu0
        %v11158 = vadd.f32 %v11115, %v11157
        %11159 = vdwg.mxu0
        %v11160 = vadd.f32 %v10164, %v11066
        %v11161 = vadd.f32 %v10165, %v11068
        %v11162 = vadd.f32 %v10166, %v11152
        %v11163 = vadd.f32 %v10167, %v11154
        %v11164 = vadd.f32 %v10168, %v11070
        %v11165 = vadd.f32 %v10169, %v11072
        %v11166 = vadd.f32 %v10170, %v11156
        %v11167 = vadd.f32 %v10171, %v11158
        %v11168 = vld [vmem:[%s322] sm:$0xc0]
        %v11169 = vld [vmem:[%s322 + $0x8] sm:$0xc0]
        %v11170 = vld [vmem:[%s322 + $0x10] sm:$0xc0]
        %v11171 = vld [vmem:[%s322 + $0x18] sm:$0xc0]
        %v11172 = vld [vmem:[%s322 + $0x20] sm:$0x3f]
        %v11173 = vld [vmem:[%s322 + $0x28] sm:$0x3f]
        %v11174 = vld [vmem:[%s322 + $0x30] sm:$0x3f]
        %v11175 = vld [vmem:[%s322 + $0x38] sm:$0x3f]
        %v11176 = vld [vmem:[%s322 + $0x60] sm:$0xc0]
        %v11177 = vld [vmem:[%s322 + $0x68] sm:$0xc0]
        %v11178 = vld [vmem:[%s322 + $0x70] sm:$0xc0]
        %v11179 = vld [vmem:[%s322 + $0x78] sm:$0xc0]
        %v11180 = vld [vmem:[%s322 + $0x80] sm:$0x3f]
        %v11181 = vld [vmem:[%s322 + $0x88] sm:$0x3f]
        %v11182 = vld [vmem:[%s322 + $0x90] sm:$0x3f]
        %v11183 = vld [vmem:[%s322 + $0x98] sm:$0x3f]
        %v11184 = vmul.f32 %v11160, 0.3
        %v11185 = vmul.f32 %v11161, 0.3
        %v11186 = vmul.f32 %v11162, 0.3
        %v11187 = vmul.f32 %v11163, 0.3
        %v11188 = vmul.f32 %v11164, 0.3
        %v11189 = vmul.f32 %v11165, 0.3
        %v11190 = vmul.f32 %v11166, 0.3
        %v11191 = vmul.f32 %v11167, 0.3
        %v11200 = vrot.slane %v11184, 2
        %v11201 = vrot.slane %v11185, 2
        %v11202 = vrot.slane %v11186, 2
        %v11203 = vrot.slane %v11187, 2
        %v11204 = vrot.slane %v11188, 2
        %v11205 = vrot.slane %v11189, 2
        %v11206 = vrot.slane %v11190, 2
        %v11207 = vrot.slane %v11191, 2
        %v11216 = vadd.f32 %v11168, %v11200
        %v11217 = vadd.f32 %v11169, %v11201
        %v11218 = vadd.f32 %v11170, %v11202
        %v11219 = vadd.f32 %v11171, %v11203
        %v11220 = vadd.f32 %v11172, %v11200
        %v11221 = vadd.f32 %v11173, %v11201
        %v11222 = vadd.f32 %v11174, %v11202
        %v11223 = vadd.f32 %v11175, %v11203
        %v11224 = vadd.f32 %v11176, %v11204
        %v11225 = vadd.f32 %v11177, %v11205
        %v11226 = vadd.f32 %v11178, %v11206
        %v11227 = vadd.f32 %v11179, %v11207
        %v11228 = vadd.f32 %v11180, %v11204
        %v11229 = vadd.f32 %v11181, %v11205
        %v11230 = vadd.f32 %v11182, %v11206
        %v11231 = vadd.f32 %v11183, %v11207
        %vm11248 = vcmask 1041408
        %v11249 = vrot.slane %v11216, 6
        %v11250 = vrot.slane %v11220, 6
        %v11251 = vsel %vm11248, %v11249, %v11250
        %v11252 = vrot.slane %v11217, 6
        %v11253 = vrot.slane %v11221, 6
        %v11254 = vsel %vm11248, %v11252, %v11253
        %v11255 = vrot.slane %v11218, 6
        %v11256 = vrot.slane %v11222, 6
        %v11257 = vsel %vm11248, %v11255, %v11256
        %v11258 = vrot.slane %v11219, 6
        %v11259 = vrot.slane %v11223, 6
        %v11260 = vsel %vm11248, %v11258, %v11259
        %v11261 = vrot.slane %v11224, 6
        %v11262 = vrot.slane %v11228, 6
        %v11263 = vsel %vm11248, %v11261, %v11262
        %v11264 = vrot.slane %v11225, 6
        %v11265 = vrot.slane %v11229, 6
        %v11266 = vsel %vm11248, %v11264, %v11265
        %v11267 = vrot.slane %v11226, 6
        %v11268 = vrot.slane %v11230, 6
        %v11269 = vsel %vm11248, %v11267, %v11268
        %v11270 = vrot.slane %v11227, 6
        %v11271 = vrot.slane %v11231, 6
        %v11272 = vsel %vm11248, %v11270, %v11271
        %11281 = vst [vmem:[%s362] sm:$0xff] %v11251
        %11282 = vst [vmem:[%s362 + $0x8] sm:$0xff] %v11254
        %11283 = vst [vmem:[%s362 + $0x10] sm:$0xff] %v11257
        %11284 = vst [vmem:[%s362 + $0x18] sm:$0xff] %v11260
        %11285 = vst [vmem:[%s362 + $0x20] sm:$0xff] %v11263
        %11286 = vst [vmem:[%s362 + $0x28] sm:$0xff] %v11266
        %11287 = vst [vmem:[%s362 + $0x30] sm:$0xff] %v11269
        %11288 = vst [vmem:[%s362 + $0x38] sm:$0xff] %v11272
        %s11289 = sand.u32 %s156, 1
        %s11290 = scalar_lea.sflag [#allocation6], %s11289
        %s11291 = sand.u32 %s156, 1
        %s11292 = smul.addr %s11291, 64
        %s11293 = scalar_lea.vmem [#allocation12], %s11292
        // Predicated region
        $region88: #{resblock_forward_nlc.1} parent=58 // pred_check
          %p11294 = pneg %p166
        $region89: #{resblock_forward_nlc.1} parent=58 // pred_check_branch
          %11296 = sbr.rel (%p11294) target = $region91
        $region90: #{resblock_forward_nlc.1} parent=58 // pred_region
          %s11297 = smul.u32 2, %s26
          %s11299 = ssub.s32 1024, 1024
          %11300 = vsyncadd %s11290, %s11299
          %s11301 = smul.addr %s27, 4
          %s11302 = smul.addr %s11297, 8
          %s11303 = sadd.s32 %s11301, %s11302
          %s11304 = smul.addr %s11303, 128
          %s11305 = scalar_lea.hbm %s5, %s11304
          %s11306 = sshll.u32 %s11293, 4
          %s11307 = int_to_ptr.vmem [resolvable:$true] %s11306
          %11312 = dma.vmem_to_hbm [thread:$0]  %s11307, 1024, %s11305, %s11290, 512, 1024, 32
        $region91: #{resblock_forward_nlc.1} parent=58 // pred_fallthru
          _
      $region59: #{resblock_forward_nlc.1} parent=5 // pred_fallthru
        _
      %p11313 = scmp.le.s32.totalorder 2, %s17
      // Predicated region
      $region92: #{resblock_forward_nlc.1} parent=5 // pred_check
        %p11314 = pneg %p11313
      $region93: #{resblock_forward_nlc.1} parent=5 // pred_check_branch
        %11316 = sbr.rel (%p11314) target = $region95
      $region94: #{resblock_forward_nlc.1} parent=5 // pred_region
        %s11317 = ssub.s32 %s17, 2
        // Predicated region
        $region96: #{resblock_forward_nlc.1} parent=94 // pred_check
          %p11318 = pneg %p172
        $region97: #{resblock_forward_nlc.1} parent=94 // pred_check_branch
          %11320 = sbr.rel (%p11318) target = $region99
        $region98: #{resblock_forward_nlc.1} parent=94 // pred_region
          %s11321 = sand.u32 %s157, 1
          %s11322 = scalar_lea.sflag [#allocation6], %s11321
          %s11323 = sand.u32 %s157, 1
          %s11324 = smul.addr %s11323, 64
          %s11325 = scalar_lea.vmem [#allocation12], %s11324
          %11326 = dma.done %s11322, 1024
        $region99: #{resblock_forward_nlc.1} parent=94 // pred_fallthru
          _
      $region95: #{resblock_forward_nlc.1} parent=5 // pred_fallthru
        _
    $region6: #{resblock_forward_nlc.1} parent=1 // loop_footer
      %s21 = sadd.s32 1, %s17
    $region7: #{resblock_forward_nlc.1} parent=1 // loop_footer_branch
      %16 = sbr.rel target = $region3
    $region8: #{resblock_forward_nlc.1} parent=1 // loop_exit
      _
    %11327 = vsyncpa [#allocation5], 1
    %s11328 = scalar_lea.sflag [#allocation5], 1
    %11329 = vsyncpa %s11328, 1
    %11330 = vsyncpa [#allocation8], 1
    %11331 = vsyncpa [#allocation11], 1
    %11332 = vsyncpa [#allocation6], 1
    %s11333 = scalar_lea.sflag [#allocation6], 1
    %11334 = vsyncpa %s11333, 1

</llo_original>
